<compile_context>
chip_gen: v7x
topology: tpu7x:2x2x1
jax: 0.10.0
libtpu: 0.0.40
codegen_flags: <defaults>
</compile_context>

<pallas_src>
import functools

import jax
import jax.numpy as jnp
from jax.experimental import pallas as pl
from jax.experimental.pallas import tpu as pltpu

_BN_EPS = 1e-5


# ------------------------------- kernel ------------------------------------ #

def _fused_resnet_kernel(*refs, num_res_blocks, hidden, h_rows, w_cols,
                         ch_heads, action_size, halo):
    """One grid step = one board: start conv -> ResBlocks -> both heads -> FCs.

    refs:
      x_ref                 (1, HW, hidden) f32   NHWC rows, channels zero-padded
      per conv layer:       w (9*hidden, cout) bf16, shift (1, cout) f32
                            [start, res blocks..., fused policy+value head conv]
      wfc_ref               (HW*ch_heads, 128) bf16  fused policy+value FC
      bfc_ref               (1, 128) f32
      out_ref               (1, 1, 128) f32   [policy logits | value | zeros]
      scratch:              halo_ref, xcat_ref, yh_ref, flat_ref
    """
    hw = h_rows * w_cols
    n_conv = 2 * num_res_blocks + 2
    x_ref = refs[0]
    wb = refs[1:1 + 2 * n_conv]
    wfc_ref = refs[1 + 2 * n_conv]
    bfc_ref = refs[2 + 2 * n_conv]
    out_ref = refs[3 + 2 * n_conv]
    halo_ref, xcat_ref, yh_ref, flat_ref = refs[4 + 2 * n_conv:]

    taps = [(dy, dx) for dy in (-1, 0, 1) for dx in (-1, 0, 1)]

    # Rows above/below the board in the halo buffer stay zero for the whole
    # grid step; they supply the vertical zero padding of every 3x3 conv.
    halo_ref[...] = jnp.zeros_like(halo_ref)

    # Horizontal edge masks (only dx = +-1 taps can wrap within a board row).
    col = jax.lax.broadcasted_iota(jnp.int32, (hw, 1), 0) % w_cols
    not_left = col >= 1
    not_right = col <= w_cols - 2

    def conv_bn_relu(x_f32, w_ref, b_ref, residual=None):
        """3x3 same conv + folded BN as one (HW, 9*Cin)@(9*Cin, Cout) matmul."""
        halo_ref[pl.ds(halo, hw), :] = x_f32
        for t, (dy, dx) in enumerate(taps):
            shift = dy * w_cols + dx
            xt = halo_ref[pl.ds(halo + shift, hw), :]
            if dx == -1:
                xt = jnp.where(not_left, xt, 0.0)
            elif dx == 1:
                xt = jnp.where(not_right, xt, 0.0)
            xcat_ref[:, t * hidden:(t + 1) * hidden] = xt
        xk = xcat_ref[...].astype(jnp.bfloat16)       # one cast per layer
        y = jnp.dot(xk, w_ref[...], preferred_element_type=jnp.float32)
        y = y + b_ref[...]                            # folded BN shift (f32)
        if residual is not None:                      # ResBlock: add, THEN ReLU
            y = y + residual
        return jnp.maximum(y, 0.0)

    # startBlock
    x = conv_bn_relu(x_ref[0], wb[0], wb[1])
    # backBone
    for i in range(num_res_blocks):
        w1, b1, w2, b2 = wb[2 + 4 * i: 6 + 4 * i]
        mid = conv_bn_relu(x, w1, b1)
        x = conv_bn_relu(mid, w2, b2, residual=x)
    # Fused policy(32ch)+value(3ch) head conv: one matmul, shares the im2col.
    yh_ref[...] = conv_bn_relu(x, wb[2 + 4 * num_res_blocks],
                               wb[3 + 4 * num_res_blocks])

    # NHWC flatten into one lane-dense row, entirely in VMEM (no HBM trip).
    for p in range(hw):
        flat_ref[:, p * ch_heads:(p + 1) * ch_heads] = yh_ref[pl.ds(p, 1), :]

    # Fused policy + value Linear heads: one (1, HW*35) @ (HW*35, 128) matmul.
    fc = jnp.dot(flat_ref[...].astype(jnp.bfloat16), wfc_ref[...],
                 preferred_element_type=jnp.float32) + bfc_ref[...]
    lane = jax.lax.broadcasted_iota(jnp.int32, fc.shape, 1)
    fc = jnp.where(lane == action_size, jnp.tanh(fc), fc)  # tanh on value only
    out_ref[0] = fc


# ------------------------------ parameters --------------------------------- #

def init_params(key, num_res_blocks, num_hidden, rows, cols, action_size):
    """Raw eval-mode parameters (conv+bias, BN stats, FC weights)."""
    def conv_bn(key, cin, cout):
        k = jax.random.split(key, 6)
        return {
            "w": jax.random.normal(k[0], (3, 3, cin, cout), jnp.float32)
                 / jnp.sqrt(9.0 * cin),
            "b": 0.1 * jax.random.normal(k[1], (cout,), jnp.float32),
            "gamma": 1.0 + 0.1 * jax.random.normal(k[2], (cout,), jnp.float32),
            "beta": 0.1 * jax.random.normal(k[3], (cout,), jnp.float32),
            "mean": 0.1 * jax.random.normal(k[4], (cout,), jnp.float32),
            "var": 1.0 + 0.1 * jnp.abs(jax.random.normal(k[5], (cout,),
                                                         jnp.float32)),
        }

    def linear(key, fan_in, fan_out):
        # NOTE: rows are in NHWC-flatten order (hw*C + c).  A real PyTorch
        # state_dict (out, C*H*W) needs a one-time c*HW+hw -> hw*C+c permute.
        k1, k2 = jax.random.split(key)
        return {"w": jax.random.normal(k1, (fan_in, fan_out), jnp.float32)
                      / jnp.sqrt(float(fan_in)),
                "b": 0.1 * jax.random.normal(k2, (fan_out,), jnp.float32)}

    keys = jax.random.split(key, 2 * num_res_blocks + 5)
    params = {"start": conv_bn(keys[0], 3, num_hidden), "blocks": []}
    for i in range(num_res_blocks):
        params["blocks"].append({
            "c1": conv_bn(keys[1 + 2 * i], num_hidden, num_hidden),
            "c2": conv_bn(keys[2 + 2 * i], num_hidden, num_hidden),
        })
    off = 1 + 2 * num_res_blocks
    params["policy_conv"] = conv_bn(keys[off], num_hidden, 32)
    params["policy_fc"] = linear(keys[off + 1], 32 * rows * cols, action_size)
    params["value_conv"] = conv_bn(keys[off + 2], num_hidden, 3)
    params["value_fc"] = linear(keys[off + 3], 3 * rows * cols, 1)
    return params


def _fold_conv(p, cin_pad):
    """Fold conv bias + eval-mode BN into (9*cin_pad, cout) bf16 taps + shift."""
    w, b = p["w"], p["b"]
    scale = p["gamma"] / jnp.sqrt(p["var"] + _BN_EPS)
    shift = p["beta"] + scale * (b - p["mean"])
    cin, cout = w.shape[2], w.shape[3]
    taps = jnp.zeros((9, cin_pad, cout), jnp.float32)
    taps = taps.at[:, :cin, :].set(w.reshape(9, cin, cout) * scale)
    return (taps.reshape(9 * cin_pad, cout).astype(jnp.bfloat16),
            shift.reshape(1, cout).astype(jnp.float32))


def _fuse_params(params, rows, cols, action_size, num_hidden):
    hw = rows * cols
    ch = 32 + 3                                   # fused head-conv channels
    out_lanes = 128 * pl.cdiv(action_size + 1, 128)

    convs = [_fold_conv(params["start"], num_hidden)]
    for blk in params["blocks"]:
        convs.append(_fold_conv(blk["c1"], num_hidden))
        convs.append(_fold_conv(blk["c2"], num_hidden))
    pw, pb = _fold_conv(params["policy_conv"], num_hidden)
    vw, vb = _fold_conv(params["value_conv"], num_hidden)
    convs.append((jnp.concatenate([pw, vw], axis=1),
                  jnp.concatenate([pb, vb], axis=1)))

    # Block-diagonal fused FC: rows grouped per board cell as
    # [32 policy-conv channels | 3 value-conv channels].
    wp = params["policy_fc"]["w"].reshape(hw, 32, action_size)
    wv = params["value_fc"]["w"].reshape(hw, 3, 1)
    wfc = jnp.zeros((hw, ch, out_lanes), jnp.float32)
    wfc = wfc.at[:, :32, :action_size].set(wp)
    wfc = wfc.at[:, 32:, action_size:action_size + 1].set(wv)
    wfc = wfc.reshape(hw * ch, out_lanes).astype(jnp.bfloat16)
    bfc = jnp.zeros((1, out_lanes), jnp.float32)
    bfc = bfc.at[0, :action_size].set(params["policy_fc"]["b"])
    bfc = bfc.at[0, action_size].set(params["value_fc"]["b"][0])
    return convs, wfc, bfc


# -------------------------------- forward ----------------------------------- #

def resnet_forward(params, x_nchw, *, num_hidden, rows, cols, action_size):
    n, cin, h, w = x_nchw.shape
    assert (h, w) == (rows, cols) and cin <= num_hidden
    hw = h * w
    assert hw % 8 == 0
    ch = 32 + 3
    out_lanes = 128 * pl.cdiv(action_size + 1, 128)
    halo = 8 * pl.cdiv(w + 1, 8)                 # >= max |tap shift|, 8-aligned

    convs, wfc, bfc = _fuse_params(params, rows, cols, action_size, num_hidden)
    nb = len(params["blocks"])

    # NCHW -> (N, HW, num_hidden) NHWC rows, input channels zero-padded.
    x = jnp.transpose(x_nchw, (0, 2, 3, 1)).reshape(n, hw, cin)
    x = jnp.pad(x, ((0, 0), (0, 0), (0, num_hidden - cin)))

    args = [x]
    for wt, sh in convs:
        args += [wt, sh]
    args += [wfc, bfc]

    def full(a):
        return pl.BlockSpec(a.shape, lambda i: (0,) * a.ndim)

    in_specs = [pl.BlockSpec((1, hw, num_hidden), lambda i: (i, 0, 0))]
    in_specs += [full(a) for a in args[1:]]

    kern = functools.partial(
        _fused_resnet_kernel, num_res_blocks=nb, hidden=num_hidden,
        h_rows=rows, w_cols=cols, ch_heads=ch, action_size=action_size,
        halo=halo)

    out = pl.pallas_call(
        kern,
        out_shape=jax.ShapeDtypeStruct((n, 1, out_lanes), jnp.float32),
        grid_spec=pltpu.PrefetchScalarGridSpec(
            num_scalar_prefetch=0,
            grid=(n,),
            in_specs=in_specs,
            out_specs=pl.BlockSpec((1, 1, out_lanes), lambda i: (i, 0, 0)),
            scratch_shapes=[
                pltpu.VMEM((hw + 2 * halo, num_hidden), jnp.float32),  # halo
                pltpu.VMEM((hw, 9 * num_hidden), jnp.float32),         # im2col
                pltpu.VMEM((hw, ch), jnp.float32),                     # head conv
                pltpu.VMEM((1, hw * ch), jnp.float32),                 # flat feat
            ]),
        compiler_params=pltpu.CompilerParams(
            dimension_semantics=("parallel",)),
    )(*args)

    out = out.reshape(n, out_lanes)
    return out[:, :action_size], out[:, action_size:action_size + 1]


# ------------------------- pure-JAX f32 reference --------------------------- #

def ref_forward(params, x_nchw):
    def conv_bn(x, p, residual=None):
        n_, h_, w_, _ = x.shape
        xp = jnp.pad(x, ((0, 0), (1, 1), (1, 1), (0, 0)))
        y = jnp.zeros(x.shape[:3] + (p["w"].shape[3],), jnp.float32)
        for ky in range(3):
            for kx in range(3):
                y = y + jnp.einsum("nhwc,cd->nhwd",
                                   xp[:, ky:ky + h_, kx:kx + w_, :],
                                   p["w"][ky, kx])
        y = y + p["b"]
        y = (y - p["mean"]) / jnp.sqrt(p["var"] + _BN_EPS) * p["gamma"] + p["beta"]
        if residual is not None:
            y = y + residual
        return jnp.maximum(y, 0.0)

    n = x_nchw.shape[0]
    x = jnp.transpose(x_nchw, (0, 2, 3, 1))
    x = conv_bn(x, params["start"])
    for blk in params["blocks"]:
        x = conv_bn(conv_bn(x, blk["c1"]), blk["c2"], residual=x)
    pf = conv_bn(x, params["policy_conv"]).reshape(n, -1)
    vf = conv_bn(x, params["value_conv"]).reshape(n, -1)
    policy = pf @ params["policy_fc"]["w"] + params["policy_fc"]["b"]
    value = jnp.tanh(vf @ params["value_fc"]["w"] + params["value_fc"]["b"])
    return policy, value


# ---------------------------------- main ------------------------------------ #

if __name__ == "__main__":
    ROWS, COLS = 8, 8
    ACTION_SIZE = ROWS * COLS
    NUM_HIDDEN = 32
    NUM_RESBLOCKS = 2
    BATCH = 2

    key = jax.random.PRNGKey(0)
    pkey, xkey = jax.random.split(key)
    params = init_params(pkey, NUM_RESBLOCKS, NUM_HIDDEN, ROWS, COLS,
                         ACTION_SIZE)
    # Input matches the PyTorch convention: NCHW with 3 input planes.
    x = jax.random.normal(xkey, (BATCH, 3, ROWS, COLS), jnp.float32)

    fwd = jax.jit(functools.partial(resnet_forward, num_hidden=NUM_HIDDEN,
                                    rows=ROWS, cols=COLS,
                                    action_size=ACTION_SIZE))
    policy, value = fwd(params, x)
    jax.block_until_ready((policy, value))

    assert policy.shape == (BATCH, ACTION_SIZE), policy.shape
    assert value.shape == (BATCH, 1), value.shape
    assert bool(jnp.all(jnp.isfinite(policy))) and bool(jnp.all(jnp.isfinite(value)))
    assert bool(jnp.all(jnp.abs(value) <= 1.0))          # tanh range

    # Tolerance check against a pure-JAX f32 reference (kernel matmuls are bf16).
    ref_p, ref_v = jax.jit(ref_forward)(params, x)
    perr = float(jnp.max(jnp.abs(policy - ref_p)))
    verr = float(jnp.max(jnp.abs(value - ref_v)))
    assert perr < 0.2 and verr < 0.2, (perr, verr)

    print("KERNEL_OK")
</pallas_src>

<mosaic_0001>
module attributes {stable_mosaic.version = 11 : i64} {
  func.func @_fused_resnet_kernel(%arg0: i32, %arg1: memref<1x64x32xf32, #tpu.memory_space<vmem>>, %arg2: memref<288x32xbf16, #tpu.memory_space<vmem>>, %arg3: memref<1x32xf32, #tpu.memory_space<vmem>>, %arg4: memref<288x32xbf16, #tpu.memory_space<vmem>>, %arg5: memref<1x32xf32, #tpu.memory_space<vmem>>, %arg6: memref<288x32xbf16, #tpu.memory_space<vmem>>, %arg7: memref<1x32xf32, #tpu.memory_space<vmem>>, %arg8: memref<288x32xbf16, #tpu.memory_space<vmem>>, %arg9: memref<1x32xf32, #tpu.memory_space<vmem>>, %arg10: memref<288x32xbf16, #tpu.memory_space<vmem>>, %arg11: memref<1x32xf32, #tpu.memory_space<vmem>>, %arg12: memref<288x35xbf16, #tpu.memory_space<vmem>>, %arg13: memref<1x35xf32, #tpu.memory_space<vmem>>, %arg14: memref<2240x128xbf16, #tpu.memory_space<vmem>>, %arg15: memref<1x128xf32, #tpu.memory_space<vmem>>, %arg16: memref<1x1x128xf32, #tpu.memory_space<vmem>>, %arg17: memref<96x32xf32, #tpu.memory_space<vmem>>, %arg18: memref<64x288xf32, #tpu.memory_space<vmem>>, %arg19: memref<64x35xf32, #tpu.memory_space<vmem>>, %arg20: memref<1x2240xf32, #tpu.memory_space<vmem>>) attributes {dimension_semantics = [#tpu.dimension_semantics<parallel>], iteration_bounds = array<i64: 2>, scalar_prefetch = 0 : i64, scratch_operands = 4 : i64, tpu.core_type = #tpu.core_type<tc>, window_params = [{transform_indices = @transform_0, window_bounds = array<i64: 1, 64, 32>}, {pipeline_mode = #tpu.pipeline_mode<synchronous>, transform_indices = @transform_1, window_bounds = array<i64: 288, 32>}, {pipeline_mode = #tpu.pipeline_mode<synchronous>, transform_indices = @transform_2, window_bounds = array<i64: 1, 32>}, {pipeline_mode = #tpu.pipeline_mode<synchronous>, transform_indices = @transform_3, window_bounds = array<i64: 288, 32>}, {pipeline_mode = #tpu.pipeline_mode<synchronous>, transform_indices = @transform_4, window_bounds = array<i64: 1, 32>}, {pipeline_mode = #tpu.pipeline_mode<synchronous>, transform_indices = @transform_5, window_bounds = array<i64: 288, 32>}, {pipeline_mode = #tpu.pipeline_mode<synchronous>, transform_indices = @transform_6, window_bounds = array<i64: 1, 32>}, {pipeline_mode = #tpu.pipeline_mode<synchronous>, transform_indices = @transform_7, window_bounds = array<i64: 288, 32>}, {pipeline_mode = #tpu.pipeline_mode<synchronous>, transform_indices = @transform_8, window_bounds = array<i64: 1, 32>}, {pipeline_mode = #tpu.pipeline_mode<synchronous>, transform_indices = @transform_9, window_bounds = array<i64: 288, 32>}, {pipeline_mode = #tpu.pipeline_mode<synchronous>, transform_indices = @transform_10, window_bounds = array<i64: 1, 32>}, {pipeline_mode = #tpu.pipeline_mode<synchronous>, transform_indices = @transform_11, window_bounds = array<i64: 288, 35>}, {pipeline_mode = #tpu.pipeline_mode<synchronous>, transform_indices = @transform_12, window_bounds = array<i64: 1, 35>}, {pipeline_mode = #tpu.pipeline_mode<synchronous>, transform_indices = @transform_13, window_bounds = array<i64: 2240, 128>}, {pipeline_mode = #tpu.pipeline_mode<synchronous>, transform_indices = @transform_14, window_bounds = array<i64: 1, 128>}, {transform_indices = @transform_15, window_bounds = array<i64: 1, 1, 128>}]} {
    %cst = arith.constant 0.000000e+00 : f32
    %0 = vector.broadcast %cst : f32 to vector<96x32xf32>
    %c0 = arith.constant 0 : index
    %c0_0 = arith.constant 0 : index
    %1 = vector.load %arg17[%c0, %c0_0] : memref<96x32xf32, #tpu.memory_space<vmem>>, vector<96x32xf32>
    tpu.vector_store %arg17[%c0, %c0_0], %0 {strides = array<i32>} : memref<96x32xf32, #tpu.memory_space<vmem>>, vector<96x32xf32>,
    %2 = tpu.iota {dimensions = array<i32: 0>} : vector<64x1xi32>
    %c8_i32 = arith.constant 8 : i32
    %c0_i32 = arith.constant 0 : i32
    %3 = arith.cmpi eq, %c8_i32, %c0_i32 : i32
    %c1_i32 = arith.constant 1 : i32
    %4 = arith.select %3, %c1_i32, %c8_i32 : i32
    %5 = vector.broadcast %4 : i32 to vector<64x1xi32>
    %6 = arith.remsi %2, %5 : vector<64x1xi32>
    %c0_i32_1 = arith.constant 0 : i32
    %7 = vector.broadcast %c0_i32_1 : i32 to vector<64x1xi32>
    %8 = arith.cmpi ne, %6, %7 : vector<64x1xi32>
    %c0_i32_2 = arith.constant 0 : i32
    %9 = vector.broadcast %c0_i32_2 : i32 to vector<64x1xi32>
    %10 = arith.cmpi slt, %6, %9 : vector<64x1xi32>
    %c0_i32_3 = arith.constant 0 : i32
    %11 = arith.cmpi slt, %4, %c0_i32_3 : i32
    %12 = vector.broadcast %11 : i1 to vector<64x1xi1>
    %13 = vector.broadcast %12 : vector<64x1xi1> to vector<64x1xi1>
    %14 = arith.xori %10, %13 : vector<64x1xi1>
    %15 = arith.andi %14, %8 : vector<64x1xi1>
    %16 = vector.broadcast %4 : i32 to vector<64x1xi32>
    %17 = arith.addi %6, %16 : vector<64x1xi32>
    %18 = arith.select %15, %17, %6 : vector<64x1xi1>, vector<64x1xi32>
    %c1_i32_4 = arith.constant 1 : i32
    %19 = vector.broadcast %c1_i32_4 : i32 to vector<64x1xi32>
    %20 = arith.cmpi sge, %18, %19 : vector<64x1xi32>
    %c6_i32 = arith.constant 6 : i32
    %21 = vector.broadcast %c6_i32 : i32 to vector<64x1xi32>
    %22 = arith.cmpi sle, %18, %21 : vector<64x1xi32>
    %c0_5 = arith.constant 0 : index
    %c0_6 = arith.constant 0 : index
    %c0_7 = arith.constant 0 : index
    %23 = vector.load %arg1[%c0_5, %c0_6, %c0_7] : memref<1x64x32xf32, #tpu.memory_space<vmem>>, vector<1x64x32xf32>
    %24 = vector.shape_cast %23 : vector<1x64x32xf32> to vector<64x32xf32>
    %c16 = arith.constant 16 : index
    %c0_8 = arith.constant 0 : index
    %25 = vector.load %arg17[%c16, %c0_8] : memref<96x32xf32, #tpu.memory_space<vmem>>, vector<64x32xf32>
    tpu.vector_store %arg17[%c16, %c0_8], %24 {strides = array<i32>} : memref<96x32xf32, #tpu.memory_space<vmem>>, vector<64x32xf32>,
    %c7 = arith.constant 7 : index
    %c0_9 = arith.constant 0 : index
    %26 = vector.load %arg17[%c7, %c0_9] : memref<96x32xf32, #tpu.memory_space<vmem>>, vector<64x32xf32>
    %cst_10 = arith.constant 0.000000e+00 : f32
    %27 = vector.shape_cast %20 : vector<64x1xi1> to vector<64x1xi1>
    %28 = vector.broadcast %27 : vector<64x1xi1> to vector<64x32xi1>
    %29 = vector.broadcast %cst_10 : f32 to vector<64x32xf32>
    %30 = arith.select %28, %26, %29 : vector<64x32xi1>, vector<64x32xf32>
    %c0_11 = arith.constant 0 : index
    %c0_12 = arith.constant 0 : index
    %31 = vector.load %arg18[%c0_11, %c0_12] : memref<64x288xf32, #tpu.memory_space<vmem>>, vector<64x32xf32>
    tpu.vector_store %arg18[%c0_11, %c0_12], %30 {strides = array<i32>} : memref<64x288xf32, #tpu.memory_space<vmem>>, vector<64x32xf32>,
    %c8 = arith.constant 8 : index
    %c0_13 = arith.constant 0 : index
    %32 = vector.load %arg17[%c8, %c0_13] : memref<96x32xf32, #tpu.memory_space<vmem>>, vector<64x32xf32>
    %c0_14 = arith.constant 0 : index
    %c32 = arith.constant 32 : index
    %33 = vector.load %arg18[%c0_14, %c32] : memref<64x288xf32, #tpu.memory_space<vmem>>, vector<64x32xf32>
    tpu.vector_store %arg18[%c0_14, %c32], %32 {strides = array<i32>} : memref<64x288xf32, #tpu.memory_space<vmem>>, vector<64x32xf32>,
    %c9 = arith.constant 9 : index
    %c0_15 = arith.constant 0 : index
    %34 = vector.load %arg17[%c9, %c0_15] : memref<96x32xf32, #tpu.memory_space<vmem>>, vector<64x32xf32>
    %cst_16 = arith.constant 0.000000e+00 : f32
    %35 = vector.shape_cast %22 : vector<64x1xi1> to vector<64x1xi1>
    %36 = vector.broadcast %35 : vector<64x1xi1> to vector<64x32xi1>
    %37 = vector.broadcast %cst_16 : f32 to vector<64x32xf32>
    %38 = arith.select %36, %34, %37 : vector<64x32xi1>, vector<64x32xf32>
    %c0_17 = arith.constant 0 : index
    %c64 = arith.constant 64 : index
    %39 = vector.load %arg18[%c0_17, %c64] : memref<64x288xf32, #tpu.memory_space<vmem>>, vector<64x32xf32>
    tpu.vector_store %arg18[%c0_17, %c64], %38 {strides = array<i32>} : memref<64x288xf32, #tpu.memory_space<vmem>>, vector<64x32xf32>,
    %c15 = arith.constant 15 : index
    %c0_18 = arith.constant 0 : index
    %40 = vector.load %arg17[%c15, %c0_18] : memref<96x32xf32, #tpu.memory_space<vmem>>, vector<64x32xf32>
    %cst_19 = arith.constant 0.000000e+00 : f32
    %41 = vector.shape_cast %20 : vector<64x1xi1> to vector<64x1xi1>
    %42 = vector.broadcast %41 : vector<64x1xi1> to vector<64x32xi1>
    %43 = vector.broadcast %cst_19 : f32 to vector<64x32xf32>
    %44 = arith.select %42, %40, %43 : vector<64x32xi1>, vector<64x32xf32>
    %c0_20 = arith.constant 0 : index
    %c96 = arith.constant 96 : index
    %45 = vector.load %arg18[%c0_20, %c96] : memref<64x288xf32, #tpu.memory_space<vmem>>, vector<64x32xf32>
    tpu.vector_store %arg18[%c0_20, %c96], %44 {strides = array<i32>} : memref<64x288xf32, #tpu.memory_space<vmem>>, vector<64x32xf32>,
    %c16_21 = arith.constant 16 : index
    %c0_22 = arith.constant 0 : index
    %46 = vector.load %arg17[%c16_21, %c0_22] : memref<96x32xf32, #tpu.memory_space<vmem>>, vector<64x32xf32>
    %c0_23 = arith.constant 0 : index
    %c128 = arith.constant 128 : index
    %47 = vector.load %arg18[%c0_23, %c128] : memref<64x288xf32, #tpu.memory_space<vmem>>, vector<64x32xf32>
    tpu.vector_store %arg18[%c0_23, %c128], %46 {strides = array<i32>} : memref<64x288xf32, #tpu.memory_space<vmem>>, vector<64x32xf32>,
    %c17 = arith.constant 17 : index
    %c0_24 = arith.constant 0 : index
    %48 = vector.load %arg17[%c17, %c0_24] : memref<96x32xf32, #tpu.memory_space<vmem>>, vector<64x32xf32>
    %cst_25 = arith.constant 0.000000e+00 : f32
    %49 = vector.shape_cast %22 : vector<64x1xi1> to vector<64x1xi1>
    %50 = vector.broadcast %49 : vector<64x1xi1> to vector<64x32xi1>
    %51 = vector.broadcast %cst_25 : f32 to vector<64x32xf32>
    %52 = arith.select %50, %48, %51 : vector<64x32xi1>, vector<64x32xf32>
    %c0_26 = arith.constant 0 : index
    %c160 = arith.constant 160 : index
    %53 = vector.load %arg18[%c0_26, %c160] : memref<64x288xf32, #tpu.memory_space<vmem>>, vector<64x32xf32>
    tpu.vector_store %arg18[%c0_26, %c160], %52 {strides = array<i32>} : memref<64x288xf32, #tpu.memory_space<vmem>>, vector<64x32xf32>,
    %c23 = arith.constant 23 : index
    %c0_27 = arith.constant 0 : index
    %54 = vector.load %arg17[%c23, %c0_27] : memref<96x32xf32, #tpu.memory_space<vmem>>, vector<64x32xf32>
    %cst_28 = arith.constant 0.000000e+00 : f32
    %55 = vector.shape_cast %20 : vector<64x1xi1> to vector<64x1xi1>
    %56 = vector.broadcast %55 : vector<64x1xi1> to vector<64x32xi1>
    %57 = vector.broadcast %cst_28 : f32 to vector<64x32xf32>
    %58 = arith.select %56, %54, %57 : vector<64x32xi1>, vector<64x32xf32>
    %c0_29 = arith.constant 0 : index
    %c192 = arith.constant 192 : index
    %59 = vector.load %arg18[%c0_29, %c192] : memref<64x288xf32, #tpu.memory_space<vmem>>, vector<64x32xf32>
    tpu.vector_store %arg18[%c0_29, %c192], %58 {strides = array<i32>} : memref<64x288xf32, #tpu.memory_space<vmem>>, vector<64x32xf32>,
    %c24 = arith.constant 24 : index
    %c0_30 = arith.constant 0 : index
    %60 = vector.load %arg17[%c24, %c0_30] : memref<96x32xf32, #tpu.memory_space<vmem>>, vector<64x32xf32>
    %c0_31 = arith.constant 0 : index
    %c224 = arith.constant 224 : index
    %61 = vector.load %arg18[%c0_31, %c224] : memref<64x288xf32, #tpu.memory_space<vmem>>, vector<64x32xf32>
    tpu.vector_store %arg18[%c0_31, %c224], %60 {strides = array<i32>} : memref<64x288xf32, #tpu.memory_space<vmem>>, vector<64x32xf32>,
    %c25 = arith.constant 25 : index
    %c0_32 = arith.constant 0 : index
    %62 = vector.load %arg17[%c25, %c0_32] : memref<96x32xf32, #tpu.memory_space<vmem>>, vector<64x32xf32>
    %cst_33 = arith.constant 0.000000e+00 : f32
    %63 = vector.shape_cast %22 : vector<64x1xi1> to vector<64x1xi1>
    %64 = vector.broadcast %63 : vector<64x1xi1> to vector<64x32xi1>
    %65 = vector.broadcast %cst_33 : f32 to vector<64x32xf32>
    %66 = arith.select %64, %62, %65 : vector<64x32xi1>, vector<64x32xf32>
    %c0_34 = arith.constant 0 : index
    %c256 = arith.constant 256 : index
    %67 = vector.load %arg18[%c0_34, %c256] : memref<64x288xf32, #tpu.memory_space<vmem>>, vector<64x32xf32>
    tpu.vector_store %arg18[%c0_34, %c256], %66 {strides = array<i32>} : memref<64x288xf32, #tpu.memory_space<vmem>>, vector<64x32xf32>,
    %c0_35 = arith.constant 0 : index
    %c0_36 = arith.constant 0 : index
    %68 = vector.load %arg18[%c0_35, %c0_36] : memref<64x288xf32, #tpu.memory_space<vmem>>, vector<64x288xf32>
    %69 = arith.truncf %68 : vector<64x288xf32> to vector<64x288xbf16>
    %c0_37 = arith.constant 0 : index
    %c0_38 = arith.constant 0 : index
    %70 = vector.load %arg2[%c0_37, %c0_38] : memref<288x32xbf16, #tpu.memory_space<vmem>>, vector<288x32xbf16>
    %cst_39 = arith.constant dense<0.000000e+00> : vector<64x32xf32>
    %71 = tpu.matmul %69, %70, %cst_39 {dimension_numbers = #tpu.dot_dimension_numbers<[1], [0], [0], [1], [0, 0, 1, 1], [], []>} : vector<64x288xbf16>, vector<288x32xbf16>, vector<64x32xf32> -> vector<64x32xf32>
    %c0_40 = arith.constant 0 : index
    %c0_41 = arith.constant 0 : index
    %72 = vector.load %arg3[%c0_40, %c0_41] : memref<1x32xf32, #tpu.memory_space<vmem>>, vector<1x32xf32>
    %73 = vector.broadcast %72 : vector<1x32xf32> to vector<64x32xf32>
    %74 = arith.addf %71, %73 : vector<64x32xf32>
    %cst_42 = arith.constant 0.000000e+00 : f32
    %75 = vector.broadcast %cst_42 : f32 to vector<64x32xf32>
    %76 = arith.maximumf %74, %75 : vector<64x32xf32>
    %c16_43 = arith.constant 16 : index
    %c0_44 = arith.constant 0 : index
    %77 = vector.load %arg17[%c16_43, %c0_44] : memref<96x32xf32, #tpu.memory_space<vmem>>, vector<64x32xf32>
    tpu.vector_store %arg17[%c16_43, %c0_44], %76 {strides = array<i32>} : memref<96x32xf32, #tpu.memory_space<vmem>>, vector<64x32xf32>,
    %c7_45 = arith.constant 7 : index
    %c0_46 = arith.constant 0 : index
    %78 = vector.load %arg17[%c7_45, %c0_46] : memref<96x32xf32, #tpu.memory_space<vmem>>, vector<64x32xf32>
    %cst_47 = arith.constant 0.000000e+00 : f32
    %79 = vector.shape_cast %20 : vector<64x1xi1> to vector<64x1xi1>
    %80 = vector.broadcast %79 : vector<64x1xi1> to vector<64x32xi1>
    %81 = vector.broadcast %cst_47 : f32 to vector<64x32xf32>
    %82 = arith.select %80, %78, %81 : vector<64x32xi1>, vector<64x32xf32>
    %c0_48 = arith.constant 0 : index
    %c0_49 = arith.constant 0 : index
    %83 = vector.load %arg18[%c0_48, %c0_49] : memref<64x288xf32, #tpu.memory_space<vmem>>, vector<64x32xf32>
    tpu.vector_store %arg18[%c0_48, %c0_49], %82 {strides = array<i32>} : memref<64x288xf32, #tpu.memory_space<vmem>>, vector<64x32xf32>,
    %c8_50 = arith.constant 8 : index
    %c0_51 = arith.constant 0 : index
    %84 = vector.load %arg17[%c8_50, %c0_51] : memref<96x32xf32, #tpu.memory_space<vmem>>, vector<64x32xf32>
    %c0_52 = arith.constant 0 : index
    %c32_53 = arith.constant 32 : index
    %85 = vector.load %arg18[%c0_52, %c32_53] : memref<64x288xf32, #tpu.memory_space<vmem>>, vector<64x32xf32>
    tpu.vector_store %arg18[%c0_52, %c32_53], %84 {strides = array<i32>} : memref<64x288xf32, #tpu.memory_space<vmem>>, vector<64x32xf32>,
    %c9_54 = arith.constant 9 : index
    %c0_55 = arith.constant 0 : index
    %86 = vector.load %arg17[%c9_54, %c0_55] : memref<96x32xf32, #tpu.memory_space<vmem>>, vector<64x32xf32>
    %cst_56 = arith.constant 0.000000e+00 : f32
    %87 = vector.shape_cast %22 : vector<64x1xi1> to vector<64x1xi1>
    %88 = vector.broadcast %87 : vector<64x1xi1> to vector<64x32xi1>
    %89 = vector.broadcast %cst_56 : f32 to vector<64x32xf32>
    %90 = arith.select %88, %86, %89 : vector<64x32xi1>, vector<64x32xf32>
    %c0_57 = arith.constant 0 : index
    %c64_58 = arith.constant 64 : index
    %91 = vector.load %arg18[%c0_57, %c64_58] : memref<64x288xf32, #tpu.memory_space<vmem>>, vector<64x32xf32>
    tpu.vector_store %arg18[%c0_57, %c64_58], %90 {strides = array<i32>} : memref<64x288xf32, #tpu.memory_space<vmem>>, vector<64x32xf32>,
    %c15_59 = arith.constant 15 : index
    %c0_60 = arith.constant 0 : index
    %92 = vector.load %arg17[%c15_59, %c0_60] : memref<96x32xf32, #tpu.memory_space<vmem>>, vector<64x32xf32>
    %cst_61 = arith.constant 0.000000e+00 : f32
    %93 = vector.shape_cast %20 : vector<64x1xi1> to vector<64x1xi1>
    %94 = vector.broadcast %93 : vector<64x1xi1> to vector<64x32xi1>
    %95 = vector.broadcast %cst_61 : f32 to vector<64x32xf32>
    %96 = arith.select %94, %92, %95 : vector<64x32xi1>, vector<64x32xf32>
    %c0_62 = arith.constant 0 : index
    %c96_63 = arith.constant 96 : index
    %97 = vector.load %arg18[%c0_62, %c96_63] : memref<64x288xf32, #tpu.memory_space<vmem>>, vector<64x32xf32>
    tpu.vector_store %arg18[%c0_62, %c96_63], %96 {strides = array<i32>} : memref<64x288xf32, #tpu.memory_space<vmem>>, vector<64x32xf32>,
    %c16_64 = arith.constant 16 : index
    %c0_65 = arith.constant 0 : index
    %98 = vector.load %arg17[%c16_64, %c0_65] : memref<96x32xf32, #tpu.memory_space<vmem>>, vector<64x32xf32>
    %c0_66 = arith.constant 0 : index
    %c128_67 = arith.constant 128 : index
    %99 = vector.load %arg18[%c0_66, %c128_67] : memref<64x288xf32, #tpu.memory_space<vmem>>, vector<64x32xf32>
    tpu.vector_store %arg18[%c0_66, %c128_67], %98 {strides = array<i32>} : memref<64x288xf32, #tpu.memory_space<vmem>>, vector<64x32xf32>,
    %c17_68 = arith.constant 17 : index
    %c0_69 = arith.constant 0 : index
    %100 = vector.load %arg17[%c17_68, %c0_69] : memref<96x32xf32, #tpu.memory_space<vmem>>, vector<64x32xf32>
    %cst_70 = arith.constant 0.000000e+00 : f32
    %101 = vector.shape_cast %22 : vector<64x1xi1> to vector<64x1xi1>
    %102 = vector.broadcast %101 : vector<64x1xi1> to vector<64x32xi1>
    %103 = vector.broadcast %cst_70 : f32 to vector<64x32xf32>
    %104 = arith.select %102, %100, %103 : vector<64x32xi1>, vector<64x32xf32>
    %c0_71 = arith.constant 0 : index
    %c160_72 = arith.constant 160 : index
    %105 = vector.load %arg18[%c0_71, %c160_72] : memref<64x288xf32, #tpu.memory_space<vmem>>, vector<64x32xf32>
    tpu.vector_store %arg18[%c0_71, %c160_72], %104 {strides = array<i32>} : memref<64x288xf32, #tpu.memory_space<vmem>>, vector<64x32xf32>,
    %c23_73 = arith.constant 23 : index
    %c0_74 = arith.constant 0 : index
    %106 = vector.load %arg17[%c23_73, %c0_74] : memref<96x32xf32, #tpu.memory_space<vmem>>, vector<64x32xf32>
    %cst_75 = arith.constant 0.000000e+00 : f32
    %107 = vector.shape_cast %20 : vector<64x1xi1> to vector<64x1xi1>
    %108 = vector.broadcast %107 : vector<64x1xi1> to vector<64x32xi1>
    %109 = vector.broadcast %cst_75 : f32 to vector<64x32xf32>
    %110 = arith.select %108, %106, %109 : vector<64x32xi1>, vector<64x32xf32>
    %c0_76 = arith.constant 0 : index
    %c192_77 = arith.constant 192 : index
    %111 = vector.load %arg18[%c0_76, %c192_77] : memref<64x288xf32, #tpu.memory_space<vmem>>, vector<64x32xf32>
    tpu.vector_store %arg18[%c0_76, %c192_77], %110 {strides = array<i32>} : memref<64x288xf32, #tpu.memory_space<vmem>>, vector<64x32xf32>,
    %c24_78 = arith.constant 24 : index
    %c0_79 = arith.constant 0 : index
    %112 = vector.load %arg17[%c24_78, %c0_79] : memref<96x32xf32, #tpu.memory_space<vmem>>, vector<64x32xf32>
    %c0_80 = arith.constant 0 : index
    %c224_81 = arith.constant 224 : index
    %113 = vector.load %arg18[%c0_80, %c224_81] : memref<64x288xf32, #tpu.memory_space<vmem>>, vector<64x32xf32>
    tpu.vector_store %arg18[%c0_80, %c224_81], %112 {strides = array<i32>} : memref<64x288xf32, #tpu.memory_space<vmem>>, vector<64x32xf32>,
    %c25_82 = arith.constant 25 : index
    %c0_83 = arith.constant 0 : index
    %114 = vector.load %arg17[%c25_82, %c0_83] : memref<96x32xf32, #tpu.memory_space<vmem>>, vector<64x32xf32>
    %cst_84 = arith.constant 0.000000e+00 : f32
    %115 = vector.shape_cast %22 : vector<64x1xi1> to vector<64x1xi1>
    %116 = vector.broadcast %115 : vector<64x1xi1> to vector<64x32xi1>
    %117 = vector.broadcast %cst_84 : f32 to vector<64x32xf32>
    %118 = arith.select %116, %114, %117 : vector<64x32xi1>, vector<64x32xf32>
    %c0_85 = arith.constant 0 : index
    %c256_86 = arith.constant 256 : index
    %119 = vector.load %arg18[%c0_85, %c256_86] : memref<64x288xf32, #tpu.memory_space<vmem>>, vector<64x32xf32>
    tpu.vector_store %arg18[%c0_85, %c256_86], %118 {strides = array<i32>} : memref<64x288xf32, #tpu.memory_space<vmem>>, vector<64x32xf32>,
    %c0_87 = arith.constant 0 : index
    %c0_88 = arith.constant 0 : index
    %120 = vector.load %arg18[%c0_87, %c0_88] : memref<64x288xf32, #tpu.memory_space<vmem>>, vector<64x288xf32>
    %121 = arith.truncf %120 : vector<64x288xf32> to vector<64x288xbf16>
    %c0_89 = arith.constant 0 : index
    %c0_90 = arith.constant 0 : index
    %122 = vector.load %arg4[%c0_89, %c0_90] : memref<288x32xbf16, #tpu.memory_space<vmem>>, vector<288x32xbf16>
    %cst_91 = arith.constant dense<0.000000e+00> : vector<64x32xf32>
    %123 = tpu.matmul %121, %122, %cst_91 {dimension_numbers = #tpu.dot_dimension_numbers<[1], [0], [0], [1], [0, 0, 1, 1], [], []>} : vector<64x288xbf16>, vector<288x32xbf16>, vector<64x32xf32> -> vector<64x32xf32>
    %c0_92 = arith.constant 0 : index
    %c0_93 = arith.constant 0 : index
    %124 = vector.load %arg5[%c0_92, %c0_93] : memref<1x32xf32, #tpu.memory_space<vmem>>, vector<1x32xf32>
    %125 = vector.broadcast %124 : vector<1x32xf32> to vector<64x32xf32>
    %126 = arith.addf %123, %125 : vector<64x32xf32>
    %cst_94 = arith.constant 0.000000e+00 : f32
    %127 = vector.broadcast %cst_94 : f32 to vector<64x32xf32>
    %128 = arith.maximumf %126, %127 : vector<64x32xf32>
    %c16_95 = arith.constant 16 : index
    %c0_96 = arith.constant 0 : index
    %129 = vector.load %arg17[%c16_95, %c0_96] : memref<96x32xf32, #tpu.memory_space<vmem>>, vector<64x32xf32>
    tpu.vector_store %arg17[%c16_95, %c0_96], %128 {strides = array<i32>} : memref<96x32xf32, #tpu.memory_space<vmem>>, vector<64x32xf32>,
    %c7_97 = arith.constant 7 : index
    %c0_98 = arith.constant 0 : index
    %130 = vector.load %arg17[%c7_97, %c0_98] : memref<96x32xf32, #tpu.memory_space<vmem>>, vector<64x32xf32>
    %cst_99 = arith.constant 0.000000e+00 : f32
    %131 = vector.shape_cast %20 : vector<64x1xi1> to vector<64x1xi1>
    %132 = vector.broadcast %131 : vector<64x1xi1> to vector<64x32xi1>
    %133 = vector.broadcast %cst_99 : f32 to vector<64x32xf32>
    %134 = arith.select %132, %130, %133 : vector<64x32xi1>, vector<64x32xf32>
    %c0_100 = arith.constant 0 : index
    %c0_101 = arith.constant 0 : index
    %135 = vector.load %arg18[%c0_100, %c0_101] : memref<64x288xf32, #tpu.memory_space<vmem>>, vector<64x32xf32>
    tpu.vector_store %arg18[%c0_100, %c0_101], %134 {strides = array<i32>} : memref<64x288xf32, #tpu.memory_space<vmem>>, vector<64x32xf32>,
    %c8_102 = arith.constant 8 : index
    %c0_103 = arith.constant 0 : index
    %136 = vector.load %arg17[%c8_102, %c0_103] : memref<96x32xf32, #tpu.memory_space<vmem>>, vector<64x32xf32>
    %c0_104 = arith.constant 0 : index
    %c32_105 = arith.constant 32 : index
    %137 = vector.load %arg18[%c0_104, %c32_105] : memref<64x288xf32, #tpu.memory_space<vmem>>, vector<64x32xf32>
    tpu.vector_store %arg18[%c0_104, %c32_105], %136 {strides = array<i32>} : memref<64x288xf32, #tpu.memory_space<vmem>>, vector<64x32xf32>,
    %c9_106 = arith.constant 9 : index
    %c0_107 = arith.constant 0 : index
    %138 = vector.load %arg17[%c9_106, %c0_107] : memref<96x32xf32, #tpu.memory_space<vmem>>, vector<64x32xf32>
    %cst_108 = arith.constant 0.000000e+00 : f32
    %139 = vector.shape_cast %22 : vector<64x1xi1> to vector<64x1xi1>
    %140 = vector.broadcast %139 : vector<64x1xi1> to vector<64x32xi1>
    %141 = vector.broadcast %cst_108 : f32 to vector<64x32xf32>
    %142 = arith.select %140, %138, %141 : vector<64x32xi1>, vector<64x32xf32>
    %c0_109 = arith.constant 0 : index
    %c64_110 = arith.constant 64 : index
    %143 = vector.load %arg18[%c0_109, %c64_110] : memref<64x288xf32, #tpu.memory_space<vmem>>, vector<64x32xf32>
    tpu.vector_store %arg18[%c0_109, %c64_110], %142 {strides = array<i32>} : memref<64x288xf32, #tpu.memory_space<vmem>>, vector<64x32xf32>,
    %c15_111 = arith.constant 15 : index
    %c0_112 = arith.constant 0 : index
    %144 = vector.load %arg17[%c15_111, %c0_112] : memref<96x32xf32, #tpu.memory_space<vmem>>, vector<64x32xf32>
    %cst_113 = arith.constant 0.000000e+00 : f32
    %145 = vector.shape_cast %20 : vector<64x1xi1> to vector<64x1xi1>
    %146 = vector.broadcast %145 : vector<64x1xi1> to vector<64x32xi1>
    %147 = vector.broadcast %cst_113 : f32 to vector<64x32xf32>
    %148 = arith.select %146, %144, %147 : vector<64x32xi1>, vector<64x32xf32>
    %c0_114 = arith.constant 0 : index
    %c96_115 = arith.constant 96 : index
    %149 = vector.load %arg18[%c0_114, %c96_115] : memref<64x288xf32, #tpu.memory_space<vmem>>, vector<64x32xf32>
    tpu.vector_store %arg18[%c0_114, %c96_115], %148 {strides = array<i32>} : memref<64x288xf32, #tpu.memory_space<vmem>>, vector<64x32xf32>,
    %c16_116 = arith.constant 16 : index
    %c0_117 = arith.constant 0 : index
    %150 = vector.load %arg17[%c16_116, %c0_117] : memref<96x32xf32, #tpu.memory_space<vmem>>, vector<64x32xf32>
    %c0_118 = arith.constant 0 : index
    %c128_119 = arith.constant 128 : index
    %151 = vector.load %arg18[%c0_118, %c128_119] : memref<64x288xf32, #tpu.memory_space<vmem>>, vector<64x32xf32>
    tpu.vector_store %arg18[%c0_118, %c128_119], %150 {strides = array<i32>} : memref<64x288xf32, #tpu.memory_space<vmem>>, vector<64x32xf32>,
    %c17_120 = arith.constant 17 : index
    %c0_121 = arith.constant 0 : index
    %152 = vector.load %arg17[%c17_120, %c0_121] : memref<96x32xf32, #tpu.memory_space<vmem>>, vector<64x32xf32>
    %cst_122 = arith.constant 0.000000e+00 : f32
    %153 = vector.shape_cast %22 : vector<64x1xi1> to vector<64x1xi1>
    %154 = vector.broadcast %153 : vector<64x1xi1> to vector<64x32xi1>
    %155 = vector.broadcast %cst_122 : f32 to vector<64x32xf32>
    %156 = arith.select %154, %152, %155 : vector<64x32xi1>, vector<64x32xf32>
    %c0_123 = arith.constant 0 : index
    %c160_124 = arith.constant 160 : index
    %157 = vector.load %arg18[%c0_123, %c160_124] : memref<64x288xf32, #tpu.memory_space<vmem>>, vector<64x32xf32>
    tpu.vector_store %arg18[%c0_123, %c160_124], %156 {strides = array<i32>} : memref<64x288xf32, #tpu.memory_space<vmem>>, vector<64x32xf32>,
    %c23_125 = arith.constant 23 : index
    %c0_126 = arith.constant 0 : index
    %158 = vector.load %arg17[%c23_125, %c0_126] : memref<96x32xf32, #tpu.memory_space<vmem>>, vector<64x32xf32>
    %cst_127 = arith.constant 0.000000e+00 : f32
    %159 = vector.shape_cast %20 : vector<64x1xi1> to vector<64x1xi1>
    %160 = vector.broadcast %159 : vector<64x1xi1> to vector<64x32xi1>
    %161 = vector.broadcast %cst_127 : f32 to vector<64x32xf32>
    %162 = arith.select %160, %158, %161 : vector<64x32xi1>, vector<64x32xf32>
    %c0_128 = arith.constant 0 : index
    %c192_129 = arith.constant 192 : index
    %163 = vector.load %arg18[%c0_128, %c192_129] : memref<64x288xf32, #tpu.memory_space<vmem>>, vector<64x32xf32>
    tpu.vector_store %arg18[%c0_128, %c192_129], %162 {strides = array<i32>} : memref<64x288xf32, #tpu.memory_space<vmem>>, vector<64x32xf32>,
    %c24_130 = arith.constant 24 : index
    %c0_131 = arith.constant 0 : index
    %164 = vector.load %arg17[%c24_130, %c0_131] : memref<96x32xf32, #tpu.memory_space<vmem>>, vector<64x32xf32>
    %c0_132 = arith.constant 0 : index
    %c224_133 = arith.constant 224 : index
    %165 = vector.load %arg18[%c0_132, %c224_133] : memref<64x288xf32, #tpu.memory_space<vmem>>, vector<64x32xf32>
    tpu.vector_store %arg18[%c0_132, %c224_133], %164 {strides = array<i32>} : memref<64x288xf32, #tpu.memory_space<vmem>>, vector<64x32xf32>,
    %c25_134 = arith.constant 25 : index
    %c0_135 = arith.constant 0 : index
    %166 = vector.load %arg17[%c25_134, %c0_135] : memref<96x32xf32, #tpu.memory_space<vmem>>, vector<64x32xf32>
    %cst_136 = arith.constant 0.000000e+00 : f32
    %167 = vector.shape_cast %22 : vector<64x1xi1> to vector<64x1xi1>
    %168 = vector.broadcast %167 : vector<64x1xi1> to vector<64x32xi1>
    %169 = vector.broadcast %cst_136 : f32 to vector<64x32xf32>
    %170 = arith.select %168, %166, %169 : vector<64x32xi1>, vector<64x32xf32>
    %c0_137 = arith.constant 0 : index
    %c256_138 = arith.constant 256 : index
    %171 = vector.load %arg18[%c0_137, %c256_138] : memref<64x288xf32, #tpu.memory_space<vmem>>, vector<64x32xf32>
    tpu.vector_store %arg18[%c0_137, %c256_138], %170 {strides = array<i32>} : memref<64x288xf32, #tpu.memory_space<vmem>>, vector<64x32xf32>,
    %c0_139 = arith.constant 0 : index
    %c0_140 = arith.constant 0 : index
    %172 = vector.load %arg18[%c0_139, %c0_140] : memref<64x288xf32, #tpu.memory_space<vmem>>, vector<64x288xf32>
    %173 = arith.truncf %172 : vector<64x288xf32> to vector<64x288xbf16>
    %c0_141 = arith.constant 0 : index
    %c0_142 = arith.constant 0 : index
    %174 = vector.load %arg6[%c0_141, %c0_142] : memref<288x32xbf16, #tpu.memory_space<vmem>>, vector<288x32xbf16>
    %cst_143 = arith.constant dense<0.000000e+00> : vector<64x32xf32>
    %175 = tpu.matmul %173, %174, %cst_143 {dimension_numbers = #tpu.dot_dimension_numbers<[1], [0], [0], [1], [0, 0, 1, 1], [], []>} : vector<64x288xbf16>, vector<288x32xbf16>, vector<64x32xf32> -> vector<64x32xf32>
    %c0_144 = arith.constant 0 : index
    %c0_145 = arith.constant 0 : index
    %176 = vector.load %arg7[%c0_144, %c0_145] : memref<1x32xf32, #tpu.memory_space<vmem>>, vector<1x32xf32>
    %177 = vector.broadcast %176 : vector<1x32xf32> to vector<64x32xf32>
    %178 = arith.addf %175, %177 : vector<64x32xf32>
    %179 = arith.addf %178, %76 : vector<64x32xf32>
    %cst_146 = arith.constant 0.000000e+00 : f32
    %180 = vector.broadcast %cst_146 : f32 to vector<64x32xf32>
    %181 = arith.maximumf %179, %180 : vector<64x32xf32>
    %c16_147 = arith.constant 16 : index
    %c0_148 = arith.constant 0 : index
    %182 = vector.load %arg17[%c16_147, %c0_148] : memref<96x32xf32, #tpu.memory_space<vmem>>, vector<64x32xf32>
    tpu.vector_store %arg17[%c16_147, %c0_148], %181 {strides = array<i32>} : memref<96x32xf32, #tpu.memory_space<vmem>>, vector<64x32xf32>,
    %c7_149 = arith.constant 7 : index
    %c0_150 = arith.constant 0 : index
    %183 = vector.load %arg17[%c7_149, %c0_150] : memref<96x32xf32, #tpu.memory_space<vmem>>, vector<64x32xf32>
    %cst_151 = arith.constant 0.000000e+00 : f32
    %184 = vector.shape_cast %20 : vector<64x1xi1> to vector<64x1xi1>
    %185 = vector.broadcast %184 : vector<64x1xi1> to vector<64x32xi1>
    %186 = vector.broadcast %cst_151 : f32 to vector<64x32xf32>
    %187 = arith.select %185, %183, %186 : vector<64x32xi1>, vector<64x32xf32>
    %c0_152 = arith.constant 0 : index
    %c0_153 = arith.constant 0 : index
    %188 = vector.load %arg18[%c0_152, %c0_153] : memref<64x288xf32, #tpu.memory_space<vmem>>, vector<64x32xf32>
    tpu.vector_store %arg18[%c0_152, %c0_153], %187 {strides = array<i32>} : memref<64x288xf32, #tpu.memory_space<vmem>>, vector<64x32xf32>,
    %c8_154 = arith.constant 8 : index
    %c0_155 = arith.constant 0 : index
    %189 = vector.load %arg17[%c8_154, %c0_155] : memref<96x32xf32, #tpu.memory_space<vmem>>, vector<64x32xf32>
    %c0_156 = arith.constant 0 : index
    %c32_157 = arith.constant 32 : index
    %190 = vector.load %arg18[%c0_156, %c32_157] : memref<64x288xf32, #tpu.memory_space<vmem>>, vector<64x32xf32>
    tpu.vector_store %arg18[%c0_156, %c32_157], %189 {strides = array<i32>} : memref<64x288xf32, #tpu.memory_space<vmem>>, vector<64x32xf32>,
    %c9_158 = arith.constant 9 : index
    %c0_159 = arith.constant 0 : index
    %191 = vector.load %arg17[%c9_158, %c0_159] : memref<96x32xf32, #tpu.memory_space<vmem>>, vector<64x32xf32>
    %cst_160 = arith.constant 0.000000e+00 : f32
    %192 = vector.shape_cast %22 : vector<64x1xi1> to vector<64x1xi1>
    %193 = vector.broadcast %192 : vector<64x1xi1> to vector<64x32xi1>
    %194 = vector.broadcast %cst_160 : f32 to vector<64x32xf32>
    %195 = arith.select %193, %191, %194 : vector<64x32xi1>, vector<64x32xf32>
    %c0_161 = arith.constant 0 : index
    %c64_162 = arith.constant 64 : index
    %196 = vector.load %arg18[%c0_161, %c64_162] : memref<64x288xf32, #tpu.memory_space<vmem>>, vector<64x32xf32>
    tpu.vector_store %arg18[%c0_161, %c64_162], %195 {strides = array<i32>} : memref<64x288xf32, #tpu.memory_space<vmem>>, vector<64x32xf32>,
    %c15_163 = arith.constant 15 : index
    %c0_164 = arith.constant 0 : index
    %197 = vector.load %arg17[%c15_163, %c0_164] : memref<96x32xf32, #tpu.memory_space<vmem>>, vector<64x32xf32>
    %cst_165 = arith.constant 0.000000e+00 : f32
    %198 = vector.shape_cast %20 : vector<64x1xi1> to vector<64x1xi1>
    %199 = vector.broadcast %198 : vector<64x1xi1> to vector<64x32xi1>
    %200 = vector.broadcast %cst_165 : f32 to vector<64x32xf32>
    %201 = arith.select %199, %197, %200 : vector<64x32xi1>, vector<64x32xf32>
    %c0_166 = arith.constant 0 : index
    %c96_167 = arith.constant 96 : index
    %202 = vector.load %arg18[%c0_166, %c96_167] : memref<64x288xf32, #tpu.memory_space<vmem>>, vector<64x32xf32>
    tpu.vector_store %arg18[%c0_166, %c96_167], %201 {strides = array<i32>} : memref<64x288xf32, #tpu.memory_space<vmem>>, vector<64x32xf32>,
    %c16_168 = arith.constant 16 : index
    %c0_169 = arith.constant 0 : index
    %203 = vector.load %arg17[%c16_168, %c0_169] : memref<96x32xf32, #tpu.memory_space<vmem>>, vector<64x32xf32>
    %c0_170 = arith.constant 0 : index
    %c128_171 = arith.constant 128 : index
    %204 = vector.load %arg18[%c0_170, %c128_171] : memref<64x288xf32, #tpu.memory_space<vmem>>, vector<64x32xf32>
    tpu.vector_store %arg18[%c0_170, %c128_171], %203 {strides = array<i32>} : memref<64x288xf32, #tpu.memory_space<vmem>>, vector<64x32xf32>,
    %c17_172 = arith.constant 17 : index
    %c0_173 = arith.constant 0 : index
    %205 = vector.load %arg17[%c17_172, %c0_173] : memref<96x32xf32, #tpu.memory_space<vmem>>, vector<64x32xf32>
    %cst_174 = arith.constant 0.000000e+00 : f32
    %206 = vector.shape_cast %22 : vector<64x1xi1> to vector<64x1xi1>
    %207 = vector.broadcast %206 : vector<64x1xi1> to vector<64x32xi1>
    %208 = vector.broadcast %cst_174 : f32 to vector<64x32xf32>
    %209 = arith.select %207, %205, %208 : vector<64x32xi1>, vector<64x32xf32>
    %c0_175 = arith.constant 0 : index
    %c160_176 = arith.constant 160 : index
    %210 = vector.load %arg18[%c0_175, %c160_176] : memref<64x288xf32, #tpu.memory_space<vmem>>, vector<64x32xf32>
    tpu.vector_store %arg18[%c0_175, %c160_176], %209 {strides = array<i32>} : memref<64x288xf32, #tpu.memory_space<vmem>>, vector<64x32xf32>,
    %c23_177 = arith.constant 23 : index
    %c0_178 = arith.constant 0 : index
    %211 = vector.load %arg17[%c23_177, %c0_178] : memref<96x32xf32, #tpu.memory_space<vmem>>, vector<64x32xf32>
    %cst_179 = arith.constant 0.000000e+00 : f32
    %212 = vector.shape_cast %20 : vector<64x1xi1> to vector<64x1xi1>
    %213 = vector.broadcast %212 : vector<64x1xi1> to vector<64x32xi1>
    %214 = vector.broadcast %cst_179 : f32 to vector<64x32xf32>
    %215 = arith.select %213, %211, %214 : vector<64x32xi1>, vector<64x32xf32>
    %c0_180 = arith.constant 0 : index
    %c192_181 = arith.constant 192 : index
    %216 = vector.load %arg18[%c0_180, %c192_181] : memref<64x288xf32, #tpu.memory_space<vmem>>, vector<64x32xf32>
    tpu.vector_store %arg18[%c0_180, %c192_181], %215 {strides = array<i32>} : memref<64x288xf32, #tpu.memory_space<vmem>>, vector<64x32xf32>,
    %c24_182 = arith.constant 24 : index
    %c0_183 = arith.constant 0 : index
    %217 = vector.load %arg17[%c24_182, %c0_183] : memref<96x32xf32, #tpu.memory_space<vmem>>, vector<64x32xf32>
    %c0_184 = arith.constant 0 : index
    %c224_185 = arith.constant 224 : index
    %218 = vector.load %arg18[%c0_184, %c224_185] : memref<64x288xf32, #tpu.memory_space<vmem>>, vector<64x32xf32>
    tpu.vector_store %arg18[%c0_184, %c224_185], %217 {strides = array<i32>} : memref<64x288xf32, #tpu.memory_space<vmem>>, vector<64x32xf32>,
    %c25_186 = arith.constant 25 : index
    %c0_187 = arith.constant 0 : index
    %219 = vector.load %arg17[%c25_186, %c0_187] : memref<96x32xf32, #tpu.memory_space<vmem>>, vector<64x32xf32>
    %cst_188 = arith.constant 0.000000e+00 : f32
    %220 = vector.shape_cast %22 : vector<64x1xi1> to vector<64x1xi1>
    %221 = vector.broadcast %220 : vector<64x1xi1> to vector<64x32xi1>
    %222 = vector.broadcast %cst_188 : f32 to vector<64x32xf32>
    %223 = arith.select %221, %219, %222 : vector<64x32xi1>, vector<64x32xf32>
    %c0_189 = arith.constant 0 : index
    %c256_190 = arith.constant 256 : index
    %224 = vector.load %arg18[%c0_189, %c256_190] : memref<64x288xf32, #tpu.memory_space<vmem>>, vector<64x32xf32>
    tpu.vector_store %arg18[%c0_189, %c256_190], %223 {strides = array<i32>} : memref<64x288xf32, #tpu.memory_space<vmem>>, vector<64x32xf32>,
    %c0_191 = arith.constant 0 : index
    %c0_192 = arith.constant 0 : index
    %225 = vector.load %arg18[%c0_191, %c0_192] : memref<64x288xf32, #tpu.memory_space<vmem>>, vector<64x288xf32>
    %226 = arith.truncf %225 : vector<64x288xf32> to vector<64x288xbf16>
    %c0_193 = arith.constant 0 : index
    %c0_194 = arith.constant 0 : index
    %227 = vector.load %arg8[%c0_193, %c0_194] : memref<288x32xbf16, #tpu.memory_space<vmem>>, vector<288x32xbf16>
    %cst_195 = arith.constant dense<0.000000e+00> : vector<64x32xf32>
    %228 = tpu.matmul %226, %227, %cst_195 {dimension_numbers = #tpu.dot_dimension_numbers<[1], [0], [0], [1], [0, 0, 1, 1], [], []>} : vector<64x288xbf16>, vector<288x32xbf16>, vector<64x32xf32> -> vector<64x32xf32>
    %c0_196 = arith.constant 0 : index
    %c0_197 = arith.constant 0 : index
    %229 = vector.load %arg9[%c0_196, %c0_197] : memref<1x32xf32, #tpu.memory_space<vmem>>, vector<1x32xf32>
    %230 = vector.broadcast %229 : vector<1x32xf32> to vector<64x32xf32>
    %231 = arith.addf %228, %230 : vector<64x32xf32>
    %cst_198 = arith.constant 0.000000e+00 : f32
    %232 = vector.broadcast %cst_198 : f32 to vector<64x32xf32>
    %233 = arith.maximumf %231, %232 : vector<64x32xf32>
    %c16_199 = arith.constant 16 : index
    %c0_200 = arith.constant 0 : index
    %234 = vector.load %arg17[%c16_199, %c0_200] : memref<96x32xf32, #tpu.memory_space<vmem>>, vector<64x32xf32>
    tpu.vector_store %arg17[%c16_199, %c0_200], %233 {strides = array<i32>} : memref<96x32xf32, #tpu.memory_space<vmem>>, vector<64x32xf32>,
    %c7_201 = arith.constant 7 : index
    %c0_202 = arith.constant 0 : index
    %235 = vector.load %arg17[%c7_201, %c0_202] : memref<96x32xf32, #tpu.memory_space<vmem>>, vector<64x32xf32>
    %cst_203 = arith.constant 0.000000e+00 : f32
    %236 = vector.shape_cast %20 : vector<64x1xi1> to vector<64x1xi1>
    %237 = vector.broadcast %236 : vector<64x1xi1> to vector<64x32xi1>
    %238 = vector.broadcast %cst_203 : f32 to vector<64x32xf32>
    %239 = arith.select %237, %235, %238 : vector<64x32xi1>, vector<64x32xf32>
    %c0_204 = arith.constant 0 : index
    %c0_205 = arith.constant 0 : index
    %240 = vector.load %arg18[%c0_204, %c0_205] : memref<64x288xf32, #tpu.memory_space<vmem>>, vector<64x32xf32>
    tpu.vector_store %arg18[%c0_204, %c0_205], %239 {strides = array<i32>} : memref<64x288xf32, #tpu.memory_space<vmem>>, vector<64x32xf32>,
    %c8_206 = arith.constant 8 : index
    %c0_207 = arith.constant 0 : index
    %241 = vector.load %arg17[%c8_206, %c0_207] : memref<96x32xf32, #tpu.memory_space<vmem>>, vector<64x32xf32>
    %c0_208 = arith.constant 0 : index
    %c32_209 = arith.constant 32 : index
    %242 = vector.load %arg18[%c0_208, %c32_209] : memref<64x288xf32, #tpu.memory_space<vmem>>, vector<64x32xf32>
    tpu.vector_store %arg18[%c0_208, %c32_209], %241 {strides = array<i32>} : memref<64x288xf32, #tpu.memory_space<vmem>>, vector<64x32xf32>,
    %c9_210 = arith.constant 9 : index
    %c0_211 = arith.constant 0 : index
    %243 = vector.load %arg17[%c9_210, %c0_211] : memref<96x32xf32, #tpu.memory_space<vmem>>, vector<64x32xf32>
    %cst_212 = arith.constant 0.000000e+00 : f32
    %244 = vector.shape_cast %22 : vector<64x1xi1> to vector<64x1xi1>
    %245 = vector.broadcast %244 : vector<64x1xi1> to vector<64x32xi1>
    %246 = vector.broadcast %cst_212 : f32 to vector<64x32xf32>
    %247 = arith.select %245, %243, %246 : vector<64x32xi1>, vector<64x32xf32>
    %c0_213 = arith.constant 0 : index
    %c64_214 = arith.constant 64 : index
    %248 = vector.load %arg18[%c0_213, %c64_214] : memref<64x288xf32, #tpu.memory_space<vmem>>, vector<64x32xf32>
    tpu.vector_store %arg18[%c0_213, %c64_214], %247 {strides = array<i32>} : memref<64x288xf32, #tpu.memory_space<vmem>>, vector<64x32xf32>,
    %c15_215 = arith.constant 15 : index
    %c0_216 = arith.constant 0 : index
    %249 = vector.load %arg17[%c15_215, %c0_216] : memref<96x32xf32, #tpu.memory_space<vmem>>, vector<64x32xf32>
    %cst_217 = arith.constant 0.000000e+00 : f32
    %250 = vector.shape_cast %20 : vector<64x1xi1> to vector<64x1xi1>
    %251 = vector.broadcast %250 : vector<64x1xi1> to vector<64x32xi1>
    %252 = vector.broadcast %cst_217 : f32 to vector<64x32xf32>
    %253 = arith.select %251, %249, %252 : vector<64x32xi1>, vector<64x32xf32>
    %c0_218 = arith.constant 0 : index
    %c96_219 = arith.constant 96 : index
    %254 = vector.load %arg18[%c0_218, %c96_219] : memref<64x288xf32, #tpu.memory_space<vmem>>, vector<64x32xf32>
    tpu.vector_store %arg18[%c0_218, %c96_219], %253 {strides = array<i32>} : memref<64x288xf32, #tpu.memory_space<vmem>>, vector<64x32xf32>,
    %c16_220 = arith.constant 16 : index
    %c0_221 = arith.constant 0 : index
    %255 = vector.load %arg17[%c16_220, %c0_221] : memref<96x32xf32, #tpu.memory_space<vmem>>, vector<64x32xf32>
    %c0_222 = arith.constant 0 : index
    %c128_223 = arith.constant 128 : index
    %256 = vector.load %arg18[%c0_222, %c128_223] : memref<64x288xf32, #tpu.memory_space<vmem>>, vector<64x32xf32>
    tpu.vector_store %arg18[%c0_222, %c128_223], %255 {strides = array<i32>} : memref<64x288xf32, #tpu.memory_space<vmem>>, vector<64x32xf32>,
    %c17_224 = arith.constant 17 : index
    %c0_225 = arith.constant 0 : index
    %257 = vector.load %arg17[%c17_224, %c0_225] : memref<96x32xf32, #tpu.memory_space<vmem>>, vector<64x32xf32>
    %cst_226 = arith.constant 0.000000e+00 : f32
    %258 = vector.shape_cast %22 : vector<64x1xi1> to vector<64x1xi1>
    %259 = vector.broadcast %258 : vector<64x1xi1> to vector<64x32xi1>
    %260 = vector.broadcast %cst_226 : f32 to vector<64x32xf32>
    %261 = arith.select %259, %257, %260 : vector<64x32xi1>, vector<64x32xf32>
    %c0_227 = arith.constant 0 : index
    %c160_228 = arith.constant 160 : index
    %262 = vector.load %arg18[%c0_227, %c160_228] : memref<64x288xf32, #tpu.memory_space<vmem>>, vector<64x32xf32>
    tpu.vector_store %arg18[%c0_227, %c160_228], %261 {strides = array<i32>} : memref<64x288xf32, #tpu.memory_space<vmem>>, vector<64x32xf32>,
    %c23_229 = arith.constant 23 : index
    %c0_230 = arith.constant 0 : index
    %263 = vector.load %arg17[%c23_229, %c0_230] : memref<96x32xf32, #tpu.memory_space<vmem>>, vector<64x32xf32>
    %cst_231 = arith.constant 0.000000e+00 : f32
    %264 = vector.shape_cast %20 : vector<64x1xi1> to vector<64x1xi1>
    %265 = vector.broadcast %264 : vector<64x1xi1> to vector<64x32xi1>
    %266 = vector.broadcast %cst_231 : f32 to vector<64x32xf32>
    %267 = arith.select %265, %263, %266 : vector<64x32xi1>, vector<64x32xf32>
    %c0_232 = arith.constant 0 : index
    %c192_233 = arith.constant 192 : index
    %268 = vector.load %arg18[%c0_232, %c192_233] : memref<64x288xf32, #tpu.memory_space<vmem>>, vector<64x32xf32>
    tpu.vector_store %arg18[%c0_232, %c192_233], %267 {strides = array<i32>} : memref<64x288xf32, #tpu.memory_space<vmem>>, vector<64x32xf32>,
    %c24_234 = arith.constant 24 : index
    %c0_235 = arith.constant 0 : index
    %269 = vector.load %arg17[%c24_234, %c0_235] : memref<96x32xf32, #tpu.memory_space<vmem>>, vector<64x32xf32>
    %c0_236 = arith.constant 0 : index
    %c224_237 = arith.constant 224 : index
    %270 = vector.load %arg18[%c0_236, %c224_237] : memref<64x288xf32, #tpu.memory_space<vmem>>, vector<64x32xf32>
    tpu.vector_store %arg18[%c0_236, %c224_237], %269 {strides = array<i32>} : memref<64x288xf32, #tpu.memory_space<vmem>>, vector<64x32xf32>,
    %c25_238 = arith.constant 25 : index
    %c0_239 = arith.constant 0 : index
    %271 = vector.load %arg17[%c25_238, %c0_239] : memref<96x32xf32, #tpu.memory_space<vmem>>, vector<64x32xf32>
    %cst_240 = arith.constant 0.000000e+00 : f32
    %272 = vector.shape_cast %22 : vector<64x1xi1> to vector<64x1xi1>
    %273 = vector.broadcast %272 : vector<64x1xi1> to vector<64x32xi1>
    %274 = vector.broadcast %cst_240 : f32 to vector<64x32xf32>
    %275 = arith.select %273, %271, %274 : vector<64x32xi1>, vector<64x32xf32>
    %c0_241 = arith.constant 0 : index
    %c256_242 = arith.constant 256 : index
    %276 = vector.load %arg18[%c0_241, %c256_242] : memref<64x288xf32, #tpu.memory_space<vmem>>, vector<64x32xf32>
    tpu.vector_store %arg18[%c0_241, %c256_242], %275 {strides = array<i32>} : memref<64x288xf32, #tpu.memory_space<vmem>>, vector<64x32xf32>,
    %c0_243 = arith.constant 0 : index
    %c0_244 = arith.constant 0 : index
    %277 = vector.load %arg18[%c0_243, %c0_244] : memref<64x288xf32, #tpu.memory_space<vmem>>, vector<64x288xf32>
    %278 = arith.truncf %277 : vector<64x288xf32> to vector<64x288xbf16>
    %c0_245 = arith.constant 0 : index
    %c0_246 = arith.constant 0 : index
    %279 = vector.load %arg10[%c0_245, %c0_246] : memref<288x32xbf16, #tpu.memory_space<vmem>>, vector<288x32xbf16>
    %cst_247 = arith.constant dense<0.000000e+00> : vector<64x32xf32>
    %280 = tpu.matmul %278, %279, %cst_247 {dimension_numbers = #tpu.dot_dimension_numbers<[1], [0], [0], [1], [0, 0, 1, 1], [], []>} : vector<64x288xbf16>, vector<288x32xbf16>, vector<64x32xf32> -> vector<64x32xf32>
    %c0_248 = arith.constant 0 : index
    %c0_249 = arith.constant 0 : index
    %281 = vector.load %arg11[%c0_248, %c0_249] : memref<1x32xf32, #tpu.memory_space<vmem>>, vector<1x32xf32>
    %282 = vector.broadcast %281 : vector<1x32xf32> to vector<64x32xf32>
    %283 = arith.addf %280, %282 : vector<64x32xf32>
    %284 = arith.addf %283, %181 : vector<64x32xf32>
    %cst_250 = arith.constant 0.000000e+00 : f32
    %285 = vector.broadcast %cst_250 : f32 to vector<64x32xf32>
    %286 = arith.maximumf %284, %285 : vector<64x32xf32>
    %c16_251 = arith.constant 16 : index
    %c0_252 = arith.constant 0 : index
    %287 = vector.load %arg17[%c16_251, %c0_252] : memref<96x32xf32, #tpu.memory_space<vmem>>, vector<64x32xf32>
    tpu.vector_store %arg17[%c16_251, %c0_252], %286 {strides = array<i32>} : memref<96x32xf32, #tpu.memory_space<vmem>>, vector<64x32xf32>,
    %c7_253 = arith.constant 7 : index
    %c0_254 = arith.constant 0 : index
    %288 = vector.load %arg17[%c7_253, %c0_254] : memref<96x32xf32, #tpu.memory_space<vmem>>, vector<64x32xf32>
    %cst_255 = arith.constant 0.000000e+00 : f32
    %289 = vector.shape_cast %20 : vector<64x1xi1> to vector<64x1xi1>
    %290 = vector.broadcast %289 : vector<64x1xi1> to vector<64x32xi1>
    %291 = vector.broadcast %cst_255 : f32 to vector<64x32xf32>
    %292 = arith.select %290, %288, %291 : vector<64x32xi1>, vector<64x32xf32>
    %c0_256 = arith.constant 0 : index
    %c0_257 = arith.constant 0 : index
    %293 = vector.load %arg18[%c0_256, %c0_257] : memref<64x288xf32, #tpu.memory_space<vmem>>, vector<64x32xf32>
    tpu.vector_store %arg18[%c0_256, %c0_257], %292 {strides = array<i32>} : memref<64x288xf32, #tpu.memory_space<vmem>>, vector<64x32xf32>,
    %c8_258 = arith.constant 8 : index
    %c0_259 = arith.constant 0 : index
    %294 = vector.load %arg17[%c8_258, %c0_259] : memref<96x32xf32, #tpu.memory_space<vmem>>, vector<64x32xf32>
    %c0_260 = arith.constant 0 : index
    %c32_261 = arith.constant 32 : index
    %295 = vector.load %arg18[%c0_260, %c32_261] : memref<64x288xf32, #tpu.memory_space<vmem>>, vector<64x32xf32>
    tpu.vector_store %arg18[%c0_260, %c32_261], %294 {strides = array<i32>} : memref<64x288xf32, #tpu.memory_space<vmem>>, vector<64x32xf32>,
    %c9_262 = arith.constant 9 : index
    %c0_263 = arith.constant 0 : index
    %296 = vector.load %arg17[%c9_262, %c0_263] : memref<96x32xf32, #tpu.memory_space<vmem>>, vector<64x32xf32>
    %cst_264 = arith.constant 0.000000e+00 : f32
    %297 = vector.shape_cast %22 : vector<64x1xi1> to vector<64x1xi1>
    %298 = vector.broadcast %297 : vector<64x1xi1> to vector<64x32xi1>
    %299 = vector.broadcast %cst_264 : f32 to vector<64x32xf32>
    %300 = arith.select %298, %296, %299 : vector<64x32xi1>, vector<64x32xf32>
    %c0_265 = arith.constant 0 : index
    %c64_266 = arith.constant 64 : index
    %301 = vector.load %arg18[%c0_265, %c64_266] : memref<64x288xf32, #tpu.memory_space<vmem>>, vector<64x32xf32>
    tpu.vector_store %arg18[%c0_265, %c64_266], %300 {strides = array<i32>} : memref<64x288xf32, #tpu.memory_space<vmem>>, vector<64x32xf32>,
    %c15_267 = arith.constant 15 : index
    %c0_268 = arith.constant 0 : index
    %302 = vector.load %arg17[%c15_267, %c0_268] : memref<96x32xf32, #tpu.memory_space<vmem>>, vector<64x32xf32>
    %cst_269 = arith.constant 0.000000e+00 : f32
    %303 = vector.shape_cast %20 : vector<64x1xi1> to vector<64x1xi1>
    %304 = vector.broadcast %303 : vector<64x1xi1> to vector<64x32xi1>
    %305 = vector.broadcast %cst_269 : f32 to vector<64x32xf32>
    %306 = arith.select %304, %302, %305 : vector<64x32xi1>, vector<64x32xf32>
    %c0_270 = arith.constant 0 : index
    %c96_271 = arith.constant 96 : index
    %307 = vector.load %arg18[%c0_270, %c96_271] : memref<64x288xf32, #tpu.memory_space<vmem>>, vector<64x32xf32>
    tpu.vector_store %arg18[%c0_270, %c96_271], %306 {strides = array<i32>} : memref<64x288xf32, #tpu.memory_space<vmem>>, vector<64x32xf32>,
    %c16_272 = arith.constant 16 : index
    %c0_273 = arith.constant 0 : index
    %308 = vector.load %arg17[%c16_272, %c0_273] : memref<96x32xf32, #tpu.memory_space<vmem>>, vector<64x32xf32>
    %c0_274 = arith.constant 0 : index
    %c128_275 = arith.constant 128 : index
    %309 = vector.load %arg18[%c0_274, %c128_275] : memref<64x288xf32, #tpu.memory_space<vmem>>, vector<64x32xf32>
    tpu.vector_store %arg18[%c0_274, %c128_275], %308 {strides = array<i32>} : memref<64x288xf32, #tpu.memory_space<vmem>>, vector<64x32xf32>,
    %c17_276 = arith.constant 17 : index
    %c0_277 = arith.constant 0 : index
    %310 = vector.load %arg17[%c17_276, %c0_277] : memref<96x32xf32, #tpu.memory_space<vmem>>, vector<64x32xf32>
    %cst_278 = arith.constant 0.000000e+00 : f32
    %311 = vector.shape_cast %22 : vector<64x1xi1> to vector<64x1xi1>
    %312 = vector.broadcast %311 : vector<64x1xi1> to vector<64x32xi1>
    %313 = vector.broadcast %cst_278 : f32 to vector<64x32xf32>
    %314 = arith.select %312, %310, %313 : vector<64x32xi1>, vector<64x32xf32>
    %c0_279 = arith.constant 0 : index
    %c160_280 = arith.constant 160 : index
    %315 = vector.load %arg18[%c0_279, %c160_280] : memref<64x288xf32, #tpu.memory_space<vmem>>, vector<64x32xf32>
    tpu.vector_store %arg18[%c0_279, %c160_280], %314 {strides = array<i32>} : memref<64x288xf32, #tpu.memory_space<vmem>>, vector<64x32xf32>,
    %c23_281 = arith.constant 23 : index
    %c0_282 = arith.constant 0 : index
    %316 = vector.load %arg17[%c23_281, %c0_282] : memref<96x32xf32, #tpu.memory_space<vmem>>, vector<64x32xf32>
    %cst_283 = arith.constant 0.000000e+00 : f32
    %317 = vector.shape_cast %20 : vector<64x1xi1> to vector<64x1xi1>
    %318 = vector.broadcast %317 : vector<64x1xi1> to vector<64x32xi1>
    %319 = vector.broadcast %cst_283 : f32 to vector<64x32xf32>
    %320 = arith.select %318, %316, %319 : vector<64x32xi1>, vector<64x32xf32>
    %c0_284 = arith.constant 0 : index
    %c192_285 = arith.constant 192 : index
    %321 = vector.load %arg18[%c0_284, %c192_285] : memref<64x288xf32, #tpu.memory_space<vmem>>, vector<64x32xf32>
    tpu.vector_store %arg18[%c0_284, %c192_285], %320 {strides = array<i32>} : memref<64x288xf32, #tpu.memory_space<vmem>>, vector<64x32xf32>,
    %c24_286 = arith.constant 24 : index
    %c0_287 = arith.constant 0 : index
    %322 = vector.load %arg17[%c24_286, %c0_287] : memref<96x32xf32, #tpu.memory_space<vmem>>, vector<64x32xf32>
    %c0_288 = arith.constant 0 : index
    %c224_289 = arith.constant 224 : index
    %323 = vector.load %arg18[%c0_288, %c224_289] : memref<64x288xf32, #tpu.memory_space<vmem>>, vector<64x32xf32>
    tpu.vector_store %arg18[%c0_288, %c224_289], %322 {strides = array<i32>} : memref<64x288xf32, #tpu.memory_space<vmem>>, vector<64x32xf32>,
    %c25_290 = arith.constant 25 : index
    %c0_291 = arith.constant 0 : index
    %324 = vector.load %arg17[%c25_290, %c0_291] : memref<96x32xf32, #tpu.memory_space<vmem>>, vector<64x32xf32>
    %cst_292 = arith.constant 0.000000e+00 : f32
    %325 = vector.shape_cast %22 : vector<64x1xi1> to vector<64x1xi1>
    %326 = vector.broadcast %325 : vector<64x1xi1> to vector<64x32xi1>
    %327 = vector.broadcast %cst_292 : f32 to vector<64x32xf32>
    %328 = arith.select %326, %324, %327 : vector<64x32xi1>, vector<64x32xf32>
    %c0_293 = arith.constant 0 : index
    %c256_294 = arith.constant 256 : index
    %329 = vector.load %arg18[%c0_293, %c256_294] : memref<64x288xf32, #tpu.memory_space<vmem>>, vector<64x32xf32>
    tpu.vector_store %arg18[%c0_293, %c256_294], %328 {strides = array<i32>} : memref<64x288xf32, #tpu.memory_space<vmem>>, vector<64x32xf32>,
    %c0_295 = arith.constant 0 : index
    %c0_296 = arith.constant 0 : index
    %330 = vector.load %arg18[%c0_295, %c0_296] : memref<64x288xf32, #tpu.memory_space<vmem>>, vector<64x288xf32>
    %331 = arith.truncf %330 : vector<64x288xf32> to vector<64x288xbf16>
    %c0_297 = arith.constant 0 : index
    %c0_298 = arith.constant 0 : index
    %332 = vector.load %arg12[%c0_297, %c0_298] : memref<288x35xbf16, #tpu.memory_space<vmem>>, vector<288x35xbf16>
    %cst_299 = arith.constant dense<0.000000e+00> : vector<64x35xf32>
    %333 = tpu.matmul %331, %332, %cst_299 {dimension_numbers = #tpu.dot_dimension_numbers<[1], [0], [0], [1], [0, 0, 1, 1], [], []>} : vector<64x288xbf16>, vector<288x35xbf16>, vector<64x35xf32> -> vector<64x35xf32>
    %c0_300 = arith.constant 0 : index
    %c0_301 = arith.constant 0 : index
    %334 = vector.load %arg13[%c0_300, %c0_301] : memref<1x35xf32, #tpu.memory_space<vmem>>, vector<1x35xf32>
    %335 = vector.broadcast %334 : vector<1x35xf32> to vector<64x35xf32>
    %336 = arith.addf %333, %335 : vector<64x35xf32>
    %cst_302 = arith.constant 0.000000e+00 : f32
    %337 = vector.broadcast %cst_302 : f32 to vector<64x35xf32>
    %338 = arith.maximumf %336, %337 : vector<64x35xf32>
    %c0_303 = arith.constant 0 : index
    %c0_304 = arith.constant 0 : index
    %339 = vector.load %arg19[%c0_303, %c0_304] : memref<64x35xf32, #tpu.memory_space<vmem>>, vector<64x35xf32>
    tpu.vector_store %arg19[%c0_303, %c0_304], %338 {strides = array<i32>} : memref<64x35xf32, #tpu.memory_space<vmem>>, vector<64x35xf32>,
    %c0_305 = arith.constant 0 : index
    %c0_306 = arith.constant 0 : index
    %340 = vector.load %arg19[%c0_305, %c0_306] : memref<64x35xf32, #tpu.memory_space<vmem>>, vector<1x35xf32>
    %c0_307 = arith.constant 0 : index
    %c0_308 = arith.constant 0 : index
    %341 = vector.load %arg20[%c0_307, %c0_308] : memref<1x2240xf32, #tpu.memory_space<vmem>>, vector<1x35xf32>
    tpu.vector_store %arg20[%c0_307, %c0_308], %340 {strides = array<i32>} : memref<1x2240xf32, #tpu.memory_space<vmem>>, vector<1x35xf32>,
    %c1 = arith.constant 1 : index
    %c0_309 = arith.constant 0 : index
    %342 = vector.load %arg19[%c1, %c0_309] : memref<64x35xf32, #tpu.memory_space<vmem>>, vector<1x35xf32>
    %c0_310 = arith.constant 0 : index
    %c35 = arith.constant 35 : index
    %343 = vector.load %arg20[%c0_310, %c35] : memref<1x2240xf32, #tpu.memory_space<vmem>>, vector<1x35xf32>
    tpu.vector_store %arg20[%c0_310, %c35], %342 {strides = array<i32>} : memref<1x2240xf32, #tpu.memory_space<vmem>>, vector<1x35xf32>,
    %c2 = arith.constant 2 : index
    %c0_311 = arith.constant 0 : index
    %344 = vector.load %arg19[%c2, %c0_311] : memref<64x35xf32, #tpu.memory_space<vmem>>, vector<1x35xf32>
    %c0_312 = arith.constant 0 : index
    %c70 = arith.constant 70 : index
    %345 = vector.load %arg20[%c0_312, %c70] : memref<1x2240xf32, #tpu.memory_space<vmem>>, vector<1x35xf32>
    tpu.vector_store %arg20[%c0_312, %c70], %344 {strides = array<i32>} : memref<1x2240xf32, #tpu.memory_space<vmem>>, vector<1x35xf32>,
    %c3 = arith.constant 3 : index
    %c0_313 = arith.constant 0 : index
    %346 = vector.load %arg19[%c3, %c0_313] : memref<64x35xf32, #tpu.memory_space<vmem>>, vector<1x35xf32>
    %c0_314 = arith.constant 0 : index
    %c105 = arith.constant 105 : index
    %347 = vector.load %arg20[%c0_314, %c105] : memref<1x2240xf32, #tpu.memory_space<vmem>>, vector<1x35xf32>
    tpu.vector_store %arg20[%c0_314, %c105], %346 {strides = array<i32>} : memref<1x2240xf32, #tpu.memory_space<vmem>>, vector<1x35xf32>,
    %c4 = arith.constant 4 : index
    %c0_315 = arith.constant 0 : index
    %348 = vector.load %arg19[%c4, %c0_315] : memref<64x35xf32, #tpu.memory_space<vmem>>, vector<1x35xf32>
    %c0_316 = arith.constant 0 : index
    %c140 = arith.constant 140 : index
    %349 = vector.load %arg20[%c0_316, %c140] : memref<1x2240xf32, #tpu.memory_space<vmem>>, vector<1x35xf32>
    tpu.vector_store %arg20[%c0_316, %c140], %348 {strides = array<i32>} : memref<1x2240xf32, #tpu.memory_space<vmem>>, vector<1x35xf32>,
    %c5 = arith.constant 5 : index
    %c0_317 = arith.constant 0 : index
    %350 = vector.load %arg19[%c5, %c0_317] : memref<64x35xf32, #tpu.memory_space<vmem>>, vector<1x35xf32>
    %c0_318 = arith.constant 0 : index
    %c175 = arith.constant 175 : index
    %351 = vector.load %arg20[%c0_318, %c175] : memref<1x2240xf32, #tpu.memory_space<vmem>>, vector<1x35xf32>
    tpu.vector_store %arg20[%c0_318, %c175], %350 {strides = array<i32>} : memref<1x2240xf32, #tpu.memory_space<vmem>>, vector<1x35xf32>,
    %c6 = arith.constant 6 : index
    %c0_319 = arith.constant 0 : index
    %352 = vector.load %arg19[%c6, %c0_319] : memref<64x35xf32, #tpu.memory_space<vmem>>, vector<1x35xf32>
    %c0_320 = arith.constant 0 : index
    %c210 = arith.constant 210 : index
    %353 = vector.load %arg20[%c0_320, %c210] : memref<1x2240xf32, #tpu.memory_space<vmem>>, vector<1x35xf32>
    tpu.vector_store %arg20[%c0_320, %c210], %352 {strides = array<i32>} : memref<1x2240xf32, #tpu.memory_space<vmem>>, vector<1x35xf32>,
    %c7_321 = arith.constant 7 : index
    %c0_322 = arith.constant 0 : index
    %354 = vector.load %arg19[%c7_321, %c0_322] : memref<64x35xf32, #tpu.memory_space<vmem>>, vector<1x35xf32>
    %c0_323 = arith.constant 0 : index
    %c245 = arith.constant 245 : index
    %355 = vector.load %arg20[%c0_323, %c245] : memref<1x2240xf32, #tpu.memory_space<vmem>>, vector<1x35xf32>
    tpu.vector_store %arg20[%c0_323, %c245], %354 {strides = array<i32>} : memref<1x2240xf32, #tpu.memory_space<vmem>>, vector<1x35xf32>,
    %c8_324 = arith.constant 8 : index
    %c0_325 = arith.constant 0 : index
    %356 = vector.load %arg19[%c8_324, %c0_325] : memref<64x35xf32, #tpu.memory_space<vmem>>, vector<1x35xf32>
    %c0_326 = arith.constant 0 : index
    %c280 = arith.constant 280 : index
    %357 = vector.load %arg20[%c0_326, %c280] : memref<1x2240xf32, #tpu.memory_space<vmem>>, vector<1x35xf32>
    tpu.vector_store %arg20[%c0_326, %c280], %356 {strides = array<i32>} : memref<1x2240xf32, #tpu.memory_space<vmem>>, vector<1x35xf32>,
    %c9_327 = arith.constant 9 : index
    %c0_328 = arith.constant 0 : index
    %358 = vector.load %arg19[%c9_327, %c0_328] : memref<64x35xf32, #tpu.memory_space<vmem>>, vector<1x35xf32>
    %c0_329 = arith.constant 0 : index
    %c315 = arith.constant 315 : index
    %359 = vector.load %arg20[%c0_329, %c315] : memref<1x2240xf32, #tpu.memory_space<vmem>>, vector<1x35xf32>
    tpu.vector_store %arg20[%c0_329, %c315], %358 {strides = array<i32>} : memref<1x2240xf32, #tpu.memory_space<vmem>>, vector<1x35xf32>,
    %c10 = arith.constant 10 : index
    %c0_330 = arith.constant 0 : index
    %360 = vector.load %arg19[%c10, %c0_330] : memref<64x35xf32, #tpu.memory_space<vmem>>, vector<1x35xf32>
    %c0_331 = arith.constant 0 : index
    %c350 = arith.constant 350 : index
    %361 = vector.load %arg20[%c0_331, %c350] : memref<1x2240xf32, #tpu.memory_space<vmem>>, vector<1x35xf32>
    tpu.vector_store %arg20[%c0_331, %c350], %360 {strides = array<i32>} : memref<1x2240xf32, #tpu.memory_space<vmem>>, vector<1x35xf32>,
    %c11 = arith.constant 11 : index
    %c0_332 = arith.constant 0 : index
    %362 = vector.load %arg19[%c11, %c0_332] : memref<64x35xf32, #tpu.memory_space<vmem>>, vector<1x35xf32>
    %c0_333 = arith.constant 0 : index
    %c385 = arith.constant 385 : index
    %363 = vector.load %arg20[%c0_333, %c385] : memref<1x2240xf32, #tpu.memory_space<vmem>>, vector<1x35xf32>
    tpu.vector_store %arg20[%c0_333, %c385], %362 {strides = array<i32>} : memref<1x2240xf32, #tpu.memory_space<vmem>>, vector<1x35xf32>,
    %c12 = arith.constant 12 : index
    %c0_334 = arith.constant 0 : index
    %364 = vector.load %arg19[%c12, %c0_334] : memref<64x35xf32, #tpu.memory_space<vmem>>, vector<1x35xf32>
    %c0_335 = arith.constant 0 : index
    %c420 = arith.constant 420 : index
    %365 = vector.load %arg20[%c0_335, %c420] : memref<1x2240xf32, #tpu.memory_space<vmem>>, vector<1x35xf32>
    tpu.vector_store %arg20[%c0_335, %c420], %364 {strides = array<i32>} : memref<1x2240xf32, #tpu.memory_space<vmem>>, vector<1x35xf32>,
    %c13 = arith.constant 13 : index
    %c0_336 = arith.constant 0 : index
    %366 = vector.load %arg19[%c13, %c0_336] : memref<64x35xf32, #tpu.memory_space<vmem>>, vector<1x35xf32>
    %c0_337 = arith.constant 0 : index
    %c455 = arith.constant 455 : index
    %367 = vector.load %arg20[%c0_337, %c455] : memref<1x2240xf32, #tpu.memory_space<vmem>>, vector<1x35xf32>
    tpu.vector_store %arg20[%c0_337, %c455], %366 {strides = array<i32>} : memref<1x2240xf32, #tpu.memory_space<vmem>>, vector<1x35xf32>,
    %c14 = arith.constant 14 : index
    %c0_338 = arith.constant 0 : index
    %368 = vector.load %arg19[%c14, %c0_338] : memref<64x35xf32, #tpu.memory_space<vmem>>, vector<1x35xf32>
    %c0_339 = arith.constant 0 : index
    %c490 = arith.constant 490 : index
    %369 = vector.load %arg20[%c0_339, %c490] : memref<1x2240xf32, #tpu.memory_space<vmem>>, vector<1x35xf32>
    tpu.vector_store %arg20[%c0_339, %c490], %368 {strides = array<i32>} : memref<1x2240xf32, #tpu.memory_space<vmem>>, vector<1x35xf32>,
    %c15_340 = arith.constant 15 : index
    %c0_341 = arith.constant 0 : index
    %370 = vector.load %arg19[%c15_340, %c0_341] : memref<64x35xf32, #tpu.memory_space<vmem>>, vector<1x35xf32>
    %c0_342 = arith.constant 0 : index
    %c525 = arith.constant 525 : index
    %371 = vector.load %arg20[%c0_342, %c525] : memref<1x2240xf32, #tpu.memory_space<vmem>>, vector<1x35xf32>
    tpu.vector_store %arg20[%c0_342, %c525], %370 {strides = array<i32>} : memref<1x2240xf32, #tpu.memory_space<vmem>>, vector<1x35xf32>,
    %c16_343 = arith.constant 16 : index
    %c0_344 = arith.constant 0 : index
    %372 = vector.load %arg19[%c16_343, %c0_344] : memref<64x35xf32, #tpu.memory_space<vmem>>, vector<1x35xf32>
    %c0_345 = arith.constant 0 : index
    %c560 = arith.constant 560 : index
    %373 = vector.load %arg20[%c0_345, %c560] : memref<1x2240xf32, #tpu.memory_space<vmem>>, vector<1x35xf32>
    tpu.vector_store %arg20[%c0_345, %c560], %372 {strides = array<i32>} : memref<1x2240xf32, #tpu.memory_space<vmem>>, vector<1x35xf32>,
    %c17_346 = arith.constant 17 : index
    %c0_347 = arith.constant 0 : index
    %374 = vector.load %arg19[%c17_346, %c0_347] : memref<64x35xf32, #tpu.memory_space<vmem>>, vector<1x35xf32>
    %c0_348 = arith.constant 0 : index
    %c595 = arith.constant 595 : index
    %375 = vector.load %arg20[%c0_348, %c595] : memref<1x2240xf32, #tpu.memory_space<vmem>>, vector<1x35xf32>
    tpu.vector_store %arg20[%c0_348, %c595], %374 {strides = array<i32>} : memref<1x2240xf32, #tpu.memory_space<vmem>>, vector<1x35xf32>,
    %c18 = arith.constant 18 : index
    %c0_349 = arith.constant 0 : index
    %376 = vector.load %arg19[%c18, %c0_349] : memref<64x35xf32, #tpu.memory_space<vmem>>, vector<1x35xf32>
    %c0_350 = arith.constant 0 : index
    %c630 = arith.constant 630 : index
    %377 = vector.load %arg20[%c0_350, %c630] : memref<1x2240xf32, #tpu.memory_space<vmem>>, vector<1x35xf32>
    tpu.vector_store %arg20[%c0_350, %c630], %376 {strides = array<i32>} : memref<1x2240xf32, #tpu.memory_space<vmem>>, vector<1x35xf32>,
    %c19 = arith.constant 19 : index
    %c0_351 = arith.constant 0 : index
    %378 = vector.load %arg19[%c19, %c0_351] : memref<64x35xf32, #tpu.memory_space<vmem>>, vector<1x35xf32>
    %c0_352 = arith.constant 0 : index
    %c665 = arith.constant 665 : index
    %379 = vector.load %arg20[%c0_352, %c665] : memref<1x2240xf32, #tpu.memory_space<vmem>>, vector<1x35xf32>
    tpu.vector_store %arg20[%c0_352, %c665], %378 {strides = array<i32>} : memref<1x2240xf32, #tpu.memory_space<vmem>>, vector<1x35xf32>,
    %c20 = arith.constant 20 : index
    %c0_353 = arith.constant 0 : index
    %380 = vector.load %arg19[%c20, %c0_353] : memref<64x35xf32, #tpu.memory_space<vmem>>, vector<1x35xf32>
    %c0_354 = arith.constant 0 : index
    %c700 = arith.constant 700 : index
    %381 = vector.load %arg20[%c0_354, %c700] : memref<1x2240xf32, #tpu.memory_space<vmem>>, vector<1x35xf32>
    tpu.vector_store %arg20[%c0_354, %c700], %380 {strides = array<i32>} : memref<1x2240xf32, #tpu.memory_space<vmem>>, vector<1x35xf32>,
    %c21 = arith.constant 21 : index
    %c0_355 = arith.constant 0 : index
    %382 = vector.load %arg19[%c21, %c0_355] : memref<64x35xf32, #tpu.memory_space<vmem>>, vector<1x35xf32>
    %c0_356 = arith.constant 0 : index
    %c735 = arith.constant 735 : index
    %383 = vector.load %arg20[%c0_356, %c735] : memref<1x2240xf32, #tpu.memory_space<vmem>>, vector<1x35xf32>
    tpu.vector_store %arg20[%c0_356, %c735], %382 {strides = array<i32>} : memref<1x2240xf32, #tpu.memory_space<vmem>>, vector<1x35xf32>,
    %c22 = arith.constant 22 : index
    %c0_357 = arith.constant 0 : index
    %384 = vector.load %arg19[%c22, %c0_357] : memref<64x35xf32, #tpu.memory_space<vmem>>, vector<1x35xf32>
    %c0_358 = arith.constant 0 : index
    %c770 = arith.constant 770 : index
    %385 = vector.load %arg20[%c0_358, %c770] : memref<1x2240xf32, #tpu.memory_space<vmem>>, vector<1x35xf32>
    tpu.vector_store %arg20[%c0_358, %c770], %384 {strides = array<i32>} : memref<1x2240xf32, #tpu.memory_space<vmem>>, vector<1x35xf32>,
    %c23_359 = arith.constant 23 : index
    %c0_360 = arith.constant 0 : index
    %386 = vector.load %arg19[%c23_359, %c0_360] : memref<64x35xf32, #tpu.memory_space<vmem>>, vector<1x35xf32>
    %c0_361 = arith.constant 0 : index
    %c805 = arith.constant 805 : index
    %387 = vector.load %arg20[%c0_361, %c805] : memref<1x2240xf32, #tpu.memory_space<vmem>>, vector<1x35xf32>
    tpu.vector_store %arg20[%c0_361, %c805], %386 {strides = array<i32>} : memref<1x2240xf32, #tpu.memory_space<vmem>>, vector<1x35xf32>,
    %c24_362 = arith.constant 24 : index
    %c0_363 = arith.constant 0 : index
    %388 = vector.load %arg19[%c24_362, %c0_363] : memref<64x35xf32, #tpu.memory_space<vmem>>, vector<1x35xf32>
    %c0_364 = arith.constant 0 : index
    %c840 = arith.constant 840 : index
    %389 = vector.load %arg20[%c0_364, %c840] : memref<1x2240xf32, #tpu.memory_space<vmem>>, vector<1x35xf32>
    tpu.vector_store %arg20[%c0_364, %c840], %388 {strides = array<i32>} : memref<1x2240xf32, #tpu.memory_space<vmem>>, vector<1x35xf32>,
    %c25_365 = arith.constant 25 : index
    %c0_366 = arith.constant 0 : index
    %390 = vector.load %arg19[%c25_365, %c0_366] : memref<64x35xf32, #tpu.memory_space<vmem>>, vector<1x35xf32>
    %c0_367 = arith.constant 0 : index
    %c875 = arith.constant 875 : index
    %391 = vector.load %arg20[%c0_367, %c875] : memref<1x2240xf32, #tpu.memory_space<vmem>>, vector<1x35xf32>
    tpu.vector_store %arg20[%c0_367, %c875], %390 {strides = array<i32>} : memref<1x2240xf32, #tpu.memory_space<vmem>>, vector<1x35xf32>,
    %c26 = arith.constant 26 : index
    %c0_368 = arith.constant 0 : index
    %392 = vector.load %arg19[%c26, %c0_368] : memref<64x35xf32, #tpu.memory_space<vmem>>, vector<1x35xf32>
    %c0_369 = arith.constant 0 : index
    %c910 = arith.constant 910 : index
    %393 = vector.load %arg20[%c0_369, %c910] : memref<1x2240xf32, #tpu.memory_space<vmem>>, vector<1x35xf32>
    tpu.vector_store %arg20[%c0_369, %c910], %392 {strides = array<i32>} : memref<1x2240xf32, #tpu.memory_space<vmem>>, vector<1x35xf32>,
    %c27 = arith.constant 27 : index
    %c0_370 = arith.constant 0 : index
    %394 = vector.load %arg19[%c27, %c0_370] : memref<64x35xf32, #tpu.memory_space<vmem>>, vector<1x35xf32>
    %c0_371 = arith.constant 0 : index
    %c945 = arith.constant 945 : index
    %395 = vector.load %arg20[%c0_371, %c945] : memref<1x2240xf32, #tpu.memory_space<vmem>>, vector<1x35xf32>
    tpu.vector_store %arg20[%c0_371, %c945], %394 {strides = array<i32>} : memref<1x2240xf32, #tpu.memory_space<vmem>>, vector<1x35xf32>,
    %c28 = arith.constant 28 : index
    %c0_372 = arith.constant 0 : index
    %396 = vector.load %arg19[%c28, %c0_372] : memref<64x35xf32, #tpu.memory_space<vmem>>, vector<1x35xf32>
    %c0_373 = arith.constant 0 : index
    %c980 = arith.constant 980 : index
    %397 = vector.load %arg20[%c0_373, %c980] : memref<1x2240xf32, #tpu.memory_space<vmem>>, vector<1x35xf32>
    tpu.vector_store %arg20[%c0_373, %c980], %396 {strides = array<i32>} : memref<1x2240xf32, #tpu.memory_space<vmem>>, vector<1x35xf32>,
    %c29 = arith.constant 29 : index
    %c0_374 = arith.constant 0 : index
    %398 = vector.load %arg19[%c29, %c0_374] : memref<64x35xf32, #tpu.memory_space<vmem>>, vector<1x35xf32>
    %c0_375 = arith.constant 0 : index
    %c1015 = arith.constant 1015 : index
    %399 = vector.load %arg20[%c0_375, %c1015] : memref<1x2240xf32, #tpu.memory_space<vmem>>, vector<1x35xf32>
    tpu.vector_store %arg20[%c0_375, %c1015], %398 {strides = array<i32>} : memref<1x2240xf32, #tpu.memory_space<vmem>>, vector<1x35xf32>,
    %c30 = arith.constant 30 : index
    %c0_376 = arith.constant 0 : index
    %400 = vector.load %arg19[%c30, %c0_376] : memref<64x35xf32, #tpu.memory_space<vmem>>, vector<1x35xf32>
    %c0_377 = arith.constant 0 : index
    %c1050 = arith.constant 1050 : index
    %401 = vector.load %arg20[%c0_377, %c1050] : memref<1x2240xf32, #tpu.memory_space<vmem>>, vector<1x35xf32>
    tpu.vector_store %arg20[%c0_377, %c1050], %400 {strides = array<i32>} : memref<1x2240xf32, #tpu.memory_space<vmem>>, vector<1x35xf32>,
    %c31 = arith.constant 31 : index
    %c0_378 = arith.constant 0 : index
    %402 = vector.load %arg19[%c31, %c0_378] : memref<64x35xf32, #tpu.memory_space<vmem>>, vector<1x35xf32>
    %c0_379 = arith.constant 0 : index
    %c1085 = arith.constant 1085 : index
    %403 = vector.load %arg20[%c0_379, %c1085] : memref<1x2240xf32, #tpu.memory_space<vmem>>, vector<1x35xf32>
    tpu.vector_store %arg20[%c0_379, %c1085], %402 {strides = array<i32>} : memref<1x2240xf32, #tpu.memory_space<vmem>>, vector<1x35xf32>,
    %c32_380 = arith.constant 32 : index
    %c0_381 = arith.constant 0 : index
    %404 = vector.load %arg19[%c32_380, %c0_381] : memref<64x35xf32, #tpu.memory_space<vmem>>, vector<1x35xf32>
    %c0_382 = arith.constant 0 : index
    %c1120 = arith.constant 1120 : index
    %405 = vector.load %arg20[%c0_382, %c1120] : memref<1x2240xf32, #tpu.memory_space<vmem>>, vector<1x35xf32>
    tpu.vector_store %arg20[%c0_382, %c1120], %404 {strides = array<i32>} : memref<1x2240xf32, #tpu.memory_space<vmem>>, vector<1x35xf32>,
    %c33 = arith.constant 33 : index
    %c0_383 = arith.constant 0 : index
    %406 = vector.load %arg19[%c33, %c0_383] : memref<64x35xf32, #tpu.memory_space<vmem>>, vector<1x35xf32>
    %c0_384 = arith.constant 0 : index
    %c1155 = arith.constant 1155 : index
    %407 = vector.load %arg20[%c0_384, %c1155] : memref<1x2240xf32, #tpu.memory_space<vmem>>, vector<1x35xf32>
    tpu.vector_store %arg20[%c0_384, %c1155], %406 {strides = array<i32>} : memref<1x2240xf32, #tpu.memory_space<vmem>>, vector<1x35xf32>,
    %c34 = arith.constant 34 : index
    %c0_385 = arith.constant 0 : index
    %408 = vector.load %arg19[%c34, %c0_385] : memref<64x35xf32, #tpu.memory_space<vmem>>, vector<1x35xf32>
    %c0_386 = arith.constant 0 : index
    %c1190 = arith.constant 1190 : index
    %409 = vector.load %arg20[%c0_386, %c1190] : memref<1x2240xf32, #tpu.memory_space<vmem>>, vector<1x35xf32>
    tpu.vector_store %arg20[%c0_386, %c1190], %408 {strides = array<i32>} : memref<1x2240xf32, #tpu.memory_space<vmem>>, vector<1x35xf32>,
    %c35_387 = arith.constant 35 : index
    %c0_388 = arith.constant 0 : index
    %410 = vector.load %arg19[%c35_387, %c0_388] : memref<64x35xf32, #tpu.memory_space<vmem>>, vector<1x35xf32>
    %c0_389 = arith.constant 0 : index
    %c1225 = arith.constant 1225 : index
    %411 = vector.load %arg20[%c0_389, %c1225] : memref<1x2240xf32, #tpu.memory_space<vmem>>, vector<1x35xf32>
    tpu.vector_store %arg20[%c0_389, %c1225], %410 {strides = array<i32>} : memref<1x2240xf32, #tpu.memory_space<vmem>>, vector<1x35xf32>,
    %c36 = arith.constant 36 : index
    %c0_390 = arith.constant 0 : index
    %412 = vector.load %arg19[%c36, %c0_390] : memref<64x35xf32, #tpu.memory_space<vmem>>, vector<1x35xf32>
    %c0_391 = arith.constant 0 : index
    %c1260 = arith.constant 1260 : index
    %413 = vector.load %arg20[%c0_391, %c1260] : memref<1x2240xf32, #tpu.memory_space<vmem>>, vector<1x35xf32>
    tpu.vector_store %arg20[%c0_391, %c1260], %412 {strides = array<i32>} : memref<1x2240xf32, #tpu.memory_space<vmem>>, vector<1x35xf32>,
    %c37 = arith.constant 37 : index
    %c0_392 = arith.constant 0 : index
    %414 = vector.load %arg19[%c37, %c0_392] : memref<64x35xf32, #tpu.memory_space<vmem>>, vector<1x35xf32>
    %c0_393 = arith.constant 0 : index
    %c1295 = arith.constant 1295 : index
    %415 = vector.load %arg20[%c0_393, %c1295] : memref<1x2240xf32, #tpu.memory_space<vmem>>, vector<1x35xf32>
    tpu.vector_store %arg20[%c0_393, %c1295], %414 {strides = array<i32>} : memref<1x2240xf32, #tpu.memory_space<vmem>>, vector<1x35xf32>,
    %c38 = arith.constant 38 : index
    %c0_394 = arith.constant 0 : index
    %416 = vector.load %arg19[%c38, %c0_394] : memref<64x35xf32, #tpu.memory_space<vmem>>, vector<1x35xf32>
    %c0_395 = arith.constant 0 : index
    %c1330 = arith.constant 1330 : index
    %417 = vector.load %arg20[%c0_395, %c1330] : memref<1x2240xf32, #tpu.memory_space<vmem>>, vector<1x35xf32>
    tpu.vector_store %arg20[%c0_395, %c1330], %416 {strides = array<i32>} : memref<1x2240xf32, #tpu.memory_space<vmem>>, vector<1x35xf32>,
    %c39 = arith.constant 39 : index
    %c0_396 = arith.constant 0 : index
    %418 = vector.load %arg19[%c39, %c0_396] : memref<64x35xf32, #tpu.memory_space<vmem>>, vector<1x35xf32>
    %c0_397 = arith.constant 0 : index
    %c1365 = arith.constant 1365 : index
    %419 = vector.load %arg20[%c0_397, %c1365] : memref<1x2240xf32, #tpu.memory_space<vmem>>, vector<1x35xf32>
    tpu.vector_store %arg20[%c0_397, %c1365], %418 {strides = array<i32>} : memref<1x2240xf32, #tpu.memory_space<vmem>>, vector<1x35xf32>,
    %c40 = arith.constant 40 : index
    %c0_398 = arith.constant 0 : index
    %420 = vector.load %arg19[%c40, %c0_398] : memref<64x35xf32, #tpu.memory_space<vmem>>, vector<1x35xf32>
    %c0_399 = arith.constant 0 : index
    %c1400 = arith.constant 1400 : index
    %421 = vector.load %arg20[%c0_399, %c1400] : memref<1x2240xf32, #tpu.memory_space<vmem>>, vector<1x35xf32>
    tpu.vector_store %arg20[%c0_399, %c1400], %420 {strides = array<i32>} : memref<1x2240xf32, #tpu.memory_space<vmem>>, vector<1x35xf32>,
    %c41 = arith.constant 41 : index
    %c0_400 = arith.constant 0 : index
    %422 = vector.load %arg19[%c41, %c0_400] : memref<64x35xf32, #tpu.memory_space<vmem>>, vector<1x35xf32>
    %c0_401 = arith.constant 0 : index
    %c1435 = arith.constant 1435 : index
    %423 = vector.load %arg20[%c0_401, %c1435] : memref<1x2240xf32, #tpu.memory_space<vmem>>, vector<1x35xf32>
    tpu.vector_store %arg20[%c0_401, %c1435], %422 {strides = array<i32>} : memref<1x2240xf32, #tpu.memory_space<vmem>>, vector<1x35xf32>,
    %c42 = arith.constant 42 : index
    %c0_402 = arith.constant 0 : index
    %424 = vector.load %arg19[%c42, %c0_402] : memref<64x35xf32, #tpu.memory_space<vmem>>, vector<1x35xf32>
    %c0_403 = arith.constant 0 : index
    %c1470 = arith.constant 1470 : index
    %425 = vector.load %arg20[%c0_403, %c1470] : memref<1x2240xf32, #tpu.memory_space<vmem>>, vector<1x35xf32>
    tpu.vector_store %arg20[%c0_403, %c1470], %424 {strides = array<i32>} : memref<1x2240xf32, #tpu.memory_space<vmem>>, vector<1x35xf32>,
    %c43 = arith.constant 43 : index
    %c0_404 = arith.constant 0 : index
    %426 = vector.load %arg19[%c43, %c0_404] : memref<64x35xf32, #tpu.memory_space<vmem>>, vector<1x35xf32>
    %c0_405 = arith.constant 0 : index
    %c1505 = arith.constant 1505 : index
    %427 = vector.load %arg20[%c0_405, %c1505] : memref<1x2240xf32, #tpu.memory_space<vmem>>, vector<1x35xf32>
    tpu.vector_store %arg20[%c0_405, %c1505], %426 {strides = array<i32>} : memref<1x2240xf32, #tpu.memory_space<vmem>>, vector<1x35xf32>,
    %c44 = arith.constant 44 : index
    %c0_406 = arith.constant 0 : index
    %428 = vector.load %arg19[%c44, %c0_406] : memref<64x35xf32, #tpu.memory_space<vmem>>, vector<1x35xf32>
    %c0_407 = arith.constant 0 : index
    %c1540 = arith.constant 1540 : index
    %429 = vector.load %arg20[%c0_407, %c1540] : memref<1x2240xf32, #tpu.memory_space<vmem>>, vector<1x35xf32>
    tpu.vector_store %arg20[%c0_407, %c1540], %428 {strides = array<i32>} : memref<1x2240xf32, #tpu.memory_space<vmem>>, vector<1x35xf32>,
    %c45 = arith.constant 45 : index
    %c0_408 = arith.constant 0 : index
    %430 = vector.load %arg19[%c45, %c0_408] : memref<64x35xf32, #tpu.memory_space<vmem>>, vector<1x35xf32>
    %c0_409 = arith.constant 0 : index
    %c1575 = arith.constant 1575 : index
    %431 = vector.load %arg20[%c0_409, %c1575] : memref<1x2240xf32, #tpu.memory_space<vmem>>, vector<1x35xf32>
    tpu.vector_store %arg20[%c0_409, %c1575], %430 {strides = array<i32>} : memref<1x2240xf32, #tpu.memory_space<vmem>>, vector<1x35xf32>,
    %c46 = arith.constant 46 : index
    %c0_410 = arith.constant 0 : index
    %432 = vector.load %arg19[%c46, %c0_410] : memref<64x35xf32, #tpu.memory_space<vmem>>, vector<1x35xf32>
    %c0_411 = arith.constant 0 : index
    %c1610 = arith.constant 1610 : index
    %433 = vector.load %arg20[%c0_411, %c1610] : memref<1x2240xf32, #tpu.memory_space<vmem>>, vector<1x35xf32>
    tpu.vector_store %arg20[%c0_411, %c1610], %432 {strides = array<i32>} : memref<1x2240xf32, #tpu.memory_space<vmem>>, vector<1x35xf32>,
    %c47 = arith.constant 47 : index
    %c0_412 = arith.constant 0 : index
    %434 = vector.load %arg19[%c47, %c0_412] : memref<64x35xf32, #tpu.memory_space<vmem>>, vector<1x35xf32>
    %c0_413 = arith.constant 0 : index
    %c1645 = arith.constant 1645 : index
    %435 = vector.load %arg20[%c0_413, %c1645] : memref<1x2240xf32, #tpu.memory_space<vmem>>, vector<1x35xf32>
    tpu.vector_store %arg20[%c0_413, %c1645], %434 {strides = array<i32>} : memref<1x2240xf32, #tpu.memory_space<vmem>>, vector<1x35xf32>,
    %c48 = arith.constant 48 : index
    %c0_414 = arith.constant 0 : index
    %436 = vector.load %arg19[%c48, %c0_414] : memref<64x35xf32, #tpu.memory_space<vmem>>, vector<1x35xf32>
    %c0_415 = arith.constant 0 : index
    %c1680 = arith.constant 1680 : index
    %437 = vector.load %arg20[%c0_415, %c1680] : memref<1x2240xf32, #tpu.memory_space<vmem>>, vector<1x35xf32>
    tpu.vector_store %arg20[%c0_415, %c1680], %436 {strides = array<i32>} : memref<1x2240xf32, #tpu.memory_space<vmem>>, vector<1x35xf32>,
    %c49 = arith.constant 49 : index
    %c0_416 = arith.constant 0 : index
    %438 = vector.load %arg19[%c49, %c0_416] : memref<64x35xf32, #tpu.memory_space<vmem>>, vector<1x35xf32>
    %c0_417 = arith.constant 0 : index
    %c1715 = arith.constant 1715 : index
    %439 = vector.load %arg20[%c0_417, %c1715] : memref<1x2240xf32, #tpu.memory_space<vmem>>, vector<1x35xf32>
    tpu.vector_store %arg20[%c0_417, %c1715], %438 {strides = array<i32>} : memref<1x2240xf32, #tpu.memory_space<vmem>>, vector<1x35xf32>,
    %c50 = arith.constant 50 : index
    %c0_418 = arith.constant 0 : index
    %440 = vector.load %arg19[%c50, %c0_418] : memref<64x35xf32, #tpu.memory_space<vmem>>, vector<1x35xf32>
    %c0_419 = arith.constant 0 : index
    %c1750 = arith.constant 1750 : index
    %441 = vector.load %arg20[%c0_419, %c1750] : memref<1x2240xf32, #tpu.memory_space<vmem>>, vector<1x35xf32>
    tpu.vector_store %arg20[%c0_419, %c1750], %440 {strides = array<i32>} : memref<1x2240xf32, #tpu.memory_space<vmem>>, vector<1x35xf32>,
    %c51 = arith.constant 51 : index
    %c0_420 = arith.constant 0 : index
    %442 = vector.load %arg19[%c51, %c0_420] : memref<64x35xf32, #tpu.memory_space<vmem>>, vector<1x35xf32>
    %c0_421 = arith.constant 0 : index
    %c1785 = arith.constant 1785 : index
    %443 = vector.load %arg20[%c0_421, %c1785] : memref<1x2240xf32, #tpu.memory_space<vmem>>, vector<1x35xf32>
    tpu.vector_store %arg20[%c0_421, %c1785], %442 {strides = array<i32>} : memref<1x2240xf32, #tpu.memory_space<vmem>>, vector<1x35xf32>,
    %c52 = arith.constant 52 : index
    %c0_422 = arith.constant 0 : index
    %444 = vector.load %arg19[%c52, %c0_422] : memref<64x35xf32, #tpu.memory_space<vmem>>, vector<1x35xf32>
    %c0_423 = arith.constant 0 : index
    %c1820 = arith.constant 1820 : index
    %445 = vector.load %arg20[%c0_423, %c1820] : memref<1x2240xf32, #tpu.memory_space<vmem>>, vector<1x35xf32>
    tpu.vector_store %arg20[%c0_423, %c1820], %444 {strides = array<i32>} : memref<1x2240xf32, #tpu.memory_space<vmem>>, vector<1x35xf32>,
    %c53 = arith.constant 53 : index
    %c0_424 = arith.constant 0 : index
    %446 = vector.load %arg19[%c53, %c0_424] : memref<64x35xf32, #tpu.memory_space<vmem>>, vector<1x35xf32>
    %c0_425 = arith.constant 0 : index
    %c1855 = arith.constant 1855 : index
    %447 = vector.load %arg20[%c0_425, %c1855] : memref<1x2240xf32, #tpu.memory_space<vmem>>, vector<1x35xf32>
    tpu.vector_store %arg20[%c0_425, %c1855], %446 {strides = array<i32>} : memref<1x2240xf32, #tpu.memory_space<vmem>>, vector<1x35xf32>,
    %c54 = arith.constant 54 : index
    %c0_426 = arith.constant 0 : index
    %448 = vector.load %arg19[%c54, %c0_426] : memref<64x35xf32, #tpu.memory_space<vmem>>, vector<1x35xf32>
    %c0_427 = arith.constant 0 : index
    %c1890 = arith.constant 1890 : index
    %449 = vector.load %arg20[%c0_427, %c1890] : memref<1x2240xf32, #tpu.memory_space<vmem>>, vector<1x35xf32>
    tpu.vector_store %arg20[%c0_427, %c1890], %448 {strides = array<i32>} : memref<1x2240xf32, #tpu.memory_space<vmem>>, vector<1x35xf32>,
    %c55 = arith.constant 55 : index
    %c0_428 = arith.constant 0 : index
    %450 = vector.load %arg19[%c55, %c0_428] : memref<64x35xf32, #tpu.memory_space<vmem>>, vector<1x35xf32>
    %c0_429 = arith.constant 0 : index
    %c1925 = arith.constant 1925 : index
    %451 = vector.load %arg20[%c0_429, %c1925] : memref<1x2240xf32, #tpu.memory_space<vmem>>, vector<1x35xf32>
    tpu.vector_store %arg20[%c0_429, %c1925], %450 {strides = array<i32>} : memref<1x2240xf32, #tpu.memory_space<vmem>>, vector<1x35xf32>,
    %c56 = arith.constant 56 : index
    %c0_430 = arith.constant 0 : index
    %452 = vector.load %arg19[%c56, %c0_430] : memref<64x35xf32, #tpu.memory_space<vmem>>, vector<1x35xf32>
    %c0_431 = arith.constant 0 : index
    %c1960 = arith.constant 1960 : index
    %453 = vector.load %arg20[%c0_431, %c1960] : memref<1x2240xf32, #tpu.memory_space<vmem>>, vector<1x35xf32>
    tpu.vector_store %arg20[%c0_431, %c1960], %452 {strides = array<i32>} : memref<1x2240xf32, #tpu.memory_space<vmem>>, vector<1x35xf32>,
    %c57 = arith.constant 57 : index
    %c0_432 = arith.constant 0 : index
    %454 = vector.load %arg19[%c57, %c0_432] : memref<64x35xf32, #tpu.memory_space<vmem>>, vector<1x35xf32>
    %c0_433 = arith.constant 0 : index
    %c1995 = arith.constant 1995 : index
    %455 = vector.load %arg20[%c0_433, %c1995] : memref<1x2240xf32, #tpu.memory_space<vmem>>, vector<1x35xf32>
    tpu.vector_store %arg20[%c0_433, %c1995], %454 {strides = array<i32>} : memref<1x2240xf32, #tpu.memory_space<vmem>>, vector<1x35xf32>,
    %c58 = arith.constant 58 : index
    %c0_434 = arith.constant 0 : index
    %456 = vector.load %arg19[%c58, %c0_434] : memref<64x35xf32, #tpu.memory_space<vmem>>, vector<1x35xf32>
    %c0_435 = arith.constant 0 : index
    %c2030 = arith.constant 2030 : index
    %457 = vector.load %arg20[%c0_435, %c2030] : memref<1x2240xf32, #tpu.memory_space<vmem>>, vector<1x35xf32>
    tpu.vector_store %arg20[%c0_435, %c2030], %456 {strides = array<i32>} : memref<1x2240xf32, #tpu.memory_space<vmem>>, vector<1x35xf32>,
    %c59 = arith.constant 59 : index
    %c0_436 = arith.constant 0 : index
    %458 = vector.load %arg19[%c59, %c0_436] : memref<64x35xf32, #tpu.memory_space<vmem>>, vector<1x35xf32>
    %c0_437 = arith.constant 0 : index
    %c2065 = arith.constant 2065 : index
    %459 = vector.load %arg20[%c0_437, %c2065] : memref<1x2240xf32, #tpu.memory_space<vmem>>, vector<1x35xf32>
    tpu.vector_store %arg20[%c0_437, %c2065], %458 {strides = array<i32>} : memref<1x2240xf32, #tpu.memory_space<vmem>>, vector<1x35xf32>,
    %c60 = arith.constant 60 : index
    %c0_438 = arith.constant 0 : index
    %460 = vector.load %arg19[%c60, %c0_438] : memref<64x35xf32, #tpu.memory_space<vmem>>, vector<1x35xf32>
    %c0_439 = arith.constant 0 : index
    %c2100 = arith.constant 2100 : index
    %461 = vector.load %arg20[%c0_439, %c2100] : memref<1x2240xf32, #tpu.memory_space<vmem>>, vector<1x35xf32>
    tpu.vector_store %arg20[%c0_439, %c2100], %460 {strides = array<i32>} : memref<1x2240xf32, #tpu.memory_space<vmem>>, vector<1x35xf32>,
    %c61 = arith.constant 61 : index
    %c0_440 = arith.constant 0 : index
    %462 = vector.load %arg19[%c61, %c0_440] : memref<64x35xf32, #tpu.memory_space<vmem>>, vector<1x35xf32>
    %c0_441 = arith.constant 0 : index
    %c2135 = arith.constant 2135 : index
    %463 = vector.load %arg20[%c0_441, %c2135] : memref<1x2240xf32, #tpu.memory_space<vmem>>, vector<1x35xf32>
    tpu.vector_store %arg20[%c0_441, %c2135], %462 {strides = array<i32>} : memref<1x2240xf32, #tpu.memory_space<vmem>>, vector<1x35xf32>,
    %c62 = arith.constant 62 : index
    %c0_442 = arith.constant 0 : index
    %464 = vector.load %arg19[%c62, %c0_442] : memref<64x35xf32, #tpu.memory_space<vmem>>, vector<1x35xf32>
    %c0_443 = arith.constant 0 : index
    %c2170 = arith.constant 2170 : index
    %465 = vector.load %arg20[%c0_443, %c2170] : memref<1x2240xf32, #tpu.memory_space<vmem>>, vector<1x35xf32>
    tpu.vector_store %arg20[%c0_443, %c2170], %464 {strides = array<i32>} : memref<1x2240xf32, #tpu.memory_space<vmem>>, vector<1x35xf32>,
    %c63 = arith.constant 63 : index
    %c0_444 = arith.constant 0 : index
    %466 = vector.load %arg19[%c63, %c0_444] : memref<64x35xf32, #tpu.memory_space<vmem>>, vector<1x35xf32>
    %c0_445 = arith.constant 0 : index
    %c2205 = arith.constant 2205 : index
    %467 = vector.load %arg20[%c0_445, %c2205] : memref<1x2240xf32, #tpu.memory_space<vmem>>, vector<1x35xf32>
    tpu.vector_store %arg20[%c0_445, %c2205], %466 {strides = array<i32>} : memref<1x2240xf32, #tpu.memory_space<vmem>>, vector<1x35xf32>,
    %c0_446 = arith.constant 0 : index
    %c0_447 = arith.constant 0 : index
    %468 = vector.load %arg20[%c0_446, %c0_447] : memref<1x2240xf32, #tpu.memory_space<vmem>>, vector<1x2240xf32>
    %469 = arith.truncf %468 : vector<1x2240xf32> to vector<1x2240xbf16>
    %c0_448 = arith.constant 0 : index
    %c0_449 = arith.constant 0 : index
    %470 = vector.load %arg14[%c0_448, %c0_449] : memref<2240x128xbf16, #tpu.memory_space<vmem>>, vector<2240x128xbf16>
    %cst_450 = arith.constant dense<0.000000e+00> : vector<1x128xf32>
    %471 = tpu.matmul %469, %470, %cst_450 {dimension_numbers = #tpu.dot_dimension_numbers<[1], [0], [0], [1], [0, 0, 1, 1], [], []>} : vector<1x2240xbf16>, vector<2240x128xbf16>, vector<1x128xf32> -> vector<1x128xf32>
    %c0_451 = arith.constant 0 : index
    %c0_452 = arith.constant 0 : index
    %472 = vector.load %arg15[%c0_451, %c0_452] : memref<1x128xf32, #tpu.memory_space<vmem>>, vector<1x128xf32>
    %473 = arith.addf %471, %472 : vector<1x128xf32>
    %474 = tpu.iota {dimensions = array<i32: 1>} : vector<1x128xi32>
    %c64_i32 = arith.constant 64 : i32
    %475 = vector.broadcast %c64_i32 : i32 to vector<1x128xi32>
    %476 = arith.cmpi eq, %474, %475 : vector<1x128xi32>
    %477 = math.tanh %473 : vector<1x128xf32>
    %478 = arith.select %476, %477, %473 : vector<1x128xi1>, vector<1x128xf32>
    %c0_453 = arith.constant 0 : index
    %c0_454 = arith.constant 0 : index
    %c0_455 = arith.constant 0 : index
    %479 = vector.load %arg16[%c0_453, %c0_454, %c0_455] : memref<1x1x128xf32, #tpu.memory_space<vmem>>, vector<1x1x128xf32>
    %480 = vector.shape_cast %479 : vector<1x1x128xf32> to vector<1x128xf32>
    %481 = vector.shape_cast %478 : vector<1x128xf32> to vector<1x1x128xf32>
    tpu.vector_store %arg16[%c0_453, %c0_454, %c0_455], %481 {strides = array<i32>} : memref<1x1x128xf32, #tpu.memory_space<vmem>>, vector<1x1x128xf32>,
    return
  }
  func.func @transform_0(%arg0: i32) -> (i32, i32, i32) {
    %c0_i32 = arith.constant 0 : i32
    %c0_i32_0 = arith.constant 0 : i32
    %c0_i32_1 = arith.constant 0 : i32
    return %arg0, %c0_i32, %c0_i32_0 : i32, i32, i32
  }
  func.func @transform_1(%arg0: i32) -> (i32, i32) {
    %c0_i32 = arith.constant 0 : i32
    %c0_i32_0 = arith.constant 0 : i32
    %c0_i32_1 = arith.constant 0 : i32
    return %c0_i32, %c0_i32_0 : i32, i32
  }
  func.func @transform_2(%arg0: i32) -> (i32, i32) {
    %c0_i32 = arith.constant 0 : i32
    %c0_i32_0 = arith.constant 0 : i32
    %c0_i32_1 = arith.constant 0 : i32
    return %c0_i32, %c0_i32_0 : i32, i32
  }
  func.func @transform_3(%arg0: i32) -> (i32, i32) {
    %c0_i32 = arith.constant 0 : i32
    %c0_i32_0 = arith.constant 0 : i32
    %c0_i32_1 = arith.constant 0 : i32
    return %c0_i32, %c0_i32_0 : i32, i32
  }
  func.func @transform_4(%arg0: i32) -> (i32, i32) {
    %c0_i32 = arith.constant 0 : i32
    %c0_i32_0 = arith.constant 0 : i32
    %c0_i32_1 = arith.constant 0 : i32
    return %c0_i32, %c0_i32_0 : i32, i32
  }
  func.func @transform_5(%arg0: i32) -> (i32, i32) {
    %c0_i32 = arith.constant 0 : i32
    %c0_i32_0 = arith.constant 0 : i32
    %c0_i32_1 = arith.constant 0 : i32
    return %c0_i32, %c0_i32_0 : i32, i32
  }
  func.func @transform_6(%arg0: i32) -> (i32, i32) {
    %c0_i32 = arith.constant 0 : i32
    %c0_i32_0 = arith.constant 0 : i32
    %c0_i32_1 = arith.constant 0 : i32
    return %c0_i32, %c0_i32_0 : i32, i32
  }
  func.func @transform_7(%arg0: i32) -> (i32, i32) {
    %c0_i32 = arith.constant 0 : i32
    %c0_i32_0 = arith.constant 0 : i32
    %c0_i32_1 = arith.constant 0 : i32
    return %c0_i32, %c0_i32_0 : i32, i32
  }
  func.func @transform_8(%arg0: i32) -> (i32, i32) {
    %c0_i32 = arith.constant 0 : i32
    %c0_i32_0 = arith.constant 0 : i32
    %c0_i32_1 = arith.constant 0 : i32
    return %c0_i32, %c0_i32_0 : i32, i32
  }
  func.func @transform_9(%arg0: i32) -> (i32, i32) {
    %c0_i32 = arith.constant 0 : i32
    %c0_i32_0 = arith.constant 0 : i32
    %c0_i32_1 = arith.constant 0 : i32
    return %c0_i32, %c0_i32_0 : i32, i32
  }
  func.func @transform_10(%arg0: i32) -> (i32, i32) {
    %c0_i32 = arith.constant 0 : i32
    %c0_i32_0 = arith.constant 0 : i32
    %c0_i32_1 = arith.constant 0 : i32
    return %c0_i32, %c0_i32_0 : i32, i32
  }
  func.func @transform_11(%arg0: i32) -> (i32, i32) {
    %c0_i32 = arith.constant 0 : i32
    %c0_i32_0 = arith.constant 0 : i32
    %c0_i32_1 = arith.constant 0 : i32
    return %c0_i32, %c0_i32_0 : i32, i32
  }
  func.func @transform_12(%arg0: i32) -> (i32, i32) {
    %c0_i32 = arith.constant 0 : i32
    %c0_i32_0 = arith.constant 0 : i32
    %c0_i32_1 = arith.constant 0 : i32
    return %c0_i32, %c0_i32_0 : i32, i32
  }
  func.func @transform_13(%arg0: i32) -> (i32, i32) {
    %c0_i32 = arith.constant 0 : i32
    %c0_i32_0 = arith.constant 0 : i32
    %c0_i32_1 = arith.constant 0 : i32
    return %c0_i32, %c0_i32_0 : i32, i32
  }
  func.func @transform_14(%arg0: i32) -> (i32, i32) {
    %c0_i32 = arith.constant 0 : i32
    %c0_i32_0 = arith.constant 0 : i32
    %c0_i32_1 = arith.constant 0 : i32
    return %c0_i32, %c0_i32_0 : i32, i32
  }
  func.func @transform_15(%arg0: i32) -> (i32, i32, i32) {
    %c0_i32 = arith.constant 0 : i32
    %c0_i32_0 = arith.constant 0 : i32
    %c0_i32_1 = arith.constant 0 : i32
    return %arg0, %c0_i32, %c0_i32_0 : i32, i32, i32
  }
}

</mosaic_0001>

<llo_original>
// kernel: resnet_forward.1
$region0: #{resnet_forward.1}
  #allocation0 [shape = 'u32[]', space=smem, size = 0x4, offset = 0x4, fixed_abs, tag = 'smem constant byte address 0x4 - core index']
  #allocation1 [shape = 'u32[144,128]{1,0:T(1,128)}', space=vmem, size = 0x12000, scoped, tag = 'internal scratch']
  #allocation2 [shape = 'f32[96,32]{1,0:T(8,128)}', space=vmem, size = 0xc000, scoped, tag = 'scratch operand']
  #allocation3 [shape = 'f32[64,288]{1,0:T(8,128)}', space=vmem, size = 0x18000, scoped, tag = 'scratch operand']
  #allocation4 [shape = 'f32[64,35]{1,0:T(8,128)}', space=vmem, size = 0x8000, scoped, tag = 'scratch operand']
  #allocation5 [shape = 'f32[1,2240]{1,0:T(1,128)}', space=vmem, size = 0x2400, scoped, tag = 'scratch operand']
  %s0 = inlined_call_operand.vmem [shape: f32[2,64,32], index: 0, kind: input, shape index: {}]
  %s1 = inlined_call_operand.vmem [shape: bf16[288,32], index: 1, kind: input, shape index: {}]
  %s2 = inlined_call_operand.vmem [shape: f32[1,32], index: 2, kind: input, shape index: {}]
  %s3 = inlined_call_operand.vmem [shape: bf16[288,32], index: 3, kind: input, shape index: {}]
  %s4 = inlined_call_operand.vmem [shape: f32[1,32], index: 4, kind: input, shape index: {}]
  %s5 = inlined_call_operand.vmem [shape: bf16[288,32], index: 5, kind: input, shape index: {}]
  %s6 = inlined_call_operand.vmem [shape: f32[1,32], index: 6, kind: input, shape index: {}]
  %s7 = inlined_call_operand.vmem [shape: bf16[288,32], index: 7, kind: input, shape index: {}]
  %s8 = inlined_call_operand.vmem [shape: f32[1,32], index: 8, kind: input, shape index: {}]
  %s9 = inlined_call_operand.vmem [shape: bf16[288,32], index: 9, kind: input, shape index: {}]
  %s10 = inlined_call_operand.vmem [shape: f32[1,32], index: 10, kind: input, shape index: {}]
  %s11 = inlined_call_operand.vmem [shape: bf16[288,35], index: 11, kind: input, shape index: {}]
  %s12 = inlined_call_operand.vmem [shape: f32[1,35], index: 12, kind: input, shape index: {}]
  %s13 = inlined_call_operand.vmem [shape: bf16[2240,128], index: 13, kind: input, shape index: {}]
  %s14 = inlined_call_operand.vmem [shape: f32[1,128], index: 14, kind: input, shape index: {}]
  %s15 = inlined_call_operand.vmem [shape: f32[2,1,128], index: 15, kind: output, shape index: {}]
  %s16 = sld [smem:[#allocation0]]
  $region93: #{resnet_forward.1} parent=0
    _
  %s18 = ssub.s32 1, %s16
  %s19 = scalar_select 0, %s18, %s16
  loop: start=0, step=1, limit=4
  $region2: #{resnet_forward.1} parent=0 // loop_pre_header
    _
  $region3: #{resnet_forward.1} parent=0 // loop_header
    %s21 = sphi 0, %s25
    %p22 = scmp.ge.s32.totalorder %s21, 4
    %s31 = sphi 0, %s33
    %s34 = sphi 0, %s31
    %s35 = sphi 0, %s34
    %s51 = sphi 0, %s35
    %s55 = sphi 0, %s55
    %s57 = sphi 0, %s55
    %s58 = sphi 0, %s57
    %s72 = sphi 0, %s58
    %s76 = sphi 0, %s76
    %s78 = sphi 0, %s76
    %s79 = sphi 0, %s78
    %s93 = sphi 0, %s79
    %s97 = sphi 0, %s97
    %s99 = sphi 0, %s97
    %s100 = sphi 0, %s99
    %s114 = sphi 0, %s100
    %s118 = sphi 0, %s118
    %s120 = sphi 0, %s118
    %s121 = sphi 0, %s120
    %s135 = sphi 0, %s121
    %s139 = sphi 0, %s139
    %s141 = sphi 0, %s139
    %s142 = sphi 0, %s141
    %s156 = sphi 0, %s142
    %s160 = sphi 0, %s160
    %s162 = sphi 0, %s160
    %s163 = sphi 0, %s162
    %s177 = sphi 0, %s163
    %s181 = sphi 0, %s181
    %s183 = sphi 0, %s181
    %s184 = sphi 0, %s183
    %s198 = sphi 0, %s184
    %s202 = sphi 0, %s202
    %s204 = sphi 0, %s202
    %s205 = sphi 0, %s204
    %s219 = sphi 0, %s205
    %s223 = sphi 0, %s223
    %s225 = sphi 0, %s223
    %s226 = sphi 0, %s225
    %s240 = sphi 0, %s226
    %s244 = sphi 0, %s244
    %s246 = sphi 0, %s244
    %s247 = sphi 0, %s246
    %s261 = sphi 0, %s247
    %s265 = sphi 0, %s265
    %s267 = sphi 0, %s265
    %s268 = sphi 0, %s267
    %s282 = sphi 0, %s268
    %s286 = sphi 0, %s286
    %s288 = sphi 0, %s286
    %s289 = sphi 0, %s288
    %s303 = sphi 0, %s289
    %s307 = sphi 0, %s307
    %s309 = sphi 0, %s307
    %s310 = sphi 0, %s309
    %s324 = sphi 0, %s310
    %s328 = sphi 0, %s328
    %s330 = sphi 0, %s328
    %s331 = sphi 0, %s330
    %s345 = sphi 0, %s331
    %s351 = sphi 0, %s353
    %s354 = sphi 0, %s351
    %s355 = sphi 0, %s354
    %s371 = sphi 0, %s355
  $region4: #{resnet_forward.1} parent=0 // loop_header_branch
    %24 = sbr.rel (%p22) target = $region8
  $region5: #{resnet_forward.1} parent=0 // loop_body
    %s26 = ssub.s32 %s21, 1
    %s27 = ssub.s32 %s21, 2
    %s28 = sadd.s32 %s21, 1
    %s29 = ssub.s32 %s21, %s28
    %p30 = scmp.eq.s32.totalorder %s29, 0
    %s32 = sadd.s32 %s31, 1
    %s33 = scalar_select %p30, %s31, %s32
    %p36 = pneg %p30
    %p37 = scmp.eq.s32.totalorder %s21, 1
    %p38 = por %p36, %p37
    %p39 = scmp.ne.s32.totalorder %s31, %s34
    %p40 = scmp.eq.s32.totalorder %s21, 0
    %p41 = por %p39, %p40
    %p42 = scmp.ne.s32.totalorder %s31, %s34
    %p43 = scmp.eq.s32.totalorder %s26, 1
    %p44 = por %p42, %p43
    %p45 = scmp.ne.s32.totalorder %s34, %s35
    %p46 = scmp.eq.s32.totalorder %s26, 0
    %p47 = por %p45, %p46
    %p48 = scmp.ne.s32.totalorder %s34, %s35
    %p49 = scmp.eq.s32.totalorder %s27, 1
    %p50 = por %p48, %p49
    %p52 = scmp.ne.s32.totalorder %s35, %s51
    %p53 = scmp.eq.s32.totalorder %s27, 0
    %p54 = por %p52, %p53
    %s56 = sadd.s32 %s55, 1
    %p59 = scmp.eq.s32.totalorder %s21, 1
    %p60 = scmp.ne.s32.totalorder %s55, %s57
    %p61 = scmp.eq.s32.totalorder %s21, 0
    %p62 = por %p60, %p61
    %p63 = scmp.ne.s32.totalorder %s55, %s57
    %p64 = scmp.eq.s32.totalorder %s26, 1
    %p65 = por %p63, %p64
    %p66 = scmp.ne.s32.totalorder %s57, %s58
    %p67 = scmp.eq.s32.totalorder %s26, 0
    %p68 = por %p66, %p67
    %p69 = scmp.ne.s32.totalorder %s57, %s58
    %p70 = scmp.eq.s32.totalorder %s27, 1
    %p71 = por %p69, %p70
    %p73 = scmp.ne.s32.totalorder %s58, %s72
    %p74 = scmp.eq.s32.totalorder %s27, 0
    %p75 = por %p73, %p74
    %s77 = sadd.s32 %s76, 1
    %p80 = scmp.eq.s32.totalorder %s21, 1
    %p81 = scmp.ne.s32.totalorder %s76, %s78
    %p82 = scmp.eq.s32.totalorder %s21, 0
    %p83 = por %p81, %p82
    %p84 = scmp.ne.s32.totalorder %s76, %s78
    %p85 = scmp.eq.s32.totalorder %s26, 1
    %p86 = por %p84, %p85
    %p87 = scmp.ne.s32.totalorder %s78, %s79
    %p88 = scmp.eq.s32.totalorder %s26, 0
    %p89 = por %p87, %p88
    %p90 = scmp.ne.s32.totalorder %s78, %s79
    %p91 = scmp.eq.s32.totalorder %s27, 1
    %p92 = por %p90, %p91
    %p94 = scmp.ne.s32.totalorder %s79, %s93
    %p95 = scmp.eq.s32.totalorder %s27, 0
    %p96 = por %p94, %p95
    %s98 = sadd.s32 %s97, 1
    %p101 = scmp.eq.s32.totalorder %s21, 1
    %p102 = scmp.ne.s32.totalorder %s97, %s99
    %p103 = scmp.eq.s32.totalorder %s21, 0
    %p104 = por %p102, %p103
    %p105 = scmp.ne.s32.totalorder %s97, %s99
    %p106 = scmp.eq.s32.totalorder %s26, 1
    %p107 = por %p105, %p106
    %p108 = scmp.ne.s32.totalorder %s99, %s100
    %p109 = scmp.eq.s32.totalorder %s26, 0
    %p110 = por %p108, %p109
    %p111 = scmp.ne.s32.totalorder %s99, %s100
    %p112 = scmp.eq.s32.totalorder %s27, 1
    %p113 = por %p111, %p112
    %p115 = scmp.ne.s32.totalorder %s100, %s114
    %p116 = scmp.eq.s32.totalorder %s27, 0
    %p117 = por %p115, %p116
    %s119 = sadd.s32 %s118, 1
    %p122 = scmp.eq.s32.totalorder %s21, 1
    %p123 = scmp.ne.s32.totalorder %s118, %s120
    %p124 = scmp.eq.s32.totalorder %s21, 0
    %p125 = por %p123, %p124
    %p126 = scmp.ne.s32.totalorder %s118, %s120
    %p127 = scmp.eq.s32.totalorder %s26, 1
    %p128 = por %p126, %p127
    %p129 = scmp.ne.s32.totalorder %s120, %s121
    %p130 = scmp.eq.s32.totalorder %s26, 0
    %p131 = por %p129, %p130
    %p132 = scmp.ne.s32.totalorder %s120, %s121
    %p133 = scmp.eq.s32.totalorder %s27, 1
    %p134 = por %p132, %p133
    %p136 = scmp.ne.s32.totalorder %s121, %s135
    %p137 = scmp.eq.s32.totalorder %s27, 0
    %p138 = por %p136, %p137
    %s140 = sadd.s32 %s139, 1
    %p143 = scmp.eq.s32.totalorder %s21, 1
    %p144 = scmp.ne.s32.totalorder %s139, %s141
    %p145 = scmp.eq.s32.totalorder %s21, 0
    %p146 = por %p144, %p145
    %p147 = scmp.ne.s32.totalorder %s139, %s141
    %p148 = scmp.eq.s32.totalorder %s26, 1
    %p149 = por %p147, %p148
    %p150 = scmp.ne.s32.totalorder %s141, %s142
    %p151 = scmp.eq.s32.totalorder %s26, 0
    %p152 = por %p150, %p151
    %p153 = scmp.ne.s32.totalorder %s141, %s142
    %p154 = scmp.eq.s32.totalorder %s27, 1
    %p155 = por %p153, %p154
    %p157 = scmp.ne.s32.totalorder %s142, %s156
    %p158 = scmp.eq.s32.totalorder %s27, 0
    %p159 = por %p157, %p158
    %s161 = sadd.s32 %s160, 1
    %p164 = scmp.eq.s32.totalorder %s21, 1
    %p165 = scmp.ne.s32.totalorder %s160, %s162
    %p166 = scmp.eq.s32.totalorder %s21, 0
    %p167 = por %p165, %p166
    %p168 = scmp.ne.s32.totalorder %s160, %s162
    %p169 = scmp.eq.s32.totalorder %s26, 1
    %p170 = por %p168, %p169
    %p171 = scmp.ne.s32.totalorder %s162, %s163
    %p172 = scmp.eq.s32.totalorder %s26, 0
    %p173 = por %p171, %p172
    %p174 = scmp.ne.s32.totalorder %s162, %s163
    %p175 = scmp.eq.s32.totalorder %s27, 1
    %p176 = por %p174, %p175
    %p178 = scmp.ne.s32.totalorder %s163, %s177
    %p179 = scmp.eq.s32.totalorder %s27, 0
    %p180 = por %p178, %p179
    %s182 = sadd.s32 %s181, 1
    %p185 = scmp.eq.s32.totalorder %s21, 1
    %p186 = scmp.ne.s32.totalorder %s181, %s183
    %p187 = scmp.eq.s32.totalorder %s21, 0
    %p188 = por %p186, %p187
    %p189 = scmp.ne.s32.totalorder %s181, %s183
    %p190 = scmp.eq.s32.totalorder %s26, 1
    %p191 = por %p189, %p190
    %p192 = scmp.ne.s32.totalorder %s183, %s184
    %p193 = scmp.eq.s32.totalorder %s26, 0
    %p194 = por %p192, %p193
    %p195 = scmp.ne.s32.totalorder %s183, %s184
    %p196 = scmp.eq.s32.totalorder %s27, 1
    %p197 = por %p195, %p196
    %p199 = scmp.ne.s32.totalorder %s184, %s198
    %p200 = scmp.eq.s32.totalorder %s27, 0
    %p201 = por %p199, %p200
    %s203 = sadd.s32 %s202, 1
    %p206 = scmp.eq.s32.totalorder %s21, 1
    %p207 = scmp.ne.s32.totalorder %s202, %s204
    %p208 = scmp.eq.s32.totalorder %s21, 0
    %p209 = por %p207, %p208
    %p210 = scmp.ne.s32.totalorder %s202, %s204
    %p211 = scmp.eq.s32.totalorder %s26, 1
    %p212 = por %p210, %p211
    %p213 = scmp.ne.s32.totalorder %s204, %s205
    %p214 = scmp.eq.s32.totalorder %s26, 0
    %p215 = por %p213, %p214
    %p216 = scmp.ne.s32.totalorder %s204, %s205
    %p217 = scmp.eq.s32.totalorder %s27, 1
    %p218 = por %p216, %p217
    %p220 = scmp.ne.s32.totalorder %s205, %s219
    %p221 = scmp.eq.s32.totalorder %s27, 0
    %p222 = por %p220, %p221
    %s224 = sadd.s32 %s223, 1
    %p227 = scmp.eq.s32.totalorder %s21, 1
    %p228 = scmp.ne.s32.totalorder %s223, %s225
    %p229 = scmp.eq.s32.totalorder %s21, 0
    %p230 = por %p228, %p229
    %p231 = scmp.ne.s32.totalorder %s223, %s225
    %p232 = scmp.eq.s32.totalorder %s26, 1
    %p233 = por %p231, %p232
    %p234 = scmp.ne.s32.totalorder %s225, %s226
    %p235 = scmp.eq.s32.totalorder %s26, 0
    %p236 = por %p234, %p235
    %p237 = scmp.ne.s32.totalorder %s225, %s226
    %p238 = scmp.eq.s32.totalorder %s27, 1
    %p239 = por %p237, %p238
    %p241 = scmp.ne.s32.totalorder %s226, %s240
    %p242 = scmp.eq.s32.totalorder %s27, 0
    %p243 = por %p241, %p242
    %s245 = sadd.s32 %s244, 1
    %p248 = scmp.eq.s32.totalorder %s21, 1
    %p249 = scmp.ne.s32.totalorder %s244, %s246
    %p250 = scmp.eq.s32.totalorder %s21, 0
    %p251 = por %p249, %p250
    %p252 = scmp.ne.s32.totalorder %s244, %s246
    %p253 = scmp.eq.s32.totalorder %s26, 1
    %p254 = por %p252, %p253
    %p255 = scmp.ne.s32.totalorder %s246, %s247
    %p256 = scmp.eq.s32.totalorder %s26, 0
    %p257 = por %p255, %p256
    %p258 = scmp.ne.s32.totalorder %s246, %s247
    %p259 = scmp.eq.s32.totalorder %s27, 1
    %p260 = por %p258, %p259
    %p262 = scmp.ne.s32.totalorder %s247, %s261
    %p263 = scmp.eq.s32.totalorder %s27, 0
    %p264 = por %p262, %p263
    %s266 = sadd.s32 %s265, 1
    %p269 = scmp.eq.s32.totalorder %s21, 1
    %p270 = scmp.ne.s32.totalorder %s265, %s267
    %p271 = scmp.eq.s32.totalorder %s21, 0
    %p272 = por %p270, %p271
    %p273 = scmp.ne.s32.totalorder %s265, %s267
    %p274 = scmp.eq.s32.totalorder %s26, 1
    %p275 = por %p273, %p274
    %p276 = scmp.ne.s32.totalorder %s267, %s268
    %p277 = scmp.eq.s32.totalorder %s26, 0
    %p278 = por %p276, %p277
    %p279 = scmp.ne.s32.totalorder %s267, %s268
    %p280 = scmp.eq.s32.totalorder %s27, 1
    %p281 = por %p279, %p280
    %p283 = scmp.ne.s32.totalorder %s268, %s282
    %p284 = scmp.eq.s32.totalorder %s27, 0
    %p285 = por %p283, %p284
    %s287 = sadd.s32 %s286, 1
    %p290 = scmp.eq.s32.totalorder %s21, 1
    %p291 = scmp.ne.s32.totalorder %s286, %s288
    %p292 = scmp.eq.s32.totalorder %s21, 0
    %p293 = por %p291, %p292
    %p294 = scmp.ne.s32.totalorder %s286, %s288
    %p295 = scmp.eq.s32.totalorder %s26, 1
    %p296 = por %p294, %p295
    %p297 = scmp.ne.s32.totalorder %s288, %s289
    %p298 = scmp.eq.s32.totalorder %s26, 0
    %p299 = por %p297, %p298
    %p300 = scmp.ne.s32.totalorder %s288, %s289
    %p301 = scmp.eq.s32.totalorder %s27, 1
    %p302 = por %p300, %p301
    %p304 = scmp.ne.s32.totalorder %s289, %s303
    %p305 = scmp.eq.s32.totalorder %s27, 0
    %p306 = por %p304, %p305
    %s308 = sadd.s32 %s307, 1
    %p311 = scmp.eq.s32.totalorder %s21, 1
    %p312 = scmp.ne.s32.totalorder %s307, %s309
    %p313 = scmp.eq.s32.totalorder %s21, 0
    %p314 = por %p312, %p313
    %p315 = scmp.ne.s32.totalorder %s307, %s309
    %p316 = scmp.eq.s32.totalorder %s26, 1
    %p317 = por %p315, %p316
    %p318 = scmp.ne.s32.totalorder %s309, %s310
    %p319 = scmp.eq.s32.totalorder %s26, 0
    %p320 = por %p318, %p319
    %p321 = scmp.ne.s32.totalorder %s309, %s310
    %p322 = scmp.eq.s32.totalorder %s27, 1
    %p323 = por %p321, %p322
    %p325 = scmp.ne.s32.totalorder %s310, %s324
    %p326 = scmp.eq.s32.totalorder %s27, 0
    %p327 = por %p325, %p326
    %s329 = sadd.s32 %s328, 1
    %p332 = scmp.eq.s32.totalorder %s21, 1
    %p333 = scmp.ne.s32.totalorder %s328, %s330
    %p334 = scmp.eq.s32.totalorder %s21, 0
    %p335 = por %p333, %p334
    %p336 = scmp.ne.s32.totalorder %s328, %s330
    %p337 = scmp.eq.s32.totalorder %s26, 1
    %p338 = por %p336, %p337
    %p339 = scmp.ne.s32.totalorder %s330, %s331
    %p340 = scmp.eq.s32.totalorder %s26, 0
    %p341 = por %p339, %p340
    %p342 = scmp.ne.s32.totalorder %s330, %s331
    %p343 = scmp.eq.s32.totalorder %s27, 1
    %p344 = por %p342, %p343
    %p346 = scmp.ne.s32.totalorder %s331, %s345
    %p347 = scmp.eq.s32.totalorder %s27, 0
    %p348 = por %p346, %p347
    %s349 = ssub.s32 %s21, %s28
    %p350 = scmp.eq.s32.totalorder %s349, 0
    %s352 = sadd.s32 %s351, 1
    %s353 = scalar_select %p350, %s351, %s352
    %p356 = pneg %p350
    %p357 = scmp.eq.s32.totalorder %s21, 1
    %p358 = por %p356, %p357
    %p359 = scmp.ne.s32.totalorder %s351, %s354
    %p360 = scmp.eq.s32.totalorder %s21, 0
    %p361 = por %p359, %p360
    %p362 = scmp.ne.s32.totalorder %s351, %s354
    %p363 = scmp.eq.s32.totalorder %s26, 1
    %p364 = por %p362, %p363
    %p365 = scmp.ne.s32.totalorder %s354, %s355
    %p366 = scmp.eq.s32.totalorder %s26, 0
    %p367 = por %p365, %p366
    %p368 = scmp.ne.s32.totalorder %s354, %s355
    %p369 = scmp.eq.s32.totalorder %s27, 1
    %p370 = por %p368, %p369
    %p372 = scmp.ne.s32.totalorder %s355, %s371
    %p373 = scmp.eq.s32.totalorder %s27, 0
    %p374 = por %p372, %p373
    %p375 = scmp.le.s32.totalorder 1, %s21
    %p376 = scmp.lt.s32.totalorder %s21, 3
    %p377 = pnand %p375, %p376
    %p378 = pneg %p377
    // Predicated region
    $region9: #{resnet_forward.1} parent=5 // pred_check
      _
    $region10: #{resnet_forward.1} parent=5 // pred_check_branch
      %380 = sbr.rel (%p377) target = $region12
    $region11: #{resnet_forward.1} parent=5 // pred_region
      %s381 = ssub.s32 %s21, 1
      // Predicated region
      $region13: #{resnet_forward.1} parent=11 // pred_check
        %p382 = pneg %p68
      $region14: #{resnet_forward.1} parent=11 // pred_check_branch
        %384 = sbr.rel (%p382) target = $region16
      $region15: #{resnet_forward.1} parent=11 // pred_region
        _
      $region16: #{resnet_forward.1} parent=11 // pred_fallthru
        _
      // Predicated region
      $region17: #{resnet_forward.1} parent=11 // pred_check
        %p385 = pneg %p89
      $region18: #{resnet_forward.1} parent=11 // pred_check_branch
        %387 = sbr.rel (%p385) target = $region20
      $region19: #{resnet_forward.1} parent=11 // pred_region
        _
      $region20: #{resnet_forward.1} parent=11 // pred_fallthru
        _
      // Predicated region
      $region21: #{resnet_forward.1} parent=11 // pred_check
        %p388 = pneg %p110
      $region22: #{resnet_forward.1} parent=11 // pred_check_branch
        %390 = sbr.rel (%p388) target = $region24
      $region23: #{resnet_forward.1} parent=11 // pred_region
        _
      $region24: #{resnet_forward.1} parent=11 // pred_fallthru
        _
      // Predicated region
      $region25: #{resnet_forward.1} parent=11 // pred_check
        %p391 = pneg %p131
      $region26: #{resnet_forward.1} parent=11 // pred_check_branch
        %393 = sbr.rel (%p391) target = $region28
      $region27: #{resnet_forward.1} parent=11 // pred_region
        _
      $region28: #{resnet_forward.1} parent=11 // pred_fallthru
        _
      // Predicated region
      $region29: #{resnet_forward.1} parent=11 // pred_check
        %p394 = pneg %p152
      $region30: #{resnet_forward.1} parent=11 // pred_check_branch
        %396 = sbr.rel (%p394) target = $region32
      $region31: #{resnet_forward.1} parent=11 // pred_region
        _
      $region32: #{resnet_forward.1} parent=11 // pred_fallthru
        _
      // Predicated region
      $region33: #{resnet_forward.1} parent=11 // pred_check
        %p397 = pneg %p173
      $region34: #{resnet_forward.1} parent=11 // pred_check_branch
        %399 = sbr.rel (%p397) target = $region36
      $region35: #{resnet_forward.1} parent=11 // pred_region
        _
      $region36: #{resnet_forward.1} parent=11 // pred_fallthru
        _
      // Predicated region
      $region37: #{resnet_forward.1} parent=11 // pred_check
        %p400 = pneg %p194
      $region38: #{resnet_forward.1} parent=11 // pred_check_branch
        %402 = sbr.rel (%p400) target = $region40
      $region39: #{resnet_forward.1} parent=11 // pred_region
        _
      $region40: #{resnet_forward.1} parent=11 // pred_fallthru
        _
      // Predicated region
      $region41: #{resnet_forward.1} parent=11 // pred_check
        %p403 = pneg %p215
      $region42: #{resnet_forward.1} parent=11 // pred_check_branch
        %405 = sbr.rel (%p403) target = $region44
      $region43: #{resnet_forward.1} parent=11 // pred_region
        _
      $region44: #{resnet_forward.1} parent=11 // pred_fallthru
        _
      // Predicated region
      $region45: #{resnet_forward.1} parent=11 // pred_check
        %p406 = pneg %p236
      $region46: #{resnet_forward.1} parent=11 // pred_check_branch
        %408 = sbr.rel (%p406) target = $region48
      $region47: #{resnet_forward.1} parent=11 // pred_region
        _
      $region48: #{resnet_forward.1} parent=11 // pred_fallthru
        _
      // Predicated region
      $region49: #{resnet_forward.1} parent=11 // pred_check
        %p409 = pneg %p257
      $region50: #{resnet_forward.1} parent=11 // pred_check_branch
        %411 = sbr.rel (%p409) target = $region52
      $region51: #{resnet_forward.1} parent=11 // pred_region
        _
      $region52: #{resnet_forward.1} parent=11 // pred_fallthru
        _
      // Predicated region
      $region53: #{resnet_forward.1} parent=11 // pred_check
        %p412 = pneg %p278
      $region54: #{resnet_forward.1} parent=11 // pred_check_branch
        %414 = sbr.rel (%p412) target = $region56
      $region55: #{resnet_forward.1} parent=11 // pred_region
        _
      $region56: #{resnet_forward.1} parent=11 // pred_fallthru
        _
      // Predicated region
      $region57: #{resnet_forward.1} parent=11 // pred_check
        %p415 = pneg %p299
      $region58: #{resnet_forward.1} parent=11 // pred_check_branch
        %417 = sbr.rel (%p415) target = $region60
      $region59: #{resnet_forward.1} parent=11 // pred_region
        _
      $region60: #{resnet_forward.1} parent=11 // pred_fallthru
        _
      // Predicated region
      $region61: #{resnet_forward.1} parent=11 // pred_check
        %p418 = pneg %p320
      $region62: #{resnet_forward.1} parent=11 // pred_check_branch
        %420 = sbr.rel (%p418) target = $region64
      $region63: #{resnet_forward.1} parent=11 // pred_region
        _
      $region64: #{resnet_forward.1} parent=11 // pred_fallthru
        _
      // Predicated region
      $region65: #{resnet_forward.1} parent=11 // pred_check
        %p421 = pneg %p341
      $region66: #{resnet_forward.1} parent=11 // pred_check_branch
        %423 = sbr.rel (%p421) target = $region68
      $region67: #{resnet_forward.1} parent=11 // pred_region
        _
      $region68: #{resnet_forward.1} parent=11 // pred_fallthru
        _
    $region12: #{resnet_forward.1} parent=5 // pred_fallthru
      _
    %p424 = scmp.lt.s32.totalorder %s21, 2
    // Predicated region
    $region69: #{resnet_forward.1} parent=5 // pred_check
      %p425 = pneg %p424
    $region70: #{resnet_forward.1} parent=5 // pred_check_branch
      %427 = sbr.rel (%p425) target = $region72
    $region71: #{resnet_forward.1} parent=5 // pred_region
      // Predicated region
      $region73: #{resnet_forward.1} parent=71 // pred_check
        %p428 = pneg %p41
      $region74: #{resnet_forward.1} parent=71 // pred_check_branch
        %430 = sbr.rel (%p428) target = $region76
      $region75: #{resnet_forward.1} parent=71 // pred_region
        %p431 = scmp.lt.s32.totalorder %s21, 1
        %s432 = scalar_select %p431, %s21, 1
        %s433 = smul.addr %s432, 8
        %s434 = smul.addr %s433, 8
        %s435 = scalar_lea.vmem %s0, %s434
      $region76: #{resnet_forward.1} parent=71 // pred_fallthru
        _
    $region72: #{resnet_forward.1} parent=5 // pred_fallthru
      _
    %p436 = scmp.le.s32.totalorder 1, %s21
    %p437 = scmp.lt.s32.totalorder %s21, 3
    %p438 = pnand %p436, %p437
    %p439 = pneg %p438
    // Predicated region
    $region77: #{resnet_forward.1} parent=5 // pred_check
      _
    $region78: #{resnet_forward.1} parent=5 // pred_check_branch
      %441 = sbr.rel (%p438) target = $region80
    $region79: #{resnet_forward.1} parent=5 // pred_region
      %s442 = ssub.s32 %s21, 1
      %p443 = scmp.lt.s32.totalorder %s26, 1
      %s444 = scalar_select %p443, %s26, 1
      %s445 = smul.addr %s444, 8
      %s446 = smul.addr %s445, 8
      %s447 = scalar_lea.vmem %s0, %s446
      %p448 = pneg %p47
      %p449 = pneg %p44
      %p450 = pneg %p68
      %p451 = pneg %p65
      %p452 = pneg %p89
      %p453 = pneg %p86
      %p454 = pneg %p110
      %p455 = pneg %p107
      %p456 = pneg %p131
      %p457 = pneg %p128
      %p458 = pneg %p152
      %p459 = pneg %p149
      %p460 = pneg %p173
      %p461 = pneg %p170
      %p462 = pneg %p194
      %p463 = pneg %p191
      %p464 = pneg %p215
      %p465 = pneg %p212
      %p466 = pneg %p236
      %p467 = pneg %p233
      %p468 = pneg %p257
      %p469 = pneg %p254
      %p470 = pneg %p278
      %p471 = pneg %p275
      %p472 = pneg %p299
      %p473 = pneg %p296
      %p474 = pneg %p320
      %p475 = pneg %p317
      %p476 = pneg %p341
      %p477 = pneg %p338
      %p478 = pneg %p367
      %p479 = pneg %p364
      %p480 = scmp.lt.s32.totalorder %s26, 1
      %s481 = scalar_select %p480, %s26, 1
      %s482 = scalar_lea.vmem %s15, %s481
      %p483 = scmp.lt.s32.totalorder %s26, 1
      %s484 = scalar_select %p483, %s26, 1
      %s485 = smul.addr %s484, 8
      %s486 = smul.addr %s485, 8
      %s487 = scalar_lea.vmem %s0, %s486
      %p488 = scmp.lt.s32.totalorder %s26, 1
      %s489 = scalar_select %p488, %s26, 1
      %s490 = scalar_lea.vmem %s15, %s489
      %vm492 = vcmask 261120
      %493 = vst.msk [vmem:[#allocation2] sm:$0xff] %vm492, 0.0
      %494 = vst.msk [vmem:[#allocation2 + $0x8] sm:$0xff] %vm492, 0.0
      %495 = vst.msk [vmem:[#allocation2 + $0x10] sm:$0xff] %vm492, 0.0
      %496 = vst.msk [vmem:[#allocation2 + $0x18] sm:$0xff] %vm492, 0.0
      %497 = vst.msk [vmem:[#allocation2 + $0x20] sm:$0xff] %vm492, 0.0
      %498 = vst.msk [vmem:[#allocation2 + $0x28] sm:$0xff] %vm492, 0.0
      %499 = vst.msk [vmem:[#allocation2 + $0x30] sm:$0xff] %vm492, 0.0
      %500 = vst.msk [vmem:[#allocation2 + $0x38] sm:$0xff] %vm492, 0.0
      %501 = vst.msk [vmem:[#allocation2 + $0x40] sm:$0xff] %vm492, 0.0
      %502 = vst.msk [vmem:[#allocation2 + $0x48] sm:$0xff] %vm492, 0.0
      %503 = vst.msk [vmem:[#allocation2 + $0x50] sm:$0xff] %vm492, 0.0
      %504 = vst.msk [vmem:[#allocation2 + $0x58] sm:$0xff] %vm492, 0.0
      %v505 = vlaneseq
      %v506 = vshrl.u32 %v505, 7
      %v507 = vadd.s32 %v506, 8
      %v508 = vadd.s32 %v506, 16
      %v509 = vadd.s32 %v506, 24
      %v510 = vadd.s32 %v506, 32
      %v511 = vadd.s32 %v506, 40
      %v512 = vadd.s32 %v506, 48
      %v513 = vadd.s32 %v506, 56
      %vm514 = vcmp.lt.s32.totalorder %v506, 0
      %v515 = vsub.s32 0, %v506
      %v516 = vsel %vm514, %v515, %v506
      %v517 = vshrl.u32 %v516, 3
      %v518 = vand.u32 %v516, 7
      %v519 = vsub.s32 0, %v518
      %v520 = vsel %vm514, %v519, %v518
      %vm521 = vcmp.lt.s32.totalorder %v507, 0
      %v522 = vsub.s32 0, %v507
      %v523 = vsel %vm521, %v522, %v507
      %v524 = vshrl.u32 %v523, 3
      %v525 = vand.u32 %v523, 7
      %v526 = vsub.s32 0, %v525
      %v527 = vsel %vm521, %v526, %v525
      %vm528 = vcmp.lt.s32.totalorder %v508, 0
      %v529 = vsub.s32 0, %v508
      %v530 = vsel %vm528, %v529, %v508
      %v531 = vshrl.u32 %v530, 3
      %v532 = vand.u32 %v530, 7
      %v533 = vsub.s32 0, %v532
      %v534 = vsel %vm528, %v533, %v532
      %vm535 = vcmp.lt.s32.totalorder %v509, 0
      %v536 = vsub.s32 0, %v509
      %v537 = vsel %vm535, %v536, %v509
      %v538 = vshrl.u32 %v537, 3
      %v539 = vand.u32 %v537, 7
      %v540 = vsub.s32 0, %v539
      %v541 = vsel %vm535, %v540, %v539
      %vm542 = vcmp.lt.s32.totalorder %v510, 0
      %v543 = vsub.s32 0, %v510
      %v544 = vsel %vm542, %v543, %v510
      %v545 = vshrl.u32 %v544, 3
      %v546 = vand.u32 %v544, 7
      %v547 = vsub.s32 0, %v546
      %v548 = vsel %vm542, %v547, %v546
      %vm549 = vcmp.lt.s32.totalorder %v511, 0
      %v550 = vsub.s32 0, %v511
      %v551 = vsel %vm549, %v550, %v511
      %v552 = vshrl.u32 %v551, 3
      %v553 = vand.u32 %v551, 7
      %v554 = vsub.s32 0, %v553
      %v555 = vsel %vm549, %v554, %v553
      %vm556 = vcmp.lt.s32.totalorder %v512, 0
      %v557 = vsub.s32 0, %v512
      %v558 = vsel %vm556, %v557, %v512
      %v559 = vshrl.u32 %v558, 3
      %v560 = vand.u32 %v558, 7
      %v561 = vsub.s32 0, %v560
      %v562 = vsel %vm556, %v561, %v560
      %vm563 = vcmp.lt.s32.totalorder %v513, 0
      %v564 = vsub.s32 0, %v513
      %v565 = vsel %vm563, %v564, %v513
      %v566 = vshrl.u32 %v565, 3
      %v567 = vand.u32 %v565, 7
      %v568 = vsub.s32 0, %v567
      %v569 = vsel %vm563, %v568, %v567
      %vm570 = vcmp.ne.s32.totalorder %v520, 0
      %vm571 = vcmp.ne.s32.totalorder %v527, 0
      %vm572 = vcmp.ne.s32.totalorder %v534, 0
      %vm573 = vcmp.ne.s32.totalorder %v541, 0
      %vm574 = vcmp.ne.s32.totalorder %v548, 0
      %vm575 = vcmp.ne.s32.totalorder %v555, 0
      %vm576 = vcmp.ne.s32.totalorder %v562, 0
      %vm577 = vcmp.ne.s32.totalorder %v569, 0
      %vm578 = vcmp.lt.s32.totalorder %v520, 0
      %vm579 = vcmp.lt.s32.totalorder %v527, 0
      %vm580 = vcmp.lt.s32.totalorder %v534, 0
      %vm581 = vcmp.lt.s32.totalorder %v541, 0
      %vm582 = vcmp.lt.s32.totalorder %v548, 0
      %vm583 = vcmp.lt.s32.totalorder %v555, 0
      %vm584 = vcmp.lt.s32.totalorder %v562, 0
      %vm585 = vcmp.lt.s32.totalorder %v569, 0
      %vm586 = vmand %vm578, %vm570
      %vm587 = vmand %vm579, %vm571
      %vm588 = vmand %vm580, %vm572
      %vm589 = vmand %vm581, %vm573
      %vm590 = vmand %vm582, %vm574
      %vm591 = vmand %vm583, %vm575
      %vm592 = vmand %vm584, %vm576
      %vm593 = vmand %vm585, %vm577
      %v594 = vadd.s32 %v520, 8
      %v595 = vadd.s32 %v527, 8
      %v596 = vadd.s32 %v534, 8
      %v597 = vadd.s32 %v541, 8
      %v598 = vadd.s32 %v548, 8
      %v599 = vadd.s32 %v555, 8
      %v600 = vadd.s32 %v562, 8
      %v601 = vadd.s32 %v569, 8
      %v602 = vsel %vm586, %v594, %v520
      %v603 = vsel %vm587, %v595, %v527
      %v604 = vsel %vm588, %v596, %v534
      %v605 = vsel %vm589, %v597, %v541
      %v606 = vsel %vm590, %v598, %v548
      %v607 = vsel %vm591, %v599, %v555
      %v608 = vsel %vm592, %v600, %v562
      %v609 = vsel %vm593, %v601, %v569
      %vm610 = vcmp.ge.s32.totalorder %v602, 1
      %vm611 = vcmp.ge.s32.totalorder %v603, 1
      %vm612 = vcmp.ge.s32.totalorder %v604, 1
      %vm613 = vcmp.ge.s32.totalorder %v605, 1
      %vm614 = vcmp.ge.s32.totalorder %v606, 1
      %vm615 = vcmp.ge.s32.totalorder %v607, 1
      %vm616 = vcmp.ge.s32.totalorder %v608, 1
      %vm617 = vcmp.ge.s32.totalorder %v609, 1
      %vm618 = vcmp.le.s32.totalorder %v602, 6
      %vm619 = vcmp.le.s32.totalorder %v603, 6
      %vm620 = vcmp.le.s32.totalorder %v604, 6
      %vm621 = vcmp.le.s32.totalorder %v605, 6
      %vm622 = vcmp.le.s32.totalorder %v606, 6
      %vm623 = vcmp.le.s32.totalorder %v607, 6
      %vm624 = vcmp.le.s32.totalorder %v608, 6
      %vm625 = vcmp.le.s32.totalorder %v609, 6
      %v626 = vld [vmem:[%s487] sm:$0xff]
      %v627 = vld [vmem:[%s487 + $0x8] sm:$0xff]
      %v628 = vld [vmem:[%s487 + $0x10] sm:$0xff]
      %v629 = vld [vmem:[%s487 + $0x18] sm:$0xff]
      %v630 = vld [vmem:[%s487 + $0x20] sm:$0xff]
      %v631 = vld [vmem:[%s487 + $0x28] sm:$0xff]
      %v632 = vld [vmem:[%s487 + $0x30] sm:$0xff]
      %v633 = vld [vmem:[%s487 + $0x38] sm:$0xff]
      %634 = vst.msk [vmem:[#allocation2 + $0x10] sm:$0xff] %vm492, %v626
      %635 = vst.msk [vmem:[#allocation2 + $0x18] sm:$0xff] %vm492, %v627
      %636 = vst.msk [vmem:[#allocation2 + $0x20] sm:$0xff] %vm492, %v628
      %637 = vst.msk [vmem:[#allocation2 + $0x28] sm:$0xff] %vm492, %v629
      %638 = vst.msk [vmem:[#allocation2 + $0x30] sm:$0xff] %vm492, %v630
      %639 = vst.msk [vmem:[#allocation2 + $0x38] sm:$0xff] %vm492, %v631
      %640 = vst.msk [vmem:[#allocation2 + $0x40] sm:$0xff] %vm492, %v632
      %641 = vst.msk [vmem:[#allocation2 + $0x48] sm:$0xff] %vm492, %v633
      %v642 = vld [vmem:[#allocation2 + $0x7] sm:$0xff]
      %v643 = vld [vmem:[#allocation2 + $0xf] sm:$0xff]
      %v644 = vld [vmem:[#allocation2 + $0x17] sm:$0xff]
      %v645 = vld [vmem:[#allocation2 + $0x1f] sm:$0xff]
      %v646 = vld [vmem:[#allocation2 + $0x27] sm:$0xff]
      %v647 = vld [vmem:[#allocation2 + $0x2f] sm:$0xff]
      %v648 = vld [vmem:[#allocation2 + $0x37] sm:$0xff]
      %v649 = vld [vmem:[#allocation2 + $0x3f] sm:$0xff]
      %v650 = vsel %vm610, 1, 0
      %v651 = vsel %vm611, 1, 0
      %v652 = vsel %vm612, 1, 0
      %v653 = vsel %vm613, 1, 0
      %v654 = vsel %vm614, 1, 0
      %v655 = vsel %vm615, 1, 0
      %v656 = vsel %vm616, 1, 0
      %v657 = vsel %vm617, 1, 0
      %vm658 = vcmp.eq.s32.totalorder %v650, 1
      %vm659 = vcmp.eq.s32.totalorder %v651, 1
      %vm660 = vcmp.eq.s32.totalorder %v652, 1
      %vm661 = vcmp.eq.s32.totalorder %v653, 1
      %vm662 = vcmp.eq.s32.totalorder %v654, 1
      %vm663 = vcmp.eq.s32.totalorder %v655, 1
      %vm664 = vcmp.eq.s32.totalorder %v656, 1
      %vm665 = vcmp.eq.s32.totalorder %v657, 1
      %v666 = vsel %vm658, %v642, 0.0
      %v667 = vsel %vm659, %v643, 0.0
      %v668 = vsel %vm660, %v644, 0.0
      %v669 = vsel %vm661, %v645, 0.0
      %v670 = vsel %vm662, %v646, 0.0
      %v671 = vsel %vm663, %v647, 0.0
      %v672 = vsel %vm664, %v648, 0.0
      %v673 = vsel %vm665, %v649, 0.0
      %674 = vst.msk [vmem:[#allocation3] sm:$0xff] %vm492, %v666
      %675 = vst.msk [vmem:[#allocation3 + $0x18] sm:$0xff] %vm492, %v667
      %676 = vst.msk [vmem:[#allocation3 + $0x30] sm:$0xff] %vm492, %v668
      %677 = vst.msk [vmem:[#allocation3 + $0x48] sm:$0xff] %vm492, %v669
      %678 = vst.msk [vmem:[#allocation3 + $0x60] sm:$0xff] %vm492, %v670
      %679 = vst.msk [vmem:[#allocation3 + $0x78] sm:$0xff] %vm492, %v671
      %680 = vst.msk [vmem:[#allocation3 + $0x90] sm:$0xff] %vm492, %v672
      %681 = vst.msk [vmem:[#allocation3 + $0xa8] sm:$0xff] %vm492, %v673
      %v682 = vld [vmem:[#allocation2 + $0x8] sm:$0xff]
      %v683 = vld [vmem:[#allocation2 + $0x10] sm:$0xff]
      %v684 = vld [vmem:[#allocation2 + $0x18] sm:$0xff]
      %v685 = vld [vmem:[#allocation2 + $0x20] sm:$0xff]
      %v686 = vld [vmem:[#allocation2 + $0x28] sm:$0xff]
      %v687 = vld [vmem:[#allocation2 + $0x30] sm:$0xff]
      %v688 = vld [vmem:[#allocation2 + $0x38] sm:$0xff]
      %v689 = vld [vmem:[#allocation2 + $0x40] sm:$0xff]
      %698 = vrot.lane.b32.xlu0 %v682, 32
      %v699 = vpop.permute.xlu0 %698
      %700 = vrot.lane.b32.xlu0 %v683, 32
      %v701 = vpop.permute.xlu0 %700
      %702 = vrot.lane.b32.xlu0 %v684, 32
      %v703 = vpop.permute.xlu0 %702
      %704 = vrot.lane.b32.xlu0 %v685, 32
      %v705 = vpop.permute.xlu0 %704
      %706 = vrot.lane.b32.xlu0 %v686, 32
      %v707 = vpop.permute.xlu0 %706
      %708 = vrot.lane.b32.xlu0 %v687, 32
      %v709 = vpop.permute.xlu0 %708
      %710 = vrot.lane.b32.xlu0 %v688, 32
      %v711 = vpop.permute.xlu0 %710
      %712 = vrot.lane.b32.xlu0 %v689, 32
      %v713 = vpop.permute.xlu0 %712
      %vm722 = vcmask 523520
      %723 = vst.msk [vmem:[#allocation3] sm:$0xff] %vm722, %v699
      %724 = vst.msk [vmem:[#allocation3 + $0x18] sm:$0xff] %vm722, %v701
      %725 = vst.msk [vmem:[#allocation3 + $0x30] sm:$0xff] %vm722, %v703
      %726 = vst.msk [vmem:[#allocation3 + $0x48] sm:$0xff] %vm722, %v705
      %727 = vst.msk [vmem:[#allocation3 + $0x60] sm:$0xff] %vm722, %v707
      %728 = vst.msk [vmem:[#allocation3 + $0x78] sm:$0xff] %vm722, %v709
      %729 = vst.msk [vmem:[#allocation3 + $0x90] sm:$0xff] %vm722, %v711
      %730 = vst.msk [vmem:[#allocation3 + $0xa8] sm:$0xff] %vm722, %v713
      %v731 = vld [vmem:[#allocation2 + $0x9] sm:$0xff]
      %v732 = vld [vmem:[#allocation2 + $0x11] sm:$0xff]
      %v733 = vld [vmem:[#allocation2 + $0x19] sm:$0xff]
      %v734 = vld [vmem:[#allocation2 + $0x21] sm:$0xff]
      %v735 = vld [vmem:[#allocation2 + $0x29] sm:$0xff]
      %v736 = vld [vmem:[#allocation2 + $0x31] sm:$0xff]
      %v737 = vld [vmem:[#allocation2 + $0x39] sm:$0xff]
      %v738 = vld [vmem:[#allocation2 + $0x41] sm:$0xff]
      %v739 = vsel %vm618, 1, 0
      %v740 = vsel %vm619, 1, 0
      %v741 = vsel %vm620, 1, 0
      %v742 = vsel %vm621, 1, 0
      %v743 = vsel %vm622, 1, 0
      %v744 = vsel %vm623, 1, 0
      %v745 = vsel %vm624, 1, 0
      %v746 = vsel %vm625, 1, 0
      %vm747 = vcmp.eq.s32.totalorder %v739, 1
      %vm748 = vcmp.eq.s32.totalorder %v740, 1
      %vm749 = vcmp.eq.s32.totalorder %v741, 1
      %vm750 = vcmp.eq.s32.totalorder %v742, 1
      %vm751 = vcmp.eq.s32.totalorder %v743, 1
      %vm752 = vcmp.eq.s32.totalorder %v744, 1
      %vm753 = vcmp.eq.s32.totalorder %v745, 1
      %vm754 = vcmp.eq.s32.totalorder %v746, 1
      %v755 = vsel %vm747, %v731, 0.0
      %v756 = vsel %vm748, %v732, 0.0
      %v757 = vsel %vm749, %v733, 0.0
      %v758 = vsel %vm750, %v734, 0.0
      %v759 = vsel %vm751, %v735, 0.0
      %v760 = vsel %vm752, %v736, 0.0
      %v761 = vsel %vm753, %v737, 0.0
      %v762 = vsel %vm754, %v738, 0.0
      %771 = vrot.lane.b32.xlu0 %v755, 64
      %v772 = vpop.permute.xlu0 %771
      %773 = vrot.lane.b32.xlu0 %v756, 64
      %v774 = vpop.permute.xlu0 %773
      %775 = vrot.lane.b32.xlu0 %v757, 64
      %v776 = vpop.permute.xlu0 %775
      %777 = vrot.lane.b32.xlu0 %v758, 64
      %v778 = vpop.permute.xlu0 %777
      %779 = vrot.lane.b32.xlu0 %v759, 64
      %v780 = vpop.permute.xlu0 %779
      %781 = vrot.lane.b32.xlu0 %v760, 64
      %v782 = vpop.permute.xlu0 %781
      %783 = vrot.lane.b32.xlu0 %v761, 64
      %v784 = vpop.permute.xlu0 %783
      %785 = vrot.lane.b32.xlu0 %v762, 64
      %v786 = vpop.permute.xlu0 %785
      %vm795 = vcmask 785920
      %796 = vst.msk [vmem:[#allocation3] sm:$0xff] %vm795, %v772
      %797 = vst.msk [vmem:[#allocation3 + $0x18] sm:$0xff] %vm795, %v774
      %798 = vst.msk [vmem:[#allocation3 + $0x30] sm:$0xff] %vm795, %v776
      %799 = vst.msk [vmem:[#allocation3 + $0x48] sm:$0xff] %vm795, %v778
      %800 = vst.msk [vmem:[#allocation3 + $0x60] sm:$0xff] %vm795, %v780
      %801 = vst.msk [vmem:[#allocation3 + $0x78] sm:$0xff] %vm795, %v782
      %802 = vst.msk [vmem:[#allocation3 + $0x90] sm:$0xff] %vm795, %v784
      %803 = vst.msk [vmem:[#allocation3 + $0xa8] sm:$0xff] %vm795, %v786
      %v804 = vld [vmem:[#allocation2 + $0xf] sm:$0xff]
      %v805 = vld [vmem:[#allocation2 + $0x17] sm:$0xff]
      %v806 = vld [vmem:[#allocation2 + $0x1f] sm:$0xff]
      %v807 = vld [vmem:[#allocation2 + $0x27] sm:$0xff]
      %v808 = vld [vmem:[#allocation2 + $0x2f] sm:$0xff]
      %v809 = vld [vmem:[#allocation2 + $0x37] sm:$0xff]
      %v810 = vld [vmem:[#allocation2 + $0x3f] sm:$0xff]
      %v811 = vld [vmem:[#allocation2 + $0x47] sm:$0xff]
      %v812 = vsel %vm658, %v804, 0.0
      %v813 = vsel %vm659, %v805, 0.0
      %v814 = vsel %vm660, %v806, 0.0
      %v815 = vsel %vm661, %v807, 0.0
      %v816 = vsel %vm662, %v808, 0.0
      %v817 = vsel %vm663, %v809, 0.0
      %v818 = vsel %vm664, %v810, 0.0
      %v819 = vsel %vm665, %v811, 0.0
      %828 = vrot.lane.b32.xlu0 %v812, 96
      %v829 = vpop.permute.xlu0 %828
      %830 = vrot.lane.b32.xlu0 %v813, 96
      %v831 = vpop.permute.xlu0 %830
      %832 = vrot.lane.b32.xlu0 %v814, 96
      %v833 = vpop.permute.xlu0 %832
      %834 = vrot.lane.b32.xlu0 %v815, 96
      %v835 = vpop.permute.xlu0 %834
      %836 = vrot.lane.b32.xlu0 %v816, 96
      %v837 = vpop.permute.xlu0 %836
      %838 = vrot.lane.b32.xlu0 %v817, 96
      %v839 = vpop.permute.xlu0 %838
      %840 = vrot.lane.b32.xlu0 %v818, 96
      %v841 = vpop.permute.xlu0 %840
      %842 = vrot.lane.b32.xlu0 %v819, 96
      %v843 = vpop.permute.xlu0 %842
      %vm852 = vcmask 1048320
      %853 = vst.msk [vmem:[#allocation3] sm:$0xff] %vm852, %v829
      %854 = vst.msk [vmem:[#allocation3 + $0x18] sm:$0xff] %vm852, %v831
      %855 = vst.msk [vmem:[#allocation3 + $0x30] sm:$0xff] %vm852, %v833
      %856 = vst.msk [vmem:[#allocation3 + $0x48] sm:$0xff] %vm852, %v835
      %857 = vst.msk [vmem:[#allocation3 + $0x60] sm:$0xff] %vm852, %v837
      %858 = vst.msk [vmem:[#allocation3 + $0x78] sm:$0xff] %vm852, %v839
      %859 = vst.msk [vmem:[#allocation3 + $0x90] sm:$0xff] %vm852, %v841
      %860 = vst.msk [vmem:[#allocation3 + $0xa8] sm:$0xff] %vm852, %v843
      %v861 = vld [vmem:[#allocation2 + $0x10] sm:$0xff]
      %v862 = vld [vmem:[#allocation2 + $0x18] sm:$0xff]
      %v863 = vld [vmem:[#allocation2 + $0x20] sm:$0xff]
      %v864 = vld [vmem:[#allocation2 + $0x28] sm:$0xff]
      %v865 = vld [vmem:[#allocation2 + $0x30] sm:$0xff]
      %v866 = vld [vmem:[#allocation2 + $0x38] sm:$0xff]
      %v867 = vld [vmem:[#allocation2 + $0x40] sm:$0xff]
      %v868 = vld [vmem:[#allocation2 + $0x48] sm:$0xff]
      %869 = vst.msk [vmem:[#allocation3 + $0x8] sm:$0xff] %vm492, %v861
      %870 = vst.msk [vmem:[#allocation3 + $0x20] sm:$0xff] %vm492, %v862
      %871 = vst.msk [vmem:[#allocation3 + $0x38] sm:$0xff] %vm492, %v863
      %872 = vst.msk [vmem:[#allocation3 + $0x50] sm:$0xff] %vm492, %v864
      %873 = vst.msk [vmem:[#allocation3 + $0x68] sm:$0xff] %vm492, %v865
      %874 = vst.msk [vmem:[#allocation3 + $0x80] sm:$0xff] %vm492, %v866
      %875 = vst.msk [vmem:[#allocation3 + $0x98] sm:$0xff] %vm492, %v867
      %876 = vst.msk [vmem:[#allocation3 + $0xb0] sm:$0xff] %vm492, %v868
      %v877 = vld [vmem:[#allocation2 + $0x11] sm:$0xff]
      %v878 = vld [vmem:[#allocation2 + $0x19] sm:$0xff]
      %v879 = vld [vmem:[#allocation2 + $0x21] sm:$0xff]
      %v880 = vld [vmem:[#allocation2 + $0x29] sm:$0xff]
      %v881 = vld [vmem:[#allocation2 + $0x31] sm:$0xff]
      %v882 = vld [vmem:[#allocation2 + $0x39] sm:$0xff]
      %v883 = vld [vmem:[#allocation2 + $0x41] sm:$0xff]
      %v884 = vld [vmem:[#allocation2 + $0x49] sm:$0xff]
      %v885 = vsel %vm747, %v877, 0.0
      %v886 = vsel %vm748, %v878, 0.0
      %v887 = vsel %vm749, %v879, 0.0
      %v888 = vsel %vm750, %v880, 0.0
      %v889 = vsel %vm751, %v881, 0.0
      %v890 = vsel %vm752, %v882, 0.0
      %v891 = vsel %vm753, %v883, 0.0
      %v892 = vsel %vm754, %v884, 0.0
      %901 = vrot.lane.b32.xlu0 %v885, 32
      %v902 = vpop.permute.xlu0 %901
      %903 = vrot.lane.b32.xlu0 %v886, 32
      %v904 = vpop.permute.xlu0 %903
      %905 = vrot.lane.b32.xlu0 %v887, 32
      %v906 = vpop.permute.xlu0 %905
      %907 = vrot.lane.b32.xlu0 %v888, 32
      %v908 = vpop.permute.xlu0 %907
      %909 = vrot.lane.b32.xlu0 %v889, 32
      %v910 = vpop.permute.xlu0 %909
      %911 = vrot.lane.b32.xlu0 %v890, 32
      %v912 = vpop.permute.xlu0 %911
      %913 = vrot.lane.b32.xlu0 %v891, 32
      %v914 = vpop.permute.xlu0 %913
      %915 = vrot.lane.b32.xlu0 %v892, 32
      %v916 = vpop.permute.xlu0 %915
      %925 = vst.msk [vmem:[#allocation3 + $0x8] sm:$0xff] %vm722, %v902
      %926 = vst.msk [vmem:[#allocation3 + $0x20] sm:$0xff] %vm722, %v904
      %927 = vst.msk [vmem:[#allocation3 + $0x38] sm:$0xff] %vm722, %v906
      %928 = vst.msk [vmem:[#allocation3 + $0x50] sm:$0xff] %vm722, %v908
      %929 = vst.msk [vmem:[#allocation3 + $0x68] sm:$0xff] %vm722, %v910
      %930 = vst.msk [vmem:[#allocation3 + $0x80] sm:$0xff] %vm722, %v912
      %931 = vst.msk [vmem:[#allocation3 + $0x98] sm:$0xff] %vm722, %v914
      %932 = vst.msk [vmem:[#allocation3 + $0xb0] sm:$0xff] %vm722, %v916
      %v933 = vld [vmem:[#allocation2 + $0x17] sm:$0xff]
      %v934 = vld [vmem:[#allocation2 + $0x1f] sm:$0xff]
      %v935 = vld [vmem:[#allocation2 + $0x27] sm:$0xff]
      %v936 = vld [vmem:[#allocation2 + $0x2f] sm:$0xff]
      %v937 = vld [vmem:[#allocation2 + $0x37] sm:$0xff]
      %v938 = vld [vmem:[#allocation2 + $0x3f] sm:$0xff]
      %v939 = vld [vmem:[#allocation2 + $0x47] sm:$0xff]
      %v940 = vld [vmem:[#allocation2 + $0x4f] sm:$0xff]
      %v941 = vsel %vm658, %v933, 0.0
      %v942 = vsel %vm659, %v934, 0.0
      %v943 = vsel %vm660, %v935, 0.0
      %v944 = vsel %vm661, %v936, 0.0
      %v945 = vsel %vm662, %v937, 0.0
      %v946 = vsel %vm663, %v938, 0.0
      %v947 = vsel %vm664, %v939, 0.0
      %v948 = vsel %vm665, %v940, 0.0
      %957 = vrot.lane.b32.xlu0 %v941, 64
      %v958 = vpop.permute.xlu0 %957
      %959 = vrot.lane.b32.xlu0 %v942, 64
      %v960 = vpop.permute.xlu0 %959
      %961 = vrot.lane.b32.xlu0 %v943, 64
      %v962 = vpop.permute.xlu0 %961
      %963 = vrot.lane.b32.xlu0 %v944, 64
      %v964 = vpop.permute.xlu0 %963
      %965 = vrot.lane.b32.xlu0 %v945, 64
      %v966 = vpop.permute.xlu0 %965
      %967 = vrot.lane.b32.xlu0 %v946, 64
      %v968 = vpop.permute.xlu0 %967
      %969 = vrot.lane.b32.xlu0 %v947, 64
      %v970 = vpop.permute.xlu0 %969
      %971 = vrot.lane.b32.xlu0 %v948, 64
      %v972 = vpop.permute.xlu0 %971
      %981 = vst.msk [vmem:[#allocation3 + $0x8] sm:$0xff] %vm795, %v958
      %982 = vst.msk [vmem:[#allocation3 + $0x20] sm:$0xff] %vm795, %v960
      %983 = vst.msk [vmem:[#allocation3 + $0x38] sm:$0xff] %vm795, %v962
      %984 = vst.msk [vmem:[#allocation3 + $0x50] sm:$0xff] %vm795, %v964
      %985 = vst.msk [vmem:[#allocation3 + $0x68] sm:$0xff] %vm795, %v966
      %986 = vst.msk [vmem:[#allocation3 + $0x80] sm:$0xff] %vm795, %v968
      %987 = vst.msk [vmem:[#allocation3 + $0x98] sm:$0xff] %vm795, %v970
      %988 = vst.msk [vmem:[#allocation3 + $0xb0] sm:$0xff] %vm795, %v972
      %v989 = vld [vmem:[#allocation2 + $0x18] sm:$0xff]
      %v990 = vld [vmem:[#allocation2 + $0x20] sm:$0xff]
      %v991 = vld [vmem:[#allocation2 + $0x28] sm:$0xff]
      %v992 = vld [vmem:[#allocation2 + $0x30] sm:$0xff]
      %v993 = vld [vmem:[#allocation2 + $0x38] sm:$0xff]
      %v994 = vld [vmem:[#allocation2 + $0x40] sm:$0xff]
      %v995 = vld [vmem:[#allocation2 + $0x48] sm:$0xff]
      %v996 = vld [vmem:[#allocation2 + $0x50] sm:$0xff]
      %1005 = vrot.lane.b32.xlu0 %v989, 96
      %v1006 = vpop.permute.xlu0 %1005
      %1007 = vrot.lane.b32.xlu0 %v990, 96
      %v1008 = vpop.permute.xlu0 %1007
      %1009 = vrot.lane.b32.xlu0 %v991, 96
      %v1010 = vpop.permute.xlu0 %1009
      %1011 = vrot.lane.b32.xlu0 %v992, 96
      %v1012 = vpop.permute.xlu0 %1011
      %1013 = vrot.lane.b32.xlu0 %v993, 96
      %v1014 = vpop.permute.xlu0 %1013
      %1015 = vrot.lane.b32.xlu0 %v994, 96
      %v1016 = vpop.permute.xlu0 %1015
      %1017 = vrot.lane.b32.xlu0 %v995, 96
      %v1018 = vpop.permute.xlu0 %1017
      %1019 = vrot.lane.b32.xlu0 %v996, 96
      %v1020 = vpop.permute.xlu0 %1019
      %1029 = vst.msk [vmem:[#allocation3 + $0x8] sm:$0xff] %vm852, %v1006
      %1030 = vst.msk [vmem:[#allocation3 + $0x20] sm:$0xff] %vm852, %v1008
      %1031 = vst.msk [vmem:[#allocation3 + $0x38] sm:$0xff] %vm852, %v1010
      %1032 = vst.msk [vmem:[#allocation3 + $0x50] sm:$0xff] %vm852, %v1012
      %1033 = vst.msk [vmem:[#allocation3 + $0x68] sm:$0xff] %vm852, %v1014
      %1034 = vst.msk [vmem:[#allocation3 + $0x80] sm:$0xff] %vm852, %v1016
      %1035 = vst.msk [vmem:[#allocation3 + $0x98] sm:$0xff] %vm852, %v1018
      %1036 = vst.msk [vmem:[#allocation3 + $0xb0] sm:$0xff] %vm852, %v1020
      %v1037 = vld [vmem:[#allocation2 + $0x19] sm:$0xff]
      %v1038 = vld [vmem:[#allocation2 + $0x21] sm:$0xff]
      %v1039 = vld [vmem:[#allocation2 + $0x29] sm:$0xff]
      %v1040 = vld [vmem:[#allocation2 + $0x31] sm:$0xff]
      %v1041 = vld [vmem:[#allocation2 + $0x39] sm:$0xff]
      %v1042 = vld [vmem:[#allocation2 + $0x41] sm:$0xff]
      %v1043 = vld [vmem:[#allocation2 + $0x49] sm:$0xff]
      %v1044 = vld [vmem:[#allocation2 + $0x51] sm:$0xff]
      %v1045 = vsel %vm747, %v1037, 0.0
      %v1046 = vsel %vm748, %v1038, 0.0
      %v1047 = vsel %vm749, %v1039, 0.0
      %v1048 = vsel %vm750, %v1040, 0.0
      %v1049 = vsel %vm751, %v1041, 0.0
      %v1050 = vsel %vm752, %v1042, 0.0
      %v1051 = vsel %vm753, %v1043, 0.0
      %v1052 = vsel %vm754, %v1044, 0.0
      %1053 = vst.msk [vmem:[#allocation3 + $0x10] sm:$0xff] %vm492, %v1045
      %1054 = vst.msk [vmem:[#allocation3 + $0x28] sm:$0xff] %vm492, %v1046
      %1055 = vst.msk [vmem:[#allocation3 + $0x40] sm:$0xff] %vm492, %v1047
      %1056 = vst.msk [vmem:[#allocation3 + $0x58] sm:$0xff] %vm492, %v1048
      %1057 = vst.msk [vmem:[#allocation3 + $0x70] sm:$0xff] %vm492, %v1049
      %1058 = vst.msk [vmem:[#allocation3 + $0x88] sm:$0xff] %vm492, %v1050
      %1059 = vst.msk [vmem:[#allocation3 + $0xa0] sm:$0xff] %vm492, %v1051
      %1060 = vst.msk [vmem:[#allocation3 + $0xb8] sm:$0xff] %vm492, %v1052
      %v1061 = vld [vmem:[#allocation3] sm:$0xff]
      %v1062 = vld [vmem:[#allocation3 + $0x8] sm:$0xff]
      %v1063 = vld [vmem:[#allocation3 + $0x10] sm:$0xff]
      %v1064 = vld [vmem:[#allocation3 + $0x18] sm:$0xff]
      %v1065 = vld [vmem:[#allocation3 + $0x20] sm:$0xff]
      %v1066 = vld [vmem:[#allocation3 + $0x28] sm:$0xff]
      %v1067 = vld [vmem:[#allocation3 + $0x30] sm:$0xff]
      %v1068 = vld [vmem:[#allocation3 + $0x38] sm:$0xff]
      %v1069 = vld [vmem:[#allocation3 + $0x40] sm:$0xff]
      %v1070 = vld [vmem:[#allocation3 + $0x48] sm:$0xff]
      %v1071 = vld [vmem:[#allocation3 + $0x50] sm:$0xff]
      %v1072 = vld [vmem:[#allocation3 + $0x58] sm:$0xff]
      %v1073 = vld [vmem:[#allocation3 + $0x60] sm:$0xff]
      %v1074 = vld [vmem:[#allocation3 + $0x68] sm:$0xff]
      %v1075 = vld [vmem:[#allocation3 + $0x70] sm:$0xff]
      %v1076 = vld [vmem:[#allocation3 + $0x78] sm:$0xff]
      %v1077 = vld [vmem:[#allocation3 + $0x80] sm:$0xff]
      %v1078 = vld [vmem:[#allocation3 + $0x88] sm:$0xff]
      %v1079 = vld [vmem:[#allocation3 + $0x90] sm:$0xff]
      %v1080 = vld [vmem:[#allocation3 + $0x98] sm:$0xff]
      %v1081 = vld [vmem:[#allocation3 + $0xa0] sm:$0xff]
      %v1082 = vld [vmem:[#allocation3 + $0xa8] sm:$0xff]
      %v1083 = vld [vmem:[#allocation3 + $0xb0] sm:$0xff]
      %v1084 = vld [vmem:[#allocation3 + $0xb8] sm:$0xff]
      %v1085 = vpack.c.bf16 %v1064, %v1061
      %v1086 = vpack.c.bf16 %v1065, %v1062
      %v1087 = vpack.c.bf16 %v1066, %v1063
      %v1088 = vpack.c.bf16 %v1070, %v1067
      %v1089 = vpack.c.bf16 %v1071, %v1068
      %v1090 = vpack.c.bf16 %v1072, %v1069
      %v1091 = vpack.c.bf16 %v1076, %v1073
      %v1092 = vpack.c.bf16 %v1077, %v1074
      %v1093 = vpack.c.bf16 %v1078, %v1075
      %v1094 = vpack.c.bf16 %v1082, %v1079
      %v1095 = vpack.c.bf16 %v1083, %v1080
      %v1096 = vpack.c.bf16 %v1084, %v1081
      %v1097 = vld [vmem:[%s1] sm:$0xf]
      %v1098 = vld [vmem:[%s1 + $0x4] sm:$0xf]
      %v1099 = vld [vmem:[%s1 + $0x8] sm:$0xf]
      %v1100 = vld [vmem:[%s1 + $0xc] sm:$0xf]
      %v1101 = vld [vmem:[%s1 + $0x10] sm:$0xf]
      %v1102 = vld [vmem:[%s1 + $0x14] sm:$0xf]
      %v1103 = vld [vmem:[%s1 + $0x18] sm:$0xf]
      %v1104 = vld [vmem:[%s1 + $0x1c] sm:$0xf]
      %v1105 = vld [vmem:[%s1 + $0x20] sm:$0xf]
      %v1106 = vld [vmem:[%s1 + $0x24] sm:$0xf]
      %v1107 = vld [vmem:[%s1 + $0x28] sm:$0xf]
      %v1108 = vld [vmem:[%s1 + $0x2c] sm:$0xf]
      %v1109 = vld [vmem:[%s1 + $0x30] sm:$0xf]
      %v1110 = vld [vmem:[%s1 + $0x34] sm:$0xf]
      %v1111 = vld [vmem:[%s1 + $0x38] sm:$0xf]
      %v1112 = vld [vmem:[%s1 + $0x3c] sm:$0xf]
      %v1113 = vld [vmem:[%s1 + $0x40] sm:$0xf]
      %v1114 = vld [vmem:[%s1 + $0x44] sm:$0xf]
      %v1115 = vld [vmem:[%s1 + $0x48] sm:$0xf]
      %v1116 = vld [vmem:[%s1 + $0x4c] sm:$0xf]
      %v1117 = vld [vmem:[%s1 + $0x50] sm:$0xf]
      %v1118 = vld [vmem:[%s1 + $0x54] sm:$0xf]
      %v1119 = vld [vmem:[%s1 + $0x58] sm:$0xf]
      %v1120 = vld [vmem:[%s1 + $0x5c] sm:$0xf]
      %v1121 = vld [vmem:[%s1 + $0x60] sm:$0xf]
      %v1122 = vld [vmem:[%s1 + $0x64] sm:$0xf]
      %v1123 = vld [vmem:[%s1 + $0x68] sm:$0xf]
      %v1124 = vld [vmem:[%s1 + $0x6c] sm:$0xf]
      %v1125 = vld [vmem:[%s1 + $0x70] sm:$0xf]
      %v1126 = vld [vmem:[%s1 + $0x74] sm:$0xf]
      %v1127 = vld [vmem:[%s1 + $0x78] sm:$0xf]
      %v1128 = vld [vmem:[%s1 + $0x7c] sm:$0xf]
      %v1129 = vld [vmem:[%s1 + $0x80] sm:$0xf]
      %v1130 = vld [vmem:[%s1 + $0x84] sm:$0xf]
      %v1131 = vld [vmem:[%s1 + $0x88] sm:$0xf]
      %v1132 = vld [vmem:[%s1 + $0x8c] sm:$0xf]
      %v1133 = vld [vmem:[%s2] sm:$0x1]
      %v1135 = vlaneseq
      %v1136 = vshrl.u32 %v1135, 7
      %v1137 = vsub.s32 0, %v1136
      %v1138 = vrot.slane %v1133, %v1137
      %v1176 = vunpack.c.l.b16 %v1097
      %v1177 = vunpack.c.l.b16 %v1098
      %v1178 = vunpack.c.l.b16 %v1099
      %v1179 = vunpack.c.l.b16 %v1100
      %v1180 = vunpack.c.l.b16 %v1101
      %v1181 = vunpack.c.l.b16 %v1102
      %v1182 = vunpack.c.l.b16 %v1103
      %v1183 = vunpack.c.l.b16 %v1104
      %v1184 = vunpack.c.l.b16 %v1105
      %v1185 = vunpack.c.l.b16 %v1106
      %v1186 = vunpack.c.l.b16 %v1107
      %v1187 = vunpack.c.l.b16 %v1108
      %v1188 = vunpack.c.l.b16 %v1109
      %v1189 = vunpack.c.l.b16 %v1110
      %v1190 = vunpack.c.l.b16 %v1111
      %v1191 = vunpack.c.l.b16 %v1112
      %v1192 = vunpack.c.l.b16 %v1113
      %v1193 = vunpack.c.l.b16 %v1114
      %v1194 = vunpack.c.l.b16 %v1115
      %v1195 = vunpack.c.l.b16 %v1116
      %v1196 = vunpack.c.l.b16 %v1117
      %v1197 = vunpack.c.l.b16 %v1118
      %v1198 = vunpack.c.l.b16 %v1119
      %v1199 = vunpack.c.l.b16 %v1120
      %v1200 = vunpack.c.l.b16 %v1121
      %v1201 = vunpack.c.l.b16 %v1122
      %v1202 = vunpack.c.l.b16 %v1123
      %v1203 = vunpack.c.l.b16 %v1124
      %v1204 = vunpack.c.l.b16 %v1125
      %v1205 = vunpack.c.l.b16 %v1126
      %v1206 = vunpack.c.l.b16 %v1127
      %v1207 = vunpack.c.l.b16 %v1128
      %v1208 = vunpack.c.l.b16 %v1129
      %v1209 = vunpack.c.l.b16 %v1130
      %v1210 = vunpack.c.l.b16 %v1131
      %v1211 = vunpack.c.l.b16 %v1132
      %v1212 = vpack.c.b16 %v1177, %v1176
      %v1213 = vpack.c.b16 %v1179, %v1178
      %v1214 = vpack.c.b16 %v1181, %v1180
      %v1215 = vpack.c.b16 %v1183, %v1182
      %v1216 = vpack.c.b16 %v1185, %v1184
      %v1217 = vpack.c.b16 %v1187, %v1186
      %v1218 = vpack.c.b16 %v1189, %v1188
      %v1219 = vpack.c.b16 %v1191, %v1190
      %v1220 = vpack.c.b16 %v1193, %v1192
      %v1221 = vpack.c.b16 %v1195, %v1194
      %v1222 = vpack.c.b16 %v1197, %v1196
      %v1223 = vpack.c.b16 %v1199, %v1198
      %v1224 = vpack.c.b16 %v1201, %v1200
      %v1225 = vpack.c.b16 %v1203, %v1202
      %v1226 = vpack.c.b16 %v1205, %v1204
      %v1227 = vpack.c.b16 %v1207, %v1206
      %v1228 = vpack.c.b16 %v1209, %v1208
      %v1229 = vpack.c.b16 %v1211, %v1210
      %v1249 = vsel %vm492, %v1087, 0
      %v1252 = vsel %vm492, %v1090, 0
      %v1255 = vsel %vm492, %v1093, 0
      %v1258 = vsel %vm492, %v1096, 0
      %1260 = vmatprep.subr.bf16.mxu0 0
      %1261 = vmatpush1.bf16.msra.mxu0 %v1212
      %1262 = vmatprep.subr.bf16.mxu0 0
      %1263 = vmatpush1.bf16.msra.mxu0 %v1213
      %1264 = vmatprep.subr.bf16.mxu0 0
      %1265 = vmatpush1.bf16.msra.mxu0 %v1214
      %1266 = vmatprep.subr.bf16.mxu0 0
      %1267 = vmatpush1.bf16.msra.mxu0 %v1215
      %1268 = vmatprep.subr.bf16.mxu0 0
      %1269 = vmatpush1.bf16.msra.mxu0 %v1216
      %1270 = vmatprep.subr.bf16.mxu0 0
      %1271 = vmatpush1.bf16.msra.mxu0 %v1217
      %1272 = vmatprep.subr.bf16.mxu0 0
      %1273 = vmatpush1.bf16.msra.mxu0 %v1218
      %1274 = vmatprep.subr.bf16.mxu0 0
      %1275 = vmatpush1.bf16.msra.mxu0 %v1219
      %1276 = vmatprep.subr.bf16.mxu0 0
      %1277 = vmatpush1.bf16.msra.mxu0 %v1220
      %1278 = vmatprep.subr.bf16.mxu0 0
      %1279 = vmatpush1.bf16.msra.mxu0 %v1221
      %1280 = vmatprep.subr.bf16.mxu0 0
      %1281 = vmatpush1.bf16.msra.mxu0 %v1222
      %1282 = vmatprep.subr.bf16.mxu0 0
      %1283 = vmatpush1.bf16.msra.mxu0 %v1223
      %1284 = vmatprep.subr.bf16.mxu0 0
      %1285 = vmatpush1.bf16.msra.mxu0 %v1224
      %1286 = vmatprep.subr.bf16.mxu0 0
      %1287 = vmatpush1.bf16.msra.mxu0 %v1225
      %1288 = vmatprep.subr.bf16.mxu0 0
      %1289 = vmatpush1.bf16.msra.mxu0 %v1226
      %1290 = vmatprep.subr.bf16.mxu0 0
      %1291 = vmatpush1.bf16.msra.mxu0 %v1227
      %1292 = vmatprep.mubr.bf16.mxu0 %v1086
      %1293 = vmatmul.mubr.bf16.gmra.mrb[0].mxu0 %v1085
      %v1294 = vpop.f32.mrb[0].mxu0
      %v1295 = vadd.f32 %v1138, %v1294
      %v1296 = vpop.f32.mrb[0].mxu0
      %v1297 = vpop.f32.mrb[0].mxu0
      %v1298 = vadd.f32 %v1138, %v1297
      %v1299 = vpop.f32.mrb[0].mxu0
      %1300 = vmatprep.mubr.bf16.mxu0 %v1089
      %1301 = vmatmul.mubr.bf16.gmra.mrb[0].mxu0 %v1088
      %v1302 = vpop.f32.mrb[0].mxu0
      %v1303 = vadd.f32 %v1138, %v1302
      %v1304 = vpop.f32.mrb[0].mxu0
      %v1305 = vpop.f32.mrb[0].mxu0
      %v1306 = vadd.f32 %v1138, %v1305
      %v1307 = vpop.f32.mrb[0].mxu0
      %1308 = vmatprep.mubr.bf16.mxu0 %v1092
      %1309 = vmatmul.mubr.bf16.gmra.mrb[0].mxu0 %v1091
      %v1310 = vpop.f32.mrb[0].mxu0
      %v1311 = vadd.f32 %v1138, %v1310
      %v1312 = vpop.f32.mrb[0].mxu0
      %v1313 = vpop.f32.mrb[0].mxu0
      %v1314 = vadd.f32 %v1138, %v1313
      %v1315 = vpop.f32.mrb[0].mxu0
      %1316 = vmatprep.mubr.bf16.mxu0 %v1095
      %1317 = vmatmul.mubr.bf16.gmra.mrb[0].mxu0 %v1094
      %v1318 = vpop.f32.mrb[0].mxu0
      %v1319 = vadd.f32 %v1138, %v1318
      %v1320 = vpop.f32.mrb[0].mxu0
      %v1321 = vpop.f32.mrb[0].mxu0
      %v1322 = vadd.f32 %v1138, %v1321
      %v1323 = vpop.f32.mrb[0].mxu0
      %1324 = vdwg.mxu0
      %1325 = vmatprep.subr.bf16.mxu0 0
      %1326 = vmatpush1.bf16.msra.mxu0 %v1228
      %1327 = vmatprep.subr.bf16.mxu0 0
      %1328 = vmatpush1.bf16.msra.mxu0 %v1229
      %1329 = vmatprep.subr.bf16.mxu0 0
      %1330 = vmatpush1.bf16.msra.mxu0 0
      %1331 = vmatprep.subr.bf16.mxu0 0
      %1332 = vmatpush1.bf16.msra.mxu0 0
      %1333 = vmatprep.subr.bf16.mxu0 0
      %1334 = vmatpush1.bf16.msra.mxu0 0
      %1335 = vmatprep.subr.bf16.mxu0 0
      %1336 = vmatpush1.bf16.msra.mxu0 0
      %1337 = vmatprep.subr.bf16.mxu0 0
      %1338 = vmatpush1.bf16.msra.mxu0 0
      %1339 = vmatprep.subr.bf16.mxu0 0
      %1340 = vmatpush1.bf16.msra.mxu0 0
      %1341 = vmatprep.subr.bf16.mxu0 0
      %1342 = vmatpush1.bf16.msra.mxu0 0
      %1343 = vmatprep.subr.bf16.mxu0 0
      %1344 = vmatpush1.bf16.msra.mxu0 0
      %1345 = vmatprep.subr.bf16.mxu0 0
      %1346 = vmatpush1.bf16.msra.mxu0 0
      %1347 = vmatprep.subr.bf16.mxu0 0
      %1348 = vmatpush1.bf16.msra.mxu0 0
      %1349 = vmatprep.subr.bf16.mxu0 0
      %1350 = vmatpush1.bf16.msra.mxu0 0
      %1351 = vmatprep.subr.bf16.mxu0 0
      %1352 = vmatpush1.bf16.msra.mxu0 0
      %1353 = vmatprep.subr.bf16.mxu0 0
      %1354 = vmatpush1.bf16.msra.mxu0 0
      %1355 = vmatprep.subr.bf16.mxu0 0
      %1356 = vmatpush1.bf16.msra.mxu0 0
      %1357 = vmatprep.mubr.bf16.mxu0 0
      %1358 = vmatmul.mubr.bf16.gmra.mrb[0].mxu0 %v1249
      %v1359 = vpop.f32.mrb[0].mxu0
      %v1360 = vadd.f32 %v1295, %v1359
      %v1361 = vpop.f32.mrb[0].mxu0
      %v1362 = vpop.f32.mrb[0].mxu0
      %v1363 = vadd.f32 %v1298, %v1362
      %v1364 = vpop.f32.mrb[0].mxu0
      %1365 = vmatprep.mubr.bf16.mxu0 0
      %1366 = vmatmul.mubr.bf16.gmra.mrb[0].mxu0 %v1252
      %v1367 = vpop.f32.mrb[0].mxu0
      %v1368 = vadd.f32 %v1303, %v1367
      %v1369 = vpop.f32.mrb[0].mxu0
      %v1370 = vpop.f32.mrb[0].mxu0
      %v1371 = vadd.f32 %v1306, %v1370
      %v1372 = vpop.f32.mrb[0].mxu0
      %1373 = vmatprep.mubr.bf16.mxu0 0
      %1374 = vmatmul.mubr.bf16.gmra.mrb[0].mxu0 %v1255
      %v1375 = vpop.f32.mrb[0].mxu0
      %v1376 = vadd.f32 %v1311, %v1375
      %v1377 = vpop.f32.mrb[0].mxu0
      %v1378 = vpop.f32.mrb[0].mxu0
      %v1379 = vadd.f32 %v1314, %v1378
      %v1380 = vpop.f32.mrb[0].mxu0
      %1381 = vmatprep.mubr.bf16.mxu0 0
      %1382 = vmatmul.mubr.bf16.gmra.mrb[0].mxu0 %v1258
      %v1383 = vpop.f32.mrb[0].mxu0
      %v1384 = vadd.f32 %v1319, %v1383
      %v1385 = vpop.f32.mrb[0].mxu0
      %v1386 = vpop.f32.mrb[0].mxu0
      %v1387 = vadd.f32 %v1322, %v1386
      %v1388 = vpop.f32.mrb[0].mxu0
      %1389 = vdwg.mxu0
      %v1390 = vmax.f32 %v1360, 0.0
      %v1391 = vmax.f32 %v1363, 0.0
      %v1392 = vmax.f32 %v1368, 0.0
      %v1393 = vmax.f32 %v1371, 0.0
      %v1394 = vmax.f32 %v1376, 0.0
      %v1395 = vmax.f32 %v1379, 0.0
      %v1396 = vmax.f32 %v1384, 0.0
      %v1397 = vmax.f32 %v1387, 0.0
      %1398 = vst.msk [vmem:[#allocation2 + $0x10] sm:$0xff] %vm492, %v1390
      %1399 = vst.msk [vmem:[#allocation2 + $0x18] sm:$0xff] %vm492, %v1391
      %1400 = vst.msk [vmem:[#allocation2 + $0x20] sm:$0xff] %vm492, %v1392
      %1401 = vst.msk [vmem:[#allocation2 + $0x28] sm:$0xff] %vm492, %v1393
      %1402 = vst.msk [vmem:[#allocation2 + $0x30] sm:$0xff] %vm492, %v1394
      %1403 = vst.msk [vmem:[#allocation2 + $0x38] sm:$0xff] %vm492, %v1395
      %1404 = vst.msk [vmem:[#allocation2 + $0x40] sm:$0xff] %vm492, %v1396
      %1405 = vst.msk [vmem:[#allocation2 + $0x48] sm:$0xff] %vm492, %v1397
      %v1406 = vld [vmem:[#allocation2 + $0x7] sm:$0xff]
      %v1407 = vld [vmem:[#allocation2 + $0xf] sm:$0xff]
      %v1408 = vld [vmem:[#allocation2 + $0x17] sm:$0xff]
      %v1409 = vld [vmem:[#allocation2 + $0x1f] sm:$0xff]
      %v1410 = vld [vmem:[#allocation2 + $0x27] sm:$0xff]
      %v1411 = vld [vmem:[#allocation2 + $0x2f] sm:$0xff]
      %v1412 = vld [vmem:[#allocation2 + $0x37] sm:$0xff]
      %v1413 = vld [vmem:[#allocation2 + $0x3f] sm:$0xff]
      %v1414 = vsel %vm658, %v1406, 0.0
      %v1415 = vsel %vm659, %v1407, 0.0
      %v1416 = vsel %vm660, %v1408, 0.0
      %v1417 = vsel %vm661, %v1409, 0.0
      %v1418 = vsel %vm662, %v1410, 0.0
      %v1419 = vsel %vm663, %v1411, 0.0
      %v1420 = vsel %vm664, %v1412, 0.0
      %v1421 = vsel %vm665, %v1413, 0.0
      %1422 = vst.msk [vmem:[#allocation3] sm:$0xff] %vm492, %v1414
      %1423 = vst.msk [vmem:[#allocation3 + $0x18] sm:$0xff] %vm492, %v1415
      %1424 = vst.msk [vmem:[#allocation3 + $0x30] sm:$0xff] %vm492, %v1416
      %1425 = vst.msk [vmem:[#allocation3 + $0x48] sm:$0xff] %vm492, %v1417
      %1426 = vst.msk [vmem:[#allocation3 + $0x60] sm:$0xff] %vm492, %v1418
      %1427 = vst.msk [vmem:[#allocation3 + $0x78] sm:$0xff] %vm492, %v1419
      %1428 = vst.msk [vmem:[#allocation3 + $0x90] sm:$0xff] %vm492, %v1420
      %1429 = vst.msk [vmem:[#allocation3 + $0xa8] sm:$0xff] %vm492, %v1421
      %v1430 = vld [vmem:[#allocation2 + $0x8] sm:$0xff]
      %v1431 = vld [vmem:[#allocation2 + $0x10] sm:$0xff]
      %v1432 = vld [vmem:[#allocation2 + $0x18] sm:$0xff]
      %v1433 = vld [vmem:[#allocation2 + $0x20] sm:$0xff]
      %v1434 = vld [vmem:[#allocation2 + $0x28] sm:$0xff]
      %v1435 = vld [vmem:[#allocation2 + $0x30] sm:$0xff]
      %v1436 = vld [vmem:[#allocation2 + $0x38] sm:$0xff]
      %v1437 = vld [vmem:[#allocation2 + $0x40] sm:$0xff]
      %1446 = vrot.lane.b32.xlu0 %v1430, 32
      %v1447 = vpop.permute.xlu0 %1446
      %1448 = vrot.lane.b32.xlu0 %v1431, 32
      %v1449 = vpop.permute.xlu0 %1448
      %1450 = vrot.lane.b32.xlu0 %v1432, 32
      %v1451 = vpop.permute.xlu0 %1450
      %1452 = vrot.lane.b32.xlu0 %v1433, 32
      %v1453 = vpop.permute.xlu0 %1452
      %1454 = vrot.lane.b32.xlu0 %v1434, 32
      %v1455 = vpop.permute.xlu0 %1454
      %1456 = vrot.lane.b32.xlu0 %v1435, 32
      %v1457 = vpop.permute.xlu0 %1456
      %1458 = vrot.lane.b32.xlu0 %v1436, 32
      %v1459 = vpop.permute.xlu0 %1458
      %1460 = vrot.lane.b32.xlu0 %v1437, 32
      %v1461 = vpop.permute.xlu0 %1460
      %1470 = vst.msk [vmem:[#allocation3] sm:$0xff] %vm722, %v1447
      %1471 = vst.msk [vmem:[#allocation3 + $0x18] sm:$0xff] %vm722, %v1449
      %1472 = vst.msk [vmem:[#allocation3 + $0x30] sm:$0xff] %vm722, %v1451
      %1473 = vst.msk [vmem:[#allocation3 + $0x48] sm:$0xff] %vm722, %v1453
      %1474 = vst.msk [vmem:[#allocation3 + $0x60] sm:$0xff] %vm722, %v1455
      %1475 = vst.msk [vmem:[#allocation3 + $0x78] sm:$0xff] %vm722, %v1457
      %1476 = vst.msk [vmem:[#allocation3 + $0x90] sm:$0xff] %vm722, %v1459
      %1477 = vst.msk [vmem:[#allocation3 + $0xa8] sm:$0xff] %vm722, %v1461
      %v1478 = vld [vmem:[#allocation2 + $0x9] sm:$0xff]
      %v1479 = vld [vmem:[#allocation2 + $0x11] sm:$0xff]
      %v1480 = vld [vmem:[#allocation2 + $0x19] sm:$0xff]
      %v1481 = vld [vmem:[#allocation2 + $0x21] sm:$0xff]
      %v1482 = vld [vmem:[#allocation2 + $0x29] sm:$0xff]
      %v1483 = vld [vmem:[#allocation2 + $0x31] sm:$0xff]
      %v1484 = vld [vmem:[#allocation2 + $0x39] sm:$0xff]
      %v1485 = vld [vmem:[#allocation2 + $0x41] sm:$0xff]
      %v1486 = vsel %vm747, %v1478, 0.0
      %v1487 = vsel %vm748, %v1479, 0.0
      %v1488 = vsel %vm749, %v1480, 0.0
      %v1489 = vsel %vm750, %v1481, 0.0
      %v1490 = vsel %vm751, %v1482, 0.0
      %v1491 = vsel %vm752, %v1483, 0.0
      %v1492 = vsel %vm753, %v1484, 0.0
      %v1493 = vsel %vm754, %v1485, 0.0
      %1502 = vrot.lane.b32.xlu0 %v1486, 64
      %v1503 = vpop.permute.xlu0 %1502
      %1504 = vrot.lane.b32.xlu0 %v1487, 64
      %v1505 = vpop.permute.xlu0 %1504
      %1506 = vrot.lane.b32.xlu0 %v1488, 64
      %v1507 = vpop.permute.xlu0 %1506
      %1508 = vrot.lane.b32.xlu0 %v1489, 64
      %v1509 = vpop.permute.xlu0 %1508
      %1510 = vrot.lane.b32.xlu0 %v1490, 64
      %v1511 = vpop.permute.xlu0 %1510
      %1512 = vrot.lane.b32.xlu0 %v1491, 64
      %v1513 = vpop.permute.xlu0 %1512
      %1514 = vrot.lane.b32.xlu0 %v1492, 64
      %v1515 = vpop.permute.xlu0 %1514
      %1516 = vrot.lane.b32.xlu0 %v1493, 64
      %v1517 = vpop.permute.xlu0 %1516
      %1526 = vst.msk [vmem:[#allocation3] sm:$0xff] %vm795, %v1503
      %1527 = vst.msk [vmem:[#allocation3 + $0x18] sm:$0xff] %vm795, %v1505
      %1528 = vst.msk [vmem:[#allocation3 + $0x30] sm:$0xff] %vm795, %v1507
      %1529 = vst.msk [vmem:[#allocation3 + $0x48] sm:$0xff] %vm795, %v1509
      %1530 = vst.msk [vmem:[#allocation3 + $0x60] sm:$0xff] %vm795, %v1511
      %1531 = vst.msk [vmem:[#allocation3 + $0x78] sm:$0xff] %vm795, %v1513
      %1532 = vst.msk [vmem:[#allocation3 + $0x90] sm:$0xff] %vm795, %v1515
      %1533 = vst.msk [vmem:[#allocation3 + $0xa8] sm:$0xff] %vm795, %v1517
      %v1534 = vld [vmem:[#allocation2 + $0xf] sm:$0xff]
      %v1535 = vld [vmem:[#allocation2 + $0x17] sm:$0xff]
      %v1536 = vld [vmem:[#allocation2 + $0x1f] sm:$0xff]
      %v1537 = vld [vmem:[#allocation2 + $0x27] sm:$0xff]
      %v1538 = vld [vmem:[#allocation2 + $0x2f] sm:$0xff]
      %v1539 = vld [vmem:[#allocation2 + $0x37] sm:$0xff]
      %v1540 = vld [vmem:[#allocation2 + $0x3f] sm:$0xff]
      %v1541 = vld [vmem:[#allocation2 + $0x47] sm:$0xff]
      %v1542 = vsel %vm658, %v1534, 0.0
      %v1543 = vsel %vm659, %v1535, 0.0
      %v1544 = vsel %vm660, %v1536, 0.0
      %v1545 = vsel %vm661, %v1537, 0.0
      %v1546 = vsel %vm662, %v1538, 0.0
      %v1547 = vsel %vm663, %v1539, 0.0
      %v1548 = vsel %vm664, %v1540, 0.0
      %v1549 = vsel %vm665, %v1541, 0.0
      %1558 = vrot.lane.b32.xlu0 %v1542, 96
      %v1559 = vpop.permute.xlu0 %1558
      %1560 = vrot.lane.b32.xlu0 %v1543, 96
      %v1561 = vpop.permute.xlu0 %1560
      %1562 = vrot.lane.b32.xlu0 %v1544, 96
      %v1563 = vpop.permute.xlu0 %1562
      %1564 = vrot.lane.b32.xlu0 %v1545, 96
      %v1565 = vpop.permute.xlu0 %1564
      %1566 = vrot.lane.b32.xlu0 %v1546, 96
      %v1567 = vpop.permute.xlu0 %1566
      %1568 = vrot.lane.b32.xlu0 %v1547, 96
      %v1569 = vpop.permute.xlu0 %1568
      %1570 = vrot.lane.b32.xlu0 %v1548, 96
      %v1571 = vpop.permute.xlu0 %1570
      %1572 = vrot.lane.b32.xlu0 %v1549, 96
      %v1573 = vpop.permute.xlu0 %1572
      %1582 = vst.msk [vmem:[#allocation3] sm:$0xff] %vm852, %v1559
      %1583 = vst.msk [vmem:[#allocation3 + $0x18] sm:$0xff] %vm852, %v1561
      %1584 = vst.msk [vmem:[#allocation3 + $0x30] sm:$0xff] %vm852, %v1563
      %1585 = vst.msk [vmem:[#allocation3 + $0x48] sm:$0xff] %vm852, %v1565
      %1586 = vst.msk [vmem:[#allocation3 + $0x60] sm:$0xff] %vm852, %v1567
      %1587 = vst.msk [vmem:[#allocation3 + $0x78] sm:$0xff] %vm852, %v1569
      %1588 = vst.msk [vmem:[#allocation3 + $0x90] sm:$0xff] %vm852, %v1571
      %1589 = vst.msk [vmem:[#allocation3 + $0xa8] sm:$0xff] %vm852, %v1573
      %v1590 = vld [vmem:[#allocation2 + $0x10] sm:$0xff]
      %v1591 = vld [vmem:[#allocation2 + $0x18] sm:$0xff]
      %v1592 = vld [vmem:[#allocation2 + $0x20] sm:$0xff]
      %v1593 = vld [vmem:[#allocation2 + $0x28] sm:$0xff]
      %v1594 = vld [vmem:[#allocation2 + $0x30] sm:$0xff]
      %v1595 = vld [vmem:[#allocation2 + $0x38] sm:$0xff]
      %v1596 = vld [vmem:[#allocation2 + $0x40] sm:$0xff]
      %v1597 = vld [vmem:[#allocation2 + $0x48] sm:$0xff]
      %1598 = vst.msk [vmem:[#allocation3 + $0x8] sm:$0xff] %vm492, %v1590
      %1599 = vst.msk [vmem:[#allocation3 + $0x20] sm:$0xff] %vm492, %v1591
      %1600 = vst.msk [vmem:[#allocation3 + $0x38] sm:$0xff] %vm492, %v1592
      %1601 = vst.msk [vmem:[#allocation3 + $0x50] sm:$0xff] %vm492, %v1593
      %1602 = vst.msk [vmem:[#allocation3 + $0x68] sm:$0xff] %vm492, %v1594
      %1603 = vst.msk [vmem:[#allocation3 + $0x80] sm:$0xff] %vm492, %v1595
      %1604 = vst.msk [vmem:[#allocation3 + $0x98] sm:$0xff] %vm492, %v1596
      %1605 = vst.msk [vmem:[#allocation3 + $0xb0] sm:$0xff] %vm492, %v1597
      %v1606 = vld [vmem:[#allocation2 + $0x11] sm:$0xff]
      %v1607 = vld [vmem:[#allocation2 + $0x19] sm:$0xff]
      %v1608 = vld [vmem:[#allocation2 + $0x21] sm:$0xff]
      %v1609 = vld [vmem:[#allocation2 + $0x29] sm:$0xff]
      %v1610 = vld [vmem:[#allocation2 + $0x31] sm:$0xff]
      %v1611 = vld [vmem:[#allocation2 + $0x39] sm:$0xff]
      %v1612 = vld [vmem:[#allocation2 + $0x41] sm:$0xff]
      %v1613 = vld [vmem:[#allocation2 + $0x49] sm:$0xff]
      %v1614 = vsel %vm747, %v1606, 0.0
      %v1615 = vsel %vm748, %v1607, 0.0
      %v1616 = vsel %vm749, %v1608, 0.0
      %v1617 = vsel %vm750, %v1609, 0.0
      %v1618 = vsel %vm751, %v1610, 0.0
      %v1619 = vsel %vm752, %v1611, 0.0
      %v1620 = vsel %vm753, %v1612, 0.0
      %v1621 = vsel %vm754, %v1613, 0.0
      %1630 = vrot.lane.b32.xlu0 %v1614, 32
      %v1631 = vpop.permute.xlu0 %1630
      %1632 = vrot.lane.b32.xlu0 %v1615, 32
      %v1633 = vpop.permute.xlu0 %1632
      %1634 = vrot.lane.b32.xlu0 %v1616, 32
      %v1635 = vpop.permute.xlu0 %1634
      %1636 = vrot.lane.b32.xlu0 %v1617, 32
      %v1637 = vpop.permute.xlu0 %1636
      %1638 = vrot.lane.b32.xlu0 %v1618, 32
      %v1639 = vpop.permute.xlu0 %1638
      %1640 = vrot.lane.b32.xlu0 %v1619, 32
      %v1641 = vpop.permute.xlu0 %1640
      %1642 = vrot.lane.b32.xlu0 %v1620, 32
      %v1643 = vpop.permute.xlu0 %1642
      %1644 = vrot.lane.b32.xlu0 %v1621, 32
      %v1645 = vpop.permute.xlu0 %1644
      %1654 = vst.msk [vmem:[#allocation3 + $0x8] sm:$0xff] %vm722, %v1631
      %1655 = vst.msk [vmem:[#allocation3 + $0x20] sm:$0xff] %vm722, %v1633
      %1656 = vst.msk [vmem:[#allocation3 + $0x38] sm:$0xff] %vm722, %v1635
      %1657 = vst.msk [vmem:[#allocation3 + $0x50] sm:$0xff] %vm722, %v1637
      %1658 = vst.msk [vmem:[#allocation3 + $0x68] sm:$0xff] %vm722, %v1639
      %1659 = vst.msk [vmem:[#allocation3 + $0x80] sm:$0xff] %vm722, %v1641
      %1660 = vst.msk [vmem:[#allocation3 + $0x98] sm:$0xff] %vm722, %v1643
      %1661 = vst.msk [vmem:[#allocation3 + $0xb0] sm:$0xff] %vm722, %v1645
      %v1662 = vld [vmem:[#allocation2 + $0x17] sm:$0xff]
      %v1663 = vld [vmem:[#allocation2 + $0x1f] sm:$0xff]
      %v1664 = vld [vmem:[#allocation2 + $0x27] sm:$0xff]
      %v1665 = vld [vmem:[#allocation2 + $0x2f] sm:$0xff]
      %v1666 = vld [vmem:[#allocation2 + $0x37] sm:$0xff]
      %v1667 = vld [vmem:[#allocation2 + $0x3f] sm:$0xff]
      %v1668 = vld [vmem:[#allocation2 + $0x47] sm:$0xff]
      %v1669 = vld [vmem:[#allocation2 + $0x4f] sm:$0xff]
      %v1670 = vsel %vm658, %v1662, 0.0
      %v1671 = vsel %vm659, %v1663, 0.0
      %v1672 = vsel %vm660, %v1664, 0.0
      %v1673 = vsel %vm661, %v1665, 0.0
      %v1674 = vsel %vm662, %v1666, 0.0
      %v1675 = vsel %vm663, %v1667, 0.0
      %v1676 = vsel %vm664, %v1668, 0.0
      %v1677 = vsel %vm665, %v1669, 0.0
      %1686 = vrot.lane.b32.xlu0 %v1670, 64
      %v1687 = vpop.permute.xlu0 %1686
      %1688 = vrot.lane.b32.xlu0 %v1671, 64
      %v1689 = vpop.permute.xlu0 %1688
      %1690 = vrot.lane.b32.xlu0 %v1672, 64
      %v1691 = vpop.permute.xlu0 %1690
      %1692 = vrot.lane.b32.xlu0 %v1673, 64
      %v1693 = vpop.permute.xlu0 %1692
      %1694 = vrot.lane.b32.xlu0 %v1674, 64
      %v1695 = vpop.permute.xlu0 %1694
      %1696 = vrot.lane.b32.xlu0 %v1675, 64
      %v1697 = vpop.permute.xlu0 %1696
      %1698 = vrot.lane.b32.xlu0 %v1676, 64
      %v1699 = vpop.permute.xlu0 %1698
      %1700 = vrot.lane.b32.xlu0 %v1677, 64
      %v1701 = vpop.permute.xlu0 %1700
      %1710 = vst.msk [vmem:[#allocation3 + $0x8] sm:$0xff] %vm795, %v1687
      %1711 = vst.msk [vmem:[#allocation3 + $0x20] sm:$0xff] %vm795, %v1689
      %1712 = vst.msk [vmem:[#allocation3 + $0x38] sm:$0xff] %vm795, %v1691
      %1713 = vst.msk [vmem:[#allocation3 + $0x50] sm:$0xff] %vm795, %v1693
      %1714 = vst.msk [vmem:[#allocation3 + $0x68] sm:$0xff] %vm795, %v1695
      %1715 = vst.msk [vmem:[#allocation3 + $0x80] sm:$0xff] %vm795, %v1697
      %1716 = vst.msk [vmem:[#allocation3 + $0x98] sm:$0xff] %vm795, %v1699
      %1717 = vst.msk [vmem:[#allocation3 + $0xb0] sm:$0xff] %vm795, %v1701
      %v1718 = vld [vmem:[#allocation2 + $0x18] sm:$0xff]
      %v1719 = vld [vmem:[#allocation2 + $0x20] sm:$0xff]
      %v1720 = vld [vmem:[#allocation2 + $0x28] sm:$0xff]
      %v1721 = vld [vmem:[#allocation2 + $0x30] sm:$0xff]
      %v1722 = vld [vmem:[#allocation2 + $0x38] sm:$0xff]
      %v1723 = vld [vmem:[#allocation2 + $0x40] sm:$0xff]
      %v1724 = vld [vmem:[#allocation2 + $0x48] sm:$0xff]
      %v1725 = vld [vmem:[#allocation2 + $0x50] sm:$0xff]
      %1734 = vrot.lane.b32.xlu0 %v1718, 96
      %v1735 = vpop.permute.xlu0 %1734
      %1736 = vrot.lane.b32.xlu0 %v1719, 96
      %v1737 = vpop.permute.xlu0 %1736
      %1738 = vrot.lane.b32.xlu0 %v1720, 96
      %v1739 = vpop.permute.xlu0 %1738
      %1740 = vrot.lane.b32.xlu0 %v1721, 96
      %v1741 = vpop.permute.xlu0 %1740
      %1742 = vrot.lane.b32.xlu0 %v1722, 96
      %v1743 = vpop.permute.xlu0 %1742
      %1744 = vrot.lane.b32.xlu0 %v1723, 96
      %v1745 = vpop.permute.xlu0 %1744
      %1746 = vrot.lane.b32.xlu0 %v1724, 96
      %v1747 = vpop.permute.xlu0 %1746
      %1748 = vrot.lane.b32.xlu0 %v1725, 96
      %v1749 = vpop.permute.xlu0 %1748
      %1758 = vst.msk [vmem:[#allocation3 + $0x8] sm:$0xff] %vm852, %v1735
      %1759 = vst.msk [vmem:[#allocation3 + $0x20] sm:$0xff] %vm852, %v1737
      %1760 = vst.msk [vmem:[#allocation3 + $0x38] sm:$0xff] %vm852, %v1739
      %1761 = vst.msk [vmem:[#allocation3 + $0x50] sm:$0xff] %vm852, %v1741
      %1762 = vst.msk [vmem:[#allocation3 + $0x68] sm:$0xff] %vm852, %v1743
      %1763 = vst.msk [vmem:[#allocation3 + $0x80] sm:$0xff] %vm852, %v1745
      %1764 = vst.msk [vmem:[#allocation3 + $0x98] sm:$0xff] %vm852, %v1747
      %1765 = vst.msk [vmem:[#allocation3 + $0xb0] sm:$0xff] %vm852, %v1749
      %v1766 = vld [vmem:[#allocation2 + $0x19] sm:$0xff]
      %v1767 = vld [vmem:[#allocation2 + $0x21] sm:$0xff]
      %v1768 = vld [vmem:[#allocation2 + $0x29] sm:$0xff]
      %v1769 = vld [vmem:[#allocation2 + $0x31] sm:$0xff]
      %v1770 = vld [vmem:[#allocation2 + $0x39] sm:$0xff]
      %v1771 = vld [vmem:[#allocation2 + $0x41] sm:$0xff]
      %v1772 = vld [vmem:[#allocation2 + $0x49] sm:$0xff]
      %v1773 = vld [vmem:[#allocation2 + $0x51] sm:$0xff]
      %v1774 = vsel %vm747, %v1766, 0.0
      %v1775 = vsel %vm748, %v1767, 0.0
      %v1776 = vsel %vm749, %v1768, 0.0
      %v1777 = vsel %vm750, %v1769, 0.0
      %v1778 = vsel %vm751, %v1770, 0.0
      %v1779 = vsel %vm752, %v1771, 0.0
      %v1780 = vsel %vm753, %v1772, 0.0
      %v1781 = vsel %vm754, %v1773, 0.0
      %1782 = vst.msk [vmem:[#allocation3 + $0x10] sm:$0xff] %vm492, %v1774
      %1783 = vst.msk [vmem:[#allocation3 + $0x28] sm:$0xff] %vm492, %v1775
      %1784 = vst.msk [vmem:[#allocation3 + $0x40] sm:$0xff] %vm492, %v1776
      %1785 = vst.msk [vmem:[#allocation3 + $0x58] sm:$0xff] %vm492, %v1777
      %1786 = vst.msk [vmem:[#allocation3 + $0x70] sm:$0xff] %vm492, %v1778
      %1787 = vst.msk [vmem:[#allocation3 + $0x88] sm:$0xff] %vm492, %v1779
      %1788 = vst.msk [vmem:[#allocation3 + $0xa0] sm:$0xff] %vm492, %v1780
      %1789 = vst.msk [vmem:[#allocation3 + $0xb8] sm:$0xff] %vm492, %v1781
      %v1790 = vld [vmem:[#allocation3] sm:$0xff]
      %v1791 = vld [vmem:[#allocation3 + $0x8] sm:$0xff]
      %v1792 = vld [vmem:[#allocation3 + $0x10] sm:$0xff]
      %v1793 = vld [vmem:[#allocation3 + $0x18] sm:$0xff]
      %v1794 = vld [vmem:[#allocation3 + $0x20] sm:$0xff]
      %v1795 = vld [vmem:[#allocation3 + $0x28] sm:$0xff]
      %v1796 = vld [vmem:[#allocation3 + $0x30] sm:$0xff]
      %v1797 = vld [vmem:[#allocation3 + $0x38] sm:$0xff]
      %v1798 = vld [vmem:[#allocation3 + $0x40] sm:$0xff]
      %v1799 = vld [vmem:[#allocation3 + $0x48] sm:$0xff]
      %v1800 = vld [vmem:[#allocation3 + $0x50] sm:$0xff]
      %v1801 = vld [vmem:[#allocation3 + $0x58] sm:$0xff]
      %v1802 = vld [vmem:[#allocation3 + $0x60] sm:$0xff]
      %v1803 = vld [vmem:[#allocation3 + $0x68] sm:$0xff]
      %v1804 = vld [vmem:[#allocation3 + $0x70] sm:$0xff]
      %v1805 = vld [vmem:[#allocation3 + $0x78] sm:$0xff]
      %v1806 = vld [vmem:[#allocation3 + $0x80] sm:$0xff]
      %v1807 = vld [vmem:[#allocation3 + $0x88] sm:$0xff]
      %v1808 = vld [vmem:[#allocation3 + $0x90] sm:$0xff]
      %v1809 = vld [vmem:[#allocation3 + $0x98] sm:$0xff]
      %v1810 = vld [vmem:[#allocation3 + $0xa0] sm:$0xff]
      %v1811 = vld [vmem:[#allocation3 + $0xa8] sm:$0xff]
      %v1812 = vld [vmem:[#allocation3 + $0xb0] sm:$0xff]
      %v1813 = vld [vmem:[#allocation3 + $0xb8] sm:$0xff]
      %v1814 = vpack.c.bf16 %v1793, %v1790
      %v1815 = vpack.c.bf16 %v1794, %v1791
      %v1816 = vpack.c.bf16 %v1795, %v1792
      %v1817 = vpack.c.bf16 %v1799, %v1796
      %v1818 = vpack.c.bf16 %v1800, %v1797
      %v1819 = vpack.c.bf16 %v1801, %v1798
      %v1820 = vpack.c.bf16 %v1805, %v1802
      %v1821 = vpack.c.bf16 %v1806, %v1803
      %v1822 = vpack.c.bf16 %v1807, %v1804
      %v1823 = vpack.c.bf16 %v1811, %v1808
      %v1824 = vpack.c.bf16 %v1812, %v1809
      %v1825 = vpack.c.bf16 %v1813, %v1810
      %v1826 = vld [vmem:[%s3] sm:$0xf]
      %v1827 = vld [vmem:[%s3 + $0x4] sm:$0xf]
      %v1828 = vld [vmem:[%s3 + $0x8] sm:$0xf]
      %v1829 = vld [vmem:[%s3 + $0xc] sm:$0xf]
      %v1830 = vld [vmem:[%s3 + $0x10] sm:$0xf]
      %v1831 = vld [vmem:[%s3 + $0x14] sm:$0xf]
      %v1832 = vld [vmem:[%s3 + $0x18] sm:$0xf]
      %v1833 = vld [vmem:[%s3 + $0x1c] sm:$0xf]
      %v1834 = vld [vmem:[%s3 + $0x20] sm:$0xf]
      %v1835 = vld [vmem:[%s3 + $0x24] sm:$0xf]
      %v1836 = vld [vmem:[%s3 + $0x28] sm:$0xf]
      %v1837 = vld [vmem:[%s3 + $0x2c] sm:$0xf]
      %v1838 = vld [vmem:[%s3 + $0x30] sm:$0xf]
      %v1839 = vld [vmem:[%s3 + $0x34] sm:$0xf]
      %v1840 = vld [vmem:[%s3 + $0x38] sm:$0xf]
      %v1841 = vld [vmem:[%s3 + $0x3c] sm:$0xf]
      %v1842 = vld [vmem:[%s3 + $0x40] sm:$0xf]
      %v1843 = vld [vmem:[%s3 + $0x44] sm:$0xf]
      %v1844 = vld [vmem:[%s3 + $0x48] sm:$0xf]
      %v1845 = vld [vmem:[%s3 + $0x4c] sm:$0xf]
      %v1846 = vld [vmem:[%s3 + $0x50] sm:$0xf]
      %v1847 = vld [vmem:[%s3 + $0x54] sm:$0xf]
      %v1848 = vld [vmem:[%s3 + $0x58] sm:$0xf]
      %v1849 = vld [vmem:[%s3 + $0x5c] sm:$0xf]
      %v1850 = vld [vmem:[%s3 + $0x60] sm:$0xf]
      %v1851 = vld [vmem:[%s3 + $0x64] sm:$0xf]
      %v1852 = vld [vmem:[%s3 + $0x68] sm:$0xf]
      %v1853 = vld [vmem:[%s3 + $0x6c] sm:$0xf]
      %v1854 = vld [vmem:[%s3 + $0x70] sm:$0xf]
      %v1855 = vld [vmem:[%s3 + $0x74] sm:$0xf]
      %v1856 = vld [vmem:[%s3 + $0x78] sm:$0xf]
      %v1857 = vld [vmem:[%s3 + $0x7c] sm:$0xf]
      %v1858 = vld [vmem:[%s3 + $0x80] sm:$0xf]
      %v1859 = vld [vmem:[%s3 + $0x84] sm:$0xf]
      %v1860 = vld [vmem:[%s3 + $0x88] sm:$0xf]
      %v1861 = vld [vmem:[%s3 + $0x8c] sm:$0xf]
      %v1862 = vld [vmem:[%s4] sm:$0x1]
      %v1864 = vlaneseq
      %v1865 = vshrl.u32 %v1864, 7
      %v1866 = vsub.s32 0, %v1865
      %v1867 = vrot.slane %v1862, %v1866
      %v1905 = vunpack.c.l.b16 %v1826
      %v1906 = vunpack.c.l.b16 %v1827
      %v1907 = vunpack.c.l.b16 %v1828
      %v1908 = vunpack.c.l.b16 %v1829
      %v1909 = vunpack.c.l.b16 %v1830
      %v1910 = vunpack.c.l.b16 %v1831
      %v1911 = vunpack.c.l.b16 %v1832
      %v1912 = vunpack.c.l.b16 %v1833
      %v1913 = vunpack.c.l.b16 %v1834
      %v1914 = vunpack.c.l.b16 %v1835
      %v1915 = vunpack.c.l.b16 %v1836
      %v1916 = vunpack.c.l.b16 %v1837
      %v1917 = vunpack.c.l.b16 %v1838
      %v1918 = vunpack.c.l.b16 %v1839
      %v1919 = vunpack.c.l.b16 %v1840
      %v1920 = vunpack.c.l.b16 %v1841
      %v1921 = vunpack.c.l.b16 %v1842
      %v1922 = vunpack.c.l.b16 %v1843
      %v1923 = vunpack.c.l.b16 %v1844
      %v1924 = vunpack.c.l.b16 %v1845
      %v1925 = vunpack.c.l.b16 %v1846
      %v1926 = vunpack.c.l.b16 %v1847
      %v1927 = vunpack.c.l.b16 %v1848
      %v1928 = vunpack.c.l.b16 %v1849
      %v1929 = vunpack.c.l.b16 %v1850
      %v1930 = vunpack.c.l.b16 %v1851
      %v1931 = vunpack.c.l.b16 %v1852
      %v1932 = vunpack.c.l.b16 %v1853
      %v1933 = vunpack.c.l.b16 %v1854
      %v1934 = vunpack.c.l.b16 %v1855
      %v1935 = vunpack.c.l.b16 %v1856
      %v1936 = vunpack.c.l.b16 %v1857
      %v1937 = vunpack.c.l.b16 %v1858
      %v1938 = vunpack.c.l.b16 %v1859
      %v1939 = vunpack.c.l.b16 %v1860
      %v1940 = vunpack.c.l.b16 %v1861
      %v1941 = vpack.c.b16 %v1906, %v1905
      %v1942 = vpack.c.b16 %v1908, %v1907
      %v1943 = vpack.c.b16 %v1910, %v1909
      %v1944 = vpack.c.b16 %v1912, %v1911
      %v1945 = vpack.c.b16 %v1914, %v1913
      %v1946 = vpack.c.b16 %v1916, %v1915
      %v1947 = vpack.c.b16 %v1918, %v1917
      %v1948 = vpack.c.b16 %v1920, %v1919
      %v1949 = vpack.c.b16 %v1922, %v1921
      %v1950 = vpack.c.b16 %v1924, %v1923
      %v1951 = vpack.c.b16 %v1926, %v1925
      %v1952 = vpack.c.b16 %v1928, %v1927
      %v1953 = vpack.c.b16 %v1930, %v1929
      %v1954 = vpack.c.b16 %v1932, %v1931
      %v1955 = vpack.c.b16 %v1934, %v1933
      %v1956 = vpack.c.b16 %v1936, %v1935
      %v1957 = vpack.c.b16 %v1938, %v1937
      %v1958 = vpack.c.b16 %v1940, %v1939
      %v1978 = vsel %vm492, %v1816, 0
      %v1981 = vsel %vm492, %v1819, 0
      %v1984 = vsel %vm492, %v1822, 0
      %v1987 = vsel %vm492, %v1825, 0
      %1989 = vmatprep.subr.bf16.mxu0 0
      %1990 = vmatpush1.bf16.msra.mxu0 %v1941
      %1991 = vmatprep.subr.bf16.mxu0 0
      %1992 = vmatpush1.bf16.msra.mxu0 %v1942
      %1993 = vmatprep.subr.bf16.mxu0 0
      %1994 = vmatpush1.bf16.msra.mxu0 %v1943
      %1995 = vmatprep.subr.bf16.mxu0 0
      %1996 = vmatpush1.bf16.msra.mxu0 %v1944
      %1997 = vmatprep.subr.bf16.mxu0 0
      %1998 = vmatpush1.bf16.msra.mxu0 %v1945
      %1999 = vmatprep.subr.bf16.mxu0 0
      %2000 = vmatpush1.bf16.msra.mxu0 %v1946
      %2001 = vmatprep.subr.bf16.mxu0 0
      %2002 = vmatpush1.bf16.msra.mxu0 %v1947
      %2003 = vmatprep.subr.bf16.mxu0 0
      %2004 = vmatpush1.bf16.msra.mxu0 %v1948
      %2005 = vmatprep.subr.bf16.mxu0 0
      %2006 = vmatpush1.bf16.msra.mxu0 %v1949
      %2007 = vmatprep.subr.bf16.mxu0 0
      %2008 = vmatpush1.bf16.msra.mxu0 %v1950
      %2009 = vmatprep.subr.bf16.mxu0 0
      %2010 = vmatpush1.bf16.msra.mxu0 %v1951
      %2011 = vmatprep.subr.bf16.mxu0 0
      %2012 = vmatpush1.bf16.msra.mxu0 %v1952
      %2013 = vmatprep.subr.bf16.mxu0 0
      %2014 = vmatpush1.bf16.msra.mxu0 %v1953
      %2015 = vmatprep.subr.bf16.mxu0 0
      %2016 = vmatpush1.bf16.msra.mxu0 %v1954
      %2017 = vmatprep.subr.bf16.mxu0 0
      %2018 = vmatpush1.bf16.msra.mxu0 %v1955
      %2019 = vmatprep.subr.bf16.mxu0 0
      %2020 = vmatpush1.bf16.msra.mxu0 %v1956
      %2021 = vmatprep.mubr.bf16.mxu0 %v1815
      %2022 = vmatmul.mubr.bf16.gmra.mrb[0].mxu0 %v1814
      %v2023 = vpop.f32.mrb[0].mxu0
      %v2024 = vadd.f32 %v1867, %v2023
      %v2025 = vpop.f32.mrb[0].mxu0
      %v2026 = vpop.f32.mrb[0].mxu0
      %v2027 = vadd.f32 %v1867, %v2026
      %v2028 = vpop.f32.mrb[0].mxu0
      %2029 = vmatprep.mubr.bf16.mxu0 %v1818
      %2030 = vmatmul.mubr.bf16.gmra.mrb[0].mxu0 %v1817
      %v2031 = vpop.f32.mrb[0].mxu0
      %v2032 = vadd.f32 %v1867, %v2031
      %v2033 = vpop.f32.mrb[0].mxu0
      %v2034 = vpop.f32.mrb[0].mxu0
      %v2035 = vadd.f32 %v1867, %v2034
      %v2036 = vpop.f32.mrb[0].mxu0
      %2037 = vmatprep.mubr.bf16.mxu0 %v1821
      %2038 = vmatmul.mubr.bf16.gmra.mrb[0].mxu0 %v1820
      %v2039 = vpop.f32.mrb[0].mxu0
      %v2040 = vadd.f32 %v1867, %v2039
      %v2041 = vpop.f32.mrb[0].mxu0
      %v2042 = vpop.f32.mrb[0].mxu0
      %v2043 = vadd.f32 %v1867, %v2042
      %v2044 = vpop.f32.mrb[0].mxu0
      %2045 = vmatprep.mubr.bf16.mxu0 %v1824
      %2046 = vmatmul.mubr.bf16.gmra.mrb[0].mxu0 %v1823
      %v2047 = vpop.f32.mrb[0].mxu0
      %v2048 = vadd.f32 %v1867, %v2047
      %v2049 = vpop.f32.mrb[0].mxu0
      %v2050 = vpop.f32.mrb[0].mxu0
      %v2051 = vadd.f32 %v1867, %v2050
      %v2052 = vpop.f32.mrb[0].mxu0
      %2053 = vdwg.mxu0
      %2054 = vmatprep.subr.bf16.mxu0 0
      %2055 = vmatpush1.bf16.msra.mxu0 %v1957
      %2056 = vmatprep.subr.bf16.mxu0 0
      %2057 = vmatpush1.bf16.msra.mxu0 %v1958
      %2058 = vmatprep.subr.bf16.mxu0 0
      %2059 = vmatpush1.bf16.msra.mxu0 0
      %2060 = vmatprep.subr.bf16.mxu0 0
      %2061 = vmatpush1.bf16.msra.mxu0 0
      %2062 = vmatprep.subr.bf16.mxu0 0
      %2063 = vmatpush1.bf16.msra.mxu0 0
      %2064 = vmatprep.subr.bf16.mxu0 0
      %2065 = vmatpush1.bf16.msra.mxu0 0
      %2066 = vmatprep.subr.bf16.mxu0 0
      %2067 = vmatpush1.bf16.msra.mxu0 0
      %2068 = vmatprep.subr.bf16.mxu0 0
      %2069 = vmatpush1.bf16.msra.mxu0 0
      %2070 = vmatprep.subr.bf16.mxu0 0
      %2071 = vmatpush1.bf16.msra.mxu0 0
      %2072 = vmatprep.subr.bf16.mxu0 0
      %2073 = vmatpush1.bf16.msra.mxu0 0
      %2074 = vmatprep.subr.bf16.mxu0 0
      %2075 = vmatpush1.bf16.msra.mxu0 0
      %2076 = vmatprep.subr.bf16.mxu0 0
      %2077 = vmatpush1.bf16.msra.mxu0 0
      %2078 = vmatprep.subr.bf16.mxu0 0
      %2079 = vmatpush1.bf16.msra.mxu0 0
      %2080 = vmatprep.subr.bf16.mxu0 0
      %2081 = vmatpush1.bf16.msra.mxu0 0
      %2082 = vmatprep.subr.bf16.mxu0 0
      %2083 = vmatpush1.bf16.msra.mxu0 0
      %2084 = vmatprep.subr.bf16.mxu0 0
      %2085 = vmatpush1.bf16.msra.mxu0 0
      %2086 = vmatprep.mubr.bf16.mxu0 0
      %2087 = vmatmul.mubr.bf16.gmra.mrb[0].mxu0 %v1978
      %v2088 = vpop.f32.mrb[0].mxu0
      %v2089 = vadd.f32 %v2024, %v2088
      %v2090 = vpop.f32.mrb[0].mxu0
      %v2091 = vpop.f32.mrb[0].mxu0
      %v2092 = vadd.f32 %v2027, %v2091
      %v2093 = vpop.f32.mrb[0].mxu0
      %2094 = vmatprep.mubr.bf16.mxu0 0
      %2095 = vmatmul.mubr.bf16.gmra.mrb[0].mxu0 %v1981
      %v2096 = vpop.f32.mrb[0].mxu0
      %v2097 = vadd.f32 %v2032, %v2096
      %v2098 = vpop.f32.mrb[0].mxu0
      %v2099 = vpop.f32.mrb[0].mxu0
      %v2100 = vadd.f32 %v2035, %v2099
      %v2101 = vpop.f32.mrb[0].mxu0
      %2102 = vmatprep.mubr.bf16.mxu0 0
      %2103 = vmatmul.mubr.bf16.gmra.mrb[0].mxu0 %v1984
      %v2104 = vpop.f32.mrb[0].mxu0
      %v2105 = vadd.f32 %v2040, %v2104
      %v2106 = vpop.f32.mrb[0].mxu0
      %v2107 = vpop.f32.mrb[0].mxu0
      %v2108 = vadd.f32 %v2043, %v2107
      %v2109 = vpop.f32.mrb[0].mxu0
      %2110 = vmatprep.mubr.bf16.mxu0 0
      %2111 = vmatmul.mubr.bf16.gmra.mrb[0].mxu0 %v1987
      %v2112 = vpop.f32.mrb[0].mxu0
      %v2113 = vadd.f32 %v2048, %v2112
      %v2114 = vpop.f32.mrb[0].mxu0
      %v2115 = vpop.f32.mrb[0].mxu0
      %v2116 = vadd.f32 %v2051, %v2115
      %v2117 = vpop.f32.mrb[0].mxu0
      %2118 = vdwg.mxu0
      %v2119 = vmax.f32 %v2089, 0.0
      %v2120 = vmax.f32 %v2092, 0.0
      %v2121 = vmax.f32 %v2097, 0.0
      %v2122 = vmax.f32 %v2100, 0.0
      %v2123 = vmax.f32 %v2105, 0.0
      %v2124 = vmax.f32 %v2108, 0.0
      %v2125 = vmax.f32 %v2113, 0.0
      %v2126 = vmax.f32 %v2116, 0.0
      %2127 = vst.msk [vmem:[#allocation2 + $0x10] sm:$0xff] %vm492, %v2119
      %2128 = vst.msk [vmem:[#allocation2 + $0x18] sm:$0xff] %vm492, %v2120
      %2129 = vst.msk [vmem:[#allocation2 + $0x20] sm:$0xff] %vm492, %v2121
      %2130 = vst.msk [vmem:[#allocation2 + $0x28] sm:$0xff] %vm492, %v2122
      %2131 = vst.msk [vmem:[#allocation2 + $0x30] sm:$0xff] %vm492, %v2123
      %2132 = vst.msk [vmem:[#allocation2 + $0x38] sm:$0xff] %vm492, %v2124
      %2133 = vst.msk [vmem:[#allocation2 + $0x40] sm:$0xff] %vm492, %v2125
      %2134 = vst.msk [vmem:[#allocation2 + $0x48] sm:$0xff] %vm492, %v2126
      %v2135 = vld [vmem:[#allocation2 + $0x7] sm:$0xff]
      %v2136 = vld [vmem:[#allocation2 + $0xf] sm:$0xff]
      %v2137 = vld [vmem:[#allocation2 + $0x17] sm:$0xff]
      %v2138 = vld [vmem:[#allocation2 + $0x1f] sm:$0xff]
      %v2139 = vld [vmem:[#allocation2 + $0x27] sm:$0xff]
      %v2140 = vld [vmem:[#allocation2 + $0x2f] sm:$0xff]
      %v2141 = vld [vmem:[#allocation2 + $0x37] sm:$0xff]
      %v2142 = vld [vmem:[#allocation2 + $0x3f] sm:$0xff]
      %v2143 = vsel %vm658, %v2135, 0.0
      %v2144 = vsel %vm659, %v2136, 0.0
      %v2145 = vsel %vm660, %v2137, 0.0
      %v2146 = vsel %vm661, %v2138, 0.0
      %v2147 = vsel %vm662, %v2139, 0.0
      %v2148 = vsel %vm663, %v2140, 0.0
      %v2149 = vsel %vm664, %v2141, 0.0
      %v2150 = vsel %vm665, %v2142, 0.0
      %2151 = vst.msk [vmem:[#allocation3] sm:$0xff] %vm492, %v2143
      %2152 = vst.msk [vmem:[#allocation3 + $0x18] sm:$0xff] %vm492, %v2144
      %2153 = vst.msk [vmem:[#allocation3 + $0x30] sm:$0xff] %vm492, %v2145
      %2154 = vst.msk [vmem:[#allocation3 + $0x48] sm:$0xff] %vm492, %v2146
      %2155 = vst.msk [vmem:[#allocation3 + $0x60] sm:$0xff] %vm492, %v2147
      %2156 = vst.msk [vmem:[#allocation3 + $0x78] sm:$0xff] %vm492, %v2148
      %2157 = vst.msk [vmem:[#allocation3 + $0x90] sm:$0xff] %vm492, %v2149
      %2158 = vst.msk [vmem:[#allocation3 + $0xa8] sm:$0xff] %vm492, %v2150
      %v2159 = vld [vmem:[#allocation2 + $0x8] sm:$0xff]
      %v2160 = vld [vmem:[#allocation2 + $0x10] sm:$0xff]
      %v2161 = vld [vmem:[#allocation2 + $0x18] sm:$0xff]
      %v2162 = vld [vmem:[#allocation2 + $0x20] sm:$0xff]
      %v2163 = vld [vmem:[#allocation2 + $0x28] sm:$0xff]
      %v2164 = vld [vmem:[#allocation2 + $0x30] sm:$0xff]
      %v2165 = vld [vmem:[#allocation2 + $0x38] sm:$0xff]
      %v2166 = vld [vmem:[#allocation2 + $0x40] sm:$0xff]
      %2175 = vrot.lane.b32.xlu0 %v2159, 32
      %v2176 = vpop.permute.xlu0 %2175
      %2177 = vrot.lane.b32.xlu0 %v2160, 32
      %v2178 = vpop.permute.xlu0 %2177
      %2179 = vrot.lane.b32.xlu0 %v2161, 32
      %v2180 = vpop.permute.xlu0 %2179
      %2181 = vrot.lane.b32.xlu0 %v2162, 32
      %v2182 = vpop.permute.xlu0 %2181
      %2183 = vrot.lane.b32.xlu0 %v2163, 32
      %v2184 = vpop.permute.xlu0 %2183
      %2185 = vrot.lane.b32.xlu0 %v2164, 32
      %v2186 = vpop.permute.xlu0 %2185
      %2187 = vrot.lane.b32.xlu0 %v2165, 32
      %v2188 = vpop.permute.xlu0 %2187
      %2189 = vrot.lane.b32.xlu0 %v2166, 32
      %v2190 = vpop.permute.xlu0 %2189
      %2199 = vst.msk [vmem:[#allocation3] sm:$0xff] %vm722, %v2176
      %2200 = vst.msk [vmem:[#allocation3 + $0x18] sm:$0xff] %vm722, %v2178
      %2201 = vst.msk [vmem:[#allocation3 + $0x30] sm:$0xff] %vm722, %v2180
      %2202 = vst.msk [vmem:[#allocation3 + $0x48] sm:$0xff] %vm722, %v2182
      %2203 = vst.msk [vmem:[#allocation3 + $0x60] sm:$0xff] %vm722, %v2184
      %2204 = vst.msk [vmem:[#allocation3 + $0x78] sm:$0xff] %vm722, %v2186
      %2205 = vst.msk [vmem:[#allocation3 + $0x90] sm:$0xff] %vm722, %v2188
      %2206 = vst.msk [vmem:[#allocation3 + $0xa8] sm:$0xff] %vm722, %v2190
      %v2207 = vld [vmem:[#allocation2 + $0x9] sm:$0xff]
      %v2208 = vld [vmem:[#allocation2 + $0x11] sm:$0xff]
      %v2209 = vld [vmem:[#allocation2 + $0x19] sm:$0xff]
      %v2210 = vld [vmem:[#allocation2 + $0x21] sm:$0xff]
      %v2211 = vld [vmem:[#allocation2 + $0x29] sm:$0xff]
      %v2212 = vld [vmem:[#allocation2 + $0x31] sm:$0xff]
      %v2213 = vld [vmem:[#allocation2 + $0x39] sm:$0xff]
      %v2214 = vld [vmem:[#allocation2 + $0x41] sm:$0xff]
      %v2215 = vsel %vm747, %v2207, 0.0
      %v2216 = vsel %vm748, %v2208, 0.0
      %v2217 = vsel %vm749, %v2209, 0.0
      %v2218 = vsel %vm750, %v2210, 0.0
      %v2219 = vsel %vm751, %v2211, 0.0
      %v2220 = vsel %vm752, %v2212, 0.0
      %v2221 = vsel %vm753, %v2213, 0.0
      %v2222 = vsel %vm754, %v2214, 0.0
      %2231 = vrot.lane.b32.xlu0 %v2215, 64
      %v2232 = vpop.permute.xlu0 %2231
      %2233 = vrot.lane.b32.xlu0 %v2216, 64
      %v2234 = vpop.permute.xlu0 %2233
      %2235 = vrot.lane.b32.xlu0 %v2217, 64
      %v2236 = vpop.permute.xlu0 %2235
      %2237 = vrot.lane.b32.xlu0 %v2218, 64
      %v2238 = vpop.permute.xlu0 %2237
      %2239 = vrot.lane.b32.xlu0 %v2219, 64
      %v2240 = vpop.permute.xlu0 %2239
      %2241 = vrot.lane.b32.xlu0 %v2220, 64
      %v2242 = vpop.permute.xlu0 %2241
      %2243 = vrot.lane.b32.xlu0 %v2221, 64
      %v2244 = vpop.permute.xlu0 %2243
      %2245 = vrot.lane.b32.xlu0 %v2222, 64
      %v2246 = vpop.permute.xlu0 %2245
      %2255 = vst.msk [vmem:[#allocation3] sm:$0xff] %vm795, %v2232
      %2256 = vst.msk [vmem:[#allocation3 + $0x18] sm:$0xff] %vm795, %v2234
      %2257 = vst.msk [vmem:[#allocation3 + $0x30] sm:$0xff] %vm795, %v2236
      %2258 = vst.msk [vmem:[#allocation3 + $0x48] sm:$0xff] %vm795, %v2238
      %2259 = vst.msk [vmem:[#allocation3 + $0x60] sm:$0xff] %vm795, %v2240
      %2260 = vst.msk [vmem:[#allocation3 + $0x78] sm:$0xff] %vm795, %v2242
      %2261 = vst.msk [vmem:[#allocation3 + $0x90] sm:$0xff] %vm795, %v2244
      %2262 = vst.msk [vmem:[#allocation3 + $0xa8] sm:$0xff] %vm795, %v2246
      %v2263 = vld [vmem:[#allocation2 + $0xf] sm:$0xff]
      %v2264 = vld [vmem:[#allocation2 + $0x17] sm:$0xff]
      %v2265 = vld [vmem:[#allocation2 + $0x1f] sm:$0xff]
      %v2266 = vld [vmem:[#allocation2 + $0x27] sm:$0xff]
      %v2267 = vld [vmem:[#allocation2 + $0x2f] sm:$0xff]
      %v2268 = vld [vmem:[#allocation2 + $0x37] sm:$0xff]
      %v2269 = vld [vmem:[#allocation2 + $0x3f] sm:$0xff]
      %v2270 = vld [vmem:[#allocation2 + $0x47] sm:$0xff]
      %v2271 = vsel %vm658, %v2263, 0.0
      %v2272 = vsel %vm659, %v2264, 0.0
      %v2273 = vsel %vm660, %v2265, 0.0
      %v2274 = vsel %vm661, %v2266, 0.0
      %v2275 = vsel %vm662, %v2267, 0.0
      %v2276 = vsel %vm663, %v2268, 0.0
      %v2277 = vsel %vm664, %v2269, 0.0
      %v2278 = vsel %vm665, %v2270, 0.0
      %2287 = vrot.lane.b32.xlu0 %v2271, 96
      %v2288 = vpop.permute.xlu0 %2287
      %2289 = vrot.lane.b32.xlu0 %v2272, 96
      %v2290 = vpop.permute.xlu0 %2289
      %2291 = vrot.lane.b32.xlu0 %v2273, 96
      %v2292 = vpop.permute.xlu0 %2291
      %2293 = vrot.lane.b32.xlu0 %v2274, 96
      %v2294 = vpop.permute.xlu0 %2293
      %2295 = vrot.lane.b32.xlu0 %v2275, 96
      %v2296 = vpop.permute.xlu0 %2295
      %2297 = vrot.lane.b32.xlu0 %v2276, 96
      %v2298 = vpop.permute.xlu0 %2297
      %2299 = vrot.lane.b32.xlu0 %v2277, 96
      %v2300 = vpop.permute.xlu0 %2299
      %2301 = vrot.lane.b32.xlu0 %v2278, 96
      %v2302 = vpop.permute.xlu0 %2301
      %2311 = vst.msk [vmem:[#allocation3] sm:$0xff] %vm852, %v2288
      %2312 = vst.msk [vmem:[#allocation3 + $0x18] sm:$0xff] %vm852, %v2290
      %2313 = vst.msk [vmem:[#allocation3 + $0x30] sm:$0xff] %vm852, %v2292
      %2314 = vst.msk [vmem:[#allocation3 + $0x48] sm:$0xff] %vm852, %v2294
      %2315 = vst.msk [vmem:[#allocation3 + $0x60] sm:$0xff] %vm852, %v2296
      %2316 = vst.msk [vmem:[#allocation3 + $0x78] sm:$0xff] %vm852, %v2298
      %2317 = vst.msk [vmem:[#allocation3 + $0x90] sm:$0xff] %vm852, %v2300
      %2318 = vst.msk [vmem:[#allocation3 + $0xa8] sm:$0xff] %vm852, %v2302
      %v2319 = vld [vmem:[#allocation2 + $0x10] sm:$0xff]
      %v2320 = vld [vmem:[#allocation2 + $0x18] sm:$0xff]
      %v2321 = vld [vmem:[#allocation2 + $0x20] sm:$0xff]
      %v2322 = vld [vmem:[#allocation2 + $0x28] sm:$0xff]
      %v2323 = vld [vmem:[#allocation2 + $0x30] sm:$0xff]
      %v2324 = vld [vmem:[#allocation2 + $0x38] sm:$0xff]
      %v2325 = vld [vmem:[#allocation2 + $0x40] sm:$0xff]
      %v2326 = vld [vmem:[#allocation2 + $0x48] sm:$0xff]
      %2327 = vst.msk [vmem:[#allocation3 + $0x8] sm:$0xff] %vm492, %v2319
      %2328 = vst.msk [vmem:[#allocation3 + $0x20] sm:$0xff] %vm492, %v2320
      %2329 = vst.msk [vmem:[#allocation3 + $0x38] sm:$0xff] %vm492, %v2321
      %2330 = vst.msk [vmem:[#allocation3 + $0x50] sm:$0xff] %vm492, %v2322
      %2331 = vst.msk [vmem:[#allocation3 + $0x68] sm:$0xff] %vm492, %v2323
      %2332 = vst.msk [vmem:[#allocation3 + $0x80] sm:$0xff] %vm492, %v2324
      %2333 = vst.msk [vmem:[#allocation3 + $0x98] sm:$0xff] %vm492, %v2325
      %2334 = vst.msk [vmem:[#allocation3 + $0xb0] sm:$0xff] %vm492, %v2326
      %v2335 = vld [vmem:[#allocation2 + $0x11] sm:$0xff]
      %v2336 = vld [vmem:[#allocation2 + $0x19] sm:$0xff]
      %v2337 = vld [vmem:[#allocation2 + $0x21] sm:$0xff]
      %v2338 = vld [vmem:[#allocation2 + $0x29] sm:$0xff]
      %v2339 = vld [vmem:[#allocation2 + $0x31] sm:$0xff]
      %v2340 = vld [vmem:[#allocation2 + $0x39] sm:$0xff]
      %v2341 = vld [vmem:[#allocation2 + $0x41] sm:$0xff]
      %v2342 = vld [vmem:[#allocation2 + $0x49] sm:$0xff]
      %v2343 = vsel %vm747, %v2335, 0.0
      %v2344 = vsel %vm748, %v2336, 0.0
      %v2345 = vsel %vm749, %v2337, 0.0
      %v2346 = vsel %vm750, %v2338, 0.0
      %v2347 = vsel %vm751, %v2339, 0.0
      %v2348 = vsel %vm752, %v2340, 0.0
      %v2349 = vsel %vm753, %v2341, 0.0
      %v2350 = vsel %vm754, %v2342, 0.0
      %2359 = vrot.lane.b32.xlu0 %v2343, 32
      %v2360 = vpop.permute.xlu0 %2359
      %2361 = vrot.lane.b32.xlu0 %v2344, 32
      %v2362 = vpop.permute.xlu0 %2361
      %2363 = vrot.lane.b32.xlu0 %v2345, 32
      %v2364 = vpop.permute.xlu0 %2363
      %2365 = vrot.lane.b32.xlu0 %v2346, 32
      %v2366 = vpop.permute.xlu0 %2365
      %2367 = vrot.lane.b32.xlu0 %v2347, 32
      %v2368 = vpop.permute.xlu0 %2367
      %2369 = vrot.lane.b32.xlu0 %v2348, 32
      %v2370 = vpop.permute.xlu0 %2369
      %2371 = vrot.lane.b32.xlu0 %v2349, 32
      %v2372 = vpop.permute.xlu0 %2371
      %2373 = vrot.lane.b32.xlu0 %v2350, 32
      %v2374 = vpop.permute.xlu0 %2373
      %2383 = vst.msk [vmem:[#allocation3 + $0x8] sm:$0xff] %vm722, %v2360
      %2384 = vst.msk [vmem:[#allocation3 + $0x20] sm:$0xff] %vm722, %v2362
      %2385 = vst.msk [vmem:[#allocation3 + $0x38] sm:$0xff] %vm722, %v2364
      %2386 = vst.msk [vmem:[#allocation3 + $0x50] sm:$0xff] %vm722, %v2366
      %2387 = vst.msk [vmem:[#allocation3 + $0x68] sm:$0xff] %vm722, %v2368
      %2388 = vst.msk [vmem:[#allocation3 + $0x80] sm:$0xff] %vm722, %v2370
      %2389 = vst.msk [vmem:[#allocation3 + $0x98] sm:$0xff] %vm722, %v2372
      %2390 = vst.msk [vmem:[#allocation3 + $0xb0] sm:$0xff] %vm722, %v2374
      %v2391 = vld [vmem:[#allocation2 + $0x17] sm:$0xff]
      %v2392 = vld [vmem:[#allocation2 + $0x1f] sm:$0xff]
      %v2393 = vld [vmem:[#allocation2 + $0x27] sm:$0xff]
      %v2394 = vld [vmem:[#allocation2 + $0x2f] sm:$0xff]
      %v2395 = vld [vmem:[#allocation2 + $0x37] sm:$0xff]
      %v2396 = vld [vmem:[#allocation2 + $0x3f] sm:$0xff]
      %v2397 = vld [vmem:[#allocation2 + $0x47] sm:$0xff]
      %v2398 = vld [vmem:[#allocation2 + $0x4f] sm:$0xff]
      %v2399 = vsel %vm658, %v2391, 0.0
      %v2400 = vsel %vm659, %v2392, 0.0
      %v2401 = vsel %vm660, %v2393, 0.0
      %v2402 = vsel %vm661, %v2394, 0.0
      %v2403 = vsel %vm662, %v2395, 0.0
      %v2404 = vsel %vm663, %v2396, 0.0
      %v2405 = vsel %vm664, %v2397, 0.0
      %v2406 = vsel %vm665, %v2398, 0.0
      %2415 = vrot.lane.b32.xlu0 %v2399, 64
      %v2416 = vpop.permute.xlu0 %2415
      %2417 = vrot.lane.b32.xlu0 %v2400, 64
      %v2418 = vpop.permute.xlu0 %2417
      %2419 = vrot.lane.b32.xlu0 %v2401, 64
      %v2420 = vpop.permute.xlu0 %2419
      %2421 = vrot.lane.b32.xlu0 %v2402, 64
      %v2422 = vpop.permute.xlu0 %2421
      %2423 = vrot.lane.b32.xlu0 %v2403, 64
      %v2424 = vpop.permute.xlu0 %2423
      %2425 = vrot.lane.b32.xlu0 %v2404, 64
      %v2426 = vpop.permute.xlu0 %2425
      %2427 = vrot.lane.b32.xlu0 %v2405, 64
      %v2428 = vpop.permute.xlu0 %2427
      %2429 = vrot.lane.b32.xlu0 %v2406, 64
      %v2430 = vpop.permute.xlu0 %2429
      %2439 = vst.msk [vmem:[#allocation3 + $0x8] sm:$0xff] %vm795, %v2416
      %2440 = vst.msk [vmem:[#allocation3 + $0x20] sm:$0xff] %vm795, %v2418
      %2441 = vst.msk [vmem:[#allocation3 + $0x38] sm:$0xff] %vm795, %v2420
      %2442 = vst.msk [vmem:[#allocation3 + $0x50] sm:$0xff] %vm795, %v2422
      %2443 = vst.msk [vmem:[#allocation3 + $0x68] sm:$0xff] %vm795, %v2424
      %2444 = vst.msk [vmem:[#allocation3 + $0x80] sm:$0xff] %vm795, %v2426
      %2445 = vst.msk [vmem:[#allocation3 + $0x98] sm:$0xff] %vm795, %v2428
      %2446 = vst.msk [vmem:[#allocation3 + $0xb0] sm:$0xff] %vm795, %v2430
      %v2447 = vld [vmem:[#allocation2 + $0x18] sm:$0xff]
      %v2448 = vld [vmem:[#allocation2 + $0x20] sm:$0xff]
      %v2449 = vld [vmem:[#allocation2 + $0x28] sm:$0xff]
      %v2450 = vld [vmem:[#allocation2 + $0x30] sm:$0xff]
      %v2451 = vld [vmem:[#allocation2 + $0x38] sm:$0xff]
      %v2452 = vld [vmem:[#allocation2 + $0x40] sm:$0xff]
      %v2453 = vld [vmem:[#allocation2 + $0x48] sm:$0xff]
      %v2454 = vld [vmem:[#allocation2 + $0x50] sm:$0xff]
      %2463 = vrot.lane.b32.xlu0 %v2447, 96
      %v2464 = vpop.permute.xlu0 %2463
      %2465 = vrot.lane.b32.xlu0 %v2448, 96
      %v2466 = vpop.permute.xlu0 %2465
      %2467 = vrot.lane.b32.xlu0 %v2449, 96
      %v2468 = vpop.permute.xlu0 %2467
      %2469 = vrot.lane.b32.xlu0 %v2450, 96
      %v2470 = vpop.permute.xlu0 %2469
      %2471 = vrot.lane.b32.xlu0 %v2451, 96
      %v2472 = vpop.permute.xlu0 %2471
      %2473 = vrot.lane.b32.xlu0 %v2452, 96
      %v2474 = vpop.permute.xlu0 %2473
      %2475 = vrot.lane.b32.xlu0 %v2453, 96
      %v2476 = vpop.permute.xlu0 %2475
      %2477 = vrot.lane.b32.xlu0 %v2454, 96
      %v2478 = vpop.permute.xlu0 %2477
      %2487 = vst.msk [vmem:[#allocation3 + $0x8] sm:$0xff] %vm852, %v2464
      %2488 = vst.msk [vmem:[#allocation3 + $0x20] sm:$0xff] %vm852, %v2466
      %2489 = vst.msk [vmem:[#allocation3 + $0x38] sm:$0xff] %vm852, %v2468
      %2490 = vst.msk [vmem:[#allocation3 + $0x50] sm:$0xff] %vm852, %v2470
      %2491 = vst.msk [vmem:[#allocation3 + $0x68] sm:$0xff] %vm852, %v2472
      %2492 = vst.msk [vmem:[#allocation3 + $0x80] sm:$0xff] %vm852, %v2474
      %2493 = vst.msk [vmem:[#allocation3 + $0x98] sm:$0xff] %vm852, %v2476
      %2494 = vst.msk [vmem:[#allocation3 + $0xb0] sm:$0xff] %vm852, %v2478
      %v2495 = vld [vmem:[#allocation2 + $0x19] sm:$0xff]
      %v2496 = vld [vmem:[#allocation2 + $0x21] sm:$0xff]
      %v2497 = vld [vmem:[#allocation2 + $0x29] sm:$0xff]
      %v2498 = vld [vmem:[#allocation2 + $0x31] sm:$0xff]
      %v2499 = vld [vmem:[#allocation2 + $0x39] sm:$0xff]
      %v2500 = vld [vmem:[#allocation2 + $0x41] sm:$0xff]
      %v2501 = vld [vmem:[#allocation2 + $0x49] sm:$0xff]
      %v2502 = vld [vmem:[#allocation2 + $0x51] sm:$0xff]
      %v2503 = vsel %vm747, %v2495, 0.0
      %v2504 = vsel %vm748, %v2496, 0.0
      %v2505 = vsel %vm749, %v2497, 0.0
      %v2506 = vsel %vm750, %v2498, 0.0
      %v2507 = vsel %vm751, %v2499, 0.0
      %v2508 = vsel %vm752, %v2500, 0.0
      %v2509 = vsel %vm753, %v2501, 0.0
      %v2510 = vsel %vm754, %v2502, 0.0
      %2511 = vst.msk [vmem:[#allocation3 + $0x10] sm:$0xff] %vm492, %v2503
      %2512 = vst.msk [vmem:[#allocation3 + $0x28] sm:$0xff] %vm492, %v2504
      %2513 = vst.msk [vmem:[#allocation3 + $0x40] sm:$0xff] %vm492, %v2505
      %2514 = vst.msk [vmem:[#allocation3 + $0x58] sm:$0xff] %vm492, %v2506
      %2515 = vst.msk [vmem:[#allocation3 + $0x70] sm:$0xff] %vm492, %v2507
      %2516 = vst.msk [vmem:[#allocation3 + $0x88] sm:$0xff] %vm492, %v2508
      %2517 = vst.msk [vmem:[#allocation3 + $0xa0] sm:$0xff] %vm492, %v2509
      %2518 = vst.msk [vmem:[#allocation3 + $0xb8] sm:$0xff] %vm492, %v2510
      %v2519 = vld [vmem:[#allocation3] sm:$0xff]
      %v2520 = vld [vmem:[#allocation3 + $0x8] sm:$0xff]
      %v2521 = vld [vmem:[#allocation3 + $0x10] sm:$0xff]
      %v2522 = vld [vmem:[#allocation3 + $0x18] sm:$0xff]
      %v2523 = vld [vmem:[#allocation3 + $0x20] sm:$0xff]
      %v2524 = vld [vmem:[#allocation3 + $0x28] sm:$0xff]
      %v2525 = vld [vmem:[#allocation3 + $0x30] sm:$0xff]
      %v2526 = vld [vmem:[#allocation3 + $0x38] sm:$0xff]
      %v2527 = vld [vmem:[#allocation3 + $0x40] sm:$0xff]
      %v2528 = vld [vmem:[#allocation3 + $0x48] sm:$0xff]
      %v2529 = vld [vmem:[#allocation3 + $0x50] sm:$0xff]
      %v2530 = vld [vmem:[#allocation3 + $0x58] sm:$0xff]
      %v2531 = vld [vmem:[#allocation3 + $0x60] sm:$0xff]
      %v2532 = vld [vmem:[#allocation3 + $0x68] sm:$0xff]
      %v2533 = vld [vmem:[#allocation3 + $0x70] sm:$0xff]
      %v2534 = vld [vmem:[#allocation3 + $0x78] sm:$0xff]
      %v2535 = vld [vmem:[#allocation3 + $0x80] sm:$0xff]
      %v2536 = vld [vmem:[#allocation3 + $0x88] sm:$0xff]
      %v2537 = vld [vmem:[#allocation3 + $0x90] sm:$0xff]
      %v2538 = vld [vmem:[#allocation3 + $0x98] sm:$0xff]
      %v2539 = vld [vmem:[#allocation3 + $0xa0] sm:$0xff]
      %v2540 = vld [vmem:[#allocation3 + $0xa8] sm:$0xff]
      %v2541 = vld [vmem:[#allocation3 + $0xb0] sm:$0xff]
      %v2542 = vld [vmem:[#allocation3 + $0xb8] sm:$0xff]
      %v2543 = vpack.c.bf16 %v2522, %v2519
      %v2544 = vpack.c.bf16 %v2523, %v2520
      %v2545 = vpack.c.bf16 %v2524, %v2521
      %v2546 = vpack.c.bf16 %v2528, %v2525
      %v2547 = vpack.c.bf16 %v2529, %v2526
      %v2548 = vpack.c.bf16 %v2530, %v2527
      %v2549 = vpack.c.bf16 %v2534, %v2531
      %v2550 = vpack.c.bf16 %v2535, %v2532
      %v2551 = vpack.c.bf16 %v2536, %v2533
      %v2552 = vpack.c.bf16 %v2540, %v2537
      %v2553 = vpack.c.bf16 %v2541, %v2538
      %v2554 = vpack.c.bf16 %v2542, %v2539
      %v2555 = vld [vmem:[%s5] sm:$0xf]
      %v2556 = vld [vmem:[%s5 + $0x4] sm:$0xf]
      %v2557 = vld [vmem:[%s5 + $0x8] sm:$0xf]
      %v2558 = vld [vmem:[%s5 + $0xc] sm:$0xf]
      %v2559 = vld [vmem:[%s5 + $0x10] sm:$0xf]
      %v2560 = vld [vmem:[%s5 + $0x14] sm:$0xf]
      %v2561 = vld [vmem:[%s5 + $0x18] sm:$0xf]
      %v2562 = vld [vmem:[%s5 + $0x1c] sm:$0xf]
      %v2563 = vld [vmem:[%s5 + $0x20] sm:$0xf]
      %v2564 = vld [vmem:[%s5 + $0x24] sm:$0xf]
      %v2565 = vld [vmem:[%s5 + $0x28] sm:$0xf]
      %v2566 = vld [vmem:[%s5 + $0x2c] sm:$0xf]
      %v2567 = vld [vmem:[%s5 + $0x30] sm:$0xf]
      %v2568 = vld [vmem:[%s5 + $0x34] sm:$0xf]
      %v2569 = vld [vmem:[%s5 + $0x38] sm:$0xf]
      %v2570 = vld [vmem:[%s5 + $0x3c] sm:$0xf]
      %v2571 = vld [vmem:[%s5 + $0x40] sm:$0xf]
      %v2572 = vld [vmem:[%s5 + $0x44] sm:$0xf]
      %v2573 = vld [vmem:[%s5 + $0x48] sm:$0xf]
      %v2574 = vld [vmem:[%s5 + $0x4c] sm:$0xf]
      %v2575 = vld [vmem:[%s5 + $0x50] sm:$0xf]
      %v2576 = vld [vmem:[%s5 + $0x54] sm:$0xf]
      %v2577 = vld [vmem:[%s5 + $0x58] sm:$0xf]
      %v2578 = vld [vmem:[%s5 + $0x5c] sm:$0xf]
      %v2579 = vld [vmem:[%s5 + $0x60] sm:$0xf]
      %v2580 = vld [vmem:[%s5 + $0x64] sm:$0xf]
      %v2581 = vld [vmem:[%s5 + $0x68] sm:$0xf]
      %v2582 = vld [vmem:[%s5 + $0x6c] sm:$0xf]
      %v2583 = vld [vmem:[%s5 + $0x70] sm:$0xf]
      %v2584 = vld [vmem:[%s5 + $0x74] sm:$0xf]
      %v2585 = vld [vmem:[%s5 + $0x78] sm:$0xf]
      %v2586 = vld [vmem:[%s5 + $0x7c] sm:$0xf]
      %v2587 = vld [vmem:[%s5 + $0x80] sm:$0xf]
      %v2588 = vld [vmem:[%s5 + $0x84] sm:$0xf]
      %v2589 = vld [vmem:[%s5 + $0x88] sm:$0xf]
      %v2590 = vld [vmem:[%s5 + $0x8c] sm:$0xf]
      %v2591 = vld [vmem:[%s6] sm:$0x1]
      %v2593 = vlaneseq
      %v2594 = vshrl.u32 %v2593, 7
      %v2595 = vsub.s32 0, %v2594
      %v2596 = vrot.slane %v2591, %v2595
      %v2634 = vunpack.c.l.b16 %v2555
      %v2635 = vunpack.c.l.b16 %v2556
      %v2636 = vunpack.c.l.b16 %v2557
      %v2637 = vunpack.c.l.b16 %v2558
      %v2638 = vunpack.c.l.b16 %v2559
      %v2639 = vunpack.c.l.b16 %v2560
      %v2640 = vunpack.c.l.b16 %v2561
      %v2641 = vunpack.c.l.b16 %v2562
      %v2642 = vunpack.c.l.b16 %v2563
      %v2643 = vunpack.c.l.b16 %v2564
      %v2644 = vunpack.c.l.b16 %v2565
      %v2645 = vunpack.c.l.b16 %v2566
      %v2646 = vunpack.c.l.b16 %v2567
      %v2647 = vunpack.c.l.b16 %v2568
      %v2648 = vunpack.c.l.b16 %v2569
      %v2649 = vunpack.c.l.b16 %v2570
      %v2650 = vunpack.c.l.b16 %v2571
      %v2651 = vunpack.c.l.b16 %v2572
      %v2652 = vunpack.c.l.b16 %v2573
      %v2653 = vunpack.c.l.b16 %v2574
      %v2654 = vunpack.c.l.b16 %v2575
      %v2655 = vunpack.c.l.b16 %v2576
      %v2656 = vunpack.c.l.b16 %v2577
      %v2657 = vunpack.c.l.b16 %v2578
      %v2658 = vunpack.c.l.b16 %v2579
      %v2659 = vunpack.c.l.b16 %v2580
      %v2660 = vunpack.c.l.b16 %v2581
      %v2661 = vunpack.c.l.b16 %v2582
      %v2662 = vunpack.c.l.b16 %v2583
      %v2663 = vunpack.c.l.b16 %v2584
      %v2664 = vunpack.c.l.b16 %v2585
      %v2665 = vunpack.c.l.b16 %v2586
      %v2666 = vunpack.c.l.b16 %v2587
      %v2667 = vunpack.c.l.b16 %v2588
      %v2668 = vunpack.c.l.b16 %v2589
      %v2669 = vunpack.c.l.b16 %v2590
      %v2670 = vpack.c.b16 %v2635, %v2634
      %v2671 = vpack.c.b16 %v2637, %v2636
      %v2672 = vpack.c.b16 %v2639, %v2638
      %v2673 = vpack.c.b16 %v2641, %v2640
      %v2674 = vpack.c.b16 %v2643, %v2642
      %v2675 = vpack.c.b16 %v2645, %v2644
      %v2676 = vpack.c.b16 %v2647, %v2646
      %v2677 = vpack.c.b16 %v2649, %v2648
      %v2678 = vpack.c.b16 %v2651, %v2650
      %v2679 = vpack.c.b16 %v2653, %v2652
      %v2680 = vpack.c.b16 %v2655, %v2654
      %v2681 = vpack.c.b16 %v2657, %v2656
      %v2682 = vpack.c.b16 %v2659, %v2658
      %v2683 = vpack.c.b16 %v2661, %v2660
      %v2684 = vpack.c.b16 %v2663, %v2662
      %v2685 = vpack.c.b16 %v2665, %v2664
      %v2686 = vpack.c.b16 %v2667, %v2666
      %v2687 = vpack.c.b16 %v2669, %v2668
      %v2707 = vsel %vm492, %v2545, 0
      %v2710 = vsel %vm492, %v2548, 0
      %v2713 = vsel %vm492, %v2551, 0
      %v2716 = vsel %vm492, %v2554, 0
      %2718 = vmatprep.subr.bf16.mxu0 0
      %2719 = vmatpush1.bf16.msra.mxu0 %v2670
      %2720 = vmatprep.subr.bf16.mxu0 0
      %2721 = vmatpush1.bf16.msra.mxu0 %v2671
      %2722 = vmatprep.subr.bf16.mxu0 0
      %2723 = vmatpush1.bf16.msra.mxu0 %v2672
      %2724 = vmatprep.subr.bf16.mxu0 0
      %2725 = vmatpush1.bf16.msra.mxu0 %v2673
      %2726 = vmatprep.subr.bf16.mxu0 0
      %2727 = vmatpush1.bf16.msra.mxu0 %v2674
      %2728 = vmatprep.subr.bf16.mxu0 0
      %2729 = vmatpush1.bf16.msra.mxu0 %v2675
      %2730 = vmatprep.subr.bf16.mxu0 0
      %2731 = vmatpush1.bf16.msra.mxu0 %v2676
      %2732 = vmatprep.subr.bf16.mxu0 0
      %2733 = vmatpush1.bf16.msra.mxu0 %v2677
      %2734 = vmatprep.subr.bf16.mxu0 0
      %2735 = vmatpush1.bf16.msra.mxu0 %v2678
      %2736 = vmatprep.subr.bf16.mxu0 0
      %2737 = vmatpush1.bf16.msra.mxu0 %v2679
      %2738 = vmatprep.subr.bf16.mxu0 0
      %2739 = vmatpush1.bf16.msra.mxu0 %v2680
      %2740 = vmatprep.subr.bf16.mxu0 0
      %2741 = vmatpush1.bf16.msra.mxu0 %v2681
      %2742 = vmatprep.subr.bf16.mxu0 0
      %2743 = vmatpush1.bf16.msra.mxu0 %v2682
      %2744 = vmatprep.subr.bf16.mxu0 0
      %2745 = vmatpush1.bf16.msra.mxu0 %v2683
      %2746 = vmatprep.subr.bf16.mxu0 0
      %2747 = vmatpush1.bf16.msra.mxu0 %v2684
      %2748 = vmatprep.subr.bf16.mxu0 0
      %2749 = vmatpush1.bf16.msra.mxu0 %v2685
      %2750 = vmatprep.mubr.bf16.mxu0 %v2544
      %2751 = vmatmul.mubr.bf16.gmra.mrb[0].mxu0 %v2543
      %v2752 = vpop.f32.mrb[0].mxu0
      %v2753 = vadd.f32 %v2596, %v2752
      %v2754 = vpop.f32.mrb[0].mxu0
      %v2755 = vpop.f32.mrb[0].mxu0
      %v2756 = vadd.f32 %v2596, %v2755
      %v2757 = vpop.f32.mrb[0].mxu0
      %2758 = vmatprep.mubr.bf16.mxu0 %v2547
      %2759 = vmatmul.mubr.bf16.gmra.mrb[0].mxu0 %v2546
      %v2760 = vpop.f32.mrb[0].mxu0
      %v2761 = vadd.f32 %v2596, %v2760
      %v2762 = vpop.f32.mrb[0].mxu0
      %v2763 = vpop.f32.mrb[0].mxu0
      %v2764 = vadd.f32 %v2596, %v2763
      %v2765 = vpop.f32.mrb[0].mxu0
      %2766 = vmatprep.mubr.bf16.mxu0 %v2550
      %2767 = vmatmul.mubr.bf16.gmra.mrb[0].mxu0 %v2549
      %v2768 = vpop.f32.mrb[0].mxu0
      %v2769 = vadd.f32 %v2596, %v2768
      %v2770 = vpop.f32.mrb[0].mxu0
      %v2771 = vpop.f32.mrb[0].mxu0
      %v2772 = vadd.f32 %v2596, %v2771
      %v2773 = vpop.f32.mrb[0].mxu0
      %2774 = vmatprep.mubr.bf16.mxu0 %v2553
      %2775 = vmatmul.mubr.bf16.gmra.mrb[0].mxu0 %v2552
      %v2776 = vpop.f32.mrb[0].mxu0
      %v2777 = vadd.f32 %v2596, %v2776
      %v2778 = vpop.f32.mrb[0].mxu0
      %v2779 = vpop.f32.mrb[0].mxu0
      %v2780 = vadd.f32 %v2596, %v2779
      %v2781 = vpop.f32.mrb[0].mxu0
      %2782 = vdwg.mxu0
      %2783 = vmatprep.subr.bf16.mxu0 0
      %2784 = vmatpush1.bf16.msra.mxu0 %v2686
      %2785 = vmatprep.subr.bf16.mxu0 0
      %2786 = vmatpush1.bf16.msra.mxu0 %v2687
      %2787 = vmatprep.subr.bf16.mxu0 0
      %2788 = vmatpush1.bf16.msra.mxu0 0
      %2789 = vmatprep.subr.bf16.mxu0 0
      %2790 = vmatpush1.bf16.msra.mxu0 0
      %2791 = vmatprep.subr.bf16.mxu0 0
      %2792 = vmatpush1.bf16.msra.mxu0 0
      %2793 = vmatprep.subr.bf16.mxu0 0
      %2794 = vmatpush1.bf16.msra.mxu0 0
      %2795 = vmatprep.subr.bf16.mxu0 0
      %2796 = vmatpush1.bf16.msra.mxu0 0
      %2797 = vmatprep.subr.bf16.mxu0 0
      %2798 = vmatpush1.bf16.msra.mxu0 0
      %2799 = vmatprep.subr.bf16.mxu0 0
      %2800 = vmatpush1.bf16.msra.mxu0 0
      %2801 = vmatprep.subr.bf16.mxu0 0
      %2802 = vmatpush1.bf16.msra.mxu0 0
      %2803 = vmatprep.subr.bf16.mxu0 0
      %2804 = vmatpush1.bf16.msra.mxu0 0
      %2805 = vmatprep.subr.bf16.mxu0 0
      %2806 = vmatpush1.bf16.msra.mxu0 0
      %2807 = vmatprep.subr.bf16.mxu0 0
      %2808 = vmatpush1.bf16.msra.mxu0 0
      %2809 = vmatprep.subr.bf16.mxu0 0
      %2810 = vmatpush1.bf16.msra.mxu0 0
      %2811 = vmatprep.subr.bf16.mxu0 0
      %2812 = vmatpush1.bf16.msra.mxu0 0
      %2813 = vmatprep.subr.bf16.mxu0 0
      %2814 = vmatpush1.bf16.msra.mxu0 0
      %2815 = vmatprep.mubr.bf16.mxu0 0
      %2816 = vmatmul.mubr.bf16.gmra.mrb[0].mxu0 %v2707
      %v2817 = vpop.f32.mrb[0].mxu0
      %v2818 = vadd.f32 %v2753, %v2817
      %v2819 = vpop.f32.mrb[0].mxu0
      %v2820 = vpop.f32.mrb[0].mxu0
      %v2821 = vadd.f32 %v2756, %v2820
      %v2822 = vpop.f32.mrb[0].mxu0
      %2823 = vmatprep.mubr.bf16.mxu0 0
      %2824 = vmatmul.mubr.bf16.gmra.mrb[0].mxu0 %v2710
      %v2825 = vpop.f32.mrb[0].mxu0
      %v2826 = vadd.f32 %v2761, %v2825
      %v2827 = vpop.f32.mrb[0].mxu0
      %v2828 = vpop.f32.mrb[0].mxu0
      %v2829 = vadd.f32 %v2764, %v2828
      %v2830 = vpop.f32.mrb[0].mxu0
      %2831 = vmatprep.mubr.bf16.mxu0 0
      %2832 = vmatmul.mubr.bf16.gmra.mrb[0].mxu0 %v2713
      %v2833 = vpop.f32.mrb[0].mxu0
      %v2834 = vadd.f32 %v2769, %v2833
      %v2835 = vpop.f32.mrb[0].mxu0
      %v2836 = vpop.f32.mrb[0].mxu0
      %v2837 = vadd.f32 %v2772, %v2836
      %v2838 = vpop.f32.mrb[0].mxu0
      %2839 = vmatprep.mubr.bf16.mxu0 0
      %2840 = vmatmul.mubr.bf16.gmra.mrb[0].mxu0 %v2716
      %v2841 = vpop.f32.mrb[0].mxu0
      %v2842 = vadd.f32 %v2777, %v2841
      %v2843 = vpop.f32.mrb[0].mxu0
      %v2844 = vpop.f32.mrb[0].mxu0
      %v2845 = vadd.f32 %v2780, %v2844
      %v2846 = vpop.f32.mrb[0].mxu0
      %2847 = vdwg.mxu0
      %v2848 = vadd.f32 %v2818, %v1390
      %v2849 = vadd.f32 %v2821, %v1391
      %v2850 = vadd.f32 %v2826, %v1392
      %v2851 = vadd.f32 %v2829, %v1393
      %v2852 = vadd.f32 %v2834, %v1394
      %v2853 = vadd.f32 %v2837, %v1395
      %v2854 = vadd.f32 %v2842, %v1396
      %v2855 = vadd.f32 %v2845, %v1397
      %v2856 = vmax.f32 %v2848, 0.0
      %v2857 = vmax.f32 %v2849, 0.0
      %v2858 = vmax.f32 %v2850, 0.0
      %v2859 = vmax.f32 %v2851, 0.0
      %v2860 = vmax.f32 %v2852, 0.0
      %v2861 = vmax.f32 %v2853, 0.0
      %v2862 = vmax.f32 %v2854, 0.0
      %v2863 = vmax.f32 %v2855, 0.0
      %2864 = vst.msk [vmem:[#allocation2 + $0x10] sm:$0xff] %vm492, %v2856
      %2865 = vst.msk [vmem:[#allocation2 + $0x18] sm:$0xff] %vm492, %v2857
      %2866 = vst.msk [vmem:[#allocation2 + $0x20] sm:$0xff] %vm492, %v2858
      %2867 = vst.msk [vmem:[#allocation2 + $0x28] sm:$0xff] %vm492, %v2859
      %2868 = vst.msk [vmem:[#allocation2 + $0x30] sm:$0xff] %vm492, %v2860
      %2869 = vst.msk [vmem:[#allocation2 + $0x38] sm:$0xff] %vm492, %v2861
      %2870 = vst.msk [vmem:[#allocation2 + $0x40] sm:$0xff] %vm492, %v2862
      %2871 = vst.msk [vmem:[#allocation2 + $0x48] sm:$0xff] %vm492, %v2863
      %v2872 = vld [vmem:[#allocation2 + $0x7] sm:$0xff]
      %v2873 = vld [vmem:[#allocation2 + $0xf] sm:$0xff]
      %v2874 = vld [vmem:[#allocation2 + $0x17] sm:$0xff]
      %v2875 = vld [vmem:[#allocation2 + $0x1f] sm:$0xff]
      %v2876 = vld [vmem:[#allocation2 + $0x27] sm:$0xff]
      %v2877 = vld [vmem:[#allocation2 + $0x2f] sm:$0xff]
      %v2878 = vld [vmem:[#allocation2 + $0x37] sm:$0xff]
      %v2879 = vld [vmem:[#allocation2 + $0x3f] sm:$0xff]
      %v2880 = vsel %vm658, %v2872, 0.0
      %v2881 = vsel %vm659, %v2873, 0.0
      %v2882 = vsel %vm660, %v2874, 0.0
      %v2883 = vsel %vm661, %v2875, 0.0
      %v2884 = vsel %vm662, %v2876, 0.0
      %v2885 = vsel %vm663, %v2877, 0.0
      %v2886 = vsel %vm664, %v2878, 0.0
      %v2887 = vsel %vm665, %v2879, 0.0
      %2888 = vst.msk [vmem:[#allocation3] sm:$0xff] %vm492, %v2880
      %2889 = vst.msk [vmem:[#allocation3 + $0x18] sm:$0xff] %vm492, %v2881
      %2890 = vst.msk [vmem:[#allocation3 + $0x30] sm:$0xff] %vm492, %v2882
      %2891 = vst.msk [vmem:[#allocation3 + $0x48] sm:$0xff] %vm492, %v2883
      %2892 = vst.msk [vmem:[#allocation3 + $0x60] sm:$0xff] %vm492, %v2884
      %2893 = vst.msk [vmem:[#allocation3 + $0x78] sm:$0xff] %vm492, %v2885
      %2894 = vst.msk [vmem:[#allocation3 + $0x90] sm:$0xff] %vm492, %v2886
      %2895 = vst.msk [vmem:[#allocation3 + $0xa8] sm:$0xff] %vm492, %v2887
      %v2896 = vld [vmem:[#allocation2 + $0x8] sm:$0xff]
      %v2897 = vld [vmem:[#allocation2 + $0x10] sm:$0xff]
      %v2898 = vld [vmem:[#allocation2 + $0x18] sm:$0xff]
      %v2899 = vld [vmem:[#allocation2 + $0x20] sm:$0xff]
      %v2900 = vld [vmem:[#allocation2 + $0x28] sm:$0xff]
      %v2901 = vld [vmem:[#allocation2 + $0x30] sm:$0xff]
      %v2902 = vld [vmem:[#allocation2 + $0x38] sm:$0xff]
      %v2903 = vld [vmem:[#allocation2 + $0x40] sm:$0xff]
      %2912 = vrot.lane.b32.xlu0 %v2896, 32
      %v2913 = vpop.permute.xlu0 %2912
      %2914 = vrot.lane.b32.xlu0 %v2897, 32
      %v2915 = vpop.permute.xlu0 %2914
      %2916 = vrot.lane.b32.xlu0 %v2898, 32
      %v2917 = vpop.permute.xlu0 %2916
      %2918 = vrot.lane.b32.xlu0 %v2899, 32
      %v2919 = vpop.permute.xlu0 %2918
      %2920 = vrot.lane.b32.xlu0 %v2900, 32
      %v2921 = vpop.permute.xlu0 %2920
      %2922 = vrot.lane.b32.xlu0 %v2901, 32
      %v2923 = vpop.permute.xlu0 %2922
      %2924 = vrot.lane.b32.xlu0 %v2902, 32
      %v2925 = vpop.permute.xlu0 %2924
      %2926 = vrot.lane.b32.xlu0 %v2903, 32
      %v2927 = vpop.permute.xlu0 %2926
      %2936 = vst.msk [vmem:[#allocation3] sm:$0xff] %vm722, %v2913
      %2937 = vst.msk [vmem:[#allocation3 + $0x18] sm:$0xff] %vm722, %v2915
      %2938 = vst.msk [vmem:[#allocation3 + $0x30] sm:$0xff] %vm722, %v2917
      %2939 = vst.msk [vmem:[#allocation3 + $0x48] sm:$0xff] %vm722, %v2919
      %2940 = vst.msk [vmem:[#allocation3 + $0x60] sm:$0xff] %vm722, %v2921
      %2941 = vst.msk [vmem:[#allocation3 + $0x78] sm:$0xff] %vm722, %v2923
      %2942 = vst.msk [vmem:[#allocation3 + $0x90] sm:$0xff] %vm722, %v2925
      %2943 = vst.msk [vmem:[#allocation3 + $0xa8] sm:$0xff] %vm722, %v2927
      %v2944 = vld [vmem:[#allocation2 + $0x9] sm:$0xff]
      %v2945 = vld [vmem:[#allocation2 + $0x11] sm:$0xff]
      %v2946 = vld [vmem:[#allocation2 + $0x19] sm:$0xff]
      %v2947 = vld [vmem:[#allocation2 + $0x21] sm:$0xff]
      %v2948 = vld [vmem:[#allocation2 + $0x29] sm:$0xff]
      %v2949 = vld [vmem:[#allocation2 + $0x31] sm:$0xff]
      %v2950 = vld [vmem:[#allocation2 + $0x39] sm:$0xff]
      %v2951 = vld [vmem:[#allocation2 + $0x41] sm:$0xff]
      %v2952 = vsel %vm747, %v2944, 0.0
      %v2953 = vsel %vm748, %v2945, 0.0
      %v2954 = vsel %vm749, %v2946, 0.0
      %v2955 = vsel %vm750, %v2947, 0.0
      %v2956 = vsel %vm751, %v2948, 0.0
      %v2957 = vsel %vm752, %v2949, 0.0
      %v2958 = vsel %vm753, %v2950, 0.0
      %v2959 = vsel %vm754, %v2951, 0.0
      %2968 = vrot.lane.b32.xlu0 %v2952, 64
      %v2969 = vpop.permute.xlu0 %2968
      %2970 = vrot.lane.b32.xlu0 %v2953, 64
      %v2971 = vpop.permute.xlu0 %2970
      %2972 = vrot.lane.b32.xlu0 %v2954, 64
      %v2973 = vpop.permute.xlu0 %2972
      %2974 = vrot.lane.b32.xlu0 %v2955, 64
      %v2975 = vpop.permute.xlu0 %2974
      %2976 = vrot.lane.b32.xlu0 %v2956, 64
      %v2977 = vpop.permute.xlu0 %2976
      %2978 = vrot.lane.b32.xlu0 %v2957, 64
      %v2979 = vpop.permute.xlu0 %2978
      %2980 = vrot.lane.b32.xlu0 %v2958, 64
      %v2981 = vpop.permute.xlu0 %2980
      %2982 = vrot.lane.b32.xlu0 %v2959, 64
      %v2983 = vpop.permute.xlu0 %2982
      %2992 = vst.msk [vmem:[#allocation3] sm:$0xff] %vm795, %v2969
      %2993 = vst.msk [vmem:[#allocation3 + $0x18] sm:$0xff] %vm795, %v2971
      %2994 = vst.msk [vmem:[#allocation3 + $0x30] sm:$0xff] %vm795, %v2973
      %2995 = vst.msk [vmem:[#allocation3 + $0x48] sm:$0xff] %vm795, %v2975
      %2996 = vst.msk [vmem:[#allocation3 + $0x60] sm:$0xff] %vm795, %v2977
      %2997 = vst.msk [vmem:[#allocation3 + $0x78] sm:$0xff] %vm795, %v2979
      %2998 = vst.msk [vmem:[#allocation3 + $0x90] sm:$0xff] %vm795, %v2981
      %2999 = vst.msk [vmem:[#allocation3 + $0xa8] sm:$0xff] %vm795, %v2983
      %v3000 = vld [vmem:[#allocation2 + $0xf] sm:$0xff]
      %v3001 = vld [vmem:[#allocation2 + $0x17] sm:$0xff]
      %v3002 = vld [vmem:[#allocation2 + $0x1f] sm:$0xff]
      %v3003 = vld [vmem:[#allocation2 + $0x27] sm:$0xff]
      %v3004 = vld [vmem:[#allocation2 + $0x2f] sm:$0xff]
      %v3005 = vld [vmem:[#allocation2 + $0x37] sm:$0xff]
      %v3006 = vld [vmem:[#allocation2 + $0x3f] sm:$0xff]
      %v3007 = vld [vmem:[#allocation2 + $0x47] sm:$0xff]
      %v3008 = vsel %vm658, %v3000, 0.0
      %v3009 = vsel %vm659, %v3001, 0.0
      %v3010 = vsel %vm660, %v3002, 0.0
      %v3011 = vsel %vm661, %v3003, 0.0
      %v3012 = vsel %vm662, %v3004, 0.0
      %v3013 = vsel %vm663, %v3005, 0.0
      %v3014 = vsel %vm664, %v3006, 0.0
      %v3015 = vsel %vm665, %v3007, 0.0
      %3024 = vrot.lane.b32.xlu0 %v3008, 96
      %v3025 = vpop.permute.xlu0 %3024
      %3026 = vrot.lane.b32.xlu0 %v3009, 96
      %v3027 = vpop.permute.xlu0 %3026
      %3028 = vrot.lane.b32.xlu0 %v3010, 96
      %v3029 = vpop.permute.xlu0 %3028
      %3030 = vrot.lane.b32.xlu0 %v3011, 96
      %v3031 = vpop.permute.xlu0 %3030
      %3032 = vrot.lane.b32.xlu0 %v3012, 96
      %v3033 = vpop.permute.xlu0 %3032
      %3034 = vrot.lane.b32.xlu0 %v3013, 96
      %v3035 = vpop.permute.xlu0 %3034
      %3036 = vrot.lane.b32.xlu0 %v3014, 96
      %v3037 = vpop.permute.xlu0 %3036
      %3038 = vrot.lane.b32.xlu0 %v3015, 96
      %v3039 = vpop.permute.xlu0 %3038
      %3048 = vst.msk [vmem:[#allocation3] sm:$0xff] %vm852, %v3025
      %3049 = vst.msk [vmem:[#allocation3 + $0x18] sm:$0xff] %vm852, %v3027
      %3050 = vst.msk [vmem:[#allocation3 + $0x30] sm:$0xff] %vm852, %v3029
      %3051 = vst.msk [vmem:[#allocation3 + $0x48] sm:$0xff] %vm852, %v3031
      %3052 = vst.msk [vmem:[#allocation3 + $0x60] sm:$0xff] %vm852, %v3033
      %3053 = vst.msk [vmem:[#allocation3 + $0x78] sm:$0xff] %vm852, %v3035
      %3054 = vst.msk [vmem:[#allocation3 + $0x90] sm:$0xff] %vm852, %v3037
      %3055 = vst.msk [vmem:[#allocation3 + $0xa8] sm:$0xff] %vm852, %v3039
      %v3056 = vld [vmem:[#allocation2 + $0x10] sm:$0xff]
      %v3057 = vld [vmem:[#allocation2 + $0x18] sm:$0xff]
      %v3058 = vld [vmem:[#allocation2 + $0x20] sm:$0xff]
      %v3059 = vld [vmem:[#allocation2 + $0x28] sm:$0xff]
      %v3060 = vld [vmem:[#allocation2 + $0x30] sm:$0xff]
      %v3061 = vld [vmem:[#allocation2 + $0x38] sm:$0xff]
      %v3062 = vld [vmem:[#allocation2 + $0x40] sm:$0xff]
      %v3063 = vld [vmem:[#allocation2 + $0x48] sm:$0xff]
      %3064 = vst.msk [vmem:[#allocation3 + $0x8] sm:$0xff] %vm492, %v3056
      %3065 = vst.msk [vmem:[#allocation3 + $0x20] sm:$0xff] %vm492, %v3057
      %3066 = vst.msk [vmem:[#allocation3 + $0x38] sm:$0xff] %vm492, %v3058
      %3067 = vst.msk [vmem:[#allocation3 + $0x50] sm:$0xff] %vm492, %v3059
      %3068 = vst.msk [vmem:[#allocation3 + $0x68] sm:$0xff] %vm492, %v3060
      %3069 = vst.msk [vmem:[#allocation3 + $0x80] sm:$0xff] %vm492, %v3061
      %3070 = vst.msk [vmem:[#allocation3 + $0x98] sm:$0xff] %vm492, %v3062
      %3071 = vst.msk [vmem:[#allocation3 + $0xb0] sm:$0xff] %vm492, %v3063
      %v3072 = vld [vmem:[#allocation2 + $0x11] sm:$0xff]
      %v3073 = vld [vmem:[#allocation2 + $0x19] sm:$0xff]
      %v3074 = vld [vmem:[#allocation2 + $0x21] sm:$0xff]
      %v3075 = vld [vmem:[#allocation2 + $0x29] sm:$0xff]
      %v3076 = vld [vmem:[#allocation2 + $0x31] sm:$0xff]
      %v3077 = vld [vmem:[#allocation2 + $0x39] sm:$0xff]
      %v3078 = vld [vmem:[#allocation2 + $0x41] sm:$0xff]
      %v3079 = vld [vmem:[#allocation2 + $0x49] sm:$0xff]
      %v3080 = vsel %vm747, %v3072, 0.0
      %v3081 = vsel %vm748, %v3073, 0.0
      %v3082 = vsel %vm749, %v3074, 0.0
      %v3083 = vsel %vm750, %v3075, 0.0
      %v3084 = vsel %vm751, %v3076, 0.0
      %v3085 = vsel %vm752, %v3077, 0.0
      %v3086 = vsel %vm753, %v3078, 0.0
      %v3087 = vsel %vm754, %v3079, 0.0
      %3096 = vrot.lane.b32.xlu0 %v3080, 32
      %v3097 = vpop.permute.xlu0 %3096
      %3098 = vrot.lane.b32.xlu0 %v3081, 32
      %v3099 = vpop.permute.xlu0 %3098
      %3100 = vrot.lane.b32.xlu0 %v3082, 32
      %v3101 = vpop.permute.xlu0 %3100
      %3102 = vrot.lane.b32.xlu0 %v3083, 32
      %v3103 = vpop.permute.xlu0 %3102
      %3104 = vrot.lane.b32.xlu0 %v3084, 32
      %v3105 = vpop.permute.xlu0 %3104
      %3106 = vrot.lane.b32.xlu0 %v3085, 32
      %v3107 = vpop.permute.xlu0 %3106
      %3108 = vrot.lane.b32.xlu0 %v3086, 32
      %v3109 = vpop.permute.xlu0 %3108
      %3110 = vrot.lane.b32.xlu0 %v3087, 32
      %v3111 = vpop.permute.xlu0 %3110
      %3120 = vst.msk [vmem:[#allocation3 + $0x8] sm:$0xff] %vm722, %v3097
      %3121 = vst.msk [vmem:[#allocation3 + $0x20] sm:$0xff] %vm722, %v3099
      %3122 = vst.msk [vmem:[#allocation3 + $0x38] sm:$0xff] %vm722, %v3101
      %3123 = vst.msk [vmem:[#allocation3 + $0x50] sm:$0xff] %vm722, %v3103
      %3124 = vst.msk [vmem:[#allocation3 + $0x68] sm:$0xff] %vm722, %v3105
      %3125 = vst.msk [vmem:[#allocation3 + $0x80] sm:$0xff] %vm722, %v3107
      %3126 = vst.msk [vmem:[#allocation3 + $0x98] sm:$0xff] %vm722, %v3109
      %3127 = vst.msk [vmem:[#allocation3 + $0xb0] sm:$0xff] %vm722, %v3111
      %v3128 = vld [vmem:[#allocation2 + $0x17] sm:$0xff]
      %v3129 = vld [vmem:[#allocation2 + $0x1f] sm:$0xff]
      %v3130 = vld [vmem:[#allocation2 + $0x27] sm:$0xff]
      %v3131 = vld [vmem:[#allocation2 + $0x2f] sm:$0xff]
      %v3132 = vld [vmem:[#allocation2 + $0x37] sm:$0xff]
      %v3133 = vld [vmem:[#allocation2 + $0x3f] sm:$0xff]
      %v3134 = vld [vmem:[#allocation2 + $0x47] sm:$0xff]
      %v3135 = vld [vmem:[#allocation2 + $0x4f] sm:$0xff]
      %v3136 = vsel %vm658, %v3128, 0.0
      %v3137 = vsel %vm659, %v3129, 0.0
      %v3138 = vsel %vm660, %v3130, 0.0
      %v3139 = vsel %vm661, %v3131, 0.0
      %v3140 = vsel %vm662, %v3132, 0.0
      %v3141 = vsel %vm663, %v3133, 0.0
      %v3142 = vsel %vm664, %v3134, 0.0
      %v3143 = vsel %vm665, %v3135, 0.0
      %3152 = vrot.lane.b32.xlu0 %v3136, 64
      %v3153 = vpop.permute.xlu0 %3152
      %3154 = vrot.lane.b32.xlu0 %v3137, 64
      %v3155 = vpop.permute.xlu0 %3154
      %3156 = vrot.lane.b32.xlu0 %v3138, 64
      %v3157 = vpop.permute.xlu0 %3156
      %3158 = vrot.lane.b32.xlu0 %v3139, 64
      %v3159 = vpop.permute.xlu0 %3158
      %3160 = vrot.lane.b32.xlu0 %v3140, 64
      %v3161 = vpop.permute.xlu0 %3160
      %3162 = vrot.lane.b32.xlu0 %v3141, 64
      %v3163 = vpop.permute.xlu0 %3162
      %3164 = vrot.lane.b32.xlu0 %v3142, 64
      %v3165 = vpop.permute.xlu0 %3164
      %3166 = vrot.lane.b32.xlu0 %v3143, 64
      %v3167 = vpop.permute.xlu0 %3166
      %3176 = vst.msk [vmem:[#allocation3 + $0x8] sm:$0xff] %vm795, %v3153
      %3177 = vst.msk [vmem:[#allocation3 + $0x20] sm:$0xff] %vm795, %v3155
      %3178 = vst.msk [vmem:[#allocation3 + $0x38] sm:$0xff] %vm795, %v3157
      %3179 = vst.msk [vmem:[#allocation3 + $0x50] sm:$0xff] %vm795, %v3159
      %3180 = vst.msk [vmem:[#allocation3 + $0x68] sm:$0xff] %vm795, %v3161
      %3181 = vst.msk [vmem:[#allocation3 + $0x80] sm:$0xff] %vm795, %v3163
      %3182 = vst.msk [vmem:[#allocation3 + $0x98] sm:$0xff] %vm795, %v3165
      %3183 = vst.msk [vmem:[#allocation3 + $0xb0] sm:$0xff] %vm795, %v3167
      %v3184 = vld [vmem:[#allocation2 + $0x18] sm:$0xff]
      %v3185 = vld [vmem:[#allocation2 + $0x20] sm:$0xff]
      %v3186 = vld [vmem:[#allocation2 + $0x28] sm:$0xff]
      %v3187 = vld [vmem:[#allocation2 + $0x30] sm:$0xff]
      %v3188 = vld [vmem:[#allocation2 + $0x38] sm:$0xff]
      %v3189 = vld [vmem:[#allocation2 + $0x40] sm:$0xff]
      %v3190 = vld [vmem:[#allocation2 + $0x48] sm:$0xff]
      %v3191 = vld [vmem:[#allocation2 + $0x50] sm:$0xff]
      %3200 = vrot.lane.b32.xlu0 %v3184, 96
      %v3201 = vpop.permute.xlu0 %3200
      %3202 = vrot.lane.b32.xlu0 %v3185, 96
      %v3203 = vpop.permute.xlu0 %3202
      %3204 = vrot.lane.b32.xlu0 %v3186, 96
      %v3205 = vpop.permute.xlu0 %3204
      %3206 = vrot.lane.b32.xlu0 %v3187, 96
      %v3207 = vpop.permute.xlu0 %3206
      %3208 = vrot.lane.b32.xlu0 %v3188, 96
      %v3209 = vpop.permute.xlu0 %3208
      %3210 = vrot.lane.b32.xlu0 %v3189, 96
      %v3211 = vpop.permute.xlu0 %3210
      %3212 = vrot.lane.b32.xlu0 %v3190, 96
      %v3213 = vpop.permute.xlu0 %3212
      %3214 = vrot.lane.b32.xlu0 %v3191, 96
      %v3215 = vpop.permute.xlu0 %3214
      %3224 = vst.msk [vmem:[#allocation3 + $0x8] sm:$0xff] %vm852, %v3201
      %3225 = vst.msk [vmem:[#allocation3 + $0x20] sm:$0xff] %vm852, %v3203
      %3226 = vst.msk [vmem:[#allocation3 + $0x38] sm:$0xff] %vm852, %v3205
      %3227 = vst.msk [vmem:[#allocation3 + $0x50] sm:$0xff] %vm852, %v3207
      %3228 = vst.msk [vmem:[#allocation3 + $0x68] sm:$0xff] %vm852, %v3209
      %3229 = vst.msk [vmem:[#allocation3 + $0x80] sm:$0xff] %vm852, %v3211
      %3230 = vst.msk [vmem:[#allocation3 + $0x98] sm:$0xff] %vm852, %v3213
      %3231 = vst.msk [vmem:[#allocation3 + $0xb0] sm:$0xff] %vm852, %v3215
      %v3232 = vld [vmem:[#allocation2 + $0x19] sm:$0xff]
      %v3233 = vld [vmem:[#allocation2 + $0x21] sm:$0xff]
      %v3234 = vld [vmem:[#allocation2 + $0x29] sm:$0xff]
      %v3235 = vld [vmem:[#allocation2 + $0x31] sm:$0xff]
      %v3236 = vld [vmem:[#allocation2 + $0x39] sm:$0xff]
      %v3237 = vld [vmem:[#allocation2 + $0x41] sm:$0xff]
      %v3238 = vld [vmem:[#allocation2 + $0x49] sm:$0xff]
      %v3239 = vld [vmem:[#allocation2 + $0x51] sm:$0xff]
      %v3240 = vsel %vm747, %v3232, 0.0
      %v3241 = vsel %vm748, %v3233, 0.0
      %v3242 = vsel %vm749, %v3234, 0.0
      %v3243 = vsel %vm750, %v3235, 0.0
      %v3244 = vsel %vm751, %v3236, 0.0
      %v3245 = vsel %vm752, %v3237, 0.0
      %v3246 = vsel %vm753, %v3238, 0.0
      %v3247 = vsel %vm754, %v3239, 0.0
      %3248 = vst.msk [vmem:[#allocation3 + $0x10] sm:$0xff] %vm492, %v3240
      %3249 = vst.msk [vmem:[#allocation3 + $0x28] sm:$0xff] %vm492, %v3241
      %3250 = vst.msk [vmem:[#allocation3 + $0x40] sm:$0xff] %vm492, %v3242
      %3251 = vst.msk [vmem:[#allocation3 + $0x58] sm:$0xff] %vm492, %v3243
      %3252 = vst.msk [vmem:[#allocation3 + $0x70] sm:$0xff] %vm492, %v3244
      %3253 = vst.msk [vmem:[#allocation3 + $0x88] sm:$0xff] %vm492, %v3245
      %3254 = vst.msk [vmem:[#allocation3 + $0xa0] sm:$0xff] %vm492, %v3246
      %3255 = vst.msk [vmem:[#allocation3 + $0xb8] sm:$0xff] %vm492, %v3247
      %v3256 = vld [vmem:[#allocation3] sm:$0xff]
      %v3257 = vld [vmem:[#allocation3 + $0x8] sm:$0xff]
      %v3258 = vld [vmem:[#allocation3 + $0x10] sm:$0xff]
      %v3259 = vld [vmem:[#allocation3 + $0x18] sm:$0xff]
      %v3260 = vld [vmem:[#allocation3 + $0x20] sm:$0xff]
      %v3261 = vld [vmem:[#allocation3 + $0x28] sm:$0xff]
      %v3262 = vld [vmem:[#allocation3 + $0x30] sm:$0xff]
      %v3263 = vld [vmem:[#allocation3 + $0x38] sm:$0xff]
      %v3264 = vld [vmem:[#allocation3 + $0x40] sm:$0xff]
      %v3265 = vld [vmem:[#allocation3 + $0x48] sm:$0xff]
      %v3266 = vld [vmem:[#allocation3 + $0x50] sm:$0xff]
      %v3267 = vld [vmem:[#allocation3 + $0x58] sm:$0xff]
      %v3268 = vld [vmem:[#allocation3 + $0x60] sm:$0xff]
      %v3269 = vld [vmem:[#allocation3 + $0x68] sm:$0xff]
      %v3270 = vld [vmem:[#allocation3 + $0x70] sm:$0xff]
      %v3271 = vld [vmem:[#allocation3 + $0x78] sm:$0xff]
      %v3272 = vld [vmem:[#allocation3 + $0x80] sm:$0xff]
      %v3273 = vld [vmem:[#allocation3 + $0x88] sm:$0xff]
      %v3274 = vld [vmem:[#allocation3 + $0x90] sm:$0xff]
      %v3275 = vld [vmem:[#allocation3 + $0x98] sm:$0xff]
      %v3276 = vld [vmem:[#allocation3 + $0xa0] sm:$0xff]
      %v3277 = vld [vmem:[#allocation3 + $0xa8] sm:$0xff]
      %v3278 = vld [vmem:[#allocation3 + $0xb0] sm:$0xff]
      %v3279 = vld [vmem:[#allocation3 + $0xb8] sm:$0xff]
      %v3280 = vpack.c.bf16 %v3259, %v3256
      %v3281 = vpack.c.bf16 %v3260, %v3257
      %v3282 = vpack.c.bf16 %v3261, %v3258
      %v3283 = vpack.c.bf16 %v3265, %v3262
      %v3284 = vpack.c.bf16 %v3266, %v3263
      %v3285 = vpack.c.bf16 %v3267, %v3264
      %v3286 = vpack.c.bf16 %v3271, %v3268
      %v3287 = vpack.c.bf16 %v3272, %v3269
      %v3288 = vpack.c.bf16 %v3273, %v3270
      %v3289 = vpack.c.bf16 %v3277, %v3274
      %v3290 = vpack.c.bf16 %v3278, %v3275
      %v3291 = vpack.c.bf16 %v3279, %v3276
      %v3292 = vld [vmem:[%s7] sm:$0xf]
      %v3293 = vld [vmem:[%s7 + $0x4] sm:$0xf]
      %v3294 = vld [vmem:[%s7 + $0x8] sm:$0xf]
      %v3295 = vld [vmem:[%s7 + $0xc] sm:$0xf]
      %v3296 = vld [vmem:[%s7 + $0x10] sm:$0xf]
      %v3297 = vld [vmem:[%s7 + $0x14] sm:$0xf]
      %v3298 = vld [vmem:[%s7 + $0x18] sm:$0xf]
      %v3299 = vld [vmem:[%s7 + $0x1c] sm:$0xf]
      %v3300 = vld [vmem:[%s7 + $0x20] sm:$0xf]
      %v3301 = vld [vmem:[%s7 + $0x24] sm:$0xf]
      %v3302 = vld [vmem:[%s7 + $0x28] sm:$0xf]
      %v3303 = vld [vmem:[%s7 + $0x2c] sm:$0xf]
      %v3304 = vld [vmem:[%s7 + $0x30] sm:$0xf]
      %v3305 = vld [vmem:[%s7 + $0x34] sm:$0xf]
      %v3306 = vld [vmem:[%s7 + $0x38] sm:$0xf]
      %v3307 = vld [vmem:[%s7 + $0x3c] sm:$0xf]
      %v3308 = vld [vmem:[%s7 + $0x40] sm:$0xf]
      %v3309 = vld [vmem:[%s7 + $0x44] sm:$0xf]
      %v3310 = vld [vmem:[%s7 + $0x48] sm:$0xf]
      %v3311 = vld [vmem:[%s7 + $0x4c] sm:$0xf]
      %v3312 = vld [vmem:[%s7 + $0x50] sm:$0xf]
      %v3313 = vld [vmem:[%s7 + $0x54] sm:$0xf]
      %v3314 = vld [vmem:[%s7 + $0x58] sm:$0xf]
      %v3315 = vld [vmem:[%s7 + $0x5c] sm:$0xf]
      %v3316 = vld [vmem:[%s7 + $0x60] sm:$0xf]
      %v3317 = vld [vmem:[%s7 + $0x64] sm:$0xf]
      %v3318 = vld [vmem:[%s7 + $0x68] sm:$0xf]
      %v3319 = vld [vmem:[%s7 + $0x6c] sm:$0xf]
      %v3320 = vld [vmem:[%s7 + $0x70] sm:$0xf]
      %v3321 = vld [vmem:[%s7 + $0x74] sm:$0xf]
      %v3322 = vld [vmem:[%s7 + $0x78] sm:$0xf]
      %v3323 = vld [vmem:[%s7 + $0x7c] sm:$0xf]
      %v3324 = vld [vmem:[%s7 + $0x80] sm:$0xf]
      %v3325 = vld [vmem:[%s7 + $0x84] sm:$0xf]
      %v3326 = vld [vmem:[%s7 + $0x88] sm:$0xf]
      %v3327 = vld [vmem:[%s7 + $0x8c] sm:$0xf]
      %v3328 = vld [vmem:[%s8] sm:$0x1]
      %v3330 = vlaneseq
      %v3331 = vshrl.u32 %v3330, 7
      %v3332 = vsub.s32 0, %v3331
      %v3333 = vrot.slane %v3328, %v3332
      %v3371 = vunpack.c.l.b16 %v3292
      %v3372 = vunpack.c.l.b16 %v3293
      %v3373 = vunpack.c.l.b16 %v3294
      %v3374 = vunpack.c.l.b16 %v3295
      %v3375 = vunpack.c.l.b16 %v3296
      %v3376 = vunpack.c.l.b16 %v3297
      %v3377 = vunpack.c.l.b16 %v3298
      %v3378 = vunpack.c.l.b16 %v3299
      %v3379 = vunpack.c.l.b16 %v3300
      %v3380 = vunpack.c.l.b16 %v3301
      %v3381 = vunpack.c.l.b16 %v3302
      %v3382 = vunpack.c.l.b16 %v3303
      %v3383 = vunpack.c.l.b16 %v3304
      %v3384 = vunpack.c.l.b16 %v3305
      %v3385 = vunpack.c.l.b16 %v3306
      %v3386 = vunpack.c.l.b16 %v3307
      %v3387 = vunpack.c.l.b16 %v3308
      %v3388 = vunpack.c.l.b16 %v3309
      %v3389 = vunpack.c.l.b16 %v3310
      %v3390 = vunpack.c.l.b16 %v3311
      %v3391 = vunpack.c.l.b16 %v3312
      %v3392 = vunpack.c.l.b16 %v3313
      %v3393 = vunpack.c.l.b16 %v3314
      %v3394 = vunpack.c.l.b16 %v3315
      %v3395 = vunpack.c.l.b16 %v3316
      %v3396 = vunpack.c.l.b16 %v3317
      %v3397 = vunpack.c.l.b16 %v3318
      %v3398 = vunpack.c.l.b16 %v3319
      %v3399 = vunpack.c.l.b16 %v3320
      %v3400 = vunpack.c.l.b16 %v3321
      %v3401 = vunpack.c.l.b16 %v3322
      %v3402 = vunpack.c.l.b16 %v3323
      %v3403 = vunpack.c.l.b16 %v3324
      %v3404 = vunpack.c.l.b16 %v3325
      %v3405 = vunpack.c.l.b16 %v3326
      %v3406 = vunpack.c.l.b16 %v3327
      %v3407 = vpack.c.b16 %v3372, %v3371
      %v3408 = vpack.c.b16 %v3374, %v3373
      %v3409 = vpack.c.b16 %v3376, %v3375
      %v3410 = vpack.c.b16 %v3378, %v3377
      %v3411 = vpack.c.b16 %v3380, %v3379
      %v3412 = vpack.c.b16 %v3382, %v3381
      %v3413 = vpack.c.b16 %v3384, %v3383
      %v3414 = vpack.c.b16 %v3386, %v3385
      %v3415 = vpack.c.b16 %v3388, %v3387
      %v3416 = vpack.c.b16 %v3390, %v3389
      %v3417 = vpack.c.b16 %v3392, %v3391
      %v3418 = vpack.c.b16 %v3394, %v3393
      %v3419 = vpack.c.b16 %v3396, %v3395
      %v3420 = vpack.c.b16 %v3398, %v3397
      %v3421 = vpack.c.b16 %v3400, %v3399
      %v3422 = vpack.c.b16 %v3402, %v3401
      %v3423 = vpack.c.b16 %v3404, %v3403
      %v3424 = vpack.c.b16 %v3406, %v3405
      %v3444 = vsel %vm492, %v3282, 0
      %v3447 = vsel %vm492, %v3285, 0
      %v3450 = vsel %vm492, %v3288, 0
      %v3453 = vsel %vm492, %v3291, 0
      %3455 = vmatprep.subr.bf16.mxu0 0
      %3456 = vmatpush1.bf16.msra.mxu0 %v3407
      %3457 = vmatprep.subr.bf16.mxu0 0
      %3458 = vmatpush1.bf16.msra.mxu0 %v3408
      %3459 = vmatprep.subr.bf16.mxu0 0
      %3460 = vmatpush1.bf16.msra.mxu0 %v3409
      %3461 = vmatprep.subr.bf16.mxu0 0
      %3462 = vmatpush1.bf16.msra.mxu0 %v3410
      %3463 = vmatprep.subr.bf16.mxu0 0
      %3464 = vmatpush1.bf16.msra.mxu0 %v3411
      %3465 = vmatprep.subr.bf16.mxu0 0
      %3466 = vmatpush1.bf16.msra.mxu0 %v3412
      %3467 = vmatprep.subr.bf16.mxu0 0
      %3468 = vmatpush1.bf16.msra.mxu0 %v3413
      %3469 = vmatprep.subr.bf16.mxu0 0
      %3470 = vmatpush1.bf16.msra.mxu0 %v3414
      %3471 = vmatprep.subr.bf16.mxu0 0
      %3472 = vmatpush1.bf16.msra.mxu0 %v3415
      %3473 = vmatprep.subr.bf16.mxu0 0
      %3474 = vmatpush1.bf16.msra.mxu0 %v3416
      %3475 = vmatprep.subr.bf16.mxu0 0
      %3476 = vmatpush1.bf16.msra.mxu0 %v3417
      %3477 = vmatprep.subr.bf16.mxu0 0
      %3478 = vmatpush1.bf16.msra.mxu0 %v3418
      %3479 = vmatprep.subr.bf16.mxu0 0
      %3480 = vmatpush1.bf16.msra.mxu0 %v3419
      %3481 = vmatprep.subr.bf16.mxu0 0
      %3482 = vmatpush1.bf16.msra.mxu0 %v3420
      %3483 = vmatprep.subr.bf16.mxu0 0
      %3484 = vmatpush1.bf16.msra.mxu0 %v3421
      %3485 = vmatprep.subr.bf16.mxu0 0
      %3486 = vmatpush1.bf16.msra.mxu0 %v3422
      %3487 = vmatprep.mubr.bf16.mxu0 %v3281
      %3488 = vmatmul.mubr.bf16.gmra.mrb[0].mxu0 %v3280
      %v3489 = vpop.f32.mrb[0].mxu0
      %v3490 = vadd.f32 %v3333, %v3489
      %v3491 = vpop.f32.mrb[0].mxu0
      %v3492 = vpop.f32.mrb[0].mxu0
      %v3493 = vadd.f32 %v3333, %v3492
      %v3494 = vpop.f32.mrb[0].mxu0
      %3495 = vmatprep.mubr.bf16.mxu0 %v3284
      %3496 = vmatmul.mubr.bf16.gmra.mrb[0].mxu0 %v3283
      %v3497 = vpop.f32.mrb[0].mxu0
      %v3498 = vadd.f32 %v3333, %v3497
      %v3499 = vpop.f32.mrb[0].mxu0
      %v3500 = vpop.f32.mrb[0].mxu0
      %v3501 = vadd.f32 %v3333, %v3500
      %v3502 = vpop.f32.mrb[0].mxu0
      %3503 = vmatprep.mubr.bf16.mxu0 %v3287
      %3504 = vmatmul.mubr.bf16.gmra.mrb[0].mxu0 %v3286
      %v3505 = vpop.f32.mrb[0].mxu0
      %v3506 = vadd.f32 %v3333, %v3505
      %v3507 = vpop.f32.mrb[0].mxu0
      %v3508 = vpop.f32.mrb[0].mxu0
      %v3509 = vadd.f32 %v3333, %v3508
      %v3510 = vpop.f32.mrb[0].mxu0
      %3511 = vmatprep.mubr.bf16.mxu0 %v3290
      %3512 = vmatmul.mubr.bf16.gmra.mrb[0].mxu0 %v3289
      %v3513 = vpop.f32.mrb[0].mxu0
      %v3514 = vadd.f32 %v3333, %v3513
      %v3515 = vpop.f32.mrb[0].mxu0
      %v3516 = vpop.f32.mrb[0].mxu0
      %v3517 = vadd.f32 %v3333, %v3516
      %v3518 = vpop.f32.mrb[0].mxu0
      %3519 = vdwg.mxu0
      %3520 = vmatprep.subr.bf16.mxu0 0
      %3521 = vmatpush1.bf16.msra.mxu0 %v3423
      %3522 = vmatprep.subr.bf16.mxu0 0
      %3523 = vmatpush1.bf16.msra.mxu0 %v3424
      %3524 = vmatprep.subr.bf16.mxu0 0
      %3525 = vmatpush1.bf16.msra.mxu0 0
      %3526 = vmatprep.subr.bf16.mxu0 0
      %3527 = vmatpush1.bf16.msra.mxu0 0
      %3528 = vmatprep.subr.bf16.mxu0 0
      %3529 = vmatpush1.bf16.msra.mxu0 0
      %3530 = vmatprep.subr.bf16.mxu0 0
      %3531 = vmatpush1.bf16.msra.mxu0 0
      %3532 = vmatprep.subr.bf16.mxu0 0
      %3533 = vmatpush1.bf16.msra.mxu0 0
      %3534 = vmatprep.subr.bf16.mxu0 0
      %3535 = vmatpush1.bf16.msra.mxu0 0
      %3536 = vmatprep.subr.bf16.mxu0 0
      %3537 = vmatpush1.bf16.msra.mxu0 0
      %3538 = vmatprep.subr.bf16.mxu0 0
      %3539 = vmatpush1.bf16.msra.mxu0 0
      %3540 = vmatprep.subr.bf16.mxu0 0
      %3541 = vmatpush1.bf16.msra.mxu0 0
      %3542 = vmatprep.subr.bf16.mxu0 0
      %3543 = vmatpush1.bf16.msra.mxu0 0
      %3544 = vmatprep.subr.bf16.mxu0 0
      %3545 = vmatpush1.bf16.msra.mxu0 0
      %3546 = vmatprep.subr.bf16.mxu0 0
      %3547 = vmatpush1.bf16.msra.mxu0 0
      %3548 = vmatprep.subr.bf16.mxu0 0
      %3549 = vmatpush1.bf16.msra.mxu0 0
      %3550 = vmatprep.subr.bf16.mxu0 0
      %3551 = vmatpush1.bf16.msra.mxu0 0
      %3552 = vmatprep.mubr.bf16.mxu0 0
      %3553 = vmatmul.mubr.bf16.gmra.mrb[0].mxu0 %v3444
      %v3554 = vpop.f32.mrb[0].mxu0
      %v3555 = vadd.f32 %v3490, %v3554
      %v3556 = vpop.f32.mrb[0].mxu0
      %v3557 = vpop.f32.mrb[0].mxu0
      %v3558 = vadd.f32 %v3493, %v3557
      %v3559 = vpop.f32.mrb[0].mxu0
      %3560 = vmatprep.mubr.bf16.mxu0 0
      %3561 = vmatmul.mubr.bf16.gmra.mrb[0].mxu0 %v3447
      %v3562 = vpop.f32.mrb[0].mxu0
      %v3563 = vadd.f32 %v3498, %v3562
      %v3564 = vpop.f32.mrb[0].mxu0
      %v3565 = vpop.f32.mrb[0].mxu0
      %v3566 = vadd.f32 %v3501, %v3565
      %v3567 = vpop.f32.mrb[0].mxu0
      %3568 = vmatprep.mubr.bf16.mxu0 0
      %3569 = vmatmul.mubr.bf16.gmra.mrb[0].mxu0 %v3450
      %v3570 = vpop.f32.mrb[0].mxu0
      %v3571 = vadd.f32 %v3506, %v3570
      %v3572 = vpop.f32.mrb[0].mxu0
      %v3573 = vpop.f32.mrb[0].mxu0
      %v3574 = vadd.f32 %v3509, %v3573
      %v3575 = vpop.f32.mrb[0].mxu0
      %3576 = vmatprep.mubr.bf16.mxu0 0
      %3577 = vmatmul.mubr.bf16.gmra.mrb[0].mxu0 %v3453
      %v3578 = vpop.f32.mrb[0].mxu0
      %v3579 = vadd.f32 %v3514, %v3578
      %v3580 = vpop.f32.mrb[0].mxu0
      %v3581 = vpop.f32.mrb[0].mxu0
      %v3582 = vadd.f32 %v3517, %v3581
      %v3583 = vpop.f32.mrb[0].mxu0
      %3584 = vdwg.mxu0
      %v3585 = vmax.f32 %v3555, 0.0
      %v3586 = vmax.f32 %v3558, 0.0
      %v3587 = vmax.f32 %v3563, 0.0
      %v3588 = vmax.f32 %v3566, 0.0
      %v3589 = vmax.f32 %v3571, 0.0
      %v3590 = vmax.f32 %v3574, 0.0
      %v3591 = vmax.f32 %v3579, 0.0
      %v3592 = vmax.f32 %v3582, 0.0
      %3593 = vst.msk [vmem:[#allocation2 + $0x10] sm:$0xff] %vm492, %v3585
      %3594 = vst.msk [vmem:[#allocation2 + $0x18] sm:$0xff] %vm492, %v3586
      %3595 = vst.msk [vmem:[#allocation2 + $0x20] sm:$0xff] %vm492, %v3587
      %3596 = vst.msk [vmem:[#allocation2 + $0x28] sm:$0xff] %vm492, %v3588
      %3597 = vst.msk [vmem:[#allocation2 + $0x30] sm:$0xff] %vm492, %v3589
      %3598 = vst.msk [vmem:[#allocation2 + $0x38] sm:$0xff] %vm492, %v3590
      %3599 = vst.msk [vmem:[#allocation2 + $0x40] sm:$0xff] %vm492, %v3591
      %3600 = vst.msk [vmem:[#allocation2 + $0x48] sm:$0xff] %vm492, %v3592
      %v3601 = vld [vmem:[#allocation2 + $0x7] sm:$0xff]
      %v3602 = vld [vmem:[#allocation2 + $0xf] sm:$0xff]
      %v3603 = vld [vmem:[#allocation2 + $0x17] sm:$0xff]
      %v3604 = vld [vmem:[#allocation2 + $0x1f] sm:$0xff]
      %v3605 = vld [vmem:[#allocation2 + $0x27] sm:$0xff]
      %v3606 = vld [vmem:[#allocation2 + $0x2f] sm:$0xff]
      %v3607 = vld [vmem:[#allocation2 + $0x37] sm:$0xff]
      %v3608 = vld [vmem:[#allocation2 + $0x3f] sm:$0xff]
      %v3609 = vsel %vm658, %v3601, 0.0
      %v3610 = vsel %vm659, %v3602, 0.0
      %v3611 = vsel %vm660, %v3603, 0.0
      %v3612 = vsel %vm661, %v3604, 0.0
      %v3613 = vsel %vm662, %v3605, 0.0
      %v3614 = vsel %vm663, %v3606, 0.0
      %v3615 = vsel %vm664, %v3607, 0.0
      %v3616 = vsel %vm665, %v3608, 0.0
      %3617 = vst.msk [vmem:[#allocation3] sm:$0xff] %vm492, %v3609
      %3618 = vst.msk [vmem:[#allocation3 + $0x18] sm:$0xff] %vm492, %v3610
      %3619 = vst.msk [vmem:[#allocation3 + $0x30] sm:$0xff] %vm492, %v3611
      %3620 = vst.msk [vmem:[#allocation3 + $0x48] sm:$0xff] %vm492, %v3612
      %3621 = vst.msk [vmem:[#allocation3 + $0x60] sm:$0xff] %vm492, %v3613
      %3622 = vst.msk [vmem:[#allocation3 + $0x78] sm:$0xff] %vm492, %v3614
      %3623 = vst.msk [vmem:[#allocation3 + $0x90] sm:$0xff] %vm492, %v3615
      %3624 = vst.msk [vmem:[#allocation3 + $0xa8] sm:$0xff] %vm492, %v3616
      %v3625 = vld [vmem:[#allocation2 + $0x8] sm:$0xff]
      %v3626 = vld [vmem:[#allocation2 + $0x10] sm:$0xff]
      %v3627 = vld [vmem:[#allocation2 + $0x18] sm:$0xff]
      %v3628 = vld [vmem:[#allocation2 + $0x20] sm:$0xff]
      %v3629 = vld [vmem:[#allocation2 + $0x28] sm:$0xff]
      %v3630 = vld [vmem:[#allocation2 + $0x30] sm:$0xff]
      %v3631 = vld [vmem:[#allocation2 + $0x38] sm:$0xff]
      %v3632 = vld [vmem:[#allocation2 + $0x40] sm:$0xff]
      %3641 = vrot.lane.b32.xlu0 %v3625, 32
      %v3642 = vpop.permute.xlu0 %3641
      %3643 = vrot.lane.b32.xlu0 %v3626, 32
      %v3644 = vpop.permute.xlu0 %3643
      %3645 = vrot.lane.b32.xlu0 %v3627, 32
      %v3646 = vpop.permute.xlu0 %3645
      %3647 = vrot.lane.b32.xlu0 %v3628, 32
      %v3648 = vpop.permute.xlu0 %3647
      %3649 = vrot.lane.b32.xlu0 %v3629, 32
      %v3650 = vpop.permute.xlu0 %3649
      %3651 = vrot.lane.b32.xlu0 %v3630, 32
      %v3652 = vpop.permute.xlu0 %3651
      %3653 = vrot.lane.b32.xlu0 %v3631, 32
      %v3654 = vpop.permute.xlu0 %3653
      %3655 = vrot.lane.b32.xlu0 %v3632, 32
      %v3656 = vpop.permute.xlu0 %3655
      %3665 = vst.msk [vmem:[#allocation3] sm:$0xff] %vm722, %v3642
      %3666 = vst.msk [vmem:[#allocation3 + $0x18] sm:$0xff] %vm722, %v3644
      %3667 = vst.msk [vmem:[#allocation3 + $0x30] sm:$0xff] %vm722, %v3646
      %3668 = vst.msk [vmem:[#allocation3 + $0x48] sm:$0xff] %vm722, %v3648
      %3669 = vst.msk [vmem:[#allocation3 + $0x60] sm:$0xff] %vm722, %v3650
      %3670 = vst.msk [vmem:[#allocation3 + $0x78] sm:$0xff] %vm722, %v3652
      %3671 = vst.msk [vmem:[#allocation3 + $0x90] sm:$0xff] %vm722, %v3654
      %3672 = vst.msk [vmem:[#allocation3 + $0xa8] sm:$0xff] %vm722, %v3656
      %v3673 = vld [vmem:[#allocation2 + $0x9] sm:$0xff]
      %v3674 = vld [vmem:[#allocation2 + $0x11] sm:$0xff]
      %v3675 = vld [vmem:[#allocation2 + $0x19] sm:$0xff]
      %v3676 = vld [vmem:[#allocation2 + $0x21] sm:$0xff]
      %v3677 = vld [vmem:[#allocation2 + $0x29] sm:$0xff]
      %v3678 = vld [vmem:[#allocation2 + $0x31] sm:$0xff]
      %v3679 = vld [vmem:[#allocation2 + $0x39] sm:$0xff]
      %v3680 = vld [vmem:[#allocation2 + $0x41] sm:$0xff]
      %v3681 = vsel %vm747, %v3673, 0.0
      %v3682 = vsel %vm748, %v3674, 0.0
      %v3683 = vsel %vm749, %v3675, 0.0
      %v3684 = vsel %vm750, %v3676, 0.0
      %v3685 = vsel %vm751, %v3677, 0.0
      %v3686 = vsel %vm752, %v3678, 0.0
      %v3687 = vsel %vm753, %v3679, 0.0
      %v3688 = vsel %vm754, %v3680, 0.0
      %3697 = vrot.lane.b32.xlu0 %v3681, 64
      %v3698 = vpop.permute.xlu0 %3697
      %3699 = vrot.lane.b32.xlu0 %v3682, 64
      %v3700 = vpop.permute.xlu0 %3699
      %3701 = vrot.lane.b32.xlu0 %v3683, 64
      %v3702 = vpop.permute.xlu0 %3701
      %3703 = vrot.lane.b32.xlu0 %v3684, 64
      %v3704 = vpop.permute.xlu0 %3703
      %3705 = vrot.lane.b32.xlu0 %v3685, 64
      %v3706 = vpop.permute.xlu0 %3705
      %3707 = vrot.lane.b32.xlu0 %v3686, 64
      %v3708 = vpop.permute.xlu0 %3707
      %3709 = vrot.lane.b32.xlu0 %v3687, 64
      %v3710 = vpop.permute.xlu0 %3709
      %3711 = vrot.lane.b32.xlu0 %v3688, 64
      %v3712 = vpop.permute.xlu0 %3711
      %3721 = vst.msk [vmem:[#allocation3] sm:$0xff] %vm795, %v3698
      %3722 = vst.msk [vmem:[#allocation3 + $0x18] sm:$0xff] %vm795, %v3700
      %3723 = vst.msk [vmem:[#allocation3 + $0x30] sm:$0xff] %vm795, %v3702
      %3724 = vst.msk [vmem:[#allocation3 + $0x48] sm:$0xff] %vm795, %v3704
      %3725 = vst.msk [vmem:[#allocation3 + $0x60] sm:$0xff] %vm795, %v3706
      %3726 = vst.msk [vmem:[#allocation3 + $0x78] sm:$0xff] %vm795, %v3708
      %3727 = vst.msk [vmem:[#allocation3 + $0x90] sm:$0xff] %vm795, %v3710
      %3728 = vst.msk [vmem:[#allocation3 + $0xa8] sm:$0xff] %vm795, %v3712
      %v3729 = vld [vmem:[#allocation2 + $0xf] sm:$0xff]
      %v3730 = vld [vmem:[#allocation2 + $0x17] sm:$0xff]
      %v3731 = vld [vmem:[#allocation2 + $0x1f] sm:$0xff]
      %v3732 = vld [vmem:[#allocation2 + $0x27] sm:$0xff]
      %v3733 = vld [vmem:[#allocation2 + $0x2f] sm:$0xff]
      %v3734 = vld [vmem:[#allocation2 + $0x37] sm:$0xff]
      %v3735 = vld [vmem:[#allocation2 + $0x3f] sm:$0xff]
      %v3736 = vld [vmem:[#allocation2 + $0x47] sm:$0xff]
      %v3737 = vsel %vm658, %v3729, 0.0
      %v3738 = vsel %vm659, %v3730, 0.0
      %v3739 = vsel %vm660, %v3731, 0.0
      %v3740 = vsel %vm661, %v3732, 0.0
      %v3741 = vsel %vm662, %v3733, 0.0
      %v3742 = vsel %vm663, %v3734, 0.0
      %v3743 = vsel %vm664, %v3735, 0.0
      %v3744 = vsel %vm665, %v3736, 0.0
      %3753 = vrot.lane.b32.xlu0 %v3737, 96
      %v3754 = vpop.permute.xlu0 %3753
      %3755 = vrot.lane.b32.xlu0 %v3738, 96
      %v3756 = vpop.permute.xlu0 %3755
      %3757 = vrot.lane.b32.xlu0 %v3739, 96
      %v3758 = vpop.permute.xlu0 %3757
      %3759 = vrot.lane.b32.xlu0 %v3740, 96
      %v3760 = vpop.permute.xlu0 %3759
      %3761 = vrot.lane.b32.xlu0 %v3741, 96
      %v3762 = vpop.permute.xlu0 %3761
      %3763 = vrot.lane.b32.xlu0 %v3742, 96
      %v3764 = vpop.permute.xlu0 %3763
      %3765 = vrot.lane.b32.xlu0 %v3743, 96
      %v3766 = vpop.permute.xlu0 %3765
      %3767 = vrot.lane.b32.xlu0 %v3744, 96
      %v3768 = vpop.permute.xlu0 %3767
      %3777 = vst.msk [vmem:[#allocation3] sm:$0xff] %vm852, %v3754
      %3778 = vst.msk [vmem:[#allocation3 + $0x18] sm:$0xff] %vm852, %v3756
      %3779 = vst.msk [vmem:[#allocation3 + $0x30] sm:$0xff] %vm852, %v3758
      %3780 = vst.msk [vmem:[#allocation3 + $0x48] sm:$0xff] %vm852, %v3760
      %3781 = vst.msk [vmem:[#allocation3 + $0x60] sm:$0xff] %vm852, %v3762
      %3782 = vst.msk [vmem:[#allocation3 + $0x78] sm:$0xff] %vm852, %v3764
      %3783 = vst.msk [vmem:[#allocation3 + $0x90] sm:$0xff] %vm852, %v3766
      %3784 = vst.msk [vmem:[#allocation3 + $0xa8] sm:$0xff] %vm852, %v3768
      %v3785 = vld [vmem:[#allocation2 + $0x10] sm:$0xff]
      %v3786 = vld [vmem:[#allocation2 + $0x18] sm:$0xff]
      %v3787 = vld [vmem:[#allocation2 + $0x20] sm:$0xff]
      %v3788 = vld [vmem:[#allocation2 + $0x28] sm:$0xff]
      %v3789 = vld [vmem:[#allocation2 + $0x30] sm:$0xff]
      %v3790 = vld [vmem:[#allocation2 + $0x38] sm:$0xff]
      %v3791 = vld [vmem:[#allocation2 + $0x40] sm:$0xff]
      %v3792 = vld [vmem:[#allocation2 + $0x48] sm:$0xff]
      %3793 = vst.msk [vmem:[#allocation3 + $0x8] sm:$0xff] %vm492, %v3785
      %3794 = vst.msk [vmem:[#allocation3 + $0x20] sm:$0xff] %vm492, %v3786
      %3795 = vst.msk [vmem:[#allocation3 + $0x38] sm:$0xff] %vm492, %v3787
      %3796 = vst.msk [vmem:[#allocation3 + $0x50] sm:$0xff] %vm492, %v3788
      %3797 = vst.msk [vmem:[#allocation3 + $0x68] sm:$0xff] %vm492, %v3789
      %3798 = vst.msk [vmem:[#allocation3 + $0x80] sm:$0xff] %vm492, %v3790
      %3799 = vst.msk [vmem:[#allocation3 + $0x98] sm:$0xff] %vm492, %v3791
      %3800 = vst.msk [vmem:[#allocation3 + $0xb0] sm:$0xff] %vm492, %v3792
      %v3801 = vld [vmem:[#allocation2 + $0x11] sm:$0xff]
      %v3802 = vld [vmem:[#allocation2 + $0x19] sm:$0xff]
      %v3803 = vld [vmem:[#allocation2 + $0x21] sm:$0xff]
      %v3804 = vld [vmem:[#allocation2 + $0x29] sm:$0xff]
      %v3805 = vld [vmem:[#allocation2 + $0x31] sm:$0xff]
      %v3806 = vld [vmem:[#allocation2 + $0x39] sm:$0xff]
      %v3807 = vld [vmem:[#allocation2 + $0x41] sm:$0xff]
      %v3808 = vld [vmem:[#allocation2 + $0x49] sm:$0xff]
      %v3809 = vsel %vm747, %v3801, 0.0
      %v3810 = vsel %vm748, %v3802, 0.0
      %v3811 = vsel %vm749, %v3803, 0.0
      %v3812 = vsel %vm750, %v3804, 0.0
      %v3813 = vsel %vm751, %v3805, 0.0
      %v3814 = vsel %vm752, %v3806, 0.0
      %v3815 = vsel %vm753, %v3807, 0.0
      %v3816 = vsel %vm754, %v3808, 0.0
      %3825 = vrot.lane.b32.xlu0 %v3809, 32
      %v3826 = vpop.permute.xlu0 %3825
      %3827 = vrot.lane.b32.xlu0 %v3810, 32
      %v3828 = vpop.permute.xlu0 %3827
      %3829 = vrot.lane.b32.xlu0 %v3811, 32
      %v3830 = vpop.permute.xlu0 %3829
      %3831 = vrot.lane.b32.xlu0 %v3812, 32
      %v3832 = vpop.permute.xlu0 %3831
      %3833 = vrot.lane.b32.xlu0 %v3813, 32
      %v3834 = vpop.permute.xlu0 %3833
      %3835 = vrot.lane.b32.xlu0 %v3814, 32
      %v3836 = vpop.permute.xlu0 %3835
      %3837 = vrot.lane.b32.xlu0 %v3815, 32
      %v3838 = vpop.permute.xlu0 %3837
      %3839 = vrot.lane.b32.xlu0 %v3816, 32
      %v3840 = vpop.permute.xlu0 %3839
      %3849 = vst.msk [vmem:[#allocation3 + $0x8] sm:$0xff] %vm722, %v3826
      %3850 = vst.msk [vmem:[#allocation3 + $0x20] sm:$0xff] %vm722, %v3828
      %3851 = vst.msk [vmem:[#allocation3 + $0x38] sm:$0xff] %vm722, %v3830
      %3852 = vst.msk [vmem:[#allocation3 + $0x50] sm:$0xff] %vm722, %v3832
      %3853 = vst.msk [vmem:[#allocation3 + $0x68] sm:$0xff] %vm722, %v3834
      %3854 = vst.msk [vmem:[#allocation3 + $0x80] sm:$0xff] %vm722, %v3836
      %3855 = vst.msk [vmem:[#allocation3 + $0x98] sm:$0xff] %vm722, %v3838
      %3856 = vst.msk [vmem:[#allocation3 + $0xb0] sm:$0xff] %vm722, %v3840
      %v3857 = vld [vmem:[#allocation2 + $0x17] sm:$0xff]
      %v3858 = vld [vmem:[#allocation2 + $0x1f] sm:$0xff]
      %v3859 = vld [vmem:[#allocation2 + $0x27] sm:$0xff]
      %v3860 = vld [vmem:[#allocation2 + $0x2f] sm:$0xff]
      %v3861 = vld [vmem:[#allocation2 + $0x37] sm:$0xff]
      %v3862 = vld [vmem:[#allocation2 + $0x3f] sm:$0xff]
      %v3863 = vld [vmem:[#allocation2 + $0x47] sm:$0xff]
      %v3864 = vld [vmem:[#allocation2 + $0x4f] sm:$0xff]
      %v3865 = vsel %vm658, %v3857, 0.0
      %v3866 = vsel %vm659, %v3858, 0.0
      %v3867 = vsel %vm660, %v3859, 0.0
      %v3868 = vsel %vm661, %v3860, 0.0
      %v3869 = vsel %vm662, %v3861, 0.0
      %v3870 = vsel %vm663, %v3862, 0.0
      %v3871 = vsel %vm664, %v3863, 0.0
      %v3872 = vsel %vm665, %v3864, 0.0
      %3881 = vrot.lane.b32.xlu0 %v3865, 64
      %v3882 = vpop.permute.xlu0 %3881
      %3883 = vrot.lane.b32.xlu0 %v3866, 64
      %v3884 = vpop.permute.xlu0 %3883
      %3885 = vrot.lane.b32.xlu0 %v3867, 64
      %v3886 = vpop.permute.xlu0 %3885
      %3887 = vrot.lane.b32.xlu0 %v3868, 64
      %v3888 = vpop.permute.xlu0 %3887
      %3889 = vrot.lane.b32.xlu0 %v3869, 64
      %v3890 = vpop.permute.xlu0 %3889
      %3891 = vrot.lane.b32.xlu0 %v3870, 64
      %v3892 = vpop.permute.xlu0 %3891
      %3893 = vrot.lane.b32.xlu0 %v3871, 64
      %v3894 = vpop.permute.xlu0 %3893
      %3895 = vrot.lane.b32.xlu0 %v3872, 64
      %v3896 = vpop.permute.xlu0 %3895
      %3905 = vst.msk [vmem:[#allocation3 + $0x8] sm:$0xff] %vm795, %v3882
      %3906 = vst.msk [vmem:[#allocation3 + $0x20] sm:$0xff] %vm795, %v3884
      %3907 = vst.msk [vmem:[#allocation3 + $0x38] sm:$0xff] %vm795, %v3886
      %3908 = vst.msk [vmem:[#allocation3 + $0x50] sm:$0xff] %vm795, %v3888
      %3909 = vst.msk [vmem:[#allocation3 + $0x68] sm:$0xff] %vm795, %v3890
      %3910 = vst.msk [vmem:[#allocation3 + $0x80] sm:$0xff] %vm795, %v3892
      %3911 = vst.msk [vmem:[#allocation3 + $0x98] sm:$0xff] %vm795, %v3894
      %3912 = vst.msk [vmem:[#allocation3 + $0xb0] sm:$0xff] %vm795, %v3896
      %v3913 = vld [vmem:[#allocation2 + $0x18] sm:$0xff]
      %v3914 = vld [vmem:[#allocation2 + $0x20] sm:$0xff]
      %v3915 = vld [vmem:[#allocation2 + $0x28] sm:$0xff]
      %v3916 = vld [vmem:[#allocation2 + $0x30] sm:$0xff]
      %v3917 = vld [vmem:[#allocation2 + $0x38] sm:$0xff]
      %v3918 = vld [vmem:[#allocation2 + $0x40] sm:$0xff]
      %v3919 = vld [vmem:[#allocation2 + $0x48] sm:$0xff]
      %v3920 = vld [vmem:[#allocation2 + $0x50] sm:$0xff]
      %3929 = vrot.lane.b32.xlu0 %v3913, 96
      %v3930 = vpop.permute.xlu0 %3929
      %3931 = vrot.lane.b32.xlu0 %v3914, 96
      %v3932 = vpop.permute.xlu0 %3931
      %3933 = vrot.lane.b32.xlu0 %v3915, 96
      %v3934 = vpop.permute.xlu0 %3933
      %3935 = vrot.lane.b32.xlu0 %v3916, 96
      %v3936 = vpop.permute.xlu0 %3935
      %3937 = vrot.lane.b32.xlu0 %v3917, 96
      %v3938 = vpop.permute.xlu0 %3937
      %3939 = vrot.lane.b32.xlu0 %v3918, 96
      %v3940 = vpop.permute.xlu0 %3939
      %3941 = vrot.lane.b32.xlu0 %v3919, 96
      %v3942 = vpop.permute.xlu0 %3941
      %3943 = vrot.lane.b32.xlu0 %v3920, 96
      %v3944 = vpop.permute.xlu0 %3943
      %3953 = vst.msk [vmem:[#allocation3 + $0x8] sm:$0xff] %vm852, %v3930
      %3954 = vst.msk [vmem:[#allocation3 + $0x20] sm:$0xff] %vm852, %v3932
      %3955 = vst.msk [vmem:[#allocation3 + $0x38] sm:$0xff] %vm852, %v3934
      %3956 = vst.msk [vmem:[#allocation3 + $0x50] sm:$0xff] %vm852, %v3936
      %3957 = vst.msk [vmem:[#allocation3 + $0x68] sm:$0xff] %vm852, %v3938
      %3958 = vst.msk [vmem:[#allocation3 + $0x80] sm:$0xff] %vm852, %v3940
      %3959 = vst.msk [vmem:[#allocation3 + $0x98] sm:$0xff] %vm852, %v3942
      %3960 = vst.msk [vmem:[#allocation3 + $0xb0] sm:$0xff] %vm852, %v3944
      %v3961 = vld [vmem:[#allocation2 + $0x19] sm:$0xff]
      %v3962 = vld [vmem:[#allocation2 + $0x21] sm:$0xff]
      %v3963 = vld [vmem:[#allocation2 + $0x29] sm:$0xff]
      %v3964 = vld [vmem:[#allocation2 + $0x31] sm:$0xff]
      %v3965 = vld [vmem:[#allocation2 + $0x39] sm:$0xff]
      %v3966 = vld [vmem:[#allocation2 + $0x41] sm:$0xff]
      %v3967 = vld [vmem:[#allocation2 + $0x49] sm:$0xff]
      %v3968 = vld [vmem:[#allocation2 + $0x51] sm:$0xff]
      %v3969 = vsel %vm747, %v3961, 0.0
      %v3970 = vsel %vm748, %v3962, 0.0
      %v3971 = vsel %vm749, %v3963, 0.0
      %v3972 = vsel %vm750, %v3964, 0.0
      %v3973 = vsel %vm751, %v3965, 0.0
      %v3974 = vsel %vm752, %v3966, 0.0
      %v3975 = vsel %vm753, %v3967, 0.0
      %v3976 = vsel %vm754, %v3968, 0.0
      %3977 = vst.msk [vmem:[#allocation3 + $0x10] sm:$0xff] %vm492, %v3969
      %3978 = vst.msk [vmem:[#allocation3 + $0x28] sm:$0xff] %vm492, %v3970
      %3979 = vst.msk [vmem:[#allocation3 + $0x40] sm:$0xff] %vm492, %v3971
      %3980 = vst.msk [vmem:[#allocation3 + $0x58] sm:$0xff] %vm492, %v3972
      %3981 = vst.msk [vmem:[#allocation3 + $0x70] sm:$0xff] %vm492, %v3973
      %3982 = vst.msk [vmem:[#allocation3 + $0x88] sm:$0xff] %vm492, %v3974
      %3983 = vst.msk [vmem:[#allocation3 + $0xa0] sm:$0xff] %vm492, %v3975
      %3984 = vst.msk [vmem:[#allocation3 + $0xb8] sm:$0xff] %vm492, %v3976
      %v3985 = vld [vmem:[#allocation3] sm:$0xff]
      %v3986 = vld [vmem:[#allocation3 + $0x8] sm:$0xff]
      %v3987 = vld [vmem:[#allocation3 + $0x10] sm:$0xff]
      %v3988 = vld [vmem:[#allocation3 + $0x18] sm:$0xff]
      %v3989 = vld [vmem:[#allocation3 + $0x20] sm:$0xff]
      %v3990 = vld [vmem:[#allocation3 + $0x28] sm:$0xff]
      %v3991 = vld [vmem:[#allocation3 + $0x30] sm:$0xff]
      %v3992 = vld [vmem:[#allocation3 + $0x38] sm:$0xff]
      %v3993 = vld [vmem:[#allocation3 + $0x40] sm:$0xff]
      %v3994 = vld [vmem:[#allocation3 + $0x48] sm:$0xff]
      %v3995 = vld [vmem:[#allocation3 + $0x50] sm:$0xff]
      %v3996 = vld [vmem:[#allocation3 + $0x58] sm:$0xff]
      %v3997 = vld [vmem:[#allocation3 + $0x60] sm:$0xff]
      %v3998 = vld [vmem:[#allocation3 + $0x68] sm:$0xff]
      %v3999 = vld [vmem:[#allocation3 + $0x70] sm:$0xff]
      %v4000 = vld [vmem:[#allocation3 + $0x78] sm:$0xff]
      %v4001 = vld [vmem:[#allocation3 + $0x80] sm:$0xff]
      %v4002 = vld [vmem:[#allocation3 + $0x88] sm:$0xff]
      %v4003 = vld [vmem:[#allocation3 + $0x90] sm:$0xff]
      %v4004 = vld [vmem:[#allocation3 + $0x98] sm:$0xff]
      %v4005 = vld [vmem:[#allocation3 + $0xa0] sm:$0xff]
      %v4006 = vld [vmem:[#allocation3 + $0xa8] sm:$0xff]
      %v4007 = vld [vmem:[#allocation3 + $0xb0] sm:$0xff]
      %v4008 = vld [vmem:[#allocation3 + $0xb8] sm:$0xff]
      %v4009 = vpack.c.bf16 %v3988, %v3985
      %v4010 = vpack.c.bf16 %v3989, %v3986
      %v4011 = vpack.c.bf16 %v3990, %v3987
      %v4012 = vpack.c.bf16 %v3994, %v3991
      %v4013 = vpack.c.bf16 %v3995, %v3992
      %v4014 = vpack.c.bf16 %v3996, %v3993
      %v4015 = vpack.c.bf16 %v4000, %v3997
      %v4016 = vpack.c.bf16 %v4001, %v3998
      %v4017 = vpack.c.bf16 %v4002, %v3999
      %v4018 = vpack.c.bf16 %v4006, %v4003
      %v4019 = vpack.c.bf16 %v4007, %v4004
      %v4020 = vpack.c.bf16 %v4008, %v4005
      %v4021 = vld [vmem:[%s9] sm:$0xf]
      %v4022 = vld [vmem:[%s9 + $0x4] sm:$0xf]
      %v4023 = vld [vmem:[%s9 + $0x8] sm:$0xf]
      %v4024 = vld [vmem:[%s9 + $0xc] sm:$0xf]
      %v4025 = vld [vmem:[%s9 + $0x10] sm:$0xf]
      %v4026 = vld [vmem:[%s9 + $0x14] sm:$0xf]
      %v4027 = vld [vmem:[%s9 + $0x18] sm:$0xf]
      %v4028 = vld [vmem:[%s9 + $0x1c] sm:$0xf]
      %v4029 = vld [vmem:[%s9 + $0x20] sm:$0xf]
      %v4030 = vld [vmem:[%s9 + $0x24] sm:$0xf]
      %v4031 = vld [vmem:[%s9 + $0x28] sm:$0xf]
      %v4032 = vld [vmem:[%s9 + $0x2c] sm:$0xf]
      %v4033 = vld [vmem:[%s9 + $0x30] sm:$0xf]
      %v4034 = vld [vmem:[%s9 + $0x34] sm:$0xf]
      %v4035 = vld [vmem:[%s9 + $0x38] sm:$0xf]
      %v4036 = vld [vmem:[%s9 + $0x3c] sm:$0xf]
      %v4037 = vld [vmem:[%s9 + $0x40] sm:$0xf]
      %v4038 = vld [vmem:[%s9 + $0x44] sm:$0xf]
      %v4039 = vld [vmem:[%s9 + $0x48] sm:$0xf]
      %v4040 = vld [vmem:[%s9 + $0x4c] sm:$0xf]
      %v4041 = vld [vmem:[%s9 + $0x50] sm:$0xf]
      %v4042 = vld [vmem:[%s9 + $0x54] sm:$0xf]
      %v4043 = vld [vmem:[%s9 + $0x58] sm:$0xf]
      %v4044 = vld [vmem:[%s9 + $0x5c] sm:$0xf]
      %v4045 = vld [vmem:[%s9 + $0x60] sm:$0xf]
      %v4046 = vld [vmem:[%s9 + $0x64] sm:$0xf]
      %v4047 = vld [vmem:[%s9 + $0x68] sm:$0xf]
      %v4048 = vld [vmem:[%s9 + $0x6c] sm:$0xf]
      %v4049 = vld [vmem:[%s9 + $0x70] sm:$0xf]
      %v4050 = vld [vmem:[%s9 + $0x74] sm:$0xf]
      %v4051 = vld [vmem:[%s9 + $0x78] sm:$0xf]
      %v4052 = vld [vmem:[%s9 + $0x7c] sm:$0xf]
      %v4053 = vld [vmem:[%s9 + $0x80] sm:$0xf]
      %v4054 = vld [vmem:[%s9 + $0x84] sm:$0xf]
      %v4055 = vld [vmem:[%s9 + $0x88] sm:$0xf]
      %v4056 = vld [vmem:[%s9 + $0x8c] sm:$0xf]
      %v4057 = vld [vmem:[%s10] sm:$0x1]
      %v4059 = vlaneseq
      %v4060 = vshrl.u32 %v4059, 7
      %v4061 = vsub.s32 0, %v4060
      %v4062 = vrot.slane %v4057, %v4061
      %v4100 = vunpack.c.l.b16 %v4021
      %v4101 = vunpack.c.l.b16 %v4022
      %v4102 = vunpack.c.l.b16 %v4023
      %v4103 = vunpack.c.l.b16 %v4024
      %v4104 = vunpack.c.l.b16 %v4025
      %v4105 = vunpack.c.l.b16 %v4026
      %v4106 = vunpack.c.l.b16 %v4027
      %v4107 = vunpack.c.l.b16 %v4028
      %v4108 = vunpack.c.l.b16 %v4029
      %v4109 = vunpack.c.l.b16 %v4030
      %v4110 = vunpack.c.l.b16 %v4031
      %v4111 = vunpack.c.l.b16 %v4032
      %v4112 = vunpack.c.l.b16 %v4033
      %v4113 = vunpack.c.l.b16 %v4034
      %v4114 = vunpack.c.l.b16 %v4035
      %v4115 = vunpack.c.l.b16 %v4036
      %v4116 = vunpack.c.l.b16 %v4037
      %v4117 = vunpack.c.l.b16 %v4038
      %v4118 = vunpack.c.l.b16 %v4039
      %v4119 = vunpack.c.l.b16 %v4040
      %v4120 = vunpack.c.l.b16 %v4041
      %v4121 = vunpack.c.l.b16 %v4042
      %v4122 = vunpack.c.l.b16 %v4043
      %v4123 = vunpack.c.l.b16 %v4044
      %v4124 = vunpack.c.l.b16 %v4045
      %v4125 = vunpack.c.l.b16 %v4046
      %v4126 = vunpack.c.l.b16 %v4047
      %v4127 = vunpack.c.l.b16 %v4048
      %v4128 = vunpack.c.l.b16 %v4049
      %v4129 = vunpack.c.l.b16 %v4050
      %v4130 = vunpack.c.l.b16 %v4051
      %v4131 = vunpack.c.l.b16 %v4052
      %v4132 = vunpack.c.l.b16 %v4053
      %v4133 = vunpack.c.l.b16 %v4054
      %v4134 = vunpack.c.l.b16 %v4055
      %v4135 = vunpack.c.l.b16 %v4056
      %v4136 = vpack.c.b16 %v4101, %v4100
      %v4137 = vpack.c.b16 %v4103, %v4102
      %v4138 = vpack.c.b16 %v4105, %v4104
      %v4139 = vpack.c.b16 %v4107, %v4106
      %v4140 = vpack.c.b16 %v4109, %v4108
      %v4141 = vpack.c.b16 %v4111, %v4110
      %v4142 = vpack.c.b16 %v4113, %v4112
      %v4143 = vpack.c.b16 %v4115, %v4114
      %v4144 = vpack.c.b16 %v4117, %v4116
      %v4145 = vpack.c.b16 %v4119, %v4118
      %v4146 = vpack.c.b16 %v4121, %v4120
      %v4147 = vpack.c.b16 %v4123, %v4122
      %v4148 = vpack.c.b16 %v4125, %v4124
      %v4149 = vpack.c.b16 %v4127, %v4126
      %v4150 = vpack.c.b16 %v4129, %v4128
      %v4151 = vpack.c.b16 %v4131, %v4130
      %v4152 = vpack.c.b16 %v4133, %v4132
      %v4153 = vpack.c.b16 %v4135, %v4134
      %v4173 = vsel %vm492, %v4011, 0
      %v4176 = vsel %vm492, %v4014, 0
      %v4179 = vsel %vm492, %v4017, 0
      %v4182 = vsel %vm492, %v4020, 0
      %4184 = vmatprep.subr.bf16.mxu0 0
      %4185 = vmatpush1.bf16.msra.mxu0 %v4136
      %4186 = vmatprep.subr.bf16.mxu0 0
      %4187 = vmatpush1.bf16.msra.mxu0 %v4137
      %4188 = vmatprep.subr.bf16.mxu0 0
      %4189 = vmatpush1.bf16.msra.mxu0 %v4138
      %4190 = vmatprep.subr.bf16.mxu0 0
      %4191 = vmatpush1.bf16.msra.mxu0 %v4139
      %4192 = vmatprep.subr.bf16.mxu0 0
      %4193 = vmatpush1.bf16.msra.mxu0 %v4140
      %4194 = vmatprep.subr.bf16.mxu0 0
      %4195 = vmatpush1.bf16.msra.mxu0 %v4141
      %4196 = vmatprep.subr.bf16.mxu0 0
      %4197 = vmatpush1.bf16.msra.mxu0 %v4142
      %4198 = vmatprep.subr.bf16.mxu0 0
      %4199 = vmatpush1.bf16.msra.mxu0 %v4143
      %4200 = vmatprep.subr.bf16.mxu0 0
      %4201 = vmatpush1.bf16.msra.mxu0 %v4144
      %4202 = vmatprep.subr.bf16.mxu0 0
      %4203 = vmatpush1.bf16.msra.mxu0 %v4145
      %4204 = vmatprep.subr.bf16.mxu0 0
      %4205 = vmatpush1.bf16.msra.mxu0 %v4146
      %4206 = vmatprep.subr.bf16.mxu0 0
      %4207 = vmatpush1.bf16.msra.mxu0 %v4147
      %4208 = vmatprep.subr.bf16.mxu0 0
      %4209 = vmatpush1.bf16.msra.mxu0 %v4148
      %4210 = vmatprep.subr.bf16.mxu0 0
      %4211 = vmatpush1.bf16.msra.mxu0 %v4149
      %4212 = vmatprep.subr.bf16.mxu0 0
      %4213 = vmatpush1.bf16.msra.mxu0 %v4150
      %4214 = vmatprep.subr.bf16.mxu0 0
      %4215 = vmatpush1.bf16.msra.mxu0 %v4151
      %4216 = vmatprep.mubr.bf16.mxu0 %v4010
      %4217 = vmatmul.mubr.bf16.gmra.mrb[0].mxu0 %v4009
      %v4218 = vpop.f32.mrb[0].mxu0
      %v4219 = vadd.f32 %v4062, %v4218
      %v4220 = vpop.f32.mrb[0].mxu0
      %v4221 = vpop.f32.mrb[0].mxu0
      %v4222 = vadd.f32 %v4062, %v4221
      %v4223 = vpop.f32.mrb[0].mxu0
      %4224 = vmatprep.mubr.bf16.mxu0 %v4013
      %4225 = vmatmul.mubr.bf16.gmra.mrb[0].mxu0 %v4012
      %v4226 = vpop.f32.mrb[0].mxu0
      %v4227 = vadd.f32 %v4062, %v4226
      %v4228 = vpop.f32.mrb[0].mxu0
      %v4229 = vpop.f32.mrb[0].mxu0
      %v4230 = vadd.f32 %v4062, %v4229
      %v4231 = vpop.f32.mrb[0].mxu0
      %4232 = vmatprep.mubr.bf16.mxu0 %v4016
      %4233 = vmatmul.mubr.bf16.gmra.mrb[0].mxu0 %v4015
      %v4234 = vpop.f32.mrb[0].mxu0
      %v4235 = vadd.f32 %v4062, %v4234
      %v4236 = vpop.f32.mrb[0].mxu0
      %v4237 = vpop.f32.mrb[0].mxu0
      %v4238 = vadd.f32 %v4062, %v4237
      %v4239 = vpop.f32.mrb[0].mxu0
      %4240 = vmatprep.mubr.bf16.mxu0 %v4019
      %4241 = vmatmul.mubr.bf16.gmra.mrb[0].mxu0 %v4018
      %v4242 = vpop.f32.mrb[0].mxu0
      %v4243 = vadd.f32 %v4062, %v4242
      %v4244 = vpop.f32.mrb[0].mxu0
      %v4245 = vpop.f32.mrb[0].mxu0
      %v4246 = vadd.f32 %v4062, %v4245
      %v4247 = vpop.f32.mrb[0].mxu0
      %4248 = vdwg.mxu0
      %4249 = vmatprep.subr.bf16.mxu0 0
      %4250 = vmatpush1.bf16.msra.mxu0 %v4152
      %4251 = vmatprep.subr.bf16.mxu0 0
      %4252 = vmatpush1.bf16.msra.mxu0 %v4153
      %4253 = vmatprep.subr.bf16.mxu0 0
      %4254 = vmatpush1.bf16.msra.mxu0 0
      %4255 = vmatprep.subr.bf16.mxu0 0
      %4256 = vmatpush1.bf16.msra.mxu0 0
      %4257 = vmatprep.subr.bf16.mxu0 0
      %4258 = vmatpush1.bf16.msra.mxu0 0
      %4259 = vmatprep.subr.bf16.mxu0 0
      %4260 = vmatpush1.bf16.msra.mxu0 0
      %4261 = vmatprep.subr.bf16.mxu0 0
      %4262 = vmatpush1.bf16.msra.mxu0 0
      %4263 = vmatprep.subr.bf16.mxu0 0
      %4264 = vmatpush1.bf16.msra.mxu0 0
      %4265 = vmatprep.subr.bf16.mxu0 0
      %4266 = vmatpush1.bf16.msra.mxu0 0
      %4267 = vmatprep.subr.bf16.mxu0 0
      %4268 = vmatpush1.bf16.msra.mxu0 0
      %4269 = vmatprep.subr.bf16.mxu0 0
      %4270 = vmatpush1.bf16.msra.mxu0 0
      %4271 = vmatprep.subr.bf16.mxu0 0
      %4272 = vmatpush1.bf16.msra.mxu0 0
      %4273 = vmatprep.subr.bf16.mxu0 0
      %4274 = vmatpush1.bf16.msra.mxu0 0
      %4275 = vmatprep.subr.bf16.mxu0 0
      %4276 = vmatpush1.bf16.msra.mxu0 0
      %4277 = vmatprep.subr.bf16.mxu0 0
      %4278 = vmatpush1.bf16.msra.mxu0 0
      %4279 = vmatprep.subr.bf16.mxu0 0
      %4280 = vmatpush1.bf16.msra.mxu0 0
      %4281 = vmatprep.mubr.bf16.mxu0 0
      %4282 = vmatmul.mubr.bf16.gmra.mrb[0].mxu0 %v4173
      %v4283 = vpop.f32.mrb[0].mxu0
      %v4284 = vadd.f32 %v4219, %v4283
      %v4285 = vpop.f32.mrb[0].mxu0
      %v4286 = vpop.f32.mrb[0].mxu0
      %v4287 = vadd.f32 %v4222, %v4286
      %v4288 = vpop.f32.mrb[0].mxu0
      %4289 = vmatprep.mubr.bf16.mxu0 0
      %4290 = vmatmul.mubr.bf16.gmra.mrb[0].mxu0 %v4176
      %v4291 = vpop.f32.mrb[0].mxu0
      %v4292 = vadd.f32 %v4227, %v4291
      %v4293 = vpop.f32.mrb[0].mxu0
      %v4294 = vpop.f32.mrb[0].mxu0
      %v4295 = vadd.f32 %v4230, %v4294
      %v4296 = vpop.f32.mrb[0].mxu0
      %4297 = vmatprep.mubr.bf16.mxu0 0
      %4298 = vmatmul.mubr.bf16.gmra.mrb[0].mxu0 %v4179
      %v4299 = vpop.f32.mrb[0].mxu0
      %v4300 = vadd.f32 %v4235, %v4299
      %v4301 = vpop.f32.mrb[0].mxu0
      %v4302 = vpop.f32.mrb[0].mxu0
      %v4303 = vadd.f32 %v4238, %v4302
      %v4304 = vpop.f32.mrb[0].mxu0
      %4305 = vmatprep.mubr.bf16.mxu0 0
      %4306 = vmatmul.mubr.bf16.gmra.mrb[0].mxu0 %v4182
      %v4307 = vpop.f32.mrb[0].mxu0
      %v4308 = vadd.f32 %v4243, %v4307
      %v4309 = vpop.f32.mrb[0].mxu0
      %v4310 = vpop.f32.mrb[0].mxu0
      %v4311 = vadd.f32 %v4246, %v4310
      %v4312 = vpop.f32.mrb[0].mxu0
      %4313 = vdwg.mxu0
      %v4314 = vadd.f32 %v4284, %v2856
      %v4315 = vadd.f32 %v4287, %v2857
      %v4316 = vadd.f32 %v4292, %v2858
      %v4317 = vadd.f32 %v4295, %v2859
      %v4318 = vadd.f32 %v4300, %v2860
      %v4319 = vadd.f32 %v4303, %v2861
      %v4320 = vadd.f32 %v4308, %v2862
      %v4321 = vadd.f32 %v4311, %v2863
      %v4322 = vmax.f32 %v4314, 0.0
      %v4323 = vmax.f32 %v4315, 0.0
      %v4324 = vmax.f32 %v4316, 0.0
      %v4325 = vmax.f32 %v4317, 0.0
      %v4326 = vmax.f32 %v4318, 0.0
      %v4327 = vmax.f32 %v4319, 0.0
      %v4328 = vmax.f32 %v4320, 0.0
      %v4329 = vmax.f32 %v4321, 0.0
      %4330 = vst.msk [vmem:[#allocation2 + $0x10] sm:$0xff] %vm492, %v4322
      %4331 = vst.msk [vmem:[#allocation2 + $0x18] sm:$0xff] %vm492, %v4323
      %4332 = vst.msk [vmem:[#allocation2 + $0x20] sm:$0xff] %vm492, %v4324
      %4333 = vst.msk [vmem:[#allocation2 + $0x28] sm:$0xff] %vm492, %v4325
      %4334 = vst.msk [vmem:[#allocation2 + $0x30] sm:$0xff] %vm492, %v4326
      %4335 = vst.msk [vmem:[#allocation2 + $0x38] sm:$0xff] %vm492, %v4327
      %4336 = vst.msk [vmem:[#allocation2 + $0x40] sm:$0xff] %vm492, %v4328
      %4337 = vst.msk [vmem:[#allocation2 + $0x48] sm:$0xff] %vm492, %v4329
      %v4338 = vld [vmem:[#allocation2 + $0x7] sm:$0xff]
      %v4339 = vld [vmem:[#allocation2 + $0xf] sm:$0xff]
      %v4340 = vld [vmem:[#allocation2 + $0x17] sm:$0xff]
      %v4341 = vld [vmem:[#allocation2 + $0x1f] sm:$0xff]
      %v4342 = vld [vmem:[#allocation2 + $0x27] sm:$0xff]
      %v4343 = vld [vmem:[#allocation2 + $0x2f] sm:$0xff]
      %v4344 = vld [vmem:[#allocation2 + $0x37] sm:$0xff]
      %v4345 = vld [vmem:[#allocation2 + $0x3f] sm:$0xff]
      %v4346 = vsel %vm658, %v4338, 0.0
      %v4347 = vsel %vm659, %v4339, 0.0
      %v4348 = vsel %vm660, %v4340, 0.0
      %v4349 = vsel %vm661, %v4341, 0.0
      %v4350 = vsel %vm662, %v4342, 0.0
      %v4351 = vsel %vm663, %v4343, 0.0
      %v4352 = vsel %vm664, %v4344, 0.0
      %v4353 = vsel %vm665, %v4345, 0.0
      %4354 = vst.msk [vmem:[#allocation3] sm:$0xff] %vm492, %v4346
      %4355 = vst.msk [vmem:[#allocation3 + $0x18] sm:$0xff] %vm492, %v4347
      %4356 = vst.msk [vmem:[#allocation3 + $0x30] sm:$0xff] %vm492, %v4348
      %4357 = vst.msk [vmem:[#allocation3 + $0x48] sm:$0xff] %vm492, %v4349
      %4358 = vst.msk [vmem:[#allocation3 + $0x60] sm:$0xff] %vm492, %v4350
      %4359 = vst.msk [vmem:[#allocation3 + $0x78] sm:$0xff] %vm492, %v4351
      %4360 = vst.msk [vmem:[#allocation3 + $0x90] sm:$0xff] %vm492, %v4352
      %4361 = vst.msk [vmem:[#allocation3 + $0xa8] sm:$0xff] %vm492, %v4353
      %v4362 = vld [vmem:[#allocation2 + $0x8] sm:$0xff]
      %v4363 = vld [vmem:[#allocation2 + $0x10] sm:$0xff]
      %v4364 = vld [vmem:[#allocation2 + $0x18] sm:$0xff]
      %v4365 = vld [vmem:[#allocation2 + $0x20] sm:$0xff]
      %v4366 = vld [vmem:[#allocation2 + $0x28] sm:$0xff]
      %v4367 = vld [vmem:[#allocation2 + $0x30] sm:$0xff]
      %v4368 = vld [vmem:[#allocation2 + $0x38] sm:$0xff]
      %v4369 = vld [vmem:[#allocation2 + $0x40] sm:$0xff]
      %4378 = vrot.lane.b32.xlu0 %v4362, 32
      %v4379 = vpop.permute.xlu0 %4378
      %4380 = vrot.lane.b32.xlu0 %v4363, 32
      %v4381 = vpop.permute.xlu0 %4380
      %4382 = vrot.lane.b32.xlu0 %v4364, 32
      %v4383 = vpop.permute.xlu0 %4382
      %4384 = vrot.lane.b32.xlu0 %v4365, 32
      %v4385 = vpop.permute.xlu0 %4384
      %4386 = vrot.lane.b32.xlu0 %v4366, 32
      %v4387 = vpop.permute.xlu0 %4386
      %4388 = vrot.lane.b32.xlu0 %v4367, 32
      %v4389 = vpop.permute.xlu0 %4388
      %4390 = vrot.lane.b32.xlu0 %v4368, 32
      %v4391 = vpop.permute.xlu0 %4390
      %4392 = vrot.lane.b32.xlu0 %v4369, 32
      %v4393 = vpop.permute.xlu0 %4392
      %4402 = vst.msk [vmem:[#allocation3] sm:$0xff] %vm722, %v4379
      %4403 = vst.msk [vmem:[#allocation3 + $0x18] sm:$0xff] %vm722, %v4381
      %4404 = vst.msk [vmem:[#allocation3 + $0x30] sm:$0xff] %vm722, %v4383
      %4405 = vst.msk [vmem:[#allocation3 + $0x48] sm:$0xff] %vm722, %v4385
      %4406 = vst.msk [vmem:[#allocation3 + $0x60] sm:$0xff] %vm722, %v4387
      %4407 = vst.msk [vmem:[#allocation3 + $0x78] sm:$0xff] %vm722, %v4389
      %4408 = vst.msk [vmem:[#allocation3 + $0x90] sm:$0xff] %vm722, %v4391
      %4409 = vst.msk [vmem:[#allocation3 + $0xa8] sm:$0xff] %vm722, %v4393
      %v4410 = vld [vmem:[#allocation2 + $0x9] sm:$0xff]
      %v4411 = vld [vmem:[#allocation2 + $0x11] sm:$0xff]
      %v4412 = vld [vmem:[#allocation2 + $0x19] sm:$0xff]
      %v4413 = vld [vmem:[#allocation2 + $0x21] sm:$0xff]
      %v4414 = vld [vmem:[#allocation2 + $0x29] sm:$0xff]
      %v4415 = vld [vmem:[#allocation2 + $0x31] sm:$0xff]
      %v4416 = vld [vmem:[#allocation2 + $0x39] sm:$0xff]
      %v4417 = vld [vmem:[#allocation2 + $0x41] sm:$0xff]
      %v4418 = vsel %vm747, %v4410, 0.0
      %v4419 = vsel %vm748, %v4411, 0.0
      %v4420 = vsel %vm749, %v4412, 0.0
      %v4421 = vsel %vm750, %v4413, 0.0
      %v4422 = vsel %vm751, %v4414, 0.0
      %v4423 = vsel %vm752, %v4415, 0.0
      %v4424 = vsel %vm753, %v4416, 0.0
      %v4425 = vsel %vm754, %v4417, 0.0
      %4434 = vrot.lane.b32.xlu0 %v4418, 64
      %v4435 = vpop.permute.xlu0 %4434
      %4436 = vrot.lane.b32.xlu0 %v4419, 64
      %v4437 = vpop.permute.xlu0 %4436
      %4438 = vrot.lane.b32.xlu0 %v4420, 64
      %v4439 = vpop.permute.xlu0 %4438
      %4440 = vrot.lane.b32.xlu0 %v4421, 64
      %v4441 = vpop.permute.xlu0 %4440
      %4442 = vrot.lane.b32.xlu0 %v4422, 64
      %v4443 = vpop.permute.xlu0 %4442
      %4444 = vrot.lane.b32.xlu0 %v4423, 64
      %v4445 = vpop.permute.xlu0 %4444
      %4446 = vrot.lane.b32.xlu0 %v4424, 64
      %v4447 = vpop.permute.xlu0 %4446
      %4448 = vrot.lane.b32.xlu0 %v4425, 64
      %v4449 = vpop.permute.xlu0 %4448
      %4458 = vst.msk [vmem:[#allocation3] sm:$0xff] %vm795, %v4435
      %4459 = vst.msk [vmem:[#allocation3 + $0x18] sm:$0xff] %vm795, %v4437
      %4460 = vst.msk [vmem:[#allocation3 + $0x30] sm:$0xff] %vm795, %v4439
      %4461 = vst.msk [vmem:[#allocation3 + $0x48] sm:$0xff] %vm795, %v4441
      %4462 = vst.msk [vmem:[#allocation3 + $0x60] sm:$0xff] %vm795, %v4443
      %4463 = vst.msk [vmem:[#allocation3 + $0x78] sm:$0xff] %vm795, %v4445
      %4464 = vst.msk [vmem:[#allocation3 + $0x90] sm:$0xff] %vm795, %v4447
      %4465 = vst.msk [vmem:[#allocation3 + $0xa8] sm:$0xff] %vm795, %v4449
      %v4466 = vld [vmem:[#allocation2 + $0xf] sm:$0xff]
      %v4467 = vld [vmem:[#allocation2 + $0x17] sm:$0xff]
      %v4468 = vld [vmem:[#allocation2 + $0x1f] sm:$0xff]
      %v4469 = vld [vmem:[#allocation2 + $0x27] sm:$0xff]
      %v4470 = vld [vmem:[#allocation2 + $0x2f] sm:$0xff]
      %v4471 = vld [vmem:[#allocation2 + $0x37] sm:$0xff]
      %v4472 = vld [vmem:[#allocation2 + $0x3f] sm:$0xff]
      %v4473 = vld [vmem:[#allocation2 + $0x47] sm:$0xff]
      %v4474 = vsel %vm658, %v4466, 0.0
      %v4475 = vsel %vm659, %v4467, 0.0
      %v4476 = vsel %vm660, %v4468, 0.0
      %v4477 = vsel %vm661, %v4469, 0.0
      %v4478 = vsel %vm662, %v4470, 0.0
      %v4479 = vsel %vm663, %v4471, 0.0
      %v4480 = vsel %vm664, %v4472, 0.0
      %v4481 = vsel %vm665, %v4473, 0.0
      %4490 = vrot.lane.b32.xlu0 %v4474, 96
      %v4491 = vpop.permute.xlu0 %4490
      %4492 = vrot.lane.b32.xlu0 %v4475, 96
      %v4493 = vpop.permute.xlu0 %4492
      %4494 = vrot.lane.b32.xlu0 %v4476, 96
      %v4495 = vpop.permute.xlu0 %4494
      %4496 = vrot.lane.b32.xlu0 %v4477, 96
      %v4497 = vpop.permute.xlu0 %4496
      %4498 = vrot.lane.b32.xlu0 %v4478, 96
      %v4499 = vpop.permute.xlu0 %4498
      %4500 = vrot.lane.b32.xlu0 %v4479, 96
      %v4501 = vpop.permute.xlu0 %4500
      %4502 = vrot.lane.b32.xlu0 %v4480, 96
      %v4503 = vpop.permute.xlu0 %4502
      %4504 = vrot.lane.b32.xlu0 %v4481, 96
      %v4505 = vpop.permute.xlu0 %4504
      %4514 = vst.msk [vmem:[#allocation3] sm:$0xff] %vm852, %v4491
      %4515 = vst.msk [vmem:[#allocation3 + $0x18] sm:$0xff] %vm852, %v4493
      %4516 = vst.msk [vmem:[#allocation3 + $0x30] sm:$0xff] %vm852, %v4495
      %4517 = vst.msk [vmem:[#allocation3 + $0x48] sm:$0xff] %vm852, %v4497
      %4518 = vst.msk [vmem:[#allocation3 + $0x60] sm:$0xff] %vm852, %v4499
      %4519 = vst.msk [vmem:[#allocation3 + $0x78] sm:$0xff] %vm852, %v4501
      %4520 = vst.msk [vmem:[#allocation3 + $0x90] sm:$0xff] %vm852, %v4503
      %4521 = vst.msk [vmem:[#allocation3 + $0xa8] sm:$0xff] %vm852, %v4505
      %v4522 = vld [vmem:[#allocation2 + $0x10] sm:$0xff]
      %v4523 = vld [vmem:[#allocation2 + $0x18] sm:$0xff]
      %v4524 = vld [vmem:[#allocation2 + $0x20] sm:$0xff]
      %v4525 = vld [vmem:[#allocation2 + $0x28] sm:$0xff]
      %v4526 = vld [vmem:[#allocation2 + $0x30] sm:$0xff]
      %v4527 = vld [vmem:[#allocation2 + $0x38] sm:$0xff]
      %v4528 = vld [vmem:[#allocation2 + $0x40] sm:$0xff]
      %v4529 = vld [vmem:[#allocation2 + $0x48] sm:$0xff]
      %4530 = vst.msk [vmem:[#allocation3 + $0x8] sm:$0xff] %vm492, %v4522
      %4531 = vst.msk [vmem:[#allocation3 + $0x20] sm:$0xff] %vm492, %v4523
      %4532 = vst.msk [vmem:[#allocation3 + $0x38] sm:$0xff] %vm492, %v4524
      %4533 = vst.msk [vmem:[#allocation3 + $0x50] sm:$0xff] %vm492, %v4525
      %4534 = vst.msk [vmem:[#allocation3 + $0x68] sm:$0xff] %vm492, %v4526
      %4535 = vst.msk [vmem:[#allocation3 + $0x80] sm:$0xff] %vm492, %v4527
      %4536 = vst.msk [vmem:[#allocation3 + $0x98] sm:$0xff] %vm492, %v4528
      %4537 = vst.msk [vmem:[#allocation3 + $0xb0] sm:$0xff] %vm492, %v4529
      %v4538 = vld [vmem:[#allocation2 + $0x11] sm:$0xff]
      %v4539 = vld [vmem:[#allocation2 + $0x19] sm:$0xff]
      %v4540 = vld [vmem:[#allocation2 + $0x21] sm:$0xff]
      %v4541 = vld [vmem:[#allocation2 + $0x29] sm:$0xff]
      %v4542 = vld [vmem:[#allocation2 + $0x31] sm:$0xff]
      %v4543 = vld [vmem:[#allocation2 + $0x39] sm:$0xff]
      %v4544 = vld [vmem:[#allocation2 + $0x41] sm:$0xff]
      %v4545 = vld [vmem:[#allocation2 + $0x49] sm:$0xff]
      %v4546 = vsel %vm747, %v4538, 0.0
      %v4547 = vsel %vm748, %v4539, 0.0
      %v4548 = vsel %vm749, %v4540, 0.0
      %v4549 = vsel %vm750, %v4541, 0.0
      %v4550 = vsel %vm751, %v4542, 0.0
      %v4551 = vsel %vm752, %v4543, 0.0
      %v4552 = vsel %vm753, %v4544, 0.0
      %v4553 = vsel %vm754, %v4545, 0.0
      %4562 = vrot.lane.b32.xlu0 %v4546, 32
      %v4563 = vpop.permute.xlu0 %4562
      %4564 = vrot.lane.b32.xlu0 %v4547, 32
      %v4565 = vpop.permute.xlu0 %4564
      %4566 = vrot.lane.b32.xlu0 %v4548, 32
      %v4567 = vpop.permute.xlu0 %4566
      %4568 = vrot.lane.b32.xlu0 %v4549, 32
      %v4569 = vpop.permute.xlu0 %4568
      %4570 = vrot.lane.b32.xlu0 %v4550, 32
      %v4571 = vpop.permute.xlu0 %4570
      %4572 = vrot.lane.b32.xlu0 %v4551, 32
      %v4573 = vpop.permute.xlu0 %4572
      %4574 = vrot.lane.b32.xlu0 %v4552, 32
      %v4575 = vpop.permute.xlu0 %4574
      %4576 = vrot.lane.b32.xlu0 %v4553, 32
      %v4577 = vpop.permute.xlu0 %4576
      %4586 = vst.msk [vmem:[#allocation3 + $0x8] sm:$0xff] %vm722, %v4563
      %4587 = vst.msk [vmem:[#allocation3 + $0x20] sm:$0xff] %vm722, %v4565
      %4588 = vst.msk [vmem:[#allocation3 + $0x38] sm:$0xff] %vm722, %v4567
      %4589 = vst.msk [vmem:[#allocation3 + $0x50] sm:$0xff] %vm722, %v4569
      %4590 = vst.msk [vmem:[#allocation3 + $0x68] sm:$0xff] %vm722, %v4571
      %4591 = vst.msk [vmem:[#allocation3 + $0x80] sm:$0xff] %vm722, %v4573
      %4592 = vst.msk [vmem:[#allocation3 + $0x98] sm:$0xff] %vm722, %v4575
      %4593 = vst.msk [vmem:[#allocation3 + $0xb0] sm:$0xff] %vm722, %v4577
      %v4594 = vld [vmem:[#allocation2 + $0x17] sm:$0xff]
      %v4595 = vld [vmem:[#allocation2 + $0x1f] sm:$0xff]
      %v4596 = vld [vmem:[#allocation2 + $0x27] sm:$0xff]
      %v4597 = vld [vmem:[#allocation2 + $0x2f] sm:$0xff]
      %v4598 = vld [vmem:[#allocation2 + $0x37] sm:$0xff]
      %v4599 = vld [vmem:[#allocation2 + $0x3f] sm:$0xff]
      %v4600 = vld [vmem:[#allocation2 + $0x47] sm:$0xff]
      %v4601 = vld [vmem:[#allocation2 + $0x4f] sm:$0xff]
      %v4602 = vsel %vm658, %v4594, 0.0
      %v4603 = vsel %vm659, %v4595, 0.0
      %v4604 = vsel %vm660, %v4596, 0.0
      %v4605 = vsel %vm661, %v4597, 0.0
      %v4606 = vsel %vm662, %v4598, 0.0
      %v4607 = vsel %vm663, %v4599, 0.0
      %v4608 = vsel %vm664, %v4600, 0.0
      %v4609 = vsel %vm665, %v4601, 0.0
      %4618 = vrot.lane.b32.xlu0 %v4602, 64
      %v4619 = vpop.permute.xlu0 %4618
      %4620 = vrot.lane.b32.xlu0 %v4603, 64
      %v4621 = vpop.permute.xlu0 %4620
      %4622 = vrot.lane.b32.xlu0 %v4604, 64
      %v4623 = vpop.permute.xlu0 %4622
      %4624 = vrot.lane.b32.xlu0 %v4605, 64
      %v4625 = vpop.permute.xlu0 %4624
      %4626 = vrot.lane.b32.xlu0 %v4606, 64
      %v4627 = vpop.permute.xlu0 %4626
      %4628 = vrot.lane.b32.xlu0 %v4607, 64
      %v4629 = vpop.permute.xlu0 %4628
      %4630 = vrot.lane.b32.xlu0 %v4608, 64
      %v4631 = vpop.permute.xlu0 %4630
      %4632 = vrot.lane.b32.xlu0 %v4609, 64
      %v4633 = vpop.permute.xlu0 %4632
      %4642 = vst.msk [vmem:[#allocation3 + $0x8] sm:$0xff] %vm795, %v4619
      %4643 = vst.msk [vmem:[#allocation3 + $0x20] sm:$0xff] %vm795, %v4621
      %4644 = vst.msk [vmem:[#allocation3 + $0x38] sm:$0xff] %vm795, %v4623
      %4645 = vst.msk [vmem:[#allocation3 + $0x50] sm:$0xff] %vm795, %v4625
      %4646 = vst.msk [vmem:[#allocation3 + $0x68] sm:$0xff] %vm795, %v4627
      %4647 = vst.msk [vmem:[#allocation3 + $0x80] sm:$0xff] %vm795, %v4629
      %4648 = vst.msk [vmem:[#allocation3 + $0x98] sm:$0xff] %vm795, %v4631
      %4649 = vst.msk [vmem:[#allocation3 + $0xb0] sm:$0xff] %vm795, %v4633
      %v4650 = vld [vmem:[#allocation2 + $0x18] sm:$0xff]
      %v4651 = vld [vmem:[#allocation2 + $0x20] sm:$0xff]
      %v4652 = vld [vmem:[#allocation2 + $0x28] sm:$0xff]
      %v4653 = vld [vmem:[#allocation2 + $0x30] sm:$0xff]
      %v4654 = vld [vmem:[#allocation2 + $0x38] sm:$0xff]
      %v4655 = vld [vmem:[#allocation2 + $0x40] sm:$0xff]
      %v4656 = vld [vmem:[#allocation2 + $0x48] sm:$0xff]
      %v4657 = vld [vmem:[#allocation2 + $0x50] sm:$0xff]
      %4666 = vrot.lane.b32.xlu0 %v4650, 96
      %v4667 = vpop.permute.xlu0 %4666
      %4668 = vrot.lane.b32.xlu0 %v4651, 96
      %v4669 = vpop.permute.xlu0 %4668
      %4670 = vrot.lane.b32.xlu0 %v4652, 96
      %v4671 = vpop.permute.xlu0 %4670
      %4672 = vrot.lane.b32.xlu0 %v4653, 96
      %v4673 = vpop.permute.xlu0 %4672
      %4674 = vrot.lane.b32.xlu0 %v4654, 96
      %v4675 = vpop.permute.xlu0 %4674
      %4676 = vrot.lane.b32.xlu0 %v4655, 96
      %v4677 = vpop.permute.xlu0 %4676
      %4678 = vrot.lane.b32.xlu0 %v4656, 96
      %v4679 = vpop.permute.xlu0 %4678
      %4680 = vrot.lane.b32.xlu0 %v4657, 96
      %v4681 = vpop.permute.xlu0 %4680
      %4690 = vst.msk [vmem:[#allocation3 + $0x8] sm:$0xff] %vm852, %v4667
      %4691 = vst.msk [vmem:[#allocation3 + $0x20] sm:$0xff] %vm852, %v4669
      %4692 = vst.msk [vmem:[#allocation3 + $0x38] sm:$0xff] %vm852, %v4671
      %4693 = vst.msk [vmem:[#allocation3 + $0x50] sm:$0xff] %vm852, %v4673
      %4694 = vst.msk [vmem:[#allocation3 + $0x68] sm:$0xff] %vm852, %v4675
      %4695 = vst.msk [vmem:[#allocation3 + $0x80] sm:$0xff] %vm852, %v4677
      %4696 = vst.msk [vmem:[#allocation3 + $0x98] sm:$0xff] %vm852, %v4679
      %4697 = vst.msk [vmem:[#allocation3 + $0xb0] sm:$0xff] %vm852, %v4681
      %v4698 = vld [vmem:[#allocation2 + $0x19] sm:$0xff]
      %v4699 = vld [vmem:[#allocation2 + $0x21] sm:$0xff]
      %v4700 = vld [vmem:[#allocation2 + $0x29] sm:$0xff]
      %v4701 = vld [vmem:[#allocation2 + $0x31] sm:$0xff]
      %v4702 = vld [vmem:[#allocation2 + $0x39] sm:$0xff]
      %v4703 = vld [vmem:[#allocation2 + $0x41] sm:$0xff]
      %v4704 = vld [vmem:[#allocation2 + $0x49] sm:$0xff]
      %v4705 = vld [vmem:[#allocation2 + $0x51] sm:$0xff]
      %v4706 = vsel %vm747, %v4698, 0.0
      %v4707 = vsel %vm748, %v4699, 0.0
      %v4708 = vsel %vm749, %v4700, 0.0
      %v4709 = vsel %vm750, %v4701, 0.0
      %v4710 = vsel %vm751, %v4702, 0.0
      %v4711 = vsel %vm752, %v4703, 0.0
      %v4712 = vsel %vm753, %v4704, 0.0
      %v4713 = vsel %vm754, %v4705, 0.0
      %4714 = vst.msk [vmem:[#allocation3 + $0x10] sm:$0xff] %vm492, %v4706
      %4715 = vst.msk [vmem:[#allocation3 + $0x28] sm:$0xff] %vm492, %v4707
      %4716 = vst.msk [vmem:[#allocation3 + $0x40] sm:$0xff] %vm492, %v4708
      %4717 = vst.msk [vmem:[#allocation3 + $0x58] sm:$0xff] %vm492, %v4709
      %4718 = vst.msk [vmem:[#allocation3 + $0x70] sm:$0xff] %vm492, %v4710
      %4719 = vst.msk [vmem:[#allocation3 + $0x88] sm:$0xff] %vm492, %v4711
      %4720 = vst.msk [vmem:[#allocation3 + $0xa0] sm:$0xff] %vm492, %v4712
      %4721 = vst.msk [vmem:[#allocation3 + $0xb8] sm:$0xff] %vm492, %v4713
      %v4722 = vld [vmem:[#allocation3] sm:$0xff]
      %v4723 = vld [vmem:[#allocation3 + $0x8] sm:$0xff]
      %v4724 = vld [vmem:[#allocation3 + $0x10] sm:$0xff]
      %v4725 = vld [vmem:[#allocation3 + $0x18] sm:$0xff]
      %v4726 = vld [vmem:[#allocation3 + $0x20] sm:$0xff]
      %v4727 = vld [vmem:[#allocation3 + $0x28] sm:$0xff]
      %v4728 = vld [vmem:[#allocation3 + $0x30] sm:$0xff]
      %v4729 = vld [vmem:[#allocation3 + $0x38] sm:$0xff]
      %v4730 = vld [vmem:[#allocation3 + $0x40] sm:$0xff]
      %v4731 = vld [vmem:[#allocation3 + $0x48] sm:$0xff]
      %v4732 = vld [vmem:[#allocation3 + $0x50] sm:$0xff]
      %v4733 = vld [vmem:[#allocation3 + $0x58] sm:$0xff]
      %v4734 = vld [vmem:[#allocation3 + $0x60] sm:$0xff]
      %v4735 = vld [vmem:[#allocation3 + $0x68] sm:$0xff]
      %v4736 = vld [vmem:[#allocation3 + $0x70] sm:$0xff]
      %v4737 = vld [vmem:[#allocation3 + $0x78] sm:$0xff]
      %v4738 = vld [vmem:[#allocation3 + $0x80] sm:$0xff]
      %v4739 = vld [vmem:[#allocation3 + $0x88] sm:$0xff]
      %v4740 = vld [vmem:[#allocation3 + $0x90] sm:$0xff]
      %v4741 = vld [vmem:[#allocation3 + $0x98] sm:$0xff]
      %v4742 = vld [vmem:[#allocation3 + $0xa0] sm:$0xff]
      %v4743 = vld [vmem:[#allocation3 + $0xa8] sm:$0xff]
      %v4744 = vld [vmem:[#allocation3 + $0xb0] sm:$0xff]
      %v4745 = vld [vmem:[#allocation3 + $0xb8] sm:$0xff]
      %v4746 = vpack.c.bf16 %v4725, %v4722
      %v4747 = vpack.c.bf16 %v4726, %v4723
      %v4748 = vpack.c.bf16 %v4727, %v4724
      %v4749 = vpack.c.bf16 %v4731, %v4728
      %v4750 = vpack.c.bf16 %v4732, %v4729
      %v4751 = vpack.c.bf16 %v4733, %v4730
      %v4752 = vpack.c.bf16 %v4737, %v4734
      %v4753 = vpack.c.bf16 %v4738, %v4735
      %v4754 = vpack.c.bf16 %v4739, %v4736
      %v4755 = vpack.c.bf16 %v4743, %v4740
      %v4756 = vpack.c.bf16 %v4744, %v4741
      %v4757 = vpack.c.bf16 %v4745, %v4742
      %v4758 = vld [vmem:[%s11] sm:$0xf]
      %v4759 = vld [vmem:[%s11 + $0x4] sm:$0xf]
      %v4760 = vld [vmem:[%s11 + $0x8] sm:$0xf]
      %v4761 = vld [vmem:[%s11 + $0xc] sm:$0xf]
      %v4762 = vld [vmem:[%s11 + $0x10] sm:$0xf]
      %v4763 = vld [vmem:[%s11 + $0x14] sm:$0xf]
      %v4764 = vld [vmem:[%s11 + $0x18] sm:$0xf]
      %v4765 = vld [vmem:[%s11 + $0x1c] sm:$0xf]
      %v4766 = vld [vmem:[%s11 + $0x20] sm:$0xf]
      %v4767 = vld [vmem:[%s11 + $0x24] sm:$0xf]
      %v4768 = vld [vmem:[%s11 + $0x28] sm:$0xf]
      %v4769 = vld [vmem:[%s11 + $0x2c] sm:$0xf]
      %v4770 = vld [vmem:[%s11 + $0x30] sm:$0xf]
      %v4771 = vld [vmem:[%s11 + $0x34] sm:$0xf]
      %v4772 = vld [vmem:[%s11 + $0x38] sm:$0xf]
      %v4773 = vld [vmem:[%s11 + $0x3c] sm:$0xf]
      %v4774 = vld [vmem:[%s11 + $0x40] sm:$0xf]
      %v4775 = vld [vmem:[%s11 + $0x44] sm:$0xf]
      %v4776 = vld [vmem:[%s11 + $0x48] sm:$0xf]
      %v4777 = vld [vmem:[%s11 + $0x4c] sm:$0xf]
      %v4778 = vld [vmem:[%s11 + $0x50] sm:$0xf]
      %v4779 = vld [vmem:[%s11 + $0x54] sm:$0xf]
      %v4780 = vld [vmem:[%s11 + $0x58] sm:$0xf]
      %v4781 = vld [vmem:[%s11 + $0x5c] sm:$0xf]
      %v4782 = vld [vmem:[%s11 + $0x60] sm:$0xf]
      %v4783 = vld [vmem:[%s11 + $0x64] sm:$0xf]
      %v4784 = vld [vmem:[%s11 + $0x68] sm:$0xf]
      %v4785 = vld [vmem:[%s11 + $0x6c] sm:$0xf]
      %v4786 = vld [vmem:[%s11 + $0x70] sm:$0xf]
      %v4787 = vld [vmem:[%s11 + $0x74] sm:$0xf]
      %v4788 = vld [vmem:[%s11 + $0x78] sm:$0xf]
      %v4789 = vld [vmem:[%s11 + $0x7c] sm:$0xf]
      %v4790 = vld [vmem:[%s11 + $0x80] sm:$0xf]
      %v4791 = vld [vmem:[%s11 + $0x84] sm:$0xf]
      %v4792 = vld [vmem:[%s11 + $0x88] sm:$0xf]
      %v4793 = vld [vmem:[%s11 + $0x8c] sm:$0xf]
      %v4794 = vld [vmem:[%s12] sm:$0x1]
      %v4796 = vlaneseq
      %v4797 = vshrl.u32 %v4796, 7
      %v4798 = vsub.s32 0, %v4797
      %v4799 = vrot.slane %v4794, %v4798
      %v4837 = vunpack.c.l.b16 %v4758
      %v4838 = vunpack.c.l.b16 %v4759
      %v4839 = vunpack.c.l.b16 %v4760
      %v4840 = vunpack.c.l.b16 %v4761
      %v4841 = vunpack.c.l.b16 %v4762
      %v4842 = vunpack.c.l.b16 %v4763
      %v4843 = vunpack.c.l.b16 %v4764
      %v4844 = vunpack.c.l.b16 %v4765
      %v4845 = vunpack.c.l.b16 %v4766
      %v4846 = vunpack.c.l.b16 %v4767
      %v4847 = vunpack.c.l.b16 %v4768
      %v4848 = vunpack.c.l.b16 %v4769
      %v4849 = vunpack.c.l.b16 %v4770
      %v4850 = vunpack.c.l.b16 %v4771
      %v4851 = vunpack.c.l.b16 %v4772
      %v4852 = vunpack.c.l.b16 %v4773
      %v4853 = vunpack.c.l.b16 %v4774
      %v4854 = vunpack.c.l.b16 %v4775
      %v4855 = vunpack.c.l.b16 %v4776
      %v4856 = vunpack.c.l.b16 %v4777
      %v4857 = vunpack.c.l.b16 %v4778
      %v4858 = vunpack.c.l.b16 %v4779
      %v4859 = vunpack.c.l.b16 %v4780
      %v4860 = vunpack.c.l.b16 %v4781
      %v4861 = vunpack.c.l.b16 %v4782
      %v4862 = vunpack.c.l.b16 %v4783
      %v4863 = vunpack.c.l.b16 %v4784
      %v4864 = vunpack.c.l.b16 %v4785
      %v4865 = vunpack.c.l.b16 %v4786
      %v4866 = vunpack.c.l.b16 %v4787
      %v4867 = vunpack.c.l.b16 %v4788
      %v4868 = vunpack.c.l.b16 %v4789
      %v4869 = vunpack.c.l.b16 %v4790
      %v4870 = vunpack.c.l.b16 %v4791
      %v4871 = vunpack.c.l.b16 %v4792
      %v4872 = vunpack.c.l.b16 %v4793
      %v4873 = vpack.c.b16 %v4838, %v4837
      %v4874 = vpack.c.b16 %v4840, %v4839
      %v4875 = vpack.c.b16 %v4842, %v4841
      %v4876 = vpack.c.b16 %v4844, %v4843
      %v4877 = vpack.c.b16 %v4846, %v4845
      %v4878 = vpack.c.b16 %v4848, %v4847
      %v4879 = vpack.c.b16 %v4850, %v4849
      %v4880 = vpack.c.b16 %v4852, %v4851
      %v4881 = vpack.c.b16 %v4854, %v4853
      %v4882 = vpack.c.b16 %v4856, %v4855
      %v4883 = vpack.c.b16 %v4858, %v4857
      %v4884 = vpack.c.b16 %v4860, %v4859
      %v4885 = vpack.c.b16 %v4862, %v4861
      %v4886 = vpack.c.b16 %v4864, %v4863
      %v4887 = vpack.c.b16 %v4866, %v4865
      %v4888 = vpack.c.b16 %v4868, %v4867
      %v4889 = vpack.c.b16 %v4870, %v4869
      %v4890 = vpack.c.b16 %v4872, %v4871
      %v4910 = vsel %vm492, %v4748, 0
      %v4913 = vsel %vm492, %v4751, 0
      %v4916 = vsel %vm492, %v4754, 0
      %v4919 = vsel %vm492, %v4757, 0
      %4921 = vmatprep.subr.bf16.mxu0 0
      %4922 = vmatpush1.bf16.msra.mxu0 %v4873
      %4923 = vmatprep.subr.bf16.mxu0 0
      %4924 = vmatpush1.bf16.msra.mxu0 %v4874
      %4925 = vmatprep.subr.bf16.mxu0 0
      %4926 = vmatpush1.bf16.msra.mxu0 %v4875
      %4927 = vmatprep.subr.bf16.mxu0 0
      %4928 = vmatpush1.bf16.msra.mxu0 %v4876
      %4929 = vmatprep.subr.bf16.mxu0 0
      %4930 = vmatpush1.bf16.msra.mxu0 %v4877
      %4931 = vmatprep.subr.bf16.mxu0 0
      %4932 = vmatpush1.bf16.msra.mxu0 %v4878
      %4933 = vmatprep.subr.bf16.mxu0 0
      %4934 = vmatpush1.bf16.msra.mxu0 %v4879
      %4935 = vmatprep.subr.bf16.mxu0 0
      %4936 = vmatpush1.bf16.msra.mxu0 %v4880
      %4937 = vmatprep.subr.bf16.mxu0 0
      %4938 = vmatpush1.bf16.msra.mxu0 %v4881
      %4939 = vmatprep.subr.bf16.mxu0 0
      %4940 = vmatpush1.bf16.msra.mxu0 %v4882
      %4941 = vmatprep.subr.bf16.mxu0 0
      %4942 = vmatpush1.bf16.msra.mxu0 %v4883
      %4943 = vmatprep.subr.bf16.mxu0 0
      %4944 = vmatpush1.bf16.msra.mxu0 %v4884
      %4945 = vmatprep.subr.bf16.mxu0 0
      %4946 = vmatpush1.bf16.msra.mxu0 %v4885
      %4947 = vmatprep.subr.bf16.mxu0 0
      %4948 = vmatpush1.bf16.msra.mxu0 %v4886
      %4949 = vmatprep.subr.bf16.mxu0 0
      %4950 = vmatpush1.bf16.msra.mxu0 %v4887
      %4951 = vmatprep.subr.bf16.mxu0 0
      %4952 = vmatpush1.bf16.msra.mxu0 %v4888
      %4953 = vmatprep.mubr.bf16.mxu0 %v4747
      %4954 = vmatmul.mubr.bf16.gmra.mrb[0].mxu0 %v4746
      %v4955 = vpop.f32.mrb[0].mxu0
      %v4956 = vadd.f32 %v4799, %v4955
      %v4957 = vpop.f32.mrb[0].mxu0
      %v4958 = vpop.f32.mrb[0].mxu0
      %v4959 = vadd.f32 %v4799, %v4958
      %v4960 = vpop.f32.mrb[0].mxu0
      %4961 = vmatprep.mubr.bf16.mxu0 %v4750
      %4962 = vmatmul.mubr.bf16.gmra.mrb[0].mxu0 %v4749
      %v4963 = vpop.f32.mrb[0].mxu0
      %v4964 = vadd.f32 %v4799, %v4963
      %v4965 = vpop.f32.mrb[0].mxu0
      %v4966 = vpop.f32.mrb[0].mxu0
      %v4967 = vadd.f32 %v4799, %v4966
      %v4968 = vpop.f32.mrb[0].mxu0
      %4969 = vmatprep.mubr.bf16.mxu0 %v4753
      %4970 = vmatmul.mubr.bf16.gmra.mrb[0].mxu0 %v4752
      %v4971 = vpop.f32.mrb[0].mxu0
      %v4972 = vadd.f32 %v4799, %v4971
      %v4973 = vpop.f32.mrb[0].mxu0
      %v4974 = vpop.f32.mrb[0].mxu0
      %v4975 = vadd.f32 %v4799, %v4974
      %v4976 = vpop.f32.mrb[0].mxu0
      %4977 = vmatprep.mubr.bf16.mxu0 %v4756
      %4978 = vmatmul.mubr.bf16.gmra.mrb[0].mxu0 %v4755
      %v4979 = vpop.f32.mrb[0].mxu0
      %v4980 = vadd.f32 %v4799, %v4979
      %v4981 = vpop.f32.mrb[0].mxu0
      %v4982 = vpop.f32.mrb[0].mxu0
      %v4983 = vadd.f32 %v4799, %v4982
      %v4984 = vpop.f32.mrb[0].mxu0
      %4985 = vdwg.mxu0
      %4986 = vmatprep.subr.bf16.mxu0 0
      %4987 = vmatpush1.bf16.msra.mxu0 %v4889
      %4988 = vmatprep.subr.bf16.mxu0 0
      %4989 = vmatpush1.bf16.msra.mxu0 %v4890
      %4990 = vmatprep.subr.bf16.mxu0 0
      %4991 = vmatpush1.bf16.msra.mxu0 0
      %4992 = vmatprep.subr.bf16.mxu0 0
      %4993 = vmatpush1.bf16.msra.mxu0 0
      %4994 = vmatprep.subr.bf16.mxu0 0
      %4995 = vmatpush1.bf16.msra.mxu0 0
      %4996 = vmatprep.subr.bf16.mxu0 0
      %4997 = vmatpush1.bf16.msra.mxu0 0
      %4998 = vmatprep.subr.bf16.mxu0 0
      %4999 = vmatpush1.bf16.msra.mxu0 0
      %5000 = vmatprep.subr.bf16.mxu0 0
      %5001 = vmatpush1.bf16.msra.mxu0 0
      %5002 = vmatprep.subr.bf16.mxu0 0
      %5003 = vmatpush1.bf16.msra.mxu0 0
      %5004 = vmatprep.subr.bf16.mxu0 0
      %5005 = vmatpush1.bf16.msra.mxu0 0
      %5006 = vmatprep.subr.bf16.mxu0 0
      %5007 = vmatpush1.bf16.msra.mxu0 0
      %5008 = vmatprep.subr.bf16.mxu0 0
      %5009 = vmatpush1.bf16.msra.mxu0 0
      %5010 = vmatprep.subr.bf16.mxu0 0
      %5011 = vmatpush1.bf16.msra.mxu0 0
      %5012 = vmatprep.subr.bf16.mxu0 0
      %5013 = vmatpush1.bf16.msra.mxu0 0
      %5014 = vmatprep.subr.bf16.mxu0 0
      %5015 = vmatpush1.bf16.msra.mxu0 0
      %5016 = vmatprep.subr.bf16.mxu0 0
      %5017 = vmatpush1.bf16.msra.mxu0 0
      %5018 = vmatprep.mubr.bf16.mxu0 0
      %5019 = vmatmul.mubr.bf16.gmra.mrb[0].mxu0 %v4910
      %v5020 = vpop.f32.mrb[0].mxu0
      %v5021 = vadd.f32 %v4956, %v5020
      %v5022 = vpop.f32.mrb[0].mxu0
      %v5023 = vpop.f32.mrb[0].mxu0
      %v5024 = vadd.f32 %v4959, %v5023
      %v5025 = vpop.f32.mrb[0].mxu0
      %5026 = vmatprep.mubr.bf16.mxu0 0
      %5027 = vmatmul.mubr.bf16.gmra.mrb[0].mxu0 %v4913
      %v5028 = vpop.f32.mrb[0].mxu0
      %v5029 = vadd.f32 %v4964, %v5028
      %v5030 = vpop.f32.mrb[0].mxu0
      %v5031 = vpop.f32.mrb[0].mxu0
      %v5032 = vadd.f32 %v4967, %v5031
      %v5033 = vpop.f32.mrb[0].mxu0
      %5034 = vmatprep.mubr.bf16.mxu0 0
      %5035 = vmatmul.mubr.bf16.gmra.mrb[0].mxu0 %v4916
      %v5036 = vpop.f32.mrb[0].mxu0
      %v5037 = vadd.f32 %v4972, %v5036
      %v5038 = vpop.f32.mrb[0].mxu0
      %v5039 = vpop.f32.mrb[0].mxu0
      %v5040 = vadd.f32 %v4975, %v5039
      %v5041 = vpop.f32.mrb[0].mxu0
      %5042 = vmatprep.mubr.bf16.mxu0 0
      %5043 = vmatmul.mubr.bf16.gmra.mrb[0].mxu0 %v4919
      %v5044 = vpop.f32.mrb[0].mxu0
      %v5045 = vadd.f32 %v4980, %v5044
      %v5046 = vpop.f32.mrb[0].mxu0
      %v5047 = vpop.f32.mrb[0].mxu0
      %v5048 = vadd.f32 %v4983, %v5047
      %v5049 = vpop.f32.mrb[0].mxu0
      %5050 = vdwg.mxu0
      %v5051 = vmax.f32 %v5021, 0.0
      %v5052 = vmax.f32 %v5024, 0.0
      %v5053 = vmax.f32 %v5029, 0.0
      %v5054 = vmax.f32 %v5032, 0.0
      %v5055 = vmax.f32 %v5037, 0.0
      %v5056 = vmax.f32 %v5040, 0.0
      %v5057 = vmax.f32 %v5045, 0.0
      %v5058 = vmax.f32 %v5048, 0.0
      %vm5059 = vcmask 285696
      %5060 = vst.msk [vmem:[#allocation4] sm:$0xff] %vm5059, %v5051
      %5061 = vst.msk [vmem:[#allocation4 + $0x8] sm:$0xff] %vm5059, %v5052
      %5062 = vst.msk [vmem:[#allocation4 + $0x10] sm:$0xff] %vm5059, %v5053
      %5063 = vst.msk [vmem:[#allocation4 + $0x18] sm:$0xff] %vm5059, %v5054
      %5064 = vst.msk [vmem:[#allocation4 + $0x20] sm:$0xff] %vm5059, %v5055
      %5065 = vst.msk [vmem:[#allocation4 + $0x28] sm:$0xff] %vm5059, %v5056
      %5066 = vst.msk [vmem:[#allocation4 + $0x30] sm:$0xff] %vm5059, %v5057
      %5067 = vst.msk [vmem:[#allocation4 + $0x38] sm:$0xff] %vm5059, %v5058
      %v5068 = vld [vmem:[#allocation4] sm:$0x1]
      %v5069 = vlaneseq
      %vm5070 = vcmp.ge.s32.totalorder %v5069, 0
      %vm5071 = vcmp.lt.s32.totalorder %v5069, 35
      %vm5072 = vmand %vm5070, %vm5071
      %5073 = vst.msk [vmem:[#allocation5] sm:$0x1] %vm5072, %v5068
      %v5074 = vld [vmem:[#allocation4 + $0x1] sm:$0x1]
      %v5077 = vunpack.c.l.s4 1966171168
      %v5078 = vunpack.c.0.s8 %v5077
      %v5079 = vlaneseq
      %v5080 = vshrl.u32 %v5079, 7
      %v5081 = vsub.s32 %v5078, %v5080
      %v5082 = vrot.slane %v5074, %v5081
      %v5084 = vunpack.c.l.s4 1966171168
      %v5085 = vunpack.c.0.s8 %v5084
      %v5086 = vlaneseq
      %v5087 = vshrl.u32 %v5086, 7
      %v5088 = vsub.s32 %v5085, %v5087
      %v5089 = vrot.slane %v5082, %v5088
      %5090 = vrot.lane.b32.xlu0 %v5089, 35
      %v5091 = vpop.permute.xlu0 %5090
      %vm5093 = vcmp.ge.s32.totalorder %v5069, 35
      %vm5094 = vcmp.lt.s32.totalorder %v5069, 70
      %vm5095 = vmand %vm5093, %vm5094
      %5096 = vst.msk [vmem:[#allocation5] sm:$0x1] %vm5095, %v5091
      %v5097 = vld [vmem:[#allocation4 + $0x2] sm:$0x1]
      %v5100 = vunpack.c.l.s4 1966171168
      %v5101 = vunpack.c.0.s8 %v5100
      %v5102 = vlaneseq
      %v5103 = vshrl.u32 %v5102, 7
      %v5104 = vsub.s32 %v5101, %v5103
      %v5105 = vrot.slane %v5097, %v5104
      %v5107 = vunpack.c.l.s4 1966171168
      %v5108 = vunpack.c.0.s8 %v5107
      %v5109 = vlaneseq
      %v5110 = vshrl.u32 %v5109, 7
      %v5111 = vsub.s32 %v5108, %v5110
      %v5112 = vrot.slane %v5105, %v5111
      %5113 = vrot.lane.b32.xlu0 %v5112, 70
      %v5114 = vpop.permute.xlu0 %5113
      %vm5116 = vcmp.ge.s32.totalorder %v5069, 70
      %vm5117 = vcmp.lt.s32.totalorder %v5069, 105
      %vm5118 = vmand %vm5116, %vm5117
      %5119 = vst.msk [vmem:[#allocation5] sm:$0x1] %vm5118, %v5114
      %v5120 = vld [vmem:[#allocation4 + $0x3] sm:$0x1]
      %v5123 = vunpack.c.l.s4 1966171168
      %v5124 = vunpack.c.0.s8 %v5123
      %v5125 = vlaneseq
      %v5126 = vshrl.u32 %v5125, 7
      %v5127 = vsub.s32 %v5124, %v5126
      %v5128 = vrot.slane %v5120, %v5127
      %v5130 = vunpack.c.l.s4 1966171168
      %v5131 = vunpack.c.0.s8 %v5130
      %v5132 = vlaneseq
      %v5133 = vshrl.u32 %v5132, 7
      %v5134 = vsub.s32 %v5131, %v5133
      %v5135 = vrot.slane %v5128, %v5134
      %5136 = vrot.lane.b32.xlu0 %v5135, 105
      %v5137 = vpop.permute.xlu0 %5136
      %v5138 = vrot.slane %v5137, 7
      %vm5139 = vcmask 859136
      %v5140 = vsel %vm5139, %v5138, %v5137
      %vm5142 = vcmp.ge.s32.totalorder %v5069, 105
      %vm5143 = vcmp.lt.s32.totalorder %v5069, 140
      %vm5144 = vmand %vm5142, %vm5143
      %5145 = vst.msk [vmem:[#allocation5] sm:$0x3] %vm5144, %v5140
      %v5146 = vld [vmem:[#allocation4 + $0x4] sm:$0x1]
      %v5149 = vunpack.c.l.s4 1966171168
      %v5150 = vunpack.c.0.s8 %v5149
      %v5151 = vlaneseq
      %v5152 = vshrl.u32 %v5151, 7
      %v5153 = vsub.s32 %v5150, %v5152
      %v5154 = vrot.slane %v5146, %v5153
      %v5156 = vunpack.c.l.s4 1966171168
      %v5157 = vunpack.c.0.s8 %v5156
      %v5158 = vlaneseq
      %v5159 = vshrl.u32 %v5158, 7
      %v5160 = vsub.s32 %v5157, %v5159
      %v5161 = vrot.slane %v5154, %v5160
      %5162 = vrot.lane.b32.xlu0 %v5161, 12
      %v5163 = vpop.permute.xlu0 %5162
      %vm5165 = vcmp.ge.s32.totalorder %v5069, 12
      %vm5166 = vcmp.lt.s32.totalorder %v5069, 47
      %vm5167 = vmand %vm5165, %vm5166
      %5168 = vst.msk [vmem:[#allocation5 + $0x1] sm:$0x1] %vm5167, %v5163
      %v5169 = vld [vmem:[#allocation4 + $0x5] sm:$0x1]
      %v5172 = vunpack.c.l.s4 1966171168
      %v5173 = vunpack.c.0.s8 %v5172
      %v5174 = vlaneseq
      %v5175 = vshrl.u32 %v5174, 7
      %v5176 = vsub.s32 %v5173, %v5175
      %v5177 = vrot.slane %v5169, %v5176
      %v5179 = vunpack.c.l.s4 1966171168
      %v5180 = vunpack.c.0.s8 %v5179
      %v5181 = vlaneseq
      %v5182 = vshrl.u32 %v5181, 7
      %v5183 = vsub.s32 %v5180, %v5182
      %v5184 = vrot.slane %v5177, %v5183
      %5185 = vrot.lane.b32.xlu0 %v5184, 47
      %v5186 = vpop.permute.xlu0 %5185
      %vm5188 = vcmp.ge.s32.totalorder %v5069, 47
      %vm5189 = vcmp.lt.s32.totalorder %v5069, 82
      %vm5190 = vmand %vm5188, %vm5189
      %5191 = vst.msk [vmem:[#allocation5 + $0x1] sm:$0x1] %vm5190, %v5186
      %v5192 = vld [vmem:[#allocation4 + $0x6] sm:$0x1]
      %v5195 = vunpack.c.l.s4 1966171168
      %v5196 = vunpack.c.0.s8 %v5195
      %v5197 = vlaneseq
      %v5198 = vshrl.u32 %v5197, 7
      %v5199 = vsub.s32 %v5196, %v5198
      %v5200 = vrot.slane %v5192, %v5199
      %v5202 = vunpack.c.l.s4 1966171168
      %v5203 = vunpack.c.0.s8 %v5202
      %v5204 = vlaneseq
      %v5205 = vshrl.u32 %v5204, 7
      %v5206 = vsub.s32 %v5203, %v5205
      %v5207 = vrot.slane %v5200, %v5206
      %5208 = vrot.lane.b32.xlu0 %v5207, 82
      %v5209 = vpop.permute.xlu0 %5208
      %vm5211 = vcmp.ge.s32.totalorder %v5069, 82
      %vm5212 = vcmp.lt.s32.totalorder %v5069, 117
      %vm5213 = vmand %vm5211, %vm5212
      %5214 = vst.msk [vmem:[#allocation5 + $0x1] sm:$0x1] %vm5213, %v5209
      %v5215 = vld [vmem:[#allocation4 + $0x7] sm:$0x1]
      %v5218 = vunpack.c.l.s4 1966171168
      %v5219 = vunpack.c.0.s8 %v5218
      %v5220 = vlaneseq
      %v5221 = vshrl.u32 %v5220, 7
      %v5222 = vsub.s32 %v5219, %v5221
      %v5223 = vrot.slane %v5215, %v5222
      %v5225 = vunpack.c.l.s4 1966171168
      %v5226 = vunpack.c.0.s8 %v5225
      %v5227 = vlaneseq
      %v5228 = vshrl.u32 %v5227, 7
      %v5229 = vsub.s32 %v5226, %v5228
      %v5230 = vrot.slane %v5223, %v5229
      %5231 = vrot.lane.b32.xlu0 %v5230, 117
      %v5232 = vpop.permute.xlu0 %5231
      %v5233 = vrot.slane %v5232, 7
      %vm5234 = vcmask 957440
      %v5235 = vsel %vm5234, %v5233, %v5232
      %vm5237 = vcmp.ge.s32.totalorder %v5069, 117
      %vm5238 = vcmp.lt.s32.totalorder %v5069, 152
      %vm5239 = vmand %vm5237, %vm5238
      %5240 = vst.msk [vmem:[#allocation5 + $0x1] sm:$0x3] %vm5239, %v5235
      %v5241 = vld [vmem:[#allocation4 + $0x8] sm:$0x1]
      %v5244 = vunpack.c.l.s4 1966171168
      %v5245 = vunpack.c.0.s8 %v5244
      %v5246 = vlaneseq
      %v5247 = vshrl.u32 %v5246, 7
      %v5248 = vsub.s32 %v5245, %v5247
      %v5249 = vrot.slane %v5241, %v5248
      %v5251 = vunpack.c.l.s4 1966171168
      %v5252 = vunpack.c.0.s8 %v5251
      %v5253 = vlaneseq
      %v5254 = vshrl.u32 %v5253, 7
      %v5255 = vsub.s32 %v5252, %v5254
      %v5256 = vrot.slane %v5249, %v5255
      %5257 = vrot.lane.b32.xlu0 %v5256, 24
      %v5258 = vpop.permute.xlu0 %5257
      %vm5260 = vcmp.ge.s32.totalorder %v5069, 24
      %vm5261 = vcmp.lt.s32.totalorder %v5069, 59
      %vm5262 = vmand %vm5260, %vm5261
      %5263 = vst.msk [vmem:[#allocation5 + $0x2] sm:$0x1] %vm5262, %v5258
      %v5264 = vld [vmem:[#allocation4 + $0x9] sm:$0x1]
      %v5267 = vunpack.c.l.s4 1966171168
      %v5268 = vunpack.c.0.s8 %v5267
      %v5269 = vlaneseq
      %v5270 = vshrl.u32 %v5269, 7
      %v5271 = vsub.s32 %v5268, %v5270
      %v5272 = vrot.slane %v5264, %v5271
      %v5274 = vunpack.c.l.s4 1966171168
      %v5275 = vunpack.c.0.s8 %v5274
      %v5276 = vlaneseq
      %v5277 = vshrl.u32 %v5276, 7
      %v5278 = vsub.s32 %v5275, %v5277
      %v5279 = vrot.slane %v5272, %v5278
      %5280 = vrot.lane.b32.xlu0 %v5279, 59
      %v5281 = vpop.permute.xlu0 %5280
      %vm5283 = vcmp.ge.s32.totalorder %v5069, 59
      %vm5284 = vcmp.lt.s32.totalorder %v5069, 94
      %vm5285 = vmand %vm5283, %vm5284
      %5286 = vst.msk [vmem:[#allocation5 + $0x2] sm:$0x1] %vm5285, %v5281
      %v5287 = vld [vmem:[#allocation4 + $0xa] sm:$0x1]
      %v5290 = vunpack.c.l.s4 1966171168
      %v5291 = vunpack.c.0.s8 %v5290
      %v5292 = vlaneseq
      %v5293 = vshrl.u32 %v5292, 7
      %v5294 = vsub.s32 %v5291, %v5293
      %v5295 = vrot.slane %v5287, %v5294
      %v5297 = vunpack.c.l.s4 1966171168
      %v5298 = vunpack.c.0.s8 %v5297
      %v5299 = vlaneseq
      %v5300 = vshrl.u32 %v5299, 7
      %v5301 = vsub.s32 %v5298, %v5300
      %v5302 = vrot.slane %v5295, %v5301
      %5303 = vrot.lane.b32.xlu0 %v5302, 94
      %v5304 = vpop.permute.xlu0 %5303
      %v5305 = vrot.slane %v5304, 7
      %vm5306 = vcmask 769024
      %v5307 = vsel %vm5306, %v5305, %v5304
      %vm5309 = vcmp.ge.s32.totalorder %v5069, 94
      %vm5310 = vcmp.lt.s32.totalorder %v5069, 129
      %vm5311 = vmand %vm5309, %vm5310
      %5312 = vst.msk [vmem:[#allocation5 + $0x2] sm:$0x3] %vm5311, %v5307
      %v5313 = vld [vmem:[#allocation4 + $0xb] sm:$0x1]
      %v5316 = vunpack.c.l.s4 1966171168
      %v5317 = vunpack.c.0.s8 %v5316
      %v5318 = vlaneseq
      %v5319 = vshrl.u32 %v5318, 7
      %v5320 = vsub.s32 %v5317, %v5319
      %v5321 = vrot.slane %v5313, %v5320
      %v5323 = vunpack.c.l.s4 1966171168
      %v5324 = vunpack.c.0.s8 %v5323
      %v5325 = vlaneseq
      %v5326 = vshrl.u32 %v5325, 7
      %v5327 = vsub.s32 %v5324, %v5326
      %v5328 = vrot.slane %v5321, %v5327
      %5329 = vrot.lane.b32.xlu0 %v5328, 1
      %v5330 = vpop.permute.xlu0 %5329
      %vm5332 = vcmp.ge.s32.totalorder %v5069, 1
      %vm5333 = vcmp.lt.s32.totalorder %v5069, 36
      %vm5334 = vmand %vm5332, %vm5333
      %5335 = vst.msk [vmem:[#allocation5 + $0x3] sm:$0x1] %vm5334, %v5330
      %v5336 = vld [vmem:[#allocation4 + $0xc] sm:$0x1]
      %v5339 = vunpack.c.l.s4 1966171168
      %v5340 = vunpack.c.0.s8 %v5339
      %v5341 = vlaneseq
      %v5342 = vshrl.u32 %v5341, 7
      %v5343 = vsub.s32 %v5340, %v5342
      %v5344 = vrot.slane %v5336, %v5343
      %v5346 = vunpack.c.l.s4 1966171168
      %v5347 = vunpack.c.0.s8 %v5346
      %v5348 = vlaneseq
      %v5349 = vshrl.u32 %v5348, 7
      %v5350 = vsub.s32 %v5347, %v5349
      %v5351 = vrot.slane %v5344, %v5350
      %5352 = vrot.lane.b32.xlu0 %v5351, 36
      %v5353 = vpop.permute.xlu0 %5352
      %vm5355 = vcmp.ge.s32.totalorder %v5069, 36
      %vm5356 = vcmp.lt.s32.totalorder %v5069, 71
      %vm5357 = vmand %vm5355, %vm5356
      %5358 = vst.msk [vmem:[#allocation5 + $0x3] sm:$0x1] %vm5357, %v5353
      %v5359 = vld [vmem:[#allocation4 + $0xd] sm:$0x1]
      %v5362 = vunpack.c.l.s4 1966171168
      %v5363 = vunpack.c.0.s8 %v5362
      %v5364 = vlaneseq
      %v5365 = vshrl.u32 %v5364, 7
      %v5366 = vsub.s32 %v5363, %v5365
      %v5367 = vrot.slane %v5359, %v5366
      %v5369 = vunpack.c.l.s4 1966171168
      %v5370 = vunpack.c.0.s8 %v5369
      %v5371 = vlaneseq
      %v5372 = vshrl.u32 %v5371, 7
      %v5373 = vsub.s32 %v5370, %v5372
      %v5374 = vrot.slane %v5367, %v5373
      %5375 = vrot.lane.b32.xlu0 %v5374, 71
      %v5376 = vpop.permute.xlu0 %5375
      %vm5378 = vcmp.ge.s32.totalorder %v5069, 71
      %vm5379 = vcmp.lt.s32.totalorder %v5069, 106
      %vm5380 = vmand %vm5378, %vm5379
      %5381 = vst.msk [vmem:[#allocation5 + $0x3] sm:$0x1] %vm5380, %v5376
      %v5382 = vld [vmem:[#allocation4 + $0xe] sm:$0x1]
      %v5385 = vunpack.c.l.s4 1966171168
      %v5386 = vunpack.c.0.s8 %v5385
      %v5387 = vlaneseq
      %v5388 = vshrl.u32 %v5387, 7
      %v5389 = vsub.s32 %v5386, %v5388
      %v5390 = vrot.slane %v5382, %v5389
      %v5392 = vunpack.c.l.s4 1966171168
      %v5393 = vunpack.c.0.s8 %v5392
      %v5394 = vlaneseq
      %v5395 = vshrl.u32 %v5394, 7
      %v5396 = vsub.s32 %v5393, %v5395
      %v5397 = vrot.slane %v5390, %v5396
      %5398 = vrot.lane.b32.xlu0 %v5397, 106
      %v5399 = vpop.permute.xlu0 %5398
      %v5400 = vrot.slane %v5399, 7
      %vm5401 = vcmask 867328
      %v5402 = vsel %vm5401, %v5400, %v5399
      %vm5404 = vcmp.ge.s32.totalorder %v5069, 106
      %vm5405 = vcmp.lt.s32.totalorder %v5069, 141
      %vm5406 = vmand %vm5404, %vm5405
      %5407 = vst.msk [vmem:[#allocation5 + $0x3] sm:$0x3] %vm5406, %v5402
      %v5408 = vld [vmem:[#allocation4 + $0xf] sm:$0x1]
      %v5411 = vunpack.c.l.s4 1966171168
      %v5412 = vunpack.c.0.s8 %v5411
      %v5413 = vlaneseq
      %v5414 = vshrl.u32 %v5413, 7
      %v5415 = vsub.s32 %v5412, %v5414
      %v5416 = vrot.slane %v5408, %v5415
      %v5418 = vunpack.c.l.s4 1966171168
      %v5419 = vunpack.c.0.s8 %v5418
      %v5420 = vlaneseq
      %v5421 = vshrl.u32 %v5420, 7
      %v5422 = vsub.s32 %v5419, %v5421
      %v5423 = vrot.slane %v5416, %v5422
      %5424 = vrot.lane.b32.xlu0 %v5423, 13
      %v5425 = vpop.permute.xlu0 %5424
      %vm5427 = vcmp.ge.s32.totalorder %v5069, 13
      %vm5428 = vcmp.lt.s32.totalorder %v5069, 48
      %vm5429 = vmand %vm5427, %vm5428
      %5430 = vst.msk [vmem:[#allocation5 + $0x4] sm:$0x1] %vm5429, %v5425
      %v5431 = vld [vmem:[#allocation4 + $0x10] sm:$0x1]
      %v5434 = vunpack.c.l.s4 1966171168
      %v5435 = vunpack.c.0.s8 %v5434
      %v5436 = vlaneseq
      %v5437 = vshrl.u32 %v5436, 7
      %v5438 = vsub.s32 %v5435, %v5437
      %v5439 = vrot.slane %v5431, %v5438
      %v5441 = vunpack.c.l.s4 1966171168
      %v5442 = vunpack.c.0.s8 %v5441
      %v5443 = vlaneseq
      %v5444 = vshrl.u32 %v5443, 7
      %v5445 = vsub.s32 %v5442, %v5444
      %v5446 = vrot.slane %v5439, %v5445
      %5447 = vrot.lane.b32.xlu0 %v5446, 48
      %v5448 = vpop.permute.xlu0 %5447
      %vm5450 = vcmp.ge.s32.totalorder %v5069, 48
      %vm5451 = vcmp.lt.s32.totalorder %v5069, 83
      %vm5452 = vmand %vm5450, %vm5451
      %5453 = vst.msk [vmem:[#allocation5 + $0x4] sm:$0x1] %vm5452, %v5448
      %v5454 = vld [vmem:[#allocation4 + $0x11] sm:$0x1]
      %v5457 = vunpack.c.l.s4 1966171168
      %v5458 = vunpack.c.0.s8 %v5457
      %v5459 = vlaneseq
      %v5460 = vshrl.u32 %v5459, 7
      %v5461 = vsub.s32 %v5458, %v5460
      %v5462 = vrot.slane %v5454, %v5461
      %v5464 = vunpack.c.l.s4 1966171168
      %v5465 = vunpack.c.0.s8 %v5464
      %v5466 = vlaneseq
      %v5467 = vshrl.u32 %v5466, 7
      %v5468 = vsub.s32 %v5465, %v5467
      %v5469 = vrot.slane %v5462, %v5468
      %5470 = vrot.lane.b32.xlu0 %v5469, 83
      %v5471 = vpop.permute.xlu0 %5470
      %vm5473 = vcmp.ge.s32.totalorder %v5069, 83
      %vm5474 = vcmp.lt.s32.totalorder %v5069, 118
      %vm5475 = vmand %vm5473, %vm5474
      %5476 = vst.msk [vmem:[#allocation5 + $0x4] sm:$0x1] %vm5475, %v5471
      %v5477 = vld [vmem:[#allocation4 + $0x12] sm:$0x1]
      %v5480 = vunpack.c.l.s4 1966171168
      %v5481 = vunpack.c.0.s8 %v5480
      %v5482 = vlaneseq
      %v5483 = vshrl.u32 %v5482, 7
      %v5484 = vsub.s32 %v5481, %v5483
      %v5485 = vrot.slane %v5477, %v5484
      %v5487 = vunpack.c.l.s4 1966171168
      %v5488 = vunpack.c.0.s8 %v5487
      %v5489 = vlaneseq
      %v5490 = vshrl.u32 %v5489, 7
      %v5491 = vsub.s32 %v5488, %v5490
      %v5492 = vrot.slane %v5485, %v5491
      %5493 = vrot.lane.b32.xlu0 %v5492, 118
      %v5494 = vpop.permute.xlu0 %5493
      %v5495 = vrot.slane %v5494, 7
      %vm5496 = vcmask 965632
      %v5497 = vsel %vm5496, %v5495, %v5494
      %vm5499 = vcmp.ge.s32.totalorder %v5069, 118
      %vm5500 = vcmp.lt.s32.totalorder %v5069, 153
      %vm5501 = vmand %vm5499, %vm5500
      %5502 = vst.msk [vmem:[#allocation5 + $0x4] sm:$0x3] %vm5501, %v5497
      %v5503 = vld [vmem:[#allocation4 + $0x13] sm:$0x1]
      %v5506 = vunpack.c.l.s4 1966171168
      %v5507 = vunpack.c.0.s8 %v5506
      %v5508 = vlaneseq
      %v5509 = vshrl.u32 %v5508, 7
      %v5510 = vsub.s32 %v5507, %v5509
      %v5511 = vrot.slane %v5503, %v5510
      %v5513 = vunpack.c.l.s4 1966171168
      %v5514 = vunpack.c.0.s8 %v5513
      %v5515 = vlaneseq
      %v5516 = vshrl.u32 %v5515, 7
      %v5517 = vsub.s32 %v5514, %v5516
      %v5518 = vrot.slane %v5511, %v5517
      %5519 = vrot.lane.b32.xlu0 %v5518, 25
      %v5520 = vpop.permute.xlu0 %5519
      %vm5522 = vcmp.ge.s32.totalorder %v5069, 25
      %vm5523 = vcmp.lt.s32.totalorder %v5069, 60
      %vm5524 = vmand %vm5522, %vm5523
      %5525 = vst.msk [vmem:[#allocation5 + $0x5] sm:$0x1] %vm5524, %v5520
      %v5526 = vld [vmem:[#allocation4 + $0x14] sm:$0x1]
      %v5529 = vunpack.c.l.s4 1966171168
      %v5530 = vunpack.c.0.s8 %v5529
      %v5531 = vlaneseq
      %v5532 = vshrl.u32 %v5531, 7
      %v5533 = vsub.s32 %v5530, %v5532
      %v5534 = vrot.slane %v5526, %v5533
      %v5536 = vunpack.c.l.s4 1966171168
      %v5537 = vunpack.c.0.s8 %v5536
      %v5538 = vlaneseq
      %v5539 = vshrl.u32 %v5538, 7
      %v5540 = vsub.s32 %v5537, %v5539
      %v5541 = vrot.slane %v5534, %v5540
      %5542 = vrot.lane.b32.xlu0 %v5541, 60
      %v5543 = vpop.permute.xlu0 %5542
      %vm5545 = vcmp.ge.s32.totalorder %v5069, 60
      %vm5546 = vcmp.lt.s32.totalorder %v5069, 95
      %vm5547 = vmand %vm5545, %vm5546
      %5548 = vst.msk [vmem:[#allocation5 + $0x5] sm:$0x1] %vm5547, %v5543
      %v5549 = vld [vmem:[#allocation4 + $0x15] sm:$0x1]
      %v5552 = vunpack.c.l.s4 1966171168
      %v5553 = vunpack.c.0.s8 %v5552
      %v5554 = vlaneseq
      %v5555 = vshrl.u32 %v5554, 7
      %v5556 = vsub.s32 %v5553, %v5555
      %v5557 = vrot.slane %v5549, %v5556
      %v5559 = vunpack.c.l.s4 1966171168
      %v5560 = vunpack.c.0.s8 %v5559
      %v5561 = vlaneseq
      %v5562 = vshrl.u32 %v5561, 7
      %v5563 = vsub.s32 %v5560, %v5562
      %v5564 = vrot.slane %v5557, %v5563
      %5565 = vrot.lane.b32.xlu0 %v5564, 95
      %v5566 = vpop.permute.xlu0 %5565
      %v5567 = vrot.slane %v5566, 7
      %vm5568 = vcmask 777216
      %v5569 = vsel %vm5568, %v5567, %v5566
      %vm5571 = vcmp.ge.s32.totalorder %v5069, 95
      %vm5572 = vcmp.lt.s32.totalorder %v5069, 130
      %vm5573 = vmand %vm5571, %vm5572
      %5574 = vst.msk [vmem:[#allocation5 + $0x5] sm:$0x3] %vm5573, %v5569
      %v5575 = vld [vmem:[#allocation4 + $0x16] sm:$0x1]
      %v5578 = vunpack.c.l.s4 1966171168
      %v5579 = vunpack.c.0.s8 %v5578
      %v5580 = vlaneseq
      %v5581 = vshrl.u32 %v5580, 7
      %v5582 = vsub.s32 %v5579, %v5581
      %v5583 = vrot.slane %v5575, %v5582
      %v5585 = vunpack.c.l.s4 1966171168
      %v5586 = vunpack.c.0.s8 %v5585
      %v5587 = vlaneseq
      %v5588 = vshrl.u32 %v5587, 7
      %v5589 = vsub.s32 %v5586, %v5588
      %v5590 = vrot.slane %v5583, %v5589
      %5591 = vrot.lane.b32.xlu0 %v5590, 2
      %v5592 = vpop.permute.xlu0 %5591
      %vm5594 = vcmp.ge.s32.totalorder %v5069, 2
      %vm5595 = vcmp.lt.s32.totalorder %v5069, 37
      %vm5596 = vmand %vm5594, %vm5595
      %5597 = vst.msk [vmem:[#allocation5 + $0x6] sm:$0x1] %vm5596, %v5592
      %v5598 = vld [vmem:[#allocation4 + $0x17] sm:$0x1]
      %v5601 = vunpack.c.l.s4 1966171168
      %v5602 = vunpack.c.0.s8 %v5601
      %v5603 = vlaneseq
      %v5604 = vshrl.u32 %v5603, 7
      %v5605 = vsub.s32 %v5602, %v5604
      %v5606 = vrot.slane %v5598, %v5605
      %v5608 = vunpack.c.l.s4 1966171168
      %v5609 = vunpack.c.0.s8 %v5608
      %v5610 = vlaneseq
      %v5611 = vshrl.u32 %v5610, 7
      %v5612 = vsub.s32 %v5609, %v5611
      %v5613 = vrot.slane %v5606, %v5612
      %5614 = vrot.lane.b32.xlu0 %v5613, 37
      %v5615 = vpop.permute.xlu0 %5614
      %vm5617 = vcmp.ge.s32.totalorder %v5069, 37
      %vm5618 = vcmp.lt.s32.totalorder %v5069, 72
      %vm5619 = vmand %vm5617, %vm5618
      %5620 = vst.msk [vmem:[#allocation5 + $0x6] sm:$0x1] %vm5619, %v5615
      %v5621 = vld [vmem:[#allocation4 + $0x18] sm:$0x1]
      %v5624 = vunpack.c.l.s4 1966171168
      %v5625 = vunpack.c.0.s8 %v5624
      %v5626 = vlaneseq
      %v5627 = vshrl.u32 %v5626, 7
      %v5628 = vsub.s32 %v5625, %v5627
      %v5629 = vrot.slane %v5621, %v5628
      %v5631 = vunpack.c.l.s4 1966171168
      %v5632 = vunpack.c.0.s8 %v5631
      %v5633 = vlaneseq
      %v5634 = vshrl.u32 %v5633, 7
      %v5635 = vsub.s32 %v5632, %v5634
      %v5636 = vrot.slane %v5629, %v5635
      %5637 = vrot.lane.b32.xlu0 %v5636, 72
      %v5638 = vpop.permute.xlu0 %5637
      %vm5640 = vcmp.ge.s32.totalorder %v5069, 72
      %vm5641 = vcmp.lt.s32.totalorder %v5069, 107
      %vm5642 = vmand %vm5640, %vm5641
      %5643 = vst.msk [vmem:[#allocation5 + $0x6] sm:$0x1] %vm5642, %v5638
      %v5644 = vld [vmem:[#allocation4 + $0x19] sm:$0x1]
      %v5647 = vunpack.c.l.s4 1966171168
      %v5648 = vunpack.c.0.s8 %v5647
      %v5649 = vlaneseq
      %v5650 = vshrl.u32 %v5649, 7
      %v5651 = vsub.s32 %v5648, %v5650
      %v5652 = vrot.slane %v5644, %v5651
      %v5654 = vunpack.c.l.s4 1966171168
      %v5655 = vunpack.c.0.s8 %v5654
      %v5656 = vlaneseq
      %v5657 = vshrl.u32 %v5656, 7
      %v5658 = vsub.s32 %v5655, %v5657
      %v5659 = vrot.slane %v5652, %v5658
      %5660 = vrot.lane.b32.xlu0 %v5659, 107
      %v5661 = vpop.permute.xlu0 %5660
      %v5662 = vrot.slane %v5661, 7
      %vm5663 = vcmask 875520
      %v5664 = vsel %vm5663, %v5662, %v5661
      %vm5666 = vcmp.ge.s32.totalorder %v5069, 107
      %vm5667 = vcmp.lt.s32.totalorder %v5069, 142
      %vm5668 = vmand %vm5666, %vm5667
      %5669 = vst.msk [vmem:[#allocation5 + $0x6] sm:$0x3] %vm5668, %v5664
      %v5670 = vld [vmem:[#allocation4 + $0x1a] sm:$0x1]
      %v5673 = vunpack.c.l.s4 1966171168
      %v5674 = vunpack.c.0.s8 %v5673
      %v5675 = vlaneseq
      %v5676 = vshrl.u32 %v5675, 7
      %v5677 = vsub.s32 %v5674, %v5676
      %v5678 = vrot.slane %v5670, %v5677
      %v5680 = vunpack.c.l.s4 1966171168
      %v5681 = vunpack.c.0.s8 %v5680
      %v5682 = vlaneseq
      %v5683 = vshrl.u32 %v5682, 7
      %v5684 = vsub.s32 %v5681, %v5683
      %v5685 = vrot.slane %v5678, %v5684
      %5686 = vrot.lane.b32.xlu0 %v5685, 14
      %v5687 = vpop.permute.xlu0 %5686
      %vm5689 = vcmp.ge.s32.totalorder %v5069, 14
      %vm5690 = vcmp.lt.s32.totalorder %v5069, 49
      %vm5691 = vmand %vm5689, %vm5690
      %5692 = vst.msk [vmem:[#allocation5 + $0x7] sm:$0x1] %vm5691, %v5687
      %v5693 = vld [vmem:[#allocation4 + $0x1b] sm:$0x1]
      %v5696 = vunpack.c.l.s4 1966171168
      %v5697 = vunpack.c.0.s8 %v5696
      %v5698 = vlaneseq
      %v5699 = vshrl.u32 %v5698, 7
      %v5700 = vsub.s32 %v5697, %v5699
      %v5701 = vrot.slane %v5693, %v5700
      %v5703 = vunpack.c.l.s4 1966171168
      %v5704 = vunpack.c.0.s8 %v5703
      %v5705 = vlaneseq
      %v5706 = vshrl.u32 %v5705, 7
      %v5707 = vsub.s32 %v5704, %v5706
      %v5708 = vrot.slane %v5701, %v5707
      %5709 = vrot.lane.b32.xlu0 %v5708, 49
      %v5710 = vpop.permute.xlu0 %5709
      %vm5712 = vcmp.ge.s32.totalorder %v5069, 49
      %vm5713 = vcmp.lt.s32.totalorder %v5069, 84
      %vm5714 = vmand %vm5712, %vm5713
      %5715 = vst.msk [vmem:[#allocation5 + $0x7] sm:$0x1] %vm5714, %v5710
      %v5716 = vld [vmem:[#allocation4 + $0x1c] sm:$0x1]
      %v5719 = vunpack.c.l.s4 1966171168
      %v5720 = vunpack.c.0.s8 %v5719
      %v5721 = vlaneseq
      %v5722 = vshrl.u32 %v5721, 7
      %v5723 = vsub.s32 %v5720, %v5722
      %v5724 = vrot.slane %v5716, %v5723
      %v5726 = vunpack.c.l.s4 1966171168
      %v5727 = vunpack.c.0.s8 %v5726
      %v5728 = vlaneseq
      %v5729 = vshrl.u32 %v5728, 7
      %v5730 = vsub.s32 %v5727, %v5729
      %v5731 = vrot.slane %v5724, %v5730
      %5732 = vrot.lane.b32.xlu0 %v5731, 84
      %v5733 = vpop.permute.xlu0 %5732
      %vm5735 = vcmp.ge.s32.totalorder %v5069, 84
      %vm5736 = vcmp.lt.s32.totalorder %v5069, 119
      %vm5737 = vmand %vm5735, %vm5736
      %5738 = vst.msk [vmem:[#allocation5 + $0x7] sm:$0x1] %vm5737, %v5733
      %v5739 = vld [vmem:[#allocation4 + $0x1d] sm:$0x1]
      %v5742 = vunpack.c.l.s4 1966171168
      %v5743 = vunpack.c.0.s8 %v5742
      %v5744 = vlaneseq
      %v5745 = vshrl.u32 %v5744, 7
      %v5746 = vsub.s32 %v5743, %v5745
      %v5747 = vrot.slane %v5739, %v5746
      %v5749 = vunpack.c.l.s4 1966171168
      %v5750 = vunpack.c.0.s8 %v5749
      %v5751 = vlaneseq
      %v5752 = vshrl.u32 %v5751, 7
      %v5753 = vsub.s32 %v5750, %v5752
      %v5754 = vrot.slane %v5747, %v5753
      %5755 = vrot.lane.b32.xlu0 %v5754, 119
      %v5756 = vpop.permute.xlu0 %5755
      %v5757 = vrot.slane %v5756, 7
      %vm5758 = vcmask 973824
      %v5759 = vsel %vm5758, %v5757, %v5756
      %vm5761 = vcmp.ge.s32.totalorder %v5069, 119
      %vm5762 = vcmp.lt.s32.totalorder %v5069, 154
      %vm5763 = vmand %vm5761, %vm5762
      %5764 = vst.msk [vmem:[#allocation5 + $0x7] sm:$0x3] %vm5763, %v5759
      %v5765 = vld [vmem:[#allocation4 + $0x1e] sm:$0x1]
      %v5768 = vunpack.c.l.s4 1966171168
      %v5769 = vunpack.c.0.s8 %v5768
      %v5770 = vlaneseq
      %v5771 = vshrl.u32 %v5770, 7
      %v5772 = vsub.s32 %v5769, %v5771
      %v5773 = vrot.slane %v5765, %v5772
      %v5775 = vunpack.c.l.s4 1966171168
      %v5776 = vunpack.c.0.s8 %v5775
      %v5777 = vlaneseq
      %v5778 = vshrl.u32 %v5777, 7
      %v5779 = vsub.s32 %v5776, %v5778
      %v5780 = vrot.slane %v5773, %v5779
      %5781 = vrot.lane.b32.xlu0 %v5780, 26
      %v5782 = vpop.permute.xlu0 %5781
      %vm5784 = vcmp.ge.s32.totalorder %v5069, 26
      %vm5785 = vcmp.lt.s32.totalorder %v5069, 61
      %vm5786 = vmand %vm5784, %vm5785
      %5787 = vst.msk [vmem:[#allocation5 + $0x8] sm:$0x1] %vm5786, %v5782
      %v5788 = vld [vmem:[#allocation4 + $0x1f] sm:$0x1]
      %v5791 = vunpack.c.l.s4 1966171168
      %v5792 = vunpack.c.0.s8 %v5791
      %v5793 = vlaneseq
      %v5794 = vshrl.u32 %v5793, 7
      %v5795 = vsub.s32 %v5792, %v5794
      %v5796 = vrot.slane %v5788, %v5795
      %v5798 = vunpack.c.l.s4 1966171168
      %v5799 = vunpack.c.0.s8 %v5798
      %v5800 = vlaneseq
      %v5801 = vshrl.u32 %v5800, 7
      %v5802 = vsub.s32 %v5799, %v5801
      %v5803 = vrot.slane %v5796, %v5802
      %5804 = vrot.lane.b32.xlu0 %v5803, 61
      %v5805 = vpop.permute.xlu0 %5804
      %vm5807 = vcmp.ge.s32.totalorder %v5069, 61
      %vm5808 = vcmp.lt.s32.totalorder %v5069, 96
      %vm5809 = vmand %vm5807, %vm5808
      %5810 = vst.msk [vmem:[#allocation5 + $0x8] sm:$0x1] %vm5809, %v5805
      %v5811 = vld [vmem:[#allocation4 + $0x20] sm:$0x1]
      %v5814 = vunpack.c.l.s4 1966171168
      %v5815 = vunpack.c.0.s8 %v5814
      %v5816 = vlaneseq
      %v5817 = vshrl.u32 %v5816, 7
      %v5818 = vsub.s32 %v5815, %v5817
      %v5819 = vrot.slane %v5811, %v5818
      %v5821 = vunpack.c.l.s4 1966171168
      %v5822 = vunpack.c.0.s8 %v5821
      %v5823 = vlaneseq
      %v5824 = vshrl.u32 %v5823, 7
      %v5825 = vsub.s32 %v5822, %v5824
      %v5826 = vrot.slane %v5819, %v5825
      %5827 = vrot.lane.b32.xlu0 %v5826, 96
      %v5828 = vpop.permute.xlu0 %5827
      %v5829 = vrot.slane %v5828, 7
      %vm5830 = vcmask 785408
      %v5831 = vsel %vm5830, %v5829, %v5828
      %vm5833 = vcmp.ge.s32.totalorder %v5069, 96
      %vm5834 = vcmp.lt.s32.totalorder %v5069, 131
      %vm5835 = vmand %vm5833, %vm5834
      %5836 = vst.msk [vmem:[#allocation5 + $0x8] sm:$0x3] %vm5835, %v5831
      %v5837 = vld [vmem:[#allocation4 + $0x21] sm:$0x1]
      %v5840 = vunpack.c.l.s4 1966171168
      %v5841 = vunpack.c.0.s8 %v5840
      %v5842 = vlaneseq
      %v5843 = vshrl.u32 %v5842, 7
      %v5844 = vsub.s32 %v5841, %v5843
      %v5845 = vrot.slane %v5837, %v5844
      %v5847 = vunpack.c.l.s4 1966171168
      %v5848 = vunpack.c.0.s8 %v5847
      %v5849 = vlaneseq
      %v5850 = vshrl.u32 %v5849, 7
      %v5851 = vsub.s32 %v5848, %v5850
      %v5852 = vrot.slane %v5845, %v5851
      %5853 = vrot.lane.b32.xlu0 %v5852, 3
      %v5854 = vpop.permute.xlu0 %5853
      %vm5856 = vcmp.ge.s32.totalorder %v5069, 3
      %vm5857 = vcmp.lt.s32.totalorder %v5069, 38
      %vm5858 = vmand %vm5856, %vm5857
      %5859 = vst.msk [vmem:[#allocation5 + $0x9] sm:$0x1] %vm5858, %v5854
      %v5860 = vld [vmem:[#allocation4 + $0x22] sm:$0x1]
      %v5863 = vunpack.c.l.s4 1966171168
      %v5864 = vunpack.c.0.s8 %v5863
      %v5865 = vlaneseq
      %v5866 = vshrl.u32 %v5865, 7
      %v5867 = vsub.s32 %v5864, %v5866
      %v5868 = vrot.slane %v5860, %v5867
      %v5870 = vunpack.c.l.s4 1966171168
      %v5871 = vunpack.c.0.s8 %v5870
      %v5872 = vlaneseq
      %v5873 = vshrl.u32 %v5872, 7
      %v5874 = vsub.s32 %v5871, %v5873
      %v5875 = vrot.slane %v5868, %v5874
      %5876 = vrot.lane.b32.xlu0 %v5875, 38
      %v5877 = vpop.permute.xlu0 %5876
      %vm5879 = vcmp.ge.s32.totalorder %v5069, 38
      %vm5880 = vcmp.lt.s32.totalorder %v5069, 73
      %vm5881 = vmand %vm5879, %vm5880
      %5882 = vst.msk [vmem:[#allocation5 + $0x9] sm:$0x1] %vm5881, %v5877
      %v5883 = vld [vmem:[#allocation4 + $0x23] sm:$0x1]
      %v5886 = vunpack.c.l.s4 1966171168
      %v5887 = vunpack.c.0.s8 %v5886
      %v5888 = vlaneseq
      %v5889 = vshrl.u32 %v5888, 7
      %v5890 = vsub.s32 %v5887, %v5889
      %v5891 = vrot.slane %v5883, %v5890
      %v5893 = vunpack.c.l.s4 1966171168
      %v5894 = vunpack.c.0.s8 %v5893
      %v5895 = vlaneseq
      %v5896 = vshrl.u32 %v5895, 7
      %v5897 = vsub.s32 %v5894, %v5896
      %v5898 = vrot.slane %v5891, %v5897
      %5899 = vrot.lane.b32.xlu0 %v5898, 73
      %v5900 = vpop.permute.xlu0 %5899
      %vm5902 = vcmp.ge.s32.totalorder %v5069, 73
      %vm5903 = vcmp.lt.s32.totalorder %v5069, 108
      %vm5904 = vmand %vm5902, %vm5903
      %5905 = vst.msk [vmem:[#allocation5 + $0x9] sm:$0x1] %vm5904, %v5900
      %v5906 = vld [vmem:[#allocation4 + $0x24] sm:$0x1]
      %v5909 = vunpack.c.l.s4 1966171168
      %v5910 = vunpack.c.0.s8 %v5909
      %v5911 = vlaneseq
      %v5912 = vshrl.u32 %v5911, 7
      %v5913 = vsub.s32 %v5910, %v5912
      %v5914 = vrot.slane %v5906, %v5913
      %v5916 = vunpack.c.l.s4 1966171168
      %v5917 = vunpack.c.0.s8 %v5916
      %v5918 = vlaneseq
      %v5919 = vshrl.u32 %v5918, 7
      %v5920 = vsub.s32 %v5917, %v5919
      %v5921 = vrot.slane %v5914, %v5920
      %5922 = vrot.lane.b32.xlu0 %v5921, 108
      %v5923 = vpop.permute.xlu0 %5922
      %v5924 = vrot.slane %v5923, 7
      %vm5925 = vcmask 883712
      %v5926 = vsel %vm5925, %v5924, %v5923
      %vm5928 = vcmp.ge.s32.totalorder %v5069, 108
      %vm5929 = vcmp.lt.s32.totalorder %v5069, 143
      %vm5930 = vmand %vm5928, %vm5929
      %5931 = vst.msk [vmem:[#allocation5 + $0x9] sm:$0x3] %vm5930, %v5926
      %v5932 = vld [vmem:[#allocation4 + $0x25] sm:$0x1]
      %v5935 = vunpack.c.l.s4 1966171168
      %v5936 = vunpack.c.0.s8 %v5935
      %v5937 = vlaneseq
      %v5938 = vshrl.u32 %v5937, 7
      %v5939 = vsub.s32 %v5936, %v5938
      %v5940 = vrot.slane %v5932, %v5939
      %v5942 = vunpack.c.l.s4 1966171168
      %v5943 = vunpack.c.0.s8 %v5942
      %v5944 = vlaneseq
      %v5945 = vshrl.u32 %v5944, 7
      %v5946 = vsub.s32 %v5943, %v5945
      %v5947 = vrot.slane %v5940, %v5946
      %5948 = vrot.lane.b32.xlu0 %v5947, 15
      %v5949 = vpop.permute.xlu0 %5948
      %vm5951 = vcmp.ge.s32.totalorder %v5069, 15
      %vm5952 = vcmp.lt.s32.totalorder %v5069, 50
      %vm5953 = vmand %vm5951, %vm5952
      %5954 = vst.msk [vmem:[#allocation5 + $0xa] sm:$0x1] %vm5953, %v5949
      %v5955 = vld [vmem:[#allocation4 + $0x26] sm:$0x1]
      %v5958 = vunpack.c.l.s4 1966171168
      %v5959 = vunpack.c.0.s8 %v5958
      %v5960 = vlaneseq
      %v5961 = vshrl.u32 %v5960, 7
      %v5962 = vsub.s32 %v5959, %v5961
      %v5963 = vrot.slane %v5955, %v5962
      %v5965 = vunpack.c.l.s4 1966171168
      %v5966 = vunpack.c.0.s8 %v5965
      %v5967 = vlaneseq
      %v5968 = vshrl.u32 %v5967, 7
      %v5969 = vsub.s32 %v5966, %v5968
      %v5970 = vrot.slane %v5963, %v5969
      %5971 = vrot.lane.b32.xlu0 %v5970, 50
      %v5972 = vpop.permute.xlu0 %5971
      %vm5974 = vcmp.ge.s32.totalorder %v5069, 50
      %vm5975 = vcmp.lt.s32.totalorder %v5069, 85
      %vm5976 = vmand %vm5974, %vm5975
      %5977 = vst.msk [vmem:[#allocation5 + $0xa] sm:$0x1] %vm5976, %v5972
      %v5978 = vld [vmem:[#allocation4 + $0x27] sm:$0x1]
      %v5981 = vunpack.c.l.s4 1966171168
      %v5982 = vunpack.c.0.s8 %v5981
      %v5983 = vlaneseq
      %v5984 = vshrl.u32 %v5983, 7
      %v5985 = vsub.s32 %v5982, %v5984
      %v5986 = vrot.slane %v5978, %v5985
      %v5988 = vunpack.c.l.s4 1966171168
      %v5989 = vunpack.c.0.s8 %v5988
      %v5990 = vlaneseq
      %v5991 = vshrl.u32 %v5990, 7
      %v5992 = vsub.s32 %v5989, %v5991
      %v5993 = vrot.slane %v5986, %v5992
      %5994 = vrot.lane.b32.xlu0 %v5993, 85
      %v5995 = vpop.permute.xlu0 %5994
      %vm5997 = vcmp.ge.s32.totalorder %v5069, 85
      %vm5998 = vcmp.lt.s32.totalorder %v5069, 120
      %vm5999 = vmand %vm5997, %vm5998
      %6000 = vst.msk [vmem:[#allocation5 + $0xa] sm:$0x1] %vm5999, %v5995
      %v6001 = vld [vmem:[#allocation4 + $0x28] sm:$0x1]
      %v6004 = vunpack.c.l.s4 1966171168
      %v6005 = vunpack.c.0.s8 %v6004
      %v6006 = vlaneseq
      %v6007 = vshrl.u32 %v6006, 7
      %v6008 = vsub.s32 %v6005, %v6007
      %v6009 = vrot.slane %v6001, %v6008
      %v6011 = vunpack.c.l.s4 1966171168
      %v6012 = vunpack.c.0.s8 %v6011
      %v6013 = vlaneseq
      %v6014 = vshrl.u32 %v6013, 7
      %v6015 = vsub.s32 %v6012, %v6014
      %v6016 = vrot.slane %v6009, %v6015
      %6017 = vrot.lane.b32.xlu0 %v6016, 120
      %v6018 = vpop.permute.xlu0 %6017
      %v6019 = vrot.slane %v6018, 7
      %vm6020 = vcmask 982016
      %v6021 = vsel %vm6020, %v6019, %v6018
      %vm6023 = vcmp.ge.s32.totalorder %v5069, 120
      %vm6024 = vcmp.lt.s32.totalorder %v5069, 155
      %vm6025 = vmand %vm6023, %vm6024
      %6026 = vst.msk [vmem:[#allocation5 + $0xa] sm:$0x3] %vm6025, %v6021
      %v6027 = vld [vmem:[#allocation4 + $0x29] sm:$0x1]
      %v6030 = vunpack.c.l.s4 1966171168
      %v6031 = vunpack.c.0.s8 %v6030
      %v6032 = vlaneseq
      %v6033 = vshrl.u32 %v6032, 7
      %v6034 = vsub.s32 %v6031, %v6033
      %v6035 = vrot.slane %v6027, %v6034
      %v6037 = vunpack.c.l.s4 1966171168
      %v6038 = vunpack.c.0.s8 %v6037
      %v6039 = vlaneseq
      %v6040 = vshrl.u32 %v6039, 7
      %v6041 = vsub.s32 %v6038, %v6040
      %v6042 = vrot.slane %v6035, %v6041
      %6043 = vrot.lane.b32.xlu0 %v6042, 27
      %v6044 = vpop.permute.xlu0 %6043
      %vm6046 = vcmp.ge.s32.totalorder %v5069, 27
      %vm6047 = vcmp.lt.s32.totalorder %v5069, 62
      %vm6048 = vmand %vm6046, %vm6047
      %6049 = vst.msk [vmem:[#allocation5 + $0xb] sm:$0x1] %vm6048, %v6044
      %v6050 = vld [vmem:[#allocation4 + $0x2a] sm:$0x1]
      %v6053 = vunpack.c.l.s4 1966171168
      %v6054 = vunpack.c.0.s8 %v6053
      %v6055 = vlaneseq
      %v6056 = vshrl.u32 %v6055, 7
      %v6057 = vsub.s32 %v6054, %v6056
      %v6058 = vrot.slane %v6050, %v6057
      %v6060 = vunpack.c.l.s4 1966171168
      %v6061 = vunpack.c.0.s8 %v6060
      %v6062 = vlaneseq
      %v6063 = vshrl.u32 %v6062, 7
      %v6064 = vsub.s32 %v6061, %v6063
      %v6065 = vrot.slane %v6058, %v6064
      %6066 = vrot.lane.b32.xlu0 %v6065, 62
      %v6067 = vpop.permute.xlu0 %6066
      %vm6069 = vcmp.ge.s32.totalorder %v5069, 62
      %vm6070 = vcmp.lt.s32.totalorder %v5069, 97
      %vm6071 = vmand %vm6069, %vm6070
      %6072 = vst.msk [vmem:[#allocation5 + $0xb] sm:$0x1] %vm6071, %v6067
      %v6073 = vld [vmem:[#allocation4 + $0x2b] sm:$0x1]
      %v6076 = vunpack.c.l.s4 1966171168
      %v6077 = vunpack.c.0.s8 %v6076
      %v6078 = vlaneseq
      %v6079 = vshrl.u32 %v6078, 7
      %v6080 = vsub.s32 %v6077, %v6079
      %v6081 = vrot.slane %v6073, %v6080
      %v6083 = vunpack.c.l.s4 1966171168
      %v6084 = vunpack.c.0.s8 %v6083
      %v6085 = vlaneseq
      %v6086 = vshrl.u32 %v6085, 7
      %v6087 = vsub.s32 %v6084, %v6086
      %v6088 = vrot.slane %v6081, %v6087
      %6089 = vrot.lane.b32.xlu0 %v6088, 97
      %v6090 = vpop.permute.xlu0 %6089
      %v6091 = vrot.slane %v6090, 7
      %vm6092 = vcmask 793600
      %v6093 = vsel %vm6092, %v6091, %v6090
      %vm6095 = vcmp.ge.s32.totalorder %v5069, 97
      %vm6096 = vcmp.lt.s32.totalorder %v5069, 132
      %vm6097 = vmand %vm6095, %vm6096
      %6098 = vst.msk [vmem:[#allocation5 + $0xb] sm:$0x3] %vm6097, %v6093
      %v6099 = vld [vmem:[#allocation4 + $0x2c] sm:$0x1]
      %v6102 = vunpack.c.l.s4 1966171168
      %v6103 = vunpack.c.0.s8 %v6102
      %v6104 = vlaneseq
      %v6105 = vshrl.u32 %v6104, 7
      %v6106 = vsub.s32 %v6103, %v6105
      %v6107 = vrot.slane %v6099, %v6106
      %v6109 = vunpack.c.l.s4 1966171168
      %v6110 = vunpack.c.0.s8 %v6109
      %v6111 = vlaneseq
      %v6112 = vshrl.u32 %v6111, 7
      %v6113 = vsub.s32 %v6110, %v6112
      %v6114 = vrot.slane %v6107, %v6113
      %6115 = vrot.lane.b32.xlu0 %v6114, 4
      %v6116 = vpop.permute.xlu0 %6115
      %vm6118 = vcmp.ge.s32.totalorder %v5069, 4
      %vm6119 = vcmp.lt.s32.totalorder %v5069, 39
      %vm6120 = vmand %vm6118, %vm6119
      %6121 = vst.msk [vmem:[#allocation5 + $0xc] sm:$0x1] %vm6120, %v6116
      %v6122 = vld [vmem:[#allocation4 + $0x2d] sm:$0x1]
      %v6125 = vunpack.c.l.s4 1966171168
      %v6126 = vunpack.c.0.s8 %v6125
      %v6127 = vlaneseq
      %v6128 = vshrl.u32 %v6127, 7
      %v6129 = vsub.s32 %v6126, %v6128
      %v6130 = vrot.slane %v6122, %v6129
      %v6132 = vunpack.c.l.s4 1966171168
      %v6133 = vunpack.c.0.s8 %v6132
      %v6134 = vlaneseq
      %v6135 = vshrl.u32 %v6134, 7
      %v6136 = vsub.s32 %v6133, %v6135
      %v6137 = vrot.slane %v6130, %v6136
      %6138 = vrot.lane.b32.xlu0 %v6137, 39
      %v6139 = vpop.permute.xlu0 %6138
      %vm6141 = vcmp.ge.s32.totalorder %v5069, 39
      %vm6142 = vcmp.lt.s32.totalorder %v5069, 74
      %vm6143 = vmand %vm6141, %vm6142
      %6144 = vst.msk [vmem:[#allocation5 + $0xc] sm:$0x1] %vm6143, %v6139
      %v6145 = vld [vmem:[#allocation4 + $0x2e] sm:$0x1]
      %v6148 = vunpack.c.l.s4 1966171168
      %v6149 = vunpack.c.0.s8 %v6148
      %v6150 = vlaneseq
      %v6151 = vshrl.u32 %v6150, 7
      %v6152 = vsub.s32 %v6149, %v6151
      %v6153 = vrot.slane %v6145, %v6152
      %v6155 = vunpack.c.l.s4 1966171168
      %v6156 = vunpack.c.0.s8 %v6155
      %v6157 = vlaneseq
      %v6158 = vshrl.u32 %v6157, 7
      %v6159 = vsub.s32 %v6156, %v6158
      %v6160 = vrot.slane %v6153, %v6159
      %6161 = vrot.lane.b32.xlu0 %v6160, 74
      %v6162 = vpop.permute.xlu0 %6161
      %vm6164 = vcmp.ge.s32.totalorder %v5069, 74
      %vm6165 = vcmp.lt.s32.totalorder %v5069, 109
      %vm6166 = vmand %vm6164, %vm6165
      %6167 = vst.msk [vmem:[#allocation5 + $0xc] sm:$0x1] %vm6166, %v6162
      %v6168 = vld [vmem:[#allocation4 + $0x2f] sm:$0x1]
      %v6171 = vunpack.c.l.s4 1966171168
      %v6172 = vunpack.c.0.s8 %v6171
      %v6173 = vlaneseq
      %v6174 = vshrl.u32 %v6173, 7
      %v6175 = vsub.s32 %v6172, %v6174
      %v6176 = vrot.slane %v6168, %v6175
      %v6178 = vunpack.c.l.s4 1966171168
      %v6179 = vunpack.c.0.s8 %v6178
      %v6180 = vlaneseq
      %v6181 = vshrl.u32 %v6180, 7
      %v6182 = vsub.s32 %v6179, %v6181
      %v6183 = vrot.slane %v6176, %v6182
      %6184 = vrot.lane.b32.xlu0 %v6183, 109
      %v6185 = vpop.permute.xlu0 %6184
      %v6186 = vrot.slane %v6185, 7
      %vm6187 = vcmask 891904
      %v6188 = vsel %vm6187, %v6186, %v6185
      %vm6190 = vcmp.ge.s32.totalorder %v5069, 109
      %vm6191 = vcmp.lt.s32.totalorder %v5069, 144
      %vm6192 = vmand %vm6190, %vm6191
      %6193 = vst.msk [vmem:[#allocation5 + $0xc] sm:$0x3] %vm6192, %v6188
      %v6194 = vld [vmem:[#allocation4 + $0x30] sm:$0x1]
      %v6197 = vunpack.c.l.s4 1966171168
      %v6198 = vunpack.c.0.s8 %v6197
      %v6199 = vlaneseq
      %v6200 = vshrl.u32 %v6199, 7
      %v6201 = vsub.s32 %v6198, %v6200
      %v6202 = vrot.slane %v6194, %v6201
      %v6204 = vunpack.c.l.s4 1966171168
      %v6205 = vunpack.c.0.s8 %v6204
      %v6206 = vlaneseq
      %v6207 = vshrl.u32 %v6206, 7
      %v6208 = vsub.s32 %v6205, %v6207
      %v6209 = vrot.slane %v6202, %v6208
      %6210 = vrot.lane.b32.xlu0 %v6209, 16
      %v6211 = vpop.permute.xlu0 %6210
      %vm6213 = vcmp.ge.s32.totalorder %v5069, 16
      %vm6214 = vcmp.lt.s32.totalorder %v5069, 51
      %vm6215 = vmand %vm6213, %vm6214
      %6216 = vst.msk [vmem:[#allocation5 + $0xd] sm:$0x1] %vm6215, %v6211
      %v6217 = vld [vmem:[#allocation4 + $0x31] sm:$0x1]
      %v6220 = vunpack.c.l.s4 1966171168
      %v6221 = vunpack.c.0.s8 %v6220
      %v6222 = vlaneseq
      %v6223 = vshrl.u32 %v6222, 7
      %v6224 = vsub.s32 %v6221, %v6223
      %v6225 = vrot.slane %v6217, %v6224
      %v6227 = vunpack.c.l.s4 1966171168
      %v6228 = vunpack.c.0.s8 %v6227
      %v6229 = vlaneseq
      %v6230 = vshrl.u32 %v6229, 7
      %v6231 = vsub.s32 %v6228, %v6230
      %v6232 = vrot.slane %v6225, %v6231
      %6233 = vrot.lane.b32.xlu0 %v6232, 51
      %v6234 = vpop.permute.xlu0 %6233
      %vm6236 = vcmp.ge.s32.totalorder %v5069, 51
      %vm6237 = vcmp.lt.s32.totalorder %v5069, 86
      %vm6238 = vmand %vm6236, %vm6237
      %6239 = vst.msk [vmem:[#allocation5 + $0xd] sm:$0x1] %vm6238, %v6234
      %v6240 = vld [vmem:[#allocation4 + $0x32] sm:$0x1]
      %v6243 = vunpack.c.l.s4 1966171168
      %v6244 = vunpack.c.0.s8 %v6243
      %v6245 = vlaneseq
      %v6246 = vshrl.u32 %v6245, 7
      %v6247 = vsub.s32 %v6244, %v6246
      %v6248 = vrot.slane %v6240, %v6247
      %v6250 = vunpack.c.l.s4 1966171168
      %v6251 = vunpack.c.0.s8 %v6250
      %v6252 = vlaneseq
      %v6253 = vshrl.u32 %v6252, 7
      %v6254 = vsub.s32 %v6251, %v6253
      %v6255 = vrot.slane %v6248, %v6254
      %6256 = vrot.lane.b32.xlu0 %v6255, 86
      %v6257 = vpop.permute.xlu0 %6256
      %vm6259 = vcmp.ge.s32.totalorder %v5069, 86
      %vm6260 = vcmp.lt.s32.totalorder %v5069, 121
      %vm6261 = vmand %vm6259, %vm6260
      %6262 = vst.msk [vmem:[#allocation5 + $0xd] sm:$0x1] %vm6261, %v6257
      %v6263 = vld [vmem:[#allocation4 + $0x33] sm:$0x1]
      %v6266 = vunpack.c.l.s4 1966171168
      %v6267 = vunpack.c.0.s8 %v6266
      %v6268 = vlaneseq
      %v6269 = vshrl.u32 %v6268, 7
      %v6270 = vsub.s32 %v6267, %v6269
      %v6271 = vrot.slane %v6263, %v6270
      %v6273 = vunpack.c.l.s4 1966171168
      %v6274 = vunpack.c.0.s8 %v6273
      %v6275 = vlaneseq
      %v6276 = vshrl.u32 %v6275, 7
      %v6277 = vsub.s32 %v6274, %v6276
      %v6278 = vrot.slane %v6271, %v6277
      %6279 = vrot.lane.b32.xlu0 %v6278, 121
      %v6280 = vpop.permute.xlu0 %6279
      %v6281 = vrot.slane %v6280, 7
      %vm6282 = vcmask 990208
      %v6283 = vsel %vm6282, %v6281, %v6280
      %vm6285 = vcmp.ge.s32.totalorder %v5069, 121
      %vm6286 = vcmp.lt.s32.totalorder %v5069, 156
      %vm6287 = vmand %vm6285, %vm6286
      %6288 = vst.msk [vmem:[#allocation5 + $0xd] sm:$0x3] %vm6287, %v6283
      %v6289 = vld [vmem:[#allocation4 + $0x34] sm:$0x1]
      %v6292 = vunpack.c.l.s4 1966171168
      %v6293 = vunpack.c.0.s8 %v6292
      %v6294 = vlaneseq
      %v6295 = vshrl.u32 %v6294, 7
      %v6296 = vsub.s32 %v6293, %v6295
      %v6297 = vrot.slane %v6289, %v6296
      %v6299 = vunpack.c.l.s4 1966171168
      %v6300 = vunpack.c.0.s8 %v6299
      %v6301 = vlaneseq
      %v6302 = vshrl.u32 %v6301, 7
      %v6303 = vsub.s32 %v6300, %v6302
      %v6304 = vrot.slane %v6297, %v6303
      %6305 = vrot.lane.b32.xlu0 %v6304, 28
      %v6306 = vpop.permute.xlu0 %6305
      %vm6308 = vcmp.ge.s32.totalorder %v5069, 28
      %vm6309 = vcmp.lt.s32.totalorder %v5069, 63
      %vm6310 = vmand %vm6308, %vm6309
      %6311 = vst.msk [vmem:[#allocation5 + $0xe] sm:$0x1] %vm6310, %v6306
      %v6312 = vld [vmem:[#allocation4 + $0x35] sm:$0x1]
      %v6315 = vunpack.c.l.s4 1966171168
      %v6316 = vunpack.c.0.s8 %v6315
      %v6317 = vlaneseq
      %v6318 = vshrl.u32 %v6317, 7
      %v6319 = vsub.s32 %v6316, %v6318
      %v6320 = vrot.slane %v6312, %v6319
      %v6322 = vunpack.c.l.s4 1966171168
      %v6323 = vunpack.c.0.s8 %v6322
      %v6324 = vlaneseq
      %v6325 = vshrl.u32 %v6324, 7
      %v6326 = vsub.s32 %v6323, %v6325
      %v6327 = vrot.slane %v6320, %v6326
      %6328 = vrot.lane.b32.xlu0 %v6327, 63
      %v6329 = vpop.permute.xlu0 %6328
      %vm6331 = vcmp.ge.s32.totalorder %v5069, 63
      %vm6332 = vcmp.lt.s32.totalorder %v5069, 98
      %vm6333 = vmand %vm6331, %vm6332
      %6334 = vst.msk [vmem:[#allocation5 + $0xe] sm:$0x1] %vm6333, %v6329
      %v6335 = vld [vmem:[#allocation4 + $0x36] sm:$0x1]
      %v6338 = vunpack.c.l.s4 1966171168
      %v6339 = vunpack.c.0.s8 %v6338
      %v6340 = vlaneseq
      %v6341 = vshrl.u32 %v6340, 7
      %v6342 = vsub.s32 %v6339, %v6341
      %v6343 = vrot.slane %v6335, %v6342
      %v6345 = vunpack.c.l.s4 1966171168
      %v6346 = vunpack.c.0.s8 %v6345
      %v6347 = vlaneseq
      %v6348 = vshrl.u32 %v6347, 7
      %v6349 = vsub.s32 %v6346, %v6348
      %v6350 = vrot.slane %v6343, %v6349
      %6351 = vrot.lane.b32.xlu0 %v6350, 98
      %v6352 = vpop.permute.xlu0 %6351
      %v6353 = vrot.slane %v6352, 7
      %vm6354 = vcmask 801792
      %v6355 = vsel %vm6354, %v6353, %v6352
      %vm6357 = vcmp.ge.s32.totalorder %v5069, 98
      %vm6358 = vcmp.lt.s32.totalorder %v5069, 133
      %vm6359 = vmand %vm6357, %vm6358
      %6360 = vst.msk [vmem:[#allocation5 + $0xe] sm:$0x3] %vm6359, %v6355
      %v6361 = vld [vmem:[#allocation4 + $0x37] sm:$0x1]
      %v6364 = vunpack.c.l.s4 1966171168
      %v6365 = vunpack.c.0.s8 %v6364
      %v6366 = vlaneseq
      %v6367 = vshrl.u32 %v6366, 7
      %v6368 = vsub.s32 %v6365, %v6367
      %v6369 = vrot.slane %v6361, %v6368
      %v6371 = vunpack.c.l.s4 1966171168
      %v6372 = vunpack.c.0.s8 %v6371
      %v6373 = vlaneseq
      %v6374 = vshrl.u32 %v6373, 7
      %v6375 = vsub.s32 %v6372, %v6374
      %v6376 = vrot.slane %v6369, %v6375
      %6377 = vrot.lane.b32.xlu0 %v6376, 5
      %v6378 = vpop.permute.xlu0 %6377
      %vm6380 = vcmp.ge.s32.totalorder %v5069, 5
      %vm6381 = vcmp.lt.s32.totalorder %v5069, 40
      %vm6382 = vmand %vm6380, %vm6381
      %6383 = vst.msk [vmem:[#allocation5 + $0xf] sm:$0x1] %vm6382, %v6378
      %v6384 = vld [vmem:[#allocation4 + $0x38] sm:$0x1]
      %v6387 = vunpack.c.l.s4 1966171168
      %v6388 = vunpack.c.0.s8 %v6387
      %v6389 = vlaneseq
      %v6390 = vshrl.u32 %v6389, 7
      %v6391 = vsub.s32 %v6388, %v6390
      %v6392 = vrot.slane %v6384, %v6391
      %v6394 = vunpack.c.l.s4 1966171168
      %v6395 = vunpack.c.0.s8 %v6394
      %v6396 = vlaneseq
      %v6397 = vshrl.u32 %v6396, 7
      %v6398 = vsub.s32 %v6395, %v6397
      %v6399 = vrot.slane %v6392, %v6398
      %6400 = vrot.lane.b32.xlu0 %v6399, 40
      %v6401 = vpop.permute.xlu0 %6400
      %vm6403 = vcmp.ge.s32.totalorder %v5069, 40
      %vm6404 = vcmp.lt.s32.totalorder %v5069, 75
      %vm6405 = vmand %vm6403, %vm6404
      %6406 = vst.msk [vmem:[#allocation5 + $0xf] sm:$0x1] %vm6405, %v6401
      %v6407 = vld [vmem:[#allocation4 + $0x39] sm:$0x1]
      %v6410 = vunpack.c.l.s4 1966171168
      %v6411 = vunpack.c.0.s8 %v6410
      %v6412 = vlaneseq
      %v6413 = vshrl.u32 %v6412, 7
      %v6414 = vsub.s32 %v6411, %v6413
      %v6415 = vrot.slane %v6407, %v6414
      %v6417 = vunpack.c.l.s4 1966171168
      %v6418 = vunpack.c.0.s8 %v6417
      %v6419 = vlaneseq
      %v6420 = vshrl.u32 %v6419, 7
      %v6421 = vsub.s32 %v6418, %v6420
      %v6422 = vrot.slane %v6415, %v6421
      %6423 = vrot.lane.b32.xlu0 %v6422, 75
      %v6424 = vpop.permute.xlu0 %6423
      %vm6426 = vcmp.ge.s32.totalorder %v5069, 75
      %vm6427 = vcmp.lt.s32.totalorder %v5069, 110
      %vm6428 = vmand %vm6426, %vm6427
      %6429 = vst.msk [vmem:[#allocation5 + $0xf] sm:$0x1] %vm6428, %v6424
      %v6430 = vld [vmem:[#allocation4 + $0x3a] sm:$0x1]
      %v6433 = vunpack.c.l.s4 1966171168
      %v6434 = vunpack.c.0.s8 %v6433
      %v6435 = vlaneseq
      %v6436 = vshrl.u32 %v6435, 7
      %v6437 = vsub.s32 %v6434, %v6436
      %v6438 = vrot.slane %v6430, %v6437
      %v6440 = vunpack.c.l.s4 1966171168
      %v6441 = vunpack.c.0.s8 %v6440
      %v6442 = vlaneseq
      %v6443 = vshrl.u32 %v6442, 7
      %v6444 = vsub.s32 %v6441, %v6443
      %v6445 = vrot.slane %v6438, %v6444
      %6446 = vrot.lane.b32.xlu0 %v6445, 110
      %v6447 = vpop.permute.xlu0 %6446
      %v6448 = vrot.slane %v6447, 7
      %vm6449 = vcmask 900096
      %v6450 = vsel %vm6449, %v6448, %v6447
      %vm6452 = vcmp.ge.s32.totalorder %v5069, 110
      %vm6453 = vcmp.lt.s32.totalorder %v5069, 145
      %vm6454 = vmand %vm6452, %vm6453
      %6455 = vst.msk [vmem:[#allocation5 + $0xf] sm:$0x3] %vm6454, %v6450
      %v6456 = vld [vmem:[#allocation4 + $0x3b] sm:$0x1]
      %v6459 = vunpack.c.l.s4 1966171168
      %v6460 = vunpack.c.0.s8 %v6459
      %v6461 = vlaneseq
      %v6462 = vshrl.u32 %v6461, 7
      %v6463 = vsub.s32 %v6460, %v6462
      %v6464 = vrot.slane %v6456, %v6463
      %v6466 = vunpack.c.l.s4 1966171168
      %v6467 = vunpack.c.0.s8 %v6466
      %v6468 = vlaneseq
      %v6469 = vshrl.u32 %v6468, 7
      %v6470 = vsub.s32 %v6467, %v6469
      %v6471 = vrot.slane %v6464, %v6470
      %6472 = vrot.lane.b32.xlu0 %v6471, 17
      %v6473 = vpop.permute.xlu0 %6472
      %vm6475 = vcmp.ge.s32.totalorder %v5069, 17
      %vm6476 = vcmp.lt.s32.totalorder %v5069, 52
      %vm6477 = vmand %vm6475, %vm6476
      %6478 = vst.msk [vmem:[#allocation5 + $0x10] sm:$0x1] %vm6477, %v6473
      %v6479 = vld [vmem:[#allocation4 + $0x3c] sm:$0x1]
      %v6482 = vunpack.c.l.s4 1966171168
      %v6483 = vunpack.c.0.s8 %v6482
      %v6484 = vlaneseq
      %v6485 = vshrl.u32 %v6484, 7
      %v6486 = vsub.s32 %v6483, %v6485
      %v6487 = vrot.slane %v6479, %v6486
      %v6489 = vunpack.c.l.s4 1966171168
      %v6490 = vunpack.c.0.s8 %v6489
      %v6491 = vlaneseq
      %v6492 = vshrl.u32 %v6491, 7
      %v6493 = vsub.s32 %v6490, %v6492
      %v6494 = vrot.slane %v6487, %v6493
      %6495 = vrot.lane.b32.xlu0 %v6494, 52
      %v6496 = vpop.permute.xlu0 %6495
      %vm6498 = vcmp.ge.s32.totalorder %v5069, 52
      %vm6499 = vcmp.lt.s32.totalorder %v5069, 87
      %vm6500 = vmand %vm6498, %vm6499
      %6501 = vst.msk [vmem:[#allocation5 + $0x10] sm:$0x1] %vm6500, %v6496
      %v6502 = vld [vmem:[#allocation4 + $0x3d] sm:$0x1]
      %v6505 = vunpack.c.l.s4 1966171168
      %v6506 = vunpack.c.0.s8 %v6505
      %v6507 = vlaneseq
      %v6508 = vshrl.u32 %v6507, 7
      %v6509 = vsub.s32 %v6506, %v6508
      %v6510 = vrot.slane %v6502, %v6509
      %v6512 = vunpack.c.l.s4 1966171168
      %v6513 = vunpack.c.0.s8 %v6512
      %v6514 = vlaneseq
      %v6515 = vshrl.u32 %v6514, 7
      %v6516 = vsub.s32 %v6513, %v6515
      %v6517 = vrot.slane %v6510, %v6516
      %6518 = vrot.lane.b32.xlu0 %v6517, 87
      %v6519 = vpop.permute.xlu0 %6518
      %vm6521 = vcmp.ge.s32.totalorder %v5069, 87
      %vm6522 = vcmp.lt.s32.totalorder %v5069, 122
      %vm6523 = vmand %vm6521, %vm6522
      %6524 = vst.msk [vmem:[#allocation5 + $0x10] sm:$0x1] %vm6523, %v6519
      %v6525 = vld [vmem:[#allocation4 + $0x3e] sm:$0x1]
      %v6528 = vunpack.c.l.s4 1966171168
      %v6529 = vunpack.c.0.s8 %v6528
      %v6530 = vlaneseq
      %v6531 = vshrl.u32 %v6530, 7
      %v6532 = vsub.s32 %v6529, %v6531
      %v6533 = vrot.slane %v6525, %v6532
      %v6535 = vunpack.c.l.s4 1966171168
      %v6536 = vunpack.c.0.s8 %v6535
      %v6537 = vlaneseq
      %v6538 = vshrl.u32 %v6537, 7
      %v6539 = vsub.s32 %v6536, %v6538
      %v6540 = vrot.slane %v6533, %v6539
      %6541 = vrot.lane.b32.xlu0 %v6540, 122
      %v6542 = vpop.permute.xlu0 %6541
      %v6543 = vrot.slane %v6542, 7
      %vm6544 = vcmask 998400
      %v6545 = vsel %vm6544, %v6543, %v6542
      %vm6547 = vcmp.ge.s32.totalorder %v5069, 122
      %vm6548 = vcmp.lt.s32.totalorder %v5069, 157
      %vm6549 = vmand %vm6547, %vm6548
      %6550 = vst.msk [vmem:[#allocation5 + $0x10] sm:$0x3] %vm6549, %v6545
      %v6551 = vld [vmem:[#allocation4 + $0x3f] sm:$0x1]
      %v6554 = vunpack.c.l.s4 1966171168
      %v6555 = vunpack.c.0.s8 %v6554
      %v6556 = vlaneseq
      %v6557 = vshrl.u32 %v6556, 7
      %v6558 = vsub.s32 %v6555, %v6557
      %v6559 = vrot.slane %v6551, %v6558
      %v6561 = vunpack.c.l.s4 1966171168
      %v6562 = vunpack.c.0.s8 %v6561
      %v6563 = vlaneseq
      %v6564 = vshrl.u32 %v6563, 7
      %v6565 = vsub.s32 %v6562, %v6564
      %v6566 = vrot.slane %v6559, %v6565
      %6567 = vrot.lane.b32.xlu0 %v6566, 29
      %v6568 = vpop.permute.xlu0 %6567
      %vm6570 = vcmp.ge.s32.totalorder %v5069, 29
      %vm6571 = vcmp.lt.s32.totalorder %v5069, 64
      %vm6572 = vmand %vm6570, %vm6571
      %6573 = vst.msk [vmem:[#allocation5 + $0x11] sm:$0x1] %vm6572, %v6568
      %v6574 = vld [vmem:[#allocation5] sm:$0xff]
      %v6575 = vld [vmem:[#allocation5 + $0x8] sm:$0xff]
      %v6576 = vld [vmem:[#allocation5 + $0x10] sm:$0x3]
      %v6580 = vlaneseq
      %v6581 = vshrl.u32 %v6580, 7
      %v6582 = vsub.s32 0, %v6581
      %v6583 = vrot.slane %v6574, %v6582
      %v6584 = vlaneseq
      %v6585 = vshrl.u32 %v6584, 7
      %v6586 = vsub.s32 1, %v6585
      %v6587 = vrot.slane %v6574, %v6586
      %v6588 = vlaneseq
      %v6589 = vshrl.u32 %v6588, 7
      %v6590 = vsub.s32 2, %v6589
      %v6591 = vrot.slane %v6574, %v6590
      %v6592 = vlaneseq
      %v6593 = vshrl.u32 %v6592, 7
      %v6594 = vsub.s32 3, %v6593
      %v6595 = vrot.slane %v6574, %v6594
      %v6596 = vlaneseq
      %v6597 = vshrl.u32 %v6596, 7
      %v6598 = vsub.s32 4, %v6597
      %v6599 = vrot.slane %v6574, %v6598
      %v6600 = vlaneseq
      %v6601 = vshrl.u32 %v6600, 7
      %v6602 = vsub.s32 5, %v6601
      %v6603 = vrot.slane %v6574, %v6602
      %v6604 = vlaneseq
      %v6605 = vshrl.u32 %v6604, 7
      %v6606 = vsub.s32 6, %v6605
      %v6607 = vrot.slane %v6574, %v6606
      %v6608 = vlaneseq
      %v6609 = vshrl.u32 %v6608, 7
      %v6610 = vsub.s32 7, %v6609
      %v6611 = vrot.slane %v6574, %v6610
      %v6612 = vlaneseq
      %v6613 = vshrl.u32 %v6612, 7
      %v6614 = vsub.s32 0, %v6613
      %v6615 = vrot.slane %v6575, %v6614
      %v6616 = vlaneseq
      %v6617 = vshrl.u32 %v6616, 7
      %v6618 = vsub.s32 1, %v6617
      %v6619 = vrot.slane %v6575, %v6618
      %v6620 = vlaneseq
      %v6621 = vshrl.u32 %v6620, 7
      %v6622 = vsub.s32 2, %v6621
      %v6623 = vrot.slane %v6575, %v6622
      %v6624 = vlaneseq
      %v6625 = vshrl.u32 %v6624, 7
      %v6626 = vsub.s32 3, %v6625
      %v6627 = vrot.slane %v6575, %v6626
      %v6628 = vlaneseq
      %v6629 = vshrl.u32 %v6628, 7
      %v6630 = vsub.s32 4, %v6629
      %v6631 = vrot.slane %v6575, %v6630
      %v6632 = vlaneseq
      %v6633 = vshrl.u32 %v6632, 7
      %v6634 = vsub.s32 5, %v6633
      %v6635 = vrot.slane %v6575, %v6634
      %v6636 = vlaneseq
      %v6637 = vshrl.u32 %v6636, 7
      %v6638 = vsub.s32 6, %v6637
      %v6639 = vrot.slane %v6575, %v6638
      %v6640 = vlaneseq
      %v6641 = vshrl.u32 %v6640, 7
      %v6642 = vsub.s32 7, %v6641
      %v6643 = vrot.slane %v6575, %v6642
      %v6644 = vlaneseq
      %v6645 = vshrl.u32 %v6644, 7
      %v6646 = vsub.s32 0, %v6645
      %v6647 = vrot.slane %v6576, %v6646
      %v6648 = vlaneseq
      %v6649 = vshrl.u32 %v6648, 7
      %v6650 = vsub.s32 1, %v6649
      %v6651 = vrot.slane %v6576, %v6650
      %v6670 = vpack.c.bf16 %v6583, %v6583
      %v6671 = vpack.c.bf16 %v6587, %v6587
      %v6672 = vpack.c.bf16 %v6591, %v6591
      %v6673 = vpack.c.bf16 %v6595, %v6595
      %v6674 = vpack.c.bf16 %v6599, %v6599
      %v6675 = vpack.c.bf16 %v6603, %v6603
      %v6676 = vpack.c.bf16 %v6607, %v6607
      %v6677 = vpack.c.bf16 %v6611, %v6611
      %v6678 = vpack.c.bf16 %v6615, %v6615
      %v6679 = vpack.c.bf16 %v6619, %v6619
      %v6680 = vpack.c.bf16 %v6623, %v6623
      %v6681 = vpack.c.bf16 %v6627, %v6627
      %v6682 = vpack.c.bf16 %v6631, %v6631
      %v6683 = vpack.c.bf16 %v6635, %v6635
      %v6684 = vpack.c.bf16 %v6639, %v6639
      %v6685 = vpack.c.bf16 %v6643, %v6643
      %v6686 = vpack.c.bf16 %v6647, %v6647
      %v6687 = vpack.c.bf16 %v6651, %v6651
      %v6688 = vld [vmem:[%s13] sm:$0xf]
      %v6689 = vld [vmem:[%s13 + $0x4] sm:$0xf]
      %v6690 = vld [vmem:[%s13 + $0x8] sm:$0xf]
      %v6691 = vld [vmem:[%s13 + $0xc] sm:$0xf]
      %v6692 = vld [vmem:[%s13 + $0x10] sm:$0xf]
      %v6693 = vld [vmem:[%s13 + $0x14] sm:$0xf]
      %v6694 = vld [vmem:[%s13 + $0x18] sm:$0xf]
      %v6695 = vld [vmem:[%s13 + $0x1c] sm:$0xf]
      %v6696 = vld [vmem:[%s13 + $0x20] sm:$0xf]
      %v6697 = vld [vmem:[%s13 + $0x24] sm:$0xf]
      %v6698 = vld [vmem:[%s13 + $0x28] sm:$0xf]
      %v6699 = vld [vmem:[%s13 + $0x2c] sm:$0xf]
      %v6700 = vld [vmem:[%s13 + $0x30] sm:$0xf]
      %v6701 = vld [vmem:[%s13 + $0x34] sm:$0xf]
      %v6702 = vld [vmem:[%s13 + $0x38] sm:$0xf]
      %v6703 = vld [vmem:[%s13 + $0x3c] sm:$0xf]
      %v6704 = vld [vmem:[%s13 + $0x40] sm:$0xf]
      %v6705 = vld [vmem:[%s13 + $0x44] sm:$0xf]
      %v6706 = vld [vmem:[%s13 + $0x48] sm:$0xf]
      %v6707 = vld [vmem:[%s13 + $0x4c] sm:$0xf]
      %v6708 = vld [vmem:[%s13 + $0x50] sm:$0xf]
      %v6709 = vld [vmem:[%s13 + $0x54] sm:$0xf]
      %v6710 = vld [vmem:[%s13 + $0x58] sm:$0xf]
      %v6711 = vld [vmem:[%s13 + $0x5c] sm:$0xf]
      %v6712 = vld [vmem:[%s13 + $0x60] sm:$0xf]
      %v6713 = vld [vmem:[%s13 + $0x64] sm:$0xf]
      %v6714 = vld [vmem:[%s13 + $0x68] sm:$0xf]
      %v6715 = vld [vmem:[%s13 + $0x6c] sm:$0xf]
      %v6716 = vld [vmem:[%s13 + $0x70] sm:$0xf]
      %v6717 = vld [vmem:[%s13 + $0x74] sm:$0xf]
      %v6718 = vld [vmem:[%s13 + $0x78] sm:$0xf]
      %v6719 = vld [vmem:[%s13 + $0x7c] sm:$0xf]
      %v6720 = vld [vmem:[%s13 + $0x80] sm:$0xf]
      %v6721 = vld [vmem:[%s13 + $0x84] sm:$0xf]
      %v6722 = vld [vmem:[%s13 + $0x88] sm:$0xf]
      %v6723 = vld [vmem:[%s13 + $0x8c] sm:$0xf]
      %v6724 = vld [vmem:[%s13 + $0x90] sm:$0xf]
      %v6725 = vld [vmem:[%s13 + $0x94] sm:$0xf]
      %v6726 = vld [vmem:[%s13 + $0x98] sm:$0xf]
      %v6727 = vld [vmem:[%s13 + $0x9c] sm:$0xf]
      %v6728 = vld [vmem:[%s13 + $0xa0] sm:$0xf]
      %v6729 = vld [vmem:[%s13 + $0xa4] sm:$0xf]
      %v6730 = vld [vmem:[%s13 + $0xa8] sm:$0xf]
      %v6731 = vld [vmem:[%s13 + $0xac] sm:$0xf]
      %v6732 = vld [vmem:[%s13 + $0xb0] sm:$0xf]
      %v6733 = vld [vmem:[%s13 + $0xb4] sm:$0xf]
      %v6734 = vld [vmem:[%s13 + $0xb8] sm:$0xf]
      %v6735 = vld [vmem:[%s13 + $0xbc] sm:$0xf]
      %v6736 = vld [vmem:[%s13 + $0xc0] sm:$0xf]
      %v6737 = vld [vmem:[%s13 + $0xc4] sm:$0xf]
      %v6738 = vld [vmem:[%s13 + $0xc8] sm:$0xf]
      %v6739 = vld [vmem:[%s13 + $0xcc] sm:$0xf]
      %v6740 = vld [vmem:[%s13 + $0xd0] sm:$0xf]
      %v6741 = vld [vmem:[%s13 + $0xd4] sm:$0xf]
      %v6742 = vld [vmem:[%s13 + $0xd8] sm:$0xf]
      %v6743 = vld [vmem:[%s13 + $0xdc] sm:$0xf]
      %v6744 = vld [vmem:[%s13 + $0xe0] sm:$0xf]
      %v6745 = vld [vmem:[%s13 + $0xe4] sm:$0xf]
      %v6746 = vld [vmem:[%s13 + $0xe8] sm:$0xf]
      %v6747 = vld [vmem:[%s13 + $0xec] sm:$0xf]
      %v6748 = vld [vmem:[%s13 + $0xf0] sm:$0xf]
      %v6749 = vld [vmem:[%s13 + $0xf4] sm:$0xf]
      %v6750 = vld [vmem:[%s13 + $0xf8] sm:$0xf]
      %v6751 = vld [vmem:[%s13 + $0xfc] sm:$0xf]
      %v6752 = vld [vmem:[%s13 + $0x100] sm:$0xf]
      %v6753 = vld [vmem:[%s13 + $0x104] sm:$0xf]
      %v6754 = vld [vmem:[%s13 + $0x108] sm:$0xf]
      %v6755 = vld [vmem:[%s13 + $0x10c] sm:$0xf]
      %v6756 = vld [vmem:[%s13 + $0x110] sm:$0xf]
      %v6757 = vld [vmem:[%s13 + $0x114] sm:$0xf]
      %v6758 = vld [vmem:[%s13 + $0x118] sm:$0xf]
      %v6759 = vld [vmem:[%s13 + $0x11c] sm:$0xf]
      %v6760 = vld [vmem:[%s13 + $0x120] sm:$0xf]
      %v6761 = vld [vmem:[%s13 + $0x124] sm:$0xf]
      %v6762 = vld [vmem:[%s13 + $0x128] sm:$0xf]
      %v6763 = vld [vmem:[%s13 + $0x12c] sm:$0xf]
      %v6764 = vld [vmem:[%s13 + $0x130] sm:$0xf]
      %v6765 = vld [vmem:[%s13 + $0x134] sm:$0xf]
      %v6766 = vld [vmem:[%s13 + $0x138] sm:$0xf]
      %v6767 = vld [vmem:[%s13 + $0x13c] sm:$0xf]
      %v6768 = vld [vmem:[%s13 + $0x140] sm:$0xf]
      %v6769 = vld [vmem:[%s13 + $0x144] sm:$0xf]
      %v6770 = vld [vmem:[%s13 + $0x148] sm:$0xf]
      %v6771 = vld [vmem:[%s13 + $0x14c] sm:$0xf]
      %v6772 = vld [vmem:[%s13 + $0x150] sm:$0xf]
      %v6773 = vld [vmem:[%s13 + $0x154] sm:$0xf]
      %v6774 = vld [vmem:[%s13 + $0x158] sm:$0xf]
      %v6775 = vld [vmem:[%s13 + $0x15c] sm:$0xf]
      %v6776 = vld [vmem:[%s13 + $0x160] sm:$0xf]
      %v6777 = vld [vmem:[%s13 + $0x164] sm:$0xf]
      %v6778 = vld [vmem:[%s13 + $0x168] sm:$0xf]
      %v6779 = vld [vmem:[%s13 + $0x16c] sm:$0xf]
      %v6780 = vld [vmem:[%s13 + $0x170] sm:$0xf]
      %v6781 = vld [vmem:[%s13 + $0x174] sm:$0xf]
      %v6782 = vld [vmem:[%s13 + $0x178] sm:$0xf]
      %v6783 = vld [vmem:[%s13 + $0x17c] sm:$0xf]
      %v6784 = vld [vmem:[%s13 + $0x180] sm:$0xf]
      %v6785 = vld [vmem:[%s13 + $0x184] sm:$0xf]
      %v6786 = vld [vmem:[%s13 + $0x188] sm:$0xf]
      %v6787 = vld [vmem:[%s13 + $0x18c] sm:$0xf]
      %v6788 = vld [vmem:[%s13 + $0x190] sm:$0xf]
      %v6789 = vld [vmem:[%s13 + $0x194] sm:$0xf]
      %v6790 = vld [vmem:[%s13 + $0x198] sm:$0xf]
      %v6791 = vld [vmem:[%s13 + $0x19c] sm:$0xf]
      %v6792 = vld [vmem:[%s13 + $0x1a0] sm:$0xf]
      %v6793 = vld [vmem:[%s13 + $0x1a4] sm:$0xf]
      %v6794 = vld [vmem:[%s13 + $0x1a8] sm:$0xf]
      %v6795 = vld [vmem:[%s13 + $0x1ac] sm:$0xf]
      %v6796 = vld [vmem:[%s13 + $0x1b0] sm:$0xf]
      %v6797 = vld [vmem:[%s13 + $0x1b4] sm:$0xf]
      %v6798 = vld [vmem:[%s13 + $0x1b8] sm:$0xf]
      %v6799 = vld [vmem:[%s13 + $0x1bc] sm:$0xf]
      %v6800 = vld [vmem:[%s13 + $0x1c0] sm:$0xf]
      %v6801 = vld [vmem:[%s13 + $0x1c4] sm:$0xf]
      %v6802 = vld [vmem:[%s13 + $0x1c8] sm:$0xf]
      %v6803 = vld [vmem:[%s13 + $0x1cc] sm:$0xf]
      %v6804 = vld [vmem:[%s13 + $0x1d0] sm:$0xf]
      %v6805 = vld [vmem:[%s13 + $0x1d4] sm:$0xf]
      %v6806 = vld [vmem:[%s13 + $0x1d8] sm:$0xf]
      %v6807 = vld [vmem:[%s13 + $0x1dc] sm:$0xf]
      %v6808 = vld [vmem:[%s13 + $0x1e0] sm:$0xf]
      %v6809 = vld [vmem:[%s13 + $0x1e4] sm:$0xf]
      %v6810 = vld [vmem:[%s13 + $0x1e8] sm:$0xf]
      %v6811 = vld [vmem:[%s13 + $0x1ec] sm:$0xf]
      %v6812 = vld [vmem:[%s13 + $0x1f0] sm:$0xf]
      %v6813 = vld [vmem:[%s13 + $0x1f4] sm:$0xf]
      %v6814 = vld [vmem:[%s13 + $0x1f8] sm:$0xf]
      %v6815 = vld [vmem:[%s13 + $0x1fc] sm:$0xf]
      %v6816 = vld [vmem:[%s13 + $0x200] sm:$0xf]
      %v6817 = vld [vmem:[%s13 + $0x204] sm:$0xf]
      %v6818 = vld [vmem:[%s13 + $0x208] sm:$0xf]
      %v6819 = vld [vmem:[%s13 + $0x20c] sm:$0xf]
      %v6820 = vld [vmem:[%s13 + $0x210] sm:$0xf]
      %v6821 = vld [vmem:[%s13 + $0x214] sm:$0xf]
      %v6822 = vld [vmem:[%s13 + $0x218] sm:$0xf]
      %v6823 = vld [vmem:[%s13 + $0x21c] sm:$0xf]
      %v6824 = vld [vmem:[%s13 + $0x220] sm:$0xf]
      %v6825 = vld [vmem:[%s13 + $0x224] sm:$0xf]
      %v6826 = vld [vmem:[%s13 + $0x228] sm:$0xf]
      %v6827 = vld [vmem:[%s13 + $0x22c] sm:$0xf]
      %v6828 = vld [vmem:[%s13 + $0x230] sm:$0xf]
      %v6829 = vld [vmem:[%s13 + $0x234] sm:$0xf]
      %v6830 = vld [vmem:[%s13 + $0x238] sm:$0xf]
      %v6831 = vld [vmem:[%s13 + $0x23c] sm:$0xf]
      %v6832 = vld [vmem:[%s13 + $0x240] sm:$0xf]
      %v6833 = vld [vmem:[%s13 + $0x244] sm:$0xf]
      %v6834 = vld [vmem:[%s13 + $0x248] sm:$0xf]
      %v6835 = vld [vmem:[%s13 + $0x24c] sm:$0xf]
      %v6836 = vld [vmem:[%s13 + $0x250] sm:$0xf]
      %v6837 = vld [vmem:[%s13 + $0x254] sm:$0xf]
      %v6838 = vld [vmem:[%s13 + $0x258] sm:$0xf]
      %v6839 = vld [vmem:[%s13 + $0x25c] sm:$0xf]
      %v6840 = vld [vmem:[%s13 + $0x260] sm:$0xf]
      %v6841 = vld [vmem:[%s13 + $0x264] sm:$0xf]
      %v6842 = vld [vmem:[%s13 + $0x268] sm:$0xf]
      %v6843 = vld [vmem:[%s13 + $0x26c] sm:$0xf]
      %v6844 = vld [vmem:[%s13 + $0x270] sm:$0xf]
      %v6845 = vld [vmem:[%s13 + $0x274] sm:$0xf]
      %v6846 = vld [vmem:[%s13 + $0x278] sm:$0xf]
      %v6847 = vld [vmem:[%s13 + $0x27c] sm:$0xf]
      %v6848 = vld [vmem:[%s13 + $0x280] sm:$0xf]
      %v6849 = vld [vmem:[%s13 + $0x284] sm:$0xf]
      %v6850 = vld [vmem:[%s13 + $0x288] sm:$0xf]
      %v6851 = vld [vmem:[%s13 + $0x28c] sm:$0xf]
      %v6852 = vld [vmem:[%s13 + $0x290] sm:$0xf]
      %v6853 = vld [vmem:[%s13 + $0x294] sm:$0xf]
      %v6854 = vld [vmem:[%s13 + $0x298] sm:$0xf]
      %v6855 = vld [vmem:[%s13 + $0x29c] sm:$0xf]
      %v6856 = vld [vmem:[%s13 + $0x2a0] sm:$0xf]
      %v6857 = vld [vmem:[%s13 + $0x2a4] sm:$0xf]
      %v6858 = vld [vmem:[%s13 + $0x2a8] sm:$0xf]
      %v6859 = vld [vmem:[%s13 + $0x2ac] sm:$0xf]
      %v6860 = vld [vmem:[%s13 + $0x2b0] sm:$0xf]
      %v6861 = vld [vmem:[%s13 + $0x2b4] sm:$0xf]
      %v6862 = vld [vmem:[%s13 + $0x2b8] sm:$0xf]
      %v6863 = vld [vmem:[%s13 + $0x2bc] sm:$0xf]
      %v6864 = vld [vmem:[%s13 + $0x2c0] sm:$0xf]
      %v6865 = vld [vmem:[%s13 + $0x2c4] sm:$0xf]
      %v6866 = vld [vmem:[%s13 + $0x2c8] sm:$0xf]
      %v6867 = vld [vmem:[%s13 + $0x2cc] sm:$0xf]
      %v6868 = vld [vmem:[%s13 + $0x2d0] sm:$0xf]
      %v6869 = vld [vmem:[%s13 + $0x2d4] sm:$0xf]
      %v6870 = vld [vmem:[%s13 + $0x2d8] sm:$0xf]
      %v6871 = vld [vmem:[%s13 + $0x2dc] sm:$0xf]
      %v6872 = vld [vmem:[%s13 + $0x2e0] sm:$0xf]
      %v6873 = vld [vmem:[%s13 + $0x2e4] sm:$0xf]
      %v6874 = vld [vmem:[%s13 + $0x2e8] sm:$0xf]
      %v6875 = vld [vmem:[%s13 + $0x2ec] sm:$0xf]
      %v6876 = vld [vmem:[%s13 + $0x2f0] sm:$0xf]
      %v6877 = vld [vmem:[%s13 + $0x2f4] sm:$0xf]
      %v6878 = vld [vmem:[%s13 + $0x2f8] sm:$0xf]
      %v6879 = vld [vmem:[%s13 + $0x2fc] sm:$0xf]
      %v6880 = vld [vmem:[%s13 + $0x300] sm:$0xf]
      %v6881 = vld [vmem:[%s13 + $0x304] sm:$0xf]
      %v6882 = vld [vmem:[%s13 + $0x308] sm:$0xf]
      %v6883 = vld [vmem:[%s13 + $0x30c] sm:$0xf]
      %v6884 = vld [vmem:[%s13 + $0x310] sm:$0xf]
      %v6885 = vld [vmem:[%s13 + $0x314] sm:$0xf]
      %v6886 = vld [vmem:[%s13 + $0x318] sm:$0xf]
      %v6887 = vld [vmem:[%s13 + $0x31c] sm:$0xf]
      %v6888 = vld [vmem:[%s13 + $0x320] sm:$0xf]
      %v6889 = vld [vmem:[%s13 + $0x324] sm:$0xf]
      %v6890 = vld [vmem:[%s13 + $0x328] sm:$0xf]
      %v6891 = vld [vmem:[%s13 + $0x32c] sm:$0xf]
      %v6892 = vld [vmem:[%s13 + $0x330] sm:$0xf]
      %v6893 = vld [vmem:[%s13 + $0x334] sm:$0xf]
      %v6894 = vld [vmem:[%s13 + $0x338] sm:$0xf]
      %v6895 = vld [vmem:[%s13 + $0x33c] sm:$0xf]
      %v6896 = vld [vmem:[%s13 + $0x340] sm:$0xf]
      %v6897 = vld [vmem:[%s13 + $0x344] sm:$0xf]
      %v6898 = vld [vmem:[%s13 + $0x348] sm:$0xf]
      %v6899 = vld [vmem:[%s13 + $0x34c] sm:$0xf]
      %v6900 = vld [vmem:[%s13 + $0x350] sm:$0xf]
      %v6901 = vld [vmem:[%s13 + $0x354] sm:$0xf]
      %v6902 = vld [vmem:[%s13 + $0x358] sm:$0xf]
      %v6903 = vld [vmem:[%s13 + $0x35c] sm:$0xf]
      %v6904 = vld [vmem:[%s13 + $0x360] sm:$0xf]
      %v6905 = vld [vmem:[%s13 + $0x364] sm:$0xf]
      %v6906 = vld [vmem:[%s13 + $0x368] sm:$0xf]
      %v6907 = vld [vmem:[%s13 + $0x36c] sm:$0xf]
      %v6908 = vld [vmem:[%s13 + $0x370] sm:$0xf]
      %v6909 = vld [vmem:[%s13 + $0x374] sm:$0xf]
      %v6910 = vld [vmem:[%s13 + $0x378] sm:$0xf]
      %v6911 = vld [vmem:[%s13 + $0x37c] sm:$0xf]
      %v6912 = vld [vmem:[%s13 + $0x380] sm:$0xf]
      %v6913 = vld [vmem:[%s13 + $0x384] sm:$0xf]
      %v6914 = vld [vmem:[%s13 + $0x388] sm:$0xf]
      %v6915 = vld [vmem:[%s13 + $0x38c] sm:$0xf]
      %v6916 = vld [vmem:[%s13 + $0x390] sm:$0xf]
      %v6917 = vld [vmem:[%s13 + $0x394] sm:$0xf]
      %v6918 = vld [vmem:[%s13 + $0x398] sm:$0xf]
      %v6919 = vld [vmem:[%s13 + $0x39c] sm:$0xf]
      %v6920 = vld [vmem:[%s13 + $0x3a0] sm:$0xf]
      %v6921 = vld [vmem:[%s13 + $0x3a4] sm:$0xf]
      %v6922 = vld [vmem:[%s13 + $0x3a8] sm:$0xf]
      %v6923 = vld [vmem:[%s13 + $0x3ac] sm:$0xf]
      %v6924 = vld [vmem:[%s13 + $0x3b0] sm:$0xf]
      %v6925 = vld [vmem:[%s13 + $0x3b4] sm:$0xf]
      %v6926 = vld [vmem:[%s13 + $0x3b8] sm:$0xf]
      %v6927 = vld [vmem:[%s13 + $0x3bc] sm:$0xf]
      %v6928 = vld [vmem:[%s13 + $0x3c0] sm:$0xf]
      %v6929 = vld [vmem:[%s13 + $0x3c4] sm:$0xf]
      %v6930 = vld [vmem:[%s13 + $0x3c8] sm:$0xf]
      %v6931 = vld [vmem:[%s13 + $0x3cc] sm:$0xf]
      %v6932 = vld [vmem:[%s13 + $0x3d0] sm:$0xf]
      %v6933 = vld [vmem:[%s13 + $0x3d4] sm:$0xf]
      %v6934 = vld [vmem:[%s13 + $0x3d8] sm:$0xf]
      %v6935 = vld [vmem:[%s13 + $0x3dc] sm:$0xf]
      %v6936 = vld [vmem:[%s13 + $0x3e0] sm:$0xf]
      %v6937 = vld [vmem:[%s13 + $0x3e4] sm:$0xf]
      %v6938 = vld [vmem:[%s13 + $0x3e8] sm:$0xf]
      %v6939 = vld [vmem:[%s13 + $0x3ec] sm:$0xf]
      %v6940 = vld [vmem:[%s13 + $0x3f0] sm:$0xf]
      %v6941 = vld [vmem:[%s13 + $0x3f4] sm:$0xf]
      %v6942 = vld [vmem:[%s13 + $0x3f8] sm:$0xf]
      %v6943 = vld [vmem:[%s13 + $0x3fc] sm:$0xf]
      %v6944 = vld [vmem:[%s13 + $0x400] sm:$0xf]
      %v6945 = vld [vmem:[%s13 + $0x404] sm:$0xf]
      %v6946 = vld [vmem:[%s13 + $0x408] sm:$0xf]
      %v6947 = vld [vmem:[%s13 + $0x40c] sm:$0xf]
      %v6948 = vld [vmem:[%s13 + $0x410] sm:$0xf]
      %v6949 = vld [vmem:[%s13 + $0x414] sm:$0xf]
      %v6950 = vld [vmem:[%s13 + $0x418] sm:$0xf]
      %v6951 = vld [vmem:[%s13 + $0x41c] sm:$0xf]
      %v6952 = vld [vmem:[%s13 + $0x420] sm:$0xf]
      %v6953 = vld [vmem:[%s13 + $0x424] sm:$0xf]
      %v6954 = vld [vmem:[%s13 + $0x428] sm:$0xf]
      %v6955 = vld [vmem:[%s13 + $0x42c] sm:$0xf]
      %v6956 = vld [vmem:[%s13 + $0x430] sm:$0xf]
      %v6957 = vld [vmem:[%s13 + $0x434] sm:$0xf]
      %v6958 = vld [vmem:[%s13 + $0x438] sm:$0xf]
      %v6959 = vld [vmem:[%s13 + $0x43c] sm:$0xf]
      %v6960 = vld [vmem:[%s13 + $0x440] sm:$0xf]
      %v6961 = vld [vmem:[%s13 + $0x444] sm:$0xf]
      %v6962 = vld [vmem:[%s13 + $0x448] sm:$0xf]
      %v6963 = vld [vmem:[%s13 + $0x44c] sm:$0xf]
      %v6964 = vld [vmem:[%s13 + $0x450] sm:$0xf]
      %v6965 = vld [vmem:[%s13 + $0x454] sm:$0xf]
      %v6966 = vld [vmem:[%s13 + $0x458] sm:$0xf]
      %v6967 = vld [vmem:[%s13 + $0x45c] sm:$0xf]
      %v6968 = vld [vmem:[%s14] sm:$0x1]
      %v7249 = vunpack.c.l.b16 %v6688
      %v7250 = vunpack.c.l.b16 %v6689
      %v7251 = vunpack.c.l.b16 %v6690
      %v7252 = vunpack.c.l.b16 %v6691
      %v7253 = vunpack.c.l.b16 %v6692
      %v7254 = vunpack.c.l.b16 %v6693
      %v7255 = vunpack.c.l.b16 %v6694
      %v7256 = vunpack.c.l.b16 %v6695
      %v7257 = vunpack.c.l.b16 %v6696
      %v7258 = vunpack.c.l.b16 %v6697
      %v7259 = vunpack.c.l.b16 %v6698
      %v7260 = vunpack.c.l.b16 %v6699
      %v7261 = vunpack.c.l.b16 %v6700
      %v7262 = vunpack.c.l.b16 %v6701
      %v7263 = vunpack.c.l.b16 %v6702
      %v7264 = vunpack.c.l.b16 %v6703
      %v7265 = vunpack.c.l.b16 %v6704
      %v7266 = vunpack.c.l.b16 %v6705
      %v7267 = vunpack.c.l.b16 %v6706
      %v7268 = vunpack.c.l.b16 %v6707
      %v7269 = vunpack.c.l.b16 %v6708
      %v7270 = vunpack.c.l.b16 %v6709
      %v7271 = vunpack.c.l.b16 %v6710
      %v7272 = vunpack.c.l.b16 %v6711
      %v7273 = vunpack.c.l.b16 %v6712
      %v7274 = vunpack.c.l.b16 %v6713
      %v7275 = vunpack.c.l.b16 %v6714
      %v7276 = vunpack.c.l.b16 %v6715
      %v7277 = vunpack.c.l.b16 %v6716
      %v7278 = vunpack.c.l.b16 %v6717
      %v7279 = vunpack.c.l.b16 %v6718
      %v7280 = vunpack.c.l.b16 %v6719
      %v7281 = vunpack.c.l.b16 %v6720
      %v7282 = vunpack.c.l.b16 %v6721
      %v7283 = vunpack.c.l.b16 %v6722
      %v7284 = vunpack.c.l.b16 %v6723
      %v7285 = vunpack.c.l.b16 %v6724
      %v7286 = vunpack.c.l.b16 %v6725
      %v7287 = vunpack.c.l.b16 %v6726
      %v7288 = vunpack.c.l.b16 %v6727
      %v7289 = vunpack.c.l.b16 %v6728
      %v7290 = vunpack.c.l.b16 %v6729
      %v7291 = vunpack.c.l.b16 %v6730
      %v7292 = vunpack.c.l.b16 %v6731
      %v7293 = vunpack.c.l.b16 %v6732
      %v7294 = vunpack.c.l.b16 %v6733
      %v7295 = vunpack.c.l.b16 %v6734
      %v7296 = vunpack.c.l.b16 %v6735
      %v7297 = vunpack.c.l.b16 %v6736
      %v7298 = vunpack.c.l.b16 %v6737
      %v7299 = vunpack.c.l.b16 %v6738
      %v7300 = vunpack.c.l.b16 %v6739
      %v7301 = vunpack.c.l.b16 %v6740
      %v7302 = vunpack.c.l.b16 %v6741
      %v7303 = vunpack.c.l.b16 %v6742
      %v7304 = vunpack.c.l.b16 %v6743
      %v7305 = vunpack.c.l.b16 %v6744
      %v7306 = vunpack.c.l.b16 %v6745
      %v7307 = vunpack.c.l.b16 %v6746
      %v7308 = vunpack.c.l.b16 %v6747
      %v7309 = vunpack.c.l.b16 %v6748
      %v7310 = vunpack.c.l.b16 %v6749
      %v7311 = vunpack.c.l.b16 %v6750
      %v7312 = vunpack.c.l.b16 %v6751
      %v7313 = vunpack.c.l.b16 %v6752
      %v7314 = vunpack.c.l.b16 %v6753
      %v7315 = vunpack.c.l.b16 %v6754
      %v7316 = vunpack.c.l.b16 %v6755
      %v7317 = vunpack.c.l.b16 %v6756
      %v7318 = vunpack.c.l.b16 %v6757
      %v7319 = vunpack.c.l.b16 %v6758
      %v7320 = vunpack.c.l.b16 %v6759
      %v7321 = vunpack.c.l.b16 %v6760
      %v7322 = vunpack.c.l.b16 %v6761
      %v7323 = vunpack.c.l.b16 %v6762
      %v7324 = vunpack.c.l.b16 %v6763
      %v7325 = vunpack.c.l.b16 %v6764
      %v7326 = vunpack.c.l.b16 %v6765
      %v7327 = vunpack.c.l.b16 %v6766
      %v7328 = vunpack.c.l.b16 %v6767
      %v7329 = vunpack.c.l.b16 %v6768
      %v7330 = vunpack.c.l.b16 %v6769
      %v7331 = vunpack.c.l.b16 %v6770
      %v7332 = vunpack.c.l.b16 %v6771
      %v7333 = vunpack.c.l.b16 %v6772
      %v7334 = vunpack.c.l.b16 %v6773
      %v7335 = vunpack.c.l.b16 %v6774
      %v7336 = vunpack.c.l.b16 %v6775
      %v7337 = vunpack.c.l.b16 %v6776
      %v7338 = vunpack.c.l.b16 %v6777
      %v7339 = vunpack.c.l.b16 %v6778
      %v7340 = vunpack.c.l.b16 %v6779
      %v7341 = vunpack.c.l.b16 %v6780
      %v7342 = vunpack.c.l.b16 %v6781
      %v7343 = vunpack.c.l.b16 %v6782
      %v7344 = vunpack.c.l.b16 %v6783
      %v7345 = vunpack.c.l.b16 %v6784
      %v7346 = vunpack.c.l.b16 %v6785
      %v7347 = vunpack.c.l.b16 %v6786
      %v7348 = vunpack.c.l.b16 %v6787
      %v7349 = vunpack.c.l.b16 %v6788
      %v7350 = vunpack.c.l.b16 %v6789
      %v7351 = vunpack.c.l.b16 %v6790
      %v7352 = vunpack.c.l.b16 %v6791
      %v7353 = vunpack.c.l.b16 %v6792
      %v7354 = vunpack.c.l.b16 %v6793
      %v7355 = vunpack.c.l.b16 %v6794
      %v7356 = vunpack.c.l.b16 %v6795
      %v7357 = vunpack.c.l.b16 %v6796
      %v7358 = vunpack.c.l.b16 %v6797
      %v7359 = vunpack.c.l.b16 %v6798
      %v7360 = vunpack.c.l.b16 %v6799
      %v7361 = vunpack.c.l.b16 %v6800
      %v7362 = vunpack.c.l.b16 %v6801
      %v7363 = vunpack.c.l.b16 %v6802
      %v7364 = vunpack.c.l.b16 %v6803
      %v7365 = vunpack.c.l.b16 %v6804
      %v7366 = vunpack.c.l.b16 %v6805
      %v7367 = vunpack.c.l.b16 %v6806
      %v7368 = vunpack.c.l.b16 %v6807
      %v7369 = vunpack.c.l.b16 %v6808
      %v7370 = vunpack.c.l.b16 %v6809
      %v7371 = vunpack.c.l.b16 %v6810
      %v7372 = vunpack.c.l.b16 %v6811
      %v7373 = vunpack.c.l.b16 %v6812
      %v7374 = vunpack.c.l.b16 %v6813
      %v7375 = vunpack.c.l.b16 %v6814
      %v7376 = vunpack.c.l.b16 %v6815
      %v7377 = vunpack.c.l.b16 %v6816
      %v7378 = vunpack.c.l.b16 %v6817
      %v7379 = vunpack.c.l.b16 %v6818
      %v7380 = vunpack.c.l.b16 %v6819
      %v7381 = vunpack.c.l.b16 %v6820
      %v7382 = vunpack.c.l.b16 %v6821
      %v7383 = vunpack.c.l.b16 %v6822
      %v7384 = vunpack.c.l.b16 %v6823
      %v7385 = vunpack.c.l.b16 %v6824
      %v7386 = vunpack.c.l.b16 %v6825
      %v7387 = vunpack.c.l.b16 %v6826
      %v7388 = vunpack.c.l.b16 %v6827
      %v7389 = vunpack.c.l.b16 %v6828
      %v7390 = vunpack.c.l.b16 %v6829
      %v7391 = vunpack.c.l.b16 %v6830
      %v7392 = vunpack.c.l.b16 %v6831
      %v7393 = vunpack.c.l.b16 %v6832
      %v7394 = vunpack.c.l.b16 %v6833
      %v7395 = vunpack.c.l.b16 %v6834
      %v7396 = vunpack.c.l.b16 %v6835
      %v7397 = vunpack.c.l.b16 %v6836
      %v7398 = vunpack.c.l.b16 %v6837
      %v7399 = vunpack.c.l.b16 %v6838
      %v7400 = vunpack.c.l.b16 %v6839
      %v7401 = vunpack.c.l.b16 %v6840
      %v7402 = vunpack.c.l.b16 %v6841
      %v7403 = vunpack.c.l.b16 %v6842
      %v7404 = vunpack.c.l.b16 %v6843
      %v7405 = vunpack.c.l.b16 %v6844
      %v7406 = vunpack.c.l.b16 %v6845
      %v7407 = vunpack.c.l.b16 %v6846
      %v7408 = vunpack.c.l.b16 %v6847
      %v7409 = vunpack.c.l.b16 %v6848
      %v7410 = vunpack.c.l.b16 %v6849
      %v7411 = vunpack.c.l.b16 %v6850
      %v7412 = vunpack.c.l.b16 %v6851
      %v7413 = vunpack.c.l.b16 %v6852
      %v7414 = vunpack.c.l.b16 %v6853
      %v7415 = vunpack.c.l.b16 %v6854
      %v7416 = vunpack.c.l.b16 %v6855
      %v7417 = vunpack.c.l.b16 %v6856
      %v7418 = vunpack.c.l.b16 %v6857
      %v7419 = vunpack.c.l.b16 %v6858
      %v7420 = vunpack.c.l.b16 %v6859
      %v7421 = vunpack.c.l.b16 %v6860
      %v7422 = vunpack.c.l.b16 %v6861
      %v7423 = vunpack.c.l.b16 %v6862
      %v7424 = vunpack.c.l.b16 %v6863
      %v7425 = vunpack.c.l.b16 %v6864
      %v7426 = vunpack.c.l.b16 %v6865
      %v7427 = vunpack.c.l.b16 %v6866
      %v7428 = vunpack.c.l.b16 %v6867
      %v7429 = vunpack.c.l.b16 %v6868
      %v7430 = vunpack.c.l.b16 %v6869
      %v7431 = vunpack.c.l.b16 %v6870
      %v7432 = vunpack.c.l.b16 %v6871
      %v7433 = vunpack.c.l.b16 %v6872
      %v7434 = vunpack.c.l.b16 %v6873
      %v7435 = vunpack.c.l.b16 %v6874
      %v7436 = vunpack.c.l.b16 %v6875
      %v7437 = vunpack.c.l.b16 %v6876
      %v7438 = vunpack.c.l.b16 %v6877
      %v7439 = vunpack.c.l.b16 %v6878
      %v7440 = vunpack.c.l.b16 %v6879
      %v7441 = vunpack.c.l.b16 %v6880
      %v7442 = vunpack.c.l.b16 %v6881
      %v7443 = vunpack.c.l.b16 %v6882
      %v7444 = vunpack.c.l.b16 %v6883
      %v7445 = vunpack.c.l.b16 %v6884
      %v7446 = vunpack.c.l.b16 %v6885
      %v7447 = vunpack.c.l.b16 %v6886
      %v7448 = vunpack.c.l.b16 %v6887
      %v7449 = vunpack.c.l.b16 %v6888
      %v7450 = vunpack.c.l.b16 %v6889
      %v7451 = vunpack.c.l.b16 %v6890
      %v7452 = vunpack.c.l.b16 %v6891
      %v7453 = vunpack.c.l.b16 %v6892
      %v7454 = vunpack.c.l.b16 %v6893
      %v7455 = vunpack.c.l.b16 %v6894
      %v7456 = vunpack.c.l.b16 %v6895
      %v7457 = vunpack.c.l.b16 %v6896
      %v7458 = vunpack.c.l.b16 %v6897
      %v7459 = vunpack.c.l.b16 %v6898
      %v7460 = vunpack.c.l.b16 %v6899
      %v7461 = vunpack.c.l.b16 %v6900
      %v7462 = vunpack.c.l.b16 %v6901
      %v7463 = vunpack.c.l.b16 %v6902
      %v7464 = vunpack.c.l.b16 %v6903
      %v7465 = vunpack.c.l.b16 %v6904
      %v7466 = vunpack.c.l.b16 %v6905
      %v7467 = vunpack.c.l.b16 %v6906
      %v7468 = vunpack.c.l.b16 %v6907
      %v7469 = vunpack.c.l.b16 %v6908
      %v7470 = vunpack.c.l.b16 %v6909
      %v7471 = vunpack.c.l.b16 %v6910
      %v7472 = vunpack.c.l.b16 %v6911
      %v7473 = vunpack.c.l.b16 %v6912
      %v7474 = vunpack.c.l.b16 %v6913
      %v7475 = vunpack.c.l.b16 %v6914
      %v7476 = vunpack.c.l.b16 %v6915
      %v7477 = vunpack.c.l.b16 %v6916
      %v7478 = vunpack.c.l.b16 %v6917
      %v7479 = vunpack.c.l.b16 %v6918
      %v7480 = vunpack.c.l.b16 %v6919
      %v7481 = vunpack.c.l.b16 %v6920
      %v7482 = vunpack.c.l.b16 %v6921
      %v7483 = vunpack.c.l.b16 %v6922
      %v7484 = vunpack.c.l.b16 %v6923
      %v7485 = vunpack.c.l.b16 %v6924
      %v7486 = vunpack.c.l.b16 %v6925
      %v7487 = vunpack.c.l.b16 %v6926
      %v7488 = vunpack.c.l.b16 %v6927
      %v7489 = vunpack.c.l.b16 %v6928
      %v7490 = vunpack.c.l.b16 %v6929
      %v7491 = vunpack.c.l.b16 %v6930
      %v7492 = vunpack.c.l.b16 %v6931
      %v7493 = vunpack.c.l.b16 %v6932
      %v7494 = vunpack.c.l.b16 %v6933
      %v7495 = vunpack.c.l.b16 %v6934
      %v7496 = vunpack.c.l.b16 %v6935
      %v7497 = vunpack.c.l.b16 %v6936
      %v7498 = vunpack.c.l.b16 %v6937
      %v7499 = vunpack.c.l.b16 %v6938
      %v7500 = vunpack.c.l.b16 %v6939
      %v7501 = vunpack.c.l.b16 %v6940
      %v7502 = vunpack.c.l.b16 %v6941
      %v7503 = vunpack.c.l.b16 %v6942
      %v7504 = vunpack.c.l.b16 %v6943
      %v7505 = vunpack.c.l.b16 %v6944
      %v7506 = vunpack.c.l.b16 %v6945
      %v7507 = vunpack.c.l.b16 %v6946
      %v7508 = vunpack.c.l.b16 %v6947
      %v7509 = vunpack.c.l.b16 %v6948
      %v7510 = vunpack.c.l.b16 %v6949
      %v7511 = vunpack.c.l.b16 %v6950
      %v7512 = vunpack.c.l.b16 %v6951
      %v7513 = vunpack.c.l.b16 %v6952
      %v7514 = vunpack.c.l.b16 %v6953
      %v7515 = vunpack.c.l.b16 %v6954
      %v7516 = vunpack.c.l.b16 %v6955
      %v7517 = vunpack.c.l.b16 %v6956
      %v7518 = vunpack.c.l.b16 %v6957
      %v7519 = vunpack.c.l.b16 %v6958
      %v7520 = vunpack.c.l.b16 %v6959
      %v7521 = vunpack.c.l.b16 %v6960
      %v7522 = vunpack.c.l.b16 %v6961
      %v7523 = vunpack.c.l.b16 %v6962
      %v7524 = vunpack.c.l.b16 %v6963
      %v7525 = vunpack.c.l.b16 %v6964
      %v7526 = vunpack.c.l.b16 %v6965
      %v7527 = vunpack.c.l.b16 %v6966
      %v7528 = vunpack.c.l.b16 %v6967
      %v7529 = vpack.c.b16 %v7250, %v7249
      %v7530 = vpack.c.b16 %v7252, %v7251
      %v7531 = vpack.c.b16 %v7254, %v7253
      %v7532 = vpack.c.b16 %v7256, %v7255
      %v7533 = vpack.c.b16 %v7258, %v7257
      %v7534 = vpack.c.b16 %v7260, %v7259
      %v7535 = vpack.c.b16 %v7262, %v7261
      %v7536 = vpack.c.b16 %v7264, %v7263
      %v7537 = vpack.c.b16 %v7266, %v7265
      %v7538 = vpack.c.b16 %v7268, %v7267
      %v7539 = vpack.c.b16 %v7270, %v7269
      %v7540 = vpack.c.b16 %v7272, %v7271
      %v7541 = vpack.c.b16 %v7274, %v7273
      %v7542 = vpack.c.b16 %v7276, %v7275
      %v7543 = vpack.c.b16 %v7278, %v7277
      %v7544 = vpack.c.b16 %v7280, %v7279
      %v7545 = vpack.c.b16 %v7282, %v7281
      %v7546 = vpack.c.b16 %v7284, %v7283
      %v7547 = vpack.c.b16 %v7286, %v7285
      %v7548 = vpack.c.b16 %v7288, %v7287
      %v7549 = vpack.c.b16 %v7290, %v7289
      %v7550 = vpack.c.b16 %v7292, %v7291
      %v7551 = vpack.c.b16 %v7294, %v7293
      %v7552 = vpack.c.b16 %v7296, %v7295
      %v7553 = vpack.c.b16 %v7298, %v7297
      %v7554 = vpack.c.b16 %v7300, %v7299
      %v7555 = vpack.c.b16 %v7302, %v7301
      %v7556 = vpack.c.b16 %v7304, %v7303
      %v7557 = vpack.c.b16 %v7306, %v7305
      %v7558 = vpack.c.b16 %v7308, %v7307
      %v7559 = vpack.c.b16 %v7310, %v7309
      %v7560 = vpack.c.b16 %v7312, %v7311
      %v7561 = vpack.c.b16 %v7314, %v7313
      %v7562 = vpack.c.b16 %v7316, %v7315
      %v7563 = vpack.c.b16 %v7318, %v7317
      %v7564 = vpack.c.b16 %v7320, %v7319
      %v7565 = vpack.c.b16 %v7322, %v7321
      %v7566 = vpack.c.b16 %v7324, %v7323
      %v7567 = vpack.c.b16 %v7326, %v7325
      %v7568 = vpack.c.b16 %v7328, %v7327
      %v7569 = vpack.c.b16 %v7330, %v7329
      %v7570 = vpack.c.b16 %v7332, %v7331
      %v7571 = vpack.c.b16 %v7334, %v7333
      %v7572 = vpack.c.b16 %v7336, %v7335
      %v7573 = vpack.c.b16 %v7338, %v7337
      %v7574 = vpack.c.b16 %v7340, %v7339
      %v7575 = vpack.c.b16 %v7342, %v7341
      %v7576 = vpack.c.b16 %v7344, %v7343
      %v7577 = vpack.c.b16 %v7346, %v7345
      %v7578 = vpack.c.b16 %v7348, %v7347
      %v7579 = vpack.c.b16 %v7350, %v7349
      %v7580 = vpack.c.b16 %v7352, %v7351
      %v7581 = vpack.c.b16 %v7354, %v7353
      %v7582 = vpack.c.b16 %v7356, %v7355
      %v7583 = vpack.c.b16 %v7358, %v7357
      %v7584 = vpack.c.b16 %v7360, %v7359
      %v7585 = vpack.c.b16 %v7362, %v7361
      %v7586 = vpack.c.b16 %v7364, %v7363
      %v7587 = vpack.c.b16 %v7366, %v7365
      %v7588 = vpack.c.b16 %v7368, %v7367
      %v7589 = vpack.c.b16 %v7370, %v7369
      %v7590 = vpack.c.b16 %v7372, %v7371
      %v7591 = vpack.c.b16 %v7374, %v7373
      %v7592 = vpack.c.b16 %v7376, %v7375
      %v7593 = vpack.c.b16 %v7378, %v7377
      %v7594 = vpack.c.b16 %v7380, %v7379
      %v7595 = vpack.c.b16 %v7382, %v7381
      %v7596 = vpack.c.b16 %v7384, %v7383
      %v7597 = vpack.c.b16 %v7386, %v7385
      %v7598 = vpack.c.b16 %v7388, %v7387
      %v7599 = vpack.c.b16 %v7390, %v7389
      %v7600 = vpack.c.b16 %v7392, %v7391
      %v7601 = vpack.c.b16 %v7394, %v7393
      %v7602 = vpack.c.b16 %v7396, %v7395
      %v7603 = vpack.c.b16 %v7398, %v7397
      %v7604 = vpack.c.b16 %v7400, %v7399
      %v7605 = vpack.c.b16 %v7402, %v7401
      %v7606 = vpack.c.b16 %v7404, %v7403
      %v7607 = vpack.c.b16 %v7406, %v7405
      %v7608 = vpack.c.b16 %v7408, %v7407
      %v7609 = vpack.c.b16 %v7410, %v7409
      %v7610 = vpack.c.b16 %v7412, %v7411
      %v7611 = vpack.c.b16 %v7414, %v7413
      %v7612 = vpack.c.b16 %v7416, %v7415
      %v7613 = vpack.c.b16 %v7418, %v7417
      %v7614 = vpack.c.b16 %v7420, %v7419
      %v7615 = vpack.c.b16 %v7422, %v7421
      %v7616 = vpack.c.b16 %v7424, %v7423
      %v7617 = vpack.c.b16 %v7426, %v7425
      %v7618 = vpack.c.b16 %v7428, %v7427
      %v7619 = vpack.c.b16 %v7430, %v7429
      %v7620 = vpack.c.b16 %v7432, %v7431
      %v7621 = vpack.c.b16 %v7434, %v7433
      %v7622 = vpack.c.b16 %v7436, %v7435
      %v7623 = vpack.c.b16 %v7438, %v7437
      %v7624 = vpack.c.b16 %v7440, %v7439
      %v7625 = vpack.c.b16 %v7442, %v7441
      %v7626 = vpack.c.b16 %v7444, %v7443
      %v7627 = vpack.c.b16 %v7446, %v7445
      %v7628 = vpack.c.b16 %v7448, %v7447
      %v7629 = vpack.c.b16 %v7450, %v7449
      %v7630 = vpack.c.b16 %v7452, %v7451
      %v7631 = vpack.c.b16 %v7454, %v7453
      %v7632 = vpack.c.b16 %v7456, %v7455
      %v7633 = vpack.c.b16 %v7458, %v7457
      %v7634 = vpack.c.b16 %v7460, %v7459
      %v7635 = vpack.c.b16 %v7462, %v7461
      %v7636 = vpack.c.b16 %v7464, %v7463
      %v7637 = vpack.c.b16 %v7466, %v7465
      %v7638 = vpack.c.b16 %v7468, %v7467
      %v7639 = vpack.c.b16 %v7470, %v7469
      %v7640 = vpack.c.b16 %v7472, %v7471
      %v7641 = vpack.c.b16 %v7474, %v7473
      %v7642 = vpack.c.b16 %v7476, %v7475
      %v7643 = vpack.c.b16 %v7478, %v7477
      %v7644 = vpack.c.b16 %v7480, %v7479
      %v7645 = vpack.c.b16 %v7482, %v7481
      %v7646 = vpack.c.b16 %v7484, %v7483
      %v7647 = vpack.c.b16 %v7486, %v7485
      %v7648 = vpack.c.b16 %v7488, %v7487
      %v7649 = vpack.c.b16 %v7490, %v7489
      %v7650 = vpack.c.b16 %v7492, %v7491
      %v7651 = vpack.c.b16 %v7494, %v7493
      %v7652 = vpack.c.b16 %v7496, %v7495
      %v7653 = vpack.c.b16 %v7498, %v7497
      %v7654 = vpack.c.b16 %v7500, %v7499
      %v7655 = vpack.c.b16 %v7502, %v7501
      %v7656 = vpack.c.b16 %v7504, %v7503
      %v7657 = vpack.c.b16 %v7506, %v7505
      %v7658 = vpack.c.b16 %v7508, %v7507
      %v7659 = vpack.c.b16 %v7510, %v7509
      %v7660 = vpack.c.b16 %v7512, %v7511
      %v7661 = vpack.c.b16 %v7514, %v7513
      %v7662 = vpack.c.b16 %v7516, %v7515
      %v7663 = vpack.c.b16 %v7518, %v7517
      %v7664 = vpack.c.b16 %v7520, %v7519
      %v7665 = vpack.c.b16 %v7522, %v7521
      %v7666 = vpack.c.b16 %v7524, %v7523
      %v7667 = vpack.c.b16 %v7526, %v7525
      %v7668 = vpack.c.b16 %v7528, %v7527
      %vm7809 = vcmask 523264
      %v7811 = vsel %vm7809, %v6687, 0
      %7813 = vmatprep.subr.bf16.mxu0 0
      %7814 = vmatpush1.bf16.msra.mxu0 %v7529
      %7815 = vmatprep.subr.bf16.mxu0 0
      %7816 = vmatpush1.bf16.msra.mxu0 %v7530
      %7817 = vmatprep.subr.bf16.mxu0 0
      %7818 = vmatpush1.bf16.msra.mxu0 %v7531
      %7819 = vmatprep.subr.bf16.mxu0 0
      %7820 = vmatpush1.bf16.msra.mxu0 %v7532
      %7821 = vmatprep.subr.bf16.mxu0 0
      %7822 = vmatpush1.bf16.msra.mxu0 %v7533
      %7823 = vmatprep.subr.bf16.mxu0 0
      %7824 = vmatpush1.bf16.msra.mxu0 %v7534
      %7825 = vmatprep.subr.bf16.mxu0 0
      %7826 = vmatpush1.bf16.msra.mxu0 %v7535
      %7827 = vmatprep.subr.bf16.mxu0 0
      %7828 = vmatpush1.bf16.msra.mxu0 %v7536
      %7829 = vmatprep.subr.bf16.mxu0 0
      %7830 = vmatpush1.bf16.msra.mxu0 %v7537
      %7831 = vmatprep.subr.bf16.mxu0 0
      %7832 = vmatpush1.bf16.msra.mxu0 %v7538
      %7833 = vmatprep.subr.bf16.mxu0 0
      %7834 = vmatpush1.bf16.msra.mxu0 %v7539
      %7835 = vmatprep.subr.bf16.mxu0 0
      %7836 = vmatpush1.bf16.msra.mxu0 %v7540
      %7837 = vmatprep.subr.bf16.mxu0 0
      %7838 = vmatpush1.bf16.msra.mxu0 %v7541
      %7839 = vmatprep.subr.bf16.mxu0 0
      %7840 = vmatpush1.bf16.msra.mxu0 %v7542
      %7841 = vmatprep.subr.bf16.mxu0 0
      %7842 = vmatpush1.bf16.msra.mxu0 %v7543
      %7843 = vmatprep.subr.bf16.mxu0 0
      %7844 = vmatpush1.bf16.msra.mxu0 %v7544
      %7845 = vmatprep.mubr.bf16.mxu0 %v6671
      %7846 = vmatmul.mubr.bf16.gmra.mrb[0].mxu0 %v6670
      %v7847 = vpop.f32.mrb[0].mxu0
      %v7848 = vadd.f32 %v6968, %v7847
      %v7849 = vpop.f32.mrb[0].mxu0
      %v7850 = vpop.f32.mrb[0].mxu0
      %v7851 = vpop.f32.mrb[0].mxu0
      %7852 = vdwg.mxu0
      %7853 = vmatprep.subr.bf16.mxu0 0
      %7854 = vmatpush1.bf16.msra.mxu0 %v7545
      %7855 = vmatprep.subr.bf16.mxu0 0
      %7856 = vmatpush1.bf16.msra.mxu0 %v7546
      %7857 = vmatprep.subr.bf16.mxu0 0
      %7858 = vmatpush1.bf16.msra.mxu0 %v7547
      %7859 = vmatprep.subr.bf16.mxu0 0
      %7860 = vmatpush1.bf16.msra.mxu0 %v7548
      %7861 = vmatprep.subr.bf16.mxu0 0
      %7862 = vmatpush1.bf16.msra.mxu0 %v7549
      %7863 = vmatprep.subr.bf16.mxu0 0
      %7864 = vmatpush1.bf16.msra.mxu0 %v7550
      %7865 = vmatprep.subr.bf16.mxu0 0
      %7866 = vmatpush1.bf16.msra.mxu0 %v7551
      %7867 = vmatprep.subr.bf16.mxu0 0
      %7868 = vmatpush1.bf16.msra.mxu0 %v7552
      %7869 = vmatprep.subr.bf16.mxu0 0
      %7870 = vmatpush1.bf16.msra.mxu0 %v7553
      %7871 = vmatprep.subr.bf16.mxu0 0
      %7872 = vmatpush1.bf16.msra.mxu0 %v7554
      %7873 = vmatprep.subr.bf16.mxu0 0
      %7874 = vmatpush1.bf16.msra.mxu0 %v7555
      %7875 = vmatprep.subr.bf16.mxu0 0
      %7876 = vmatpush1.bf16.msra.mxu0 %v7556
      %7877 = vmatprep.subr.bf16.mxu0 0
      %7878 = vmatpush1.bf16.msra.mxu0 %v7557
      %7879 = vmatprep.subr.bf16.mxu0 0
      %7880 = vmatpush1.bf16.msra.mxu0 %v7558
      %7881 = vmatprep.subr.bf16.mxu0 0
      %7882 = vmatpush1.bf16.msra.mxu0 %v7559
      %7883 = vmatprep.subr.bf16.mxu0 0
      %7884 = vmatpush1.bf16.msra.mxu0 %v7560
      %7885 = vmatprep.mubr.bf16.mxu0 %v6673
      %7886 = vmatmul.mubr.bf16.gmra.mrb[0].mxu0 %v6672
      %v7887 = vpop.f32.mrb[0].mxu0
      %v7888 = vadd.f32 %v7848, %v7887
      %v7889 = vpop.f32.mrb[0].mxu0
      %v7890 = vpop.f32.mrb[0].mxu0
      %v7891 = vpop.f32.mrb[0].mxu0
      %7892 = vdwg.mxu0
      %7893 = vmatprep.subr.bf16.mxu0 0
      %7894 = vmatpush1.bf16.msra.mxu0 %v7561
      %7895 = vmatprep.subr.bf16.mxu0 0
      %7896 = vmatpush1.bf16.msra.mxu0 %v7562
      %7897 = vmatprep.subr.bf16.mxu0 0
      %7898 = vmatpush1.bf16.msra.mxu0 %v7563
      %7899 = vmatprep.subr.bf16.mxu0 0
      %7900 = vmatpush1.bf16.msra.mxu0 %v7564
      %7901 = vmatprep.subr.bf16.mxu0 0
      %7902 = vmatpush1.bf16.msra.mxu0 %v7565
      %7903 = vmatprep.subr.bf16.mxu0 0
      %7904 = vmatpush1.bf16.msra.mxu0 %v7566
      %7905 = vmatprep.subr.bf16.mxu0 0
      %7906 = vmatpush1.bf16.msra.mxu0 %v7567
      %7907 = vmatprep.subr.bf16.mxu0 0
      %7908 = vmatpush1.bf16.msra.mxu0 %v7568
      %7909 = vmatprep.subr.bf16.mxu0 0
      %7910 = vmatpush1.bf16.msra.mxu0 %v7569
      %7911 = vmatprep.subr.bf16.mxu0 0
      %7912 = vmatpush1.bf16.msra.mxu0 %v7570
      %7913 = vmatprep.subr.bf16.mxu0 0
      %7914 = vmatpush1.bf16.msra.mxu0 %v7571
      %7915 = vmatprep.subr.bf16.mxu0 0
      %7916 = vmatpush1.bf16.msra.mxu0 %v7572
      %7917 = vmatprep.subr.bf16.mxu0 0
      %7918 = vmatpush1.bf16.msra.mxu0 %v7573
      %7919 = vmatprep.subr.bf16.mxu0 0
      %7920 = vmatpush1.bf16.msra.mxu0 %v7574
      %7921 = vmatprep.subr.bf16.mxu0 0
      %7922 = vmatpush1.bf16.msra.mxu0 %v7575
      %7923 = vmatprep.subr.bf16.mxu0 0
      %7924 = vmatpush1.bf16.msra.mxu0 %v7576
      %7925 = vmatprep.mubr.bf16.mxu0 %v6675
      %7926 = vmatmul.mubr.bf16.gmra.mrb[0].mxu0 %v6674
      %v7927 = vpop.f32.mrb[0].mxu0
      %v7928 = vadd.f32 %v7888, %v7927
      %v7929 = vpop.f32.mrb[0].mxu0
      %v7930 = vpop.f32.mrb[0].mxu0
      %v7931 = vpop.f32.mrb[0].mxu0
      %7932 = vdwg.mxu0
      %7933 = vmatprep.subr.bf16.mxu0 0
      %7934 = vmatpush1.bf16.msra.mxu0 %v7577
      %7935 = vmatprep.subr.bf16.mxu0 0
      %7936 = vmatpush1.bf16.msra.mxu0 %v7578
      %7937 = vmatprep.subr.bf16.mxu0 0
      %7938 = vmatpush1.bf16.msra.mxu0 %v7579
      %7939 = vmatprep.subr.bf16.mxu0 0
      %7940 = vmatpush1.bf16.msra.mxu0 %v7580
      %7941 = vmatprep.subr.bf16.mxu0 0
      %7942 = vmatpush1.bf16.msra.mxu0 %v7581
      %7943 = vmatprep.subr.bf16.mxu0 0
      %7944 = vmatpush1.bf16.msra.mxu0 %v7582
      %7945 = vmatprep.subr.bf16.mxu0 0
      %7946 = vmatpush1.bf16.msra.mxu0 %v7583
      %7947 = vmatprep.subr.bf16.mxu0 0
      %7948 = vmatpush1.bf16.msra.mxu0 %v7584
      %7949 = vmatprep.subr.bf16.mxu0 0
      %7950 = vmatpush1.bf16.msra.mxu0 %v7585
      %7951 = vmatprep.subr.bf16.mxu0 0
      %7952 = vmatpush1.bf16.msra.mxu0 %v7586
      %7953 = vmatprep.subr.bf16.mxu0 0
      %7954 = vmatpush1.bf16.msra.mxu0 %v7587
      %7955 = vmatprep.subr.bf16.mxu0 0
      %7956 = vmatpush1.bf16.msra.mxu0 %v7588
      %7957 = vmatprep.subr.bf16.mxu0 0
      %7958 = vmatpush1.bf16.msra.mxu0 %v7589
      %7959 = vmatprep.subr.bf16.mxu0 0
      %7960 = vmatpush1.bf16.msra.mxu0 %v7590
      %7961 = vmatprep.subr.bf16.mxu0 0
      %7962 = vmatpush1.bf16.msra.mxu0 %v7591
      %7963 = vmatprep.subr.bf16.mxu0 0
      %7964 = vmatpush1.bf16.msra.mxu0 %v7592
      %7965 = vmatprep.mubr.bf16.mxu0 %v6677
      %7966 = vmatmul.mubr.bf16.gmra.mrb[0].mxu0 %v6676
      %v7967 = vpop.f32.mrb[0].mxu0
      %v7968 = vadd.f32 %v7928, %v7967
      %v7969 = vpop.f32.mrb[0].mxu0
      %v7970 = vpop.f32.mrb[0].mxu0
      %v7971 = vpop.f32.mrb[0].mxu0
      %7972 = vdwg.mxu0
      %7973 = vmatprep.subr.bf16.mxu0 0
      %7974 = vmatpush1.bf16.msra.mxu0 %v7593
      %7975 = vmatprep.subr.bf16.mxu0 0
      %7976 = vmatpush1.bf16.msra.mxu0 %v7594
      %7977 = vmatprep.subr.bf16.mxu0 0
      %7978 = vmatpush1.bf16.msra.mxu0 %v7595
      %7979 = vmatprep.subr.bf16.mxu0 0
      %7980 = vmatpush1.bf16.msra.mxu0 %v7596
      %7981 = vmatprep.subr.bf16.mxu0 0
      %7982 = vmatpush1.bf16.msra.mxu0 %v7597
      %7983 = vmatprep.subr.bf16.mxu0 0
      %7984 = vmatpush1.bf16.msra.mxu0 %v7598
      %7985 = vmatprep.subr.bf16.mxu0 0
      %7986 = vmatpush1.bf16.msra.mxu0 %v7599
      %7987 = vmatprep.subr.bf16.mxu0 0
      %7988 = vmatpush1.bf16.msra.mxu0 %v7600
      %7989 = vmatprep.subr.bf16.mxu0 0
      %7990 = vmatpush1.bf16.msra.mxu0 %v7601
      %7991 = vmatprep.subr.bf16.mxu0 0
      %7992 = vmatpush1.bf16.msra.mxu0 %v7602
      %7993 = vmatprep.subr.bf16.mxu0 0
      %7994 = vmatpush1.bf16.msra.mxu0 %v7603
      %7995 = vmatprep.subr.bf16.mxu0 0
      %7996 = vmatpush1.bf16.msra.mxu0 %v7604
      %7997 = vmatprep.subr.bf16.mxu0 0
      %7998 = vmatpush1.bf16.msra.mxu0 %v7605
      %7999 = vmatprep.subr.bf16.mxu0 0
      %8000 = vmatpush1.bf16.msra.mxu0 %v7606
      %8001 = vmatprep.subr.bf16.mxu0 0
      %8002 = vmatpush1.bf16.msra.mxu0 %v7607
      %8003 = vmatprep.subr.bf16.mxu0 0
      %8004 = vmatpush1.bf16.msra.mxu0 %v7608
      %8005 = vmatprep.mubr.bf16.mxu0 %v6679
      %8006 = vmatmul.mubr.bf16.gmra.mrb[0].mxu0 %v6678
      %v8007 = vpop.f32.mrb[0].mxu0
      %v8008 = vadd.f32 %v7968, %v8007
      %v8009 = vpop.f32.mrb[0].mxu0
      %v8010 = vpop.f32.mrb[0].mxu0
      %v8011 = vpop.f32.mrb[0].mxu0
      %8012 = vdwg.mxu0
      %8013 = vmatprep.subr.bf16.mxu0 0
      %8014 = vmatpush1.bf16.msra.mxu0 %v7609
      %8015 = vmatprep.subr.bf16.mxu0 0
      %8016 = vmatpush1.bf16.msra.mxu0 %v7610
      %8017 = vmatprep.subr.bf16.mxu0 0
      %8018 = vmatpush1.bf16.msra.mxu0 %v7611
      %8019 = vmatprep.subr.bf16.mxu0 0
      %8020 = vmatpush1.bf16.msra.mxu0 %v7612
      %8021 = vmatprep.subr.bf16.mxu0 0
      %8022 = vmatpush1.bf16.msra.mxu0 %v7613
      %8023 = vmatprep.subr.bf16.mxu0 0
      %8024 = vmatpush1.bf16.msra.mxu0 %v7614
      %8025 = vmatprep.subr.bf16.mxu0 0
      %8026 = vmatpush1.bf16.msra.mxu0 %v7615
      %8027 = vmatprep.subr.bf16.mxu0 0
      %8028 = vmatpush1.bf16.msra.mxu0 %v7616
      %8029 = vmatprep.subr.bf16.mxu0 0
      %8030 = vmatpush1.bf16.msra.mxu0 %v7617
      %8031 = vmatprep.subr.bf16.mxu0 0
      %8032 = vmatpush1.bf16.msra.mxu0 %v7618
      %8033 = vmatprep.subr.bf16.mxu0 0
      %8034 = vmatpush1.bf16.msra.mxu0 %v7619
      %8035 = vmatprep.subr.bf16.mxu0 0
      %8036 = vmatpush1.bf16.msra.mxu0 %v7620
      %8037 = vmatprep.subr.bf16.mxu0 0
      %8038 = vmatpush1.bf16.msra.mxu0 %v7621
      %8039 = vmatprep.subr.bf16.mxu0 0
      %8040 = vmatpush1.bf16.msra.mxu0 %v7622
      %8041 = vmatprep.subr.bf16.mxu0 0
      %8042 = vmatpush1.bf16.msra.mxu0 %v7623
      %8043 = vmatprep.subr.bf16.mxu0 0
      %8044 = vmatpush1.bf16.msra.mxu0 %v7624
      %8045 = vmatprep.mubr.bf16.mxu0 %v6681
      %8046 = vmatmul.mubr.bf16.gmra.mrb[0].mxu0 %v6680
      %v8047 = vpop.f32.mrb[0].mxu0
      %v8048 = vadd.f32 %v8008, %v8047
      %v8049 = vpop.f32.mrb[0].mxu0
      %v8050 = vpop.f32.mrb[0].mxu0
      %v8051 = vpop.f32.mrb[0].mxu0
      %8052 = vdwg.mxu0
      %8053 = vmatprep.subr.bf16.mxu0 0
      %8054 = vmatpush1.bf16.msra.mxu0 %v7625
      %8055 = vmatprep.subr.bf16.mxu0 0
      %8056 = vmatpush1.bf16.msra.mxu0 %v7626
      %8057 = vmatprep.subr.bf16.mxu0 0
      %8058 = vmatpush1.bf16.msra.mxu0 %v7627
      %8059 = vmatprep.subr.bf16.mxu0 0
      %8060 = vmatpush1.bf16.msra.mxu0 %v7628
      %8061 = vmatprep.subr.bf16.mxu0 0
      %8062 = vmatpush1.bf16.msra.mxu0 %v7629
      %8063 = vmatprep.subr.bf16.mxu0 0
      %8064 = vmatpush1.bf16.msra.mxu0 %v7630
      %8065 = vmatprep.subr.bf16.mxu0 0
      %8066 = vmatpush1.bf16.msra.mxu0 %v7631
      %8067 = vmatprep.subr.bf16.mxu0 0
      %8068 = vmatpush1.bf16.msra.mxu0 %v7632
      %8069 = vmatprep.subr.bf16.mxu0 0
      %8070 = vmatpush1.bf16.msra.mxu0 %v7633
      %8071 = vmatprep.subr.bf16.mxu0 0
      %8072 = vmatpush1.bf16.msra.mxu0 %v7634
      %8073 = vmatprep.subr.bf16.mxu0 0
      %8074 = vmatpush1.bf16.msra.mxu0 %v7635
      %8075 = vmatprep.subr.bf16.mxu0 0
      %8076 = vmatpush1.bf16.msra.mxu0 %v7636
      %8077 = vmatprep.subr.bf16.mxu0 0
      %8078 = vmatpush1.bf16.msra.mxu0 %v7637
      %8079 = vmatprep.subr.bf16.mxu0 0
      %8080 = vmatpush1.bf16.msra.mxu0 %v7638
      %8081 = vmatprep.subr.bf16.mxu0 0
      %8082 = vmatpush1.bf16.msra.mxu0 %v7639
      %8083 = vmatprep.subr.bf16.mxu0 0
      %8084 = vmatpush1.bf16.msra.mxu0 %v7640
      %8085 = vmatprep.mubr.bf16.mxu0 %v6683
      %8086 = vmatmul.mubr.bf16.gmra.mrb[0].mxu0 %v6682
      %v8087 = vpop.f32.mrb[0].mxu0
      %v8088 = vadd.f32 %v8048, %v8087
      %v8089 = vpop.f32.mrb[0].mxu0
      %v8090 = vpop.f32.mrb[0].mxu0
      %v8091 = vpop.f32.mrb[0].mxu0
      %8092 = vdwg.mxu0
      %8093 = vmatprep.subr.bf16.mxu0 0
      %8094 = vmatpush1.bf16.msra.mxu0 %v7641
      %8095 = vmatprep.subr.bf16.mxu0 0
      %8096 = vmatpush1.bf16.msra.mxu0 %v7642
      %8097 = vmatprep.subr.bf16.mxu0 0
      %8098 = vmatpush1.bf16.msra.mxu0 %v7643
      %8099 = vmatprep.subr.bf16.mxu0 0
      %8100 = vmatpush1.bf16.msra.mxu0 %v7644
      %8101 = vmatprep.subr.bf16.mxu0 0
      %8102 = vmatpush1.bf16.msra.mxu0 %v7645
      %8103 = vmatprep.subr.bf16.mxu0 0
      %8104 = vmatpush1.bf16.msra.mxu0 %v7646
      %8105 = vmatprep.subr.bf16.mxu0 0
      %8106 = vmatpush1.bf16.msra.mxu0 %v7647
      %8107 = vmatprep.subr.bf16.mxu0 0
      %8108 = vmatpush1.bf16.msra.mxu0 %v7648
      %8109 = vmatprep.subr.bf16.mxu0 0
      %8110 = vmatpush1.bf16.msra.mxu0 %v7649
      %8111 = vmatprep.subr.bf16.mxu0 0
      %8112 = vmatpush1.bf16.msra.mxu0 %v7650
      %8113 = vmatprep.subr.bf16.mxu0 0
      %8114 = vmatpush1.bf16.msra.mxu0 %v7651
      %8115 = vmatprep.subr.bf16.mxu0 0
      %8116 = vmatpush1.bf16.msra.mxu0 %v7652
      %8117 = vmatprep.subr.bf16.mxu0 0
      %8118 = vmatpush1.bf16.msra.mxu0 %v7653
      %8119 = vmatprep.subr.bf16.mxu0 0
      %8120 = vmatpush1.bf16.msra.mxu0 %v7654
      %8121 = vmatprep.subr.bf16.mxu0 0
      %8122 = vmatpush1.bf16.msra.mxu0 %v7655
      %8123 = vmatprep.subr.bf16.mxu0 0
      %8124 = vmatpush1.bf16.msra.mxu0 %v7656
      %8125 = vmatprep.mubr.bf16.mxu0 %v6685
      %8126 = vmatmul.mubr.bf16.gmra.mrb[0].mxu0 %v6684
      %v8127 = vpop.f32.mrb[0].mxu0
      %v8128 = vadd.f32 %v8088, %v8127
      %v8129 = vpop.f32.mrb[0].mxu0
      %v8130 = vpop.f32.mrb[0].mxu0
      %v8131 = vpop.f32.mrb[0].mxu0
      %8132 = vdwg.mxu0
      %8133 = vmatprep.subr.bf16.mxu0 0
      %8134 = vmatpush1.bf16.msra.mxu0 %v7657
      %8135 = vmatprep.subr.bf16.mxu0 0
      %8136 = vmatpush1.bf16.msra.mxu0 %v7658
      %8137 = vmatprep.subr.bf16.mxu0 0
      %8138 = vmatpush1.bf16.msra.mxu0 %v7659
      %8139 = vmatprep.subr.bf16.mxu0 0
      %8140 = vmatpush1.bf16.msra.mxu0 %v7660
      %8141 = vmatprep.subr.bf16.mxu0 0
      %8142 = vmatpush1.bf16.msra.mxu0 %v7661
      %8143 = vmatprep.subr.bf16.mxu0 0
      %8144 = vmatpush1.bf16.msra.mxu0 %v7662
      %8145 = vmatprep.subr.bf16.mxu0 0
      %8146 = vmatpush1.bf16.msra.mxu0 %v7663
      %8147 = vmatprep.subr.bf16.mxu0 0
      %8148 = vmatpush1.bf16.msra.mxu0 %v7664
      %8149 = vmatprep.subr.bf16.mxu0 0
      %8150 = vmatpush1.bf16.msra.mxu0 %v7665
      %8151 = vmatprep.subr.bf16.mxu0 0
      %8152 = vmatpush1.bf16.msra.mxu0 %v7666
      %8153 = vmatprep.subr.bf16.mxu0 0
      %8154 = vmatpush1.bf16.msra.mxu0 %v7667
      %8155 = vmatprep.subr.bf16.mxu0 0
      %8156 = vmatpush1.bf16.msra.mxu0 %v7668
      %8157 = vmatprep.subr.bf16.mxu0 0
      %8158 = vmatpush1.bf16.msra.mxu0 0
      %8159 = vmatprep.subr.bf16.mxu0 0
      %8160 = vmatpush1.bf16.msra.mxu0 0
      %8161 = vmatprep.subr.bf16.mxu0 0
      %8162 = vmatpush1.bf16.msra.mxu0 0
      %8163 = vmatprep.subr.bf16.mxu0 0
      %8164 = vmatpush1.bf16.msra.mxu0 0
      %8165 = vmatprep.mubr.bf16.mxu0 %v7811
      %8166 = vmatmul.mubr.bf16.gmra.mrb[0].mxu0 %v6686
      %v8167 = vpop.f32.mrb[0].mxu0
      %v8168 = vadd.f32 %v8128, %v8167
      %v8169 = vpop.f32.mrb[0].mxu0
      %v8170 = vpop.f32.mrb[0].mxu0
      %v8171 = vpop.f32.mrb[0].mxu0
      %8172 = vdwg.mxu0
      %v8173 = vlaneseq
      %v8174 = vand.u32 %v8173, 127
      %vm8175 = vcmp.eq.s32.totalorder %v8174, 64
      %v8176 = vtanh.pop %v8168
      %v8177 = vsel %vm8175, %v8176, %v8168
      %8178 = vst [vmem:[%s490] sm:$0x1] %v8177
      %p8179 = scmp.lt.s32.totalorder %s26, 1
      %s8180 = scalar_select %p8179, %s26, 1
      %s8181 = scalar_lea.vmem %s15, %s8180
      // Predicated region
      $region81: #{resnet_forward.1} parent=79 // pred_check
        %p8182 = pneg %p364
      $region82: #{resnet_forward.1} parent=79 // pred_check_branch
        %8184 = sbr.rel (%p8182) target = $region84
      $region83: #{resnet_forward.1} parent=79 // pred_region
        _
      $region84: #{resnet_forward.1} parent=79 // pred_fallthru
        _
    $region80: #{resnet_forward.1} parent=5 // pred_fallthru
      _
    %p8185 = scmp.le.s32.totalorder 2, %s21
    // Predicated region
    $region85: #{resnet_forward.1} parent=5 // pred_check
      %p8186 = pneg %p8185
    $region86: #{resnet_forward.1} parent=5 // pred_check_branch
      %8188 = sbr.rel (%p8186) target = $region88
    $region87: #{resnet_forward.1} parent=5 // pred_region
      %s8189 = ssub.s32 %s21, 2
      // Predicated region
      $region89: #{resnet_forward.1} parent=87 // pred_check
        %p8190 = pneg %p370
      $region90: #{resnet_forward.1} parent=87 // pred_check_branch
        %8192 = sbr.rel (%p8190) target = $region92
      $region91: #{resnet_forward.1} parent=87 // pred_region
        %p8193 = scmp.lt.s32.totalorder %s27, 1
        %s8194 = scalar_select %p8193, %s27, 1
        %s8195 = scalar_lea.vmem %s15, %s8194
      $region92: #{resnet_forward.1} parent=87 // pred_fallthru
        _
    $region88: #{resnet_forward.1} parent=5 // pred_fallthru
      _
  $region6: #{resnet_forward.1} parent=0 // loop_footer
    %s25 = sadd.s32 1, %s21
  $region7: #{resnet_forward.1} parent=0 // loop_footer_branch
    %20 = sbr.rel target = $region3
  $region8: #{resnet_forward.1} parent=0 // loop_exit
    _

</llo_original>
